<compile_context>
chip_gen: v7x
topology: tpu7x:2x2x1
jax: 0.10.0
libtpu: 0.0.40
codegen_flags: <defaults>
</compile_context>

<pallas_src>
import jax
import jax.numpy as jnp
from jax import lax
from jax.experimental import pallas as pl
from jax.experimental.pallas import tpu as pltpu

EPS = 1e-8

# ----- small, module-consistent hyper-parameters -----
B = 2          # batch
T = 64         # n_frames (time / sequence)
IN_CHAN = 16   # n_filters (feature channels)
BN_CHAN = 32   # bottleneck channels
HID_CHAN = 64  # hidden channels of depthwise block
KSIZE = 3      # depthwise kernel size
N_BLOCKS = 3   # blocks per repeat  (dilations 1, 2, 4)
N_REPEATS = 2
N_SRC = 2
N_LAYERS = N_BLOCKS * N_REPEATS

# Default MXU operand dtype: bf16 on all generations (full-rate MXU, half the
# operand / vreg traffic).  Accumulation stays f32.  The f32 path is kept only
# for bit-level parity checks against the pure-JAX reference.
MATMUL_DTYPE = jnp.bfloat16


def _prelu(v, a):
    return jnp.maximum(v, 0.0) + a * jnp.minimum(v, 0.0)


# ---------------------------- the Pallas kernel ------------------------------
def make_tcn_kernel(n_seg: int, t: int, matmul_dtype):
    """Kernel over one [C, n_seg*t] block holding `n_seg` examples side by side
    along the lane (time) axis."""
    st = n_seg * t

    def _mm(w, x):
        # Weight matmuls: bf16 (or f32) operands, f32 accumulation on the MXU.
        return jnp.dot(w.astype(matmul_dtype), x.astype(matmul_dtype),
                       preferred_element_type=jnp.float32)

    def kernel(x_ref, segind_ref, segindt_ref,
               g0_ref, be0_ref, wbn_ref, bbn_ref,
               w_in_ref, b_in_ref, a1_ref, g1_ref, be1_ref,
               w_d_ref, b_d_ref, a2_ref, g2_ref, be2_ref,
               w_res_ref, b_res_ref,
               a_out_ref, w_head_ref, b_head_ref,
               logits_ref, weak_ref):
        x = x_ref[0]                                   # [IN_CHAN, n_seg*T]
        seg_ind = segind_ref[...]                      # [st, n_seg]  (0/1, f32)
        seg_ind_t = segindt_ref[...]                   # [n_seg, st]

        # ---- hoisted lane helpers (shared by every layer) ----
        lane = lax.broadcasted_iota(jnp.int32, (1, st), 1)
        lane_mod = lane                                # time index within example
        for s in range(1, n_seg):
            lane_mod = jnp.where(lane >= s * t, lane - s * t, lane_mod)
        dils = sorted({2 ** b for b in range(N_BLOCKS)})
        # edge masks restoring zero-padding after the (wrapping) roll
        edge_masks = {d: (lane_mod >= d, lane_mod < (t - d)) for d in dils}

        # ---- single-pass GlobLN; per-example stats on the MXU ----
        def glob_ln(v, gamma, beta):
            inv_n = 1.0 / (v.shape[0] * t)             # elements per example
            cols = jnp.concatenate(
                [jnp.sum(v, axis=0, keepdims=True),
                 jnp.sum(v * v, axis=0, keepdims=True)], axis=0)        # [2, st]
            if n_seg == 1:
                mean = jnp.sum(cols[0:1]) * inv_n
                msq = jnp.sum(cols[1:2]) * inv_n
            else:
                # segment sums via 0/1 indicator matmul (exact in f32), then
                # broadcast back to lanes with a second tiny matmul.
                seg_stats = jnp.dot(cols, seg_ind,
                                    preferred_element_type=jnp.float32) * inv_n  # [2, n_seg]
                stats_l = jnp.dot(seg_stats, seg_ind_t,
                                  preferred_element_type=jnp.float32)            # [2, st]
                mean = stats_l[0:1]
                msq = stats_l[1:2]
            var = jnp.maximum(msq - mean * mean, 0.0)
            scale = gamma * lax.rsqrt(var + EPS)       # EUP rsqrt
            return v * scale + (beta - mean * scale)

        # ---- bottleneck: GlobLN(in_chan) -> 1x1 conv in_chan -> bn_chan ----
        y = glob_ln(x, g0_ref[...], be0_ref[...])
        out = _mm(wbn_ref[...], y) + bbn_ref[...]

        # ---- TCN residual blocks (statically unrolled) ----
        for l in range(N_LAYERS):
            d = 2 ** (l % N_BLOCKS)
            m_prev, m_next = edge_masks[d]
            h = _mm(w_in_ref[l], out) + b_in_ref[l]
            h = _prelu(h, a1_ref[l])
            h = glob_ln(h, g1_ref[l], be1_ref[l])
            # depthwise dilated conv (k=3, "same", zero padded) via XLU roll;
            # taps accumulated sequentially to limit peak live vregs.
            wd = w_d_ref[l]                            # [HID, 3]
            acc = wd[:, 1:2] * h + b_d_ref[l]
            acc = acc + wd[:, 0:1] * jnp.where(m_prev, pltpu.roll(h, d, axis=1), 0.0)
            acc = acc + wd[:, 2:3] * jnp.where(m_next, pltpu.roll(h, st - d, axis=1), 0.0)
            h = _prelu(acc, a2_ref[l])
            h = glob_ln(h, g2_ref[l], be2_ref[l])
            out = out + _mm(w_res_ref[l], h) + b_res_ref[l]

        # ---- fused output + attention head: one MXU matmul ----
        ho = _prelu(out, a_out_ref[...])
        stacked = jnp.concatenate([ho, out], axis=0)               # [2*BN, st]
        head = _mm(w_head_ref[...], stacked) + b_head_ref[...]     # [2*N_SRC, st]
        strong_pre = head[:N_SRC]
        sof_logits = head[N_SRC:]
        logits_ref[0] = strong_pre          # strong = sigmoid(logits) done outside

        # attention pooling (softmax over sources, clamp, weighted time mean)
        strong_sig = jax.nn.sigmoid(strong_pre)
        mx = jnp.max(sof_logits, axis=0, keepdims=True)
        e = jnp.exp(sof_logits - mx)
        sof = e * pl.reciprocal(jnp.sum(e, axis=0, keepdims=True), approx=True)
        sof = jnp.clip(sof, 1e-7, 1.0)
        prod = strong_sig * sof
        if n_seg == 1:
            num = jnp.sum(prod, axis=1, keepdims=True)
            den = jnp.sum(sof, axis=1, keepdims=True)
            weak_ref[0] = num * pl.reciprocal(den, approx=True)
        else:
            # per-example num/den sums on the MXU, one un-sliced store.
            pooled = jnp.dot(jnp.concatenate([prod, sof], axis=0), seg_ind,
                             preferred_element_type=jnp.float32)   # [2*N_SRC, n_seg]
            weak_ref[0] = pooled[:N_SRC] * pl.reciprocal(pooled[N_SRC:], approx=True)

    return kernel


# --------------------------------- wrapper -----------------------------------
def tcn_forward(mixture_w, params, seg_per_block=None, matmul_dtype=MATMUL_DTYPE):
    """mixture_w: [B, 1, T, IN_CHAN] (as the PyTorch forward implies).
    Returns (strong [B,T,n_src], weak [B,n_src], logits [B,T,n_src]).

    seg_per_block: how many batch examples are folded into one lane-dense block
    (default: as many as fill up to 512 lanes).  Prefer widening the lane axis
    over growing the grid; only split the batch across grid steps (and thus
    across v7x's two TensorCores) when each block still keeps >=128 lanes."""
    x = jnp.transpose(jnp.squeeze(mixture_w, 1), (0, 2, 1)).astype(jnp.float32)  # [B,C,T]
    bsz, in_chan, t = x.shape

    if seg_per_block is None:
        seg_per_block = min(bsz, max(1, 512 // t))
        while bsz % seg_per_block:
            seg_per_block -= 1
    assert bsz % seg_per_block == 0, "seg_per_block must divide the batch"
    n_seg = seg_per_block
    nb = bsz // n_seg
    st = n_seg * t

    # lane-dense folded layout: [n_blocks, C, n_seg*T]
    x_f = (x.reshape(nb, n_seg, in_chan, t)
             .transpose(0, 2, 1, 3)
             .reshape(nb, in_chan, st))

    # 0/1 segment-indicator matrices for MXU-offloaded per-example sums
    lane = jnp.arange(st)
    seg_ind = (lane[:, None] // t == jnp.arange(n_seg)[None, :]).astype(jnp.float32)  # [st,n_seg]
    seg_ind_t = seg_ind.T                                                              # [n_seg,st]

    # fused (block-diagonal) output + attention head weights, built once outside
    w_head = jnp.concatenate([
        jnp.concatenate([params["w_out"], jnp.zeros_like(params["w_ds"])], axis=1),
        jnp.concatenate([jnp.zeros_like(params["w_out"]), params["w_ds"]], axis=1)],
        axis=0)                                        # [2*N_SRC, 2*BN]
    b_head = jnp.concatenate([params["b_out"], params["b_ds"]], axis=0)

    # pre-cast MXU weight operands once (no per-layer in-kernel weight casts)
    cast = lambda w: w.astype(matmul_dtype)
    param_list = [seg_ind, seg_ind_t,
                  params["g0"], params["be0"], cast(params["wbn"]), params["bbn"],
                  cast(params["w_in"]), params["b_in"], params["a1"],
                  params["g1"], params["be1"],
                  params["w_d"], params["b_d"], params["a2"],
                  params["g2"], params["be2"],
                  cast(params["w_res"]), params["b_res"],
                  params["a_out"], cast(w_head), b_head]

    def const_spec(p):
        nd = p.ndim
        return pl.BlockSpec(tuple(p.shape), lambda b, _nd=nd: (0,) * _nd)

    in_specs = ([pl.BlockSpec((1, in_chan, st), lambda b: (b, 0, 0))] +
                [const_spec(p) for p in param_list])
    out_specs = (
        pl.BlockSpec((1, N_SRC, st), lambda b: (b, 0, 0)),
        pl.BlockSpec((1, N_SRC, n_seg), lambda b: (b, 0, 0)),
    )
    out_shape = (
        jax.ShapeDtypeStruct((nb, N_SRC, st), jnp.float32),
        jax.ShapeDtypeStruct((nb, N_SRC, n_seg), jnp.float32),
    )

    logits_f, weak_f = pl.pallas_call(
        make_tcn_kernel(n_seg, t, matmul_dtype),
        out_shape=out_shape,
        grid_spec=pltpu.PrefetchScalarGridSpec(
            num_scalar_prefetch=0,
            grid=(nb,),
            in_specs=in_specs,
            out_specs=out_specs,
        ),
        compiler_params=pltpu.CompilerParams(
            dimension_semantics=("parallel",)),
    )(x_f, *param_list)

    # unfold: [nb, n_src, n_seg*T] -> [B, T, n_src]
    logits = (logits_f.reshape(nb, N_SRC, n_seg, t)
                      .transpose(0, 2, 3, 1)
                      .reshape(bsz, t, N_SRC))
    strong = jax.nn.sigmoid(logits)                 # recomputed outside the kernel
    weak = weak_f.transpose(0, 2, 1).reshape(bsz, N_SRC)
    return strong, weak, logits


# ---------------------- pure-JAX reference (for self-check) ------------------
def _glob_ln_ref(v, gamma, beta):
    mean = jnp.mean(v)
    var = jnp.mean((v - mean) ** 2)
    return gamma * ((v - mean) / jnp.sqrt(var + EPS)) + beta


def _shift_fwd_exact(v, d):
    if d == 0:
        return v
    c, tt = v.shape
    return jnp.concatenate([jnp.zeros((c, d), v.dtype), v[:, : tt - d]], axis=1)


def _shift_bwd_exact(v, d):
    if d == 0:
        return v
    c, tt = v.shape
    return jnp.concatenate([v[:, d:], jnp.zeros((c, d), v.dtype)], axis=1)


def ref_forward(mixture_w, p):
    x = jnp.transpose(jnp.squeeze(mixture_w, 1), (0, 2, 1)).astype(jnp.float32)

    def one(xe):
        y = _glob_ln_ref(xe, p["g0"], p["be0"])
        out = p["wbn"] @ y + p["bbn"]
        for l in range(N_LAYERS):
            d = 2 ** (l % N_BLOCKS)
            h = p["w_in"][l] @ out + p["b_in"][l]
            h = _prelu(h, p["a1"][l])
            h = _glob_ln_ref(h, p["g1"][l], p["be1"][l])
            wd = p["w_d"][l]
            h = (wd[:, 0:1] * _shift_fwd_exact(h, d)
                 + wd[:, 1:2] * h
                 + wd[:, 2:3] * _shift_bwd_exact(h, d)
                 + p["b_d"][l])
            h = _prelu(h, p["a2"][l])
            h = _glob_ln_ref(h, p["g2"][l], p["be2"][l])
            out = out + p["w_res"][l] @ h + p["b_res"][l]
        ho = _prelu(out, p["a_out"])
        strong_pre = p["w_out"] @ ho + p["b_out"]
        strong_sig = jax.nn.sigmoid(strong_pre)
        sof = jax.nn.softmax(p["w_ds"] @ out + p["b_ds"], axis=0)
        sof = jnp.clip(sof, 1e-7, 1.0)
        weak = jnp.sum(strong_sig * sof, axis=1) / jnp.sum(sof, axis=1)
        return strong_sig, weak, strong_pre

    s, w, lg = jax.vmap(one)(x)
    return jnp.transpose(s, (0, 2, 1)), w, jnp.transpose(lg, (0, 2, 1))


# --------------------------- deterministic params ----------------------------
def init_params(key):
    ks = jax.random.split(key, 16)

    def nrm(k, shape, scale=0.1):
        return (scale * jax.random.normal(k, shape)).astype(jnp.float32)

    return dict(
        g0=1.0 + nrm(ks[12], (IN_CHAN, 1)),
        be0=nrm(ks[13], (IN_CHAN, 1)),
        wbn=nrm(ks[0], (BN_CHAN, IN_CHAN)),
        bbn=nrm(ks[1], (BN_CHAN, 1)),
        w_in=nrm(ks[2], (N_LAYERS, HID_CHAN, BN_CHAN)),
        b_in=nrm(ks[3], (N_LAYERS, HID_CHAN, 1)),
        a1=jnp.full((N_LAYERS, 1, 1), 0.25, jnp.float32),
        g1=1.0 + nrm(ks[14], (N_LAYERS, HID_CHAN, 1)),
        be1=nrm(ks[15], (N_LAYERS, HID_CHAN, 1)),
        w_d=nrm(ks[4], (N_LAYERS, HID_CHAN, KSIZE)),
        b_d=nrm(ks[5], (N_LAYERS, HID_CHAN, 1)),
        a2=jnp.full((N_LAYERS, 1, 1), 0.25, jnp.float32),
        g2=jnp.ones((N_LAYERS, HID_CHAN, 1), jnp.float32),
        be2=jnp.zeros((N_LAYERS, HID_CHAN, 1), jnp.float32),
        w_res=nrm(ks[6], (N_LAYERS, BN_CHAN, HID_CHAN)),
        b_res=nrm(ks[7], (N_LAYERS, BN_CHAN, 1)),
        a_out=jnp.full((1, 1), 0.25, jnp.float32),
        w_out=nrm(ks[8], (N_SRC, BN_CHAN)),
        b_out=nrm(ks[9], (N_SRC, 1)),
        w_ds=nrm(ks[10], (N_SRC, BN_CHAN)),
        b_ds=nrm(ks[11], (N_SRC, 1)),
    )


if __name__ == "__main__":
    key = jax.random.PRNGKey(0)
    pkey, xkey = jax.random.split(key)
    params = init_params(pkey)
    # input implied by the PyTorch forward: [batch, 1, n_frames, in_chan]
    mixture_w = jax.random.normal(xkey, (B, 1, T, IN_CHAN), jnp.float32)

    strong_r, weak_r, logits_r = ref_forward(mixture_w, params)

    # (matmul dtype, seg_per_block, abs tolerance):
    #  * f32 configs verify algorithmic parity with the reference and cover both
    #    the n_seg>1 (MXU-pooled stats) and n_seg==1 code paths.  seg=1 here is
    #    correctness coverage only, NOT a perf recommendation on any chip.
    #  * bf16 + lane-dense folding (defaults) is the recommended perf config;
    #    its tolerance absorbs bf16 MXU rounding through the 6-layer stack.
    configs = [
        (jnp.float32, None, 2e-2),
        (jnp.float32, 1, 2e-2),
        (jnp.bfloat16, None, 1.5e-1),
    ]
    for mdt, seg, tol in configs:
        strong, weak, logits = tcn_forward(mixture_w, params,
                                           seg_per_block=seg, matmul_dtype=mdt)
        jax.block_until_ready((strong, weak, logits))
        assert strong.shape == (B, T, N_SRC)
        assert logits.shape == (B, T, N_SRC)
        assert weak.shape == (B, N_SRC)
        for got, want in ((strong, strong_r), (weak, weak_r), (logits, logits_r)):
            err = float(jnp.max(jnp.abs(got - want)))
            assert err < tol, f"kernel/reference mismatch (dtype={mdt}, seg={seg}): {err}"

    print("KERNEL_OK")
</pallas_src>

<mosaic_0001>
module attributes {stable_mosaic.version = 11 : i64} {
  func.func @kernel(%arg0: i32, %arg1: memref<1x16x128xf32, #tpu.memory_space<vmem>>, %arg2: memref<128x2xf32, #tpu.memory_space<vmem>>, %arg3: memref<2x128xf32, #tpu.memory_space<vmem>>, %arg4: memref<16x1xf32, #tpu.memory_space<vmem>>, %arg5: memref<16x1xf32, #tpu.memory_space<vmem>>, %arg6: memref<32x16xf32, #tpu.memory_space<vmem>>, %arg7: memref<32x1xf32, #tpu.memory_space<vmem>>, %arg8: memref<6x64x32xf32, #tpu.memory_space<vmem>>, %arg9: memref<6x64x1xf32, #tpu.memory_space<vmem>>, %arg10: memref<6x1x1xf32, #tpu.memory_space<vmem>>, %arg11: memref<6x64x1xf32, #tpu.memory_space<vmem>>, %arg12: memref<6x64x1xf32, #tpu.memory_space<vmem>>, %arg13: memref<6x64x3xf32, #tpu.memory_space<vmem>>, %arg14: memref<6x64x1xf32, #tpu.memory_space<vmem>>, %arg15: memref<6x1x1xf32, #tpu.memory_space<vmem>>, %arg16: memref<6x64x1xf32, #tpu.memory_space<vmem>>, %arg17: memref<6x64x1xf32, #tpu.memory_space<vmem>>, %arg18: memref<6x32x64xf32, #tpu.memory_space<vmem>>, %arg19: memref<6x32x1xf32, #tpu.memory_space<vmem>>, %arg20: memref<1x1xf32, #tpu.memory_space<vmem>>, %arg21: memref<4x64xf32, #tpu.memory_space<vmem>>, %arg22: memref<4x1xf32, #tpu.memory_space<vmem>>, %arg23: memref<1x2x128xf32, #tpu.memory_space<vmem>>, %arg24: memref<1x2x2xf32, #tpu.memory_space<vmem>>) attributes {dimension_semantics = [#tpu.dimension_semantics<parallel>], iteration_bounds = array<i64: 1>, scalar_prefetch = 0 : i64, scratch_operands = 0 : i64, tpu.core_type = #tpu.core_type<tc>, window_params = [{transform_indices = @transform_0, window_bounds = array<i64: 1, 16, 128>}, {pipeline_mode = #tpu.pipeline_mode<synchronous>, transform_indices = @transform_1, window_bounds = array<i64: 128, 2>}, {pipeline_mode = #tpu.pipeline_mode<synchronous>, transform_indices = @transform_2, window_bounds = array<i64: 2, 128>}, {pipeline_mode = #tpu.pipeline_mode<synchronous>, transform_indices = @transform_3, window_bounds = array<i64: 16, 1>}, {pipeline_mode = #tpu.pipeline_mode<synchronous>, transform_indices = @transform_4, window_bounds = array<i64: 16, 1>}, {pipeline_mode = #tpu.pipeline_mode<synchronous>, transform_indices = @transform_5, window_bounds = array<i64: 32, 16>}, {pipeline_mode = #tpu.pipeline_mode<synchronous>, transform_indices = @transform_6, window_bounds = array<i64: 32, 1>}, {pipeline_mode = #tpu.pipeline_mode<synchronous>, transform_indices = @transform_7, window_bounds = array<i64: 6, 64, 32>}, {pipeline_mode = #tpu.pipeline_mode<synchronous>, transform_indices = @transform_8, window_bounds = array<i64: 6, 64, 1>}, {pipeline_mode = #tpu.pipeline_mode<synchronous>, transform_indices = @transform_9, window_bounds = array<i64: 6, 1, 1>}, {pipeline_mode = #tpu.pipeline_mode<synchronous>, transform_indices = @transform_10, window_bounds = array<i64: 6, 64, 1>}, {pipeline_mode = #tpu.pipeline_mode<synchronous>, transform_indices = @transform_11, window_bounds = array<i64: 6, 64, 1>}, {pipeline_mode = #tpu.pipeline_mode<synchronous>, transform_indices = @transform_12, window_bounds = array<i64: 6, 64, 3>}, {pipeline_mode = #tpu.pipeline_mode<synchronous>, transform_indices = @transform_13, window_bounds = array<i64: 6, 64, 1>}, {pipeline_mode = #tpu.pipeline_mode<synchronous>, transform_indices = @transform_14, window_bounds = array<i64: 6, 1, 1>}, {pipeline_mode = #tpu.pipeline_mode<synchronous>, transform_indices = @transform_15, window_bounds = array<i64: 6, 64, 1>}, {pipeline_mode = #tpu.pipeline_mode<synchronous>, transform_indices = @transform_16, window_bounds = array<i64: 6, 64, 1>}, {pipeline_mode = #tpu.pipeline_mode<synchronous>, transform_indices = @transform_17, window_bounds = array<i64: 6, 32, 64>}, {pipeline_mode = #tpu.pipeline_mode<synchronous>, transform_indices = @transform_18, window_bounds = array<i64: 6, 32, 1>}, {pipeline_mode = #tpu.pipeline_mode<synchronous>, transform_indices = @transform_19, window_bounds = array<i64: 1, 1>}, {pipeline_mode = #tpu.pipeline_mode<synchronous>, transform_indices = @transform_20, window_bounds = array<i64: 4, 64>}, {pipeline_mode = #tpu.pipeline_mode<synchronous>, transform_indices = @transform_21, window_bounds = array<i64: 4, 1>}, {transform_indices = @transform_22, window_bounds = array<i64: 1, 2, 128>}, {transform_indices = @transform_23, window_bounds = array<i64: 1, 2, 2>}]} {
    %c0 = arith.constant 0 : index
    %c0_0 = arith.constant 0 : index
    %c0_1 = arith.constant 0 : index
    %0 = vector.load %arg1[%c0, %c0_0, %c0_1] : memref<1x16x128xf32, #tpu.memory_space<vmem>>, vector<1x16x128xf32>
    %1 = vector.shape_cast %0 : vector<1x16x128xf32> to vector<16x128xf32>
    %c0_2 = arith.constant 0 : index
    %c0_3 = arith.constant 0 : index
    %2 = vector.load %arg2[%c0_2, %c0_3] : memref<128x2xf32, #tpu.memory_space<vmem>>, vector<128x2xf32>
    %c0_4 = arith.constant 0 : index
    %c0_5 = arith.constant 0 : index
    %3 = vector.load %arg3[%c0_4, %c0_5] : memref<2x128xf32, #tpu.memory_space<vmem>>, vector<2x128xf32>
    %4 = tpu.iota {dimensions = array<i32: 1>} : vector<1x128xi32>
    %c64_i32 = arith.constant 64 : i32
    %5 = vector.broadcast %c64_i32 : i32 to vector<1x128xi32>
    %6 = arith.cmpi sge, %4, %5 : vector<1x128xi32>
    %c64_i32_6 = arith.constant 64 : i32
    %7 = vector.broadcast %c64_i32_6 : i32 to vector<1x128xi32>
    %8 = arith.subi %4, %7 : vector<1x128xi32>
    %9 = arith.select %6, %8, %4 : vector<1x128xi1>, vector<1x128xi32>
    %c1_i32 = arith.constant 1 : i32
    %10 = vector.broadcast %c1_i32 : i32 to vector<1x128xi32>
    %11 = arith.cmpi sge, %9, %10 : vector<1x128xi32>
    %c63_i32 = arith.constant 63 : i32
    %12 = vector.broadcast %c63_i32 : i32 to vector<1x128xi32>
    %13 = arith.cmpi slt, %9, %12 : vector<1x128xi32>
    %c2_i32 = arith.constant 2 : i32
    %14 = vector.broadcast %c2_i32 : i32 to vector<1x128xi32>
    %15 = arith.cmpi sge, %9, %14 : vector<1x128xi32>
    %c62_i32 = arith.constant 62 : i32
    %16 = vector.broadcast %c62_i32 : i32 to vector<1x128xi32>
    %17 = arith.cmpi slt, %9, %16 : vector<1x128xi32>
    %c4_i32 = arith.constant 4 : i32
    %18 = vector.broadcast %c4_i32 : i32 to vector<1x128xi32>
    %19 = arith.cmpi sge, %9, %18 : vector<1x128xi32>
    %c60_i32 = arith.constant 60 : i32
    %20 = vector.broadcast %c60_i32 : i32 to vector<1x128xi32>
    %21 = arith.cmpi slt, %9, %20 : vector<1x128xi32>
    %c0_7 = arith.constant 0 : index
    %c0_8 = arith.constant 0 : index
    %22 = vector.load %arg4[%c0_7, %c0_8] : memref<16x1xf32, #tpu.memory_space<vmem>>, vector<16x1xf32>
    %c0_9 = arith.constant 0 : index
    %c0_10 = arith.constant 0 : index
    %23 = vector.load %arg5[%c0_9, %c0_10] : memref<16x1xf32, #tpu.memory_space<vmem>>, vector<16x1xf32>
    %cst = arith.constant dense<0.000000e+00> : vector<128xf32>
    %24 = vector.multi_reduction <add>, %1, %cst [0] : vector<16x128xf32> to vector<128xf32>
    %25 = vector.shape_cast %24 : vector<128xf32> to vector<1x128xf32>
    %26 = arith.mulf %1, %1 : vector<16x128xf32>
    %cst_11 = arith.constant dense<0.000000e+00> : vector<128xf32>
    %27 = vector.multi_reduction <add>, %26, %cst_11 [0] : vector<16x128xf32> to vector<128xf32>
    %28 = vector.shape_cast %27 : vector<128xf32> to vector<1x128xf32>
    %29 = tpu.concatenate %25, %28 in 0 : vector<1x128xf32>, vector<1x128xf32> -> vector<2x128xf32>
    %cst_12 = arith.constant dense<0.000000e+00> : vector<2x2xf32>
    %30 = tpu.matmul %29, %2, %cst_12 {dimension_numbers = #tpu.dot_dimension_numbers<[1], [0], [0], [1], [0, 0, 1, 1], [], []>} : vector<2x128xf32>, vector<128x2xf32>, vector<2x2xf32> -> vector<2x2xf32>
    %cst_13 = arith.constant 9.765625E-4 : f32
    %31 = vector.broadcast %cst_13 : f32 to vector<2x2xf32>
    %32 = arith.mulf %30, %31 : vector<2x2xf32>
    %cst_14 = arith.constant dense<0.000000e+00> : vector<2x128xf32>
    %33 = tpu.matmul %32, %3, %cst_14 {dimension_numbers = #tpu.dot_dimension_numbers<[1], [0], [0], [1], [0, 0, 1, 1], [], []>} : vector<2x2xf32>, vector<2x128xf32>, vector<2x128xf32> -> vector<2x128xf32>
    %34 = vector.extract_strided_slice %33 {offsets = [0, 0], sizes = [1, 128], strides = [1, 1]} : vector<2x128xf32> to vector<1x128xf32>
    %35 = vector.extract_strided_slice %33 {offsets = [1, 0], sizes = [1, 128], strides = [1, 1]} : vector<2x128xf32> to vector<1x128xf32>
    %36 = arith.mulf %34, %34 : vector<1x128xf32>
    %37 = arith.subf %35, %36 : vector<1x128xf32>
    %cst_15 = arith.constant 0.000000e+00 : f32
    %38 = vector.broadcast %cst_15 : f32 to vector<1x128xf32>
    %39 = arith.maximumf %37, %38 : vector<1x128xf32>
    %cst_16 = arith.constant 9.99999993E-9 : f32
    %40 = vector.broadcast %cst_16 : f32 to vector<1x128xf32>
    %41 = arith.addf %39, %40 : vector<1x128xf32>
    %42 = math.rsqrt %41 : vector<1x128xf32>
    %43 = vector.broadcast %22 : vector<16x1xf32> to vector<16x128xf32>
    %44 = vector.broadcast %42 : vector<1x128xf32> to vector<16x128xf32>
    %45 = arith.mulf %43, %44 : vector<16x128xf32>
    %46 = arith.mulf %1, %45 : vector<16x128xf32>
    %47 = vector.broadcast %34 : vector<1x128xf32> to vector<16x128xf32>
    %48 = arith.mulf %47, %45 : vector<16x128xf32>
    %49 = vector.broadcast %23 : vector<16x1xf32> to vector<16x128xf32>
    %50 = arith.subf %49, %48 : vector<16x128xf32>
    %51 = arith.addf %46, %50 : vector<16x128xf32>
    %c0_17 = arith.constant 0 : index
    %c0_18 = arith.constant 0 : index
    %52 = vector.load %arg6[%c0_17, %c0_18] : memref<32x16xf32, #tpu.memory_space<vmem>>, vector<32x16xf32>
    %cst_19 = arith.constant dense<0.000000e+00> : vector<32x128xf32>
    %53 = tpu.matmul %52, %51, %cst_19 {dimension_numbers = #tpu.dot_dimension_numbers<[1], [0], [0], [1], [0, 0, 1, 1], [], []>} : vector<32x16xf32>, vector<16x128xf32>, vector<32x128xf32> -> vector<32x128xf32>
    %c0_20 = arith.constant 0 : index
    %c0_21 = arith.constant 0 : index
    %54 = vector.load %arg7[%c0_20, %c0_21] : memref<32x1xf32, #tpu.memory_space<vmem>>, vector<32x1xf32>
    %55 = vector.broadcast %54 : vector<32x1xf32> to vector<32x128xf32>
    %56 = arith.addf %53, %55 : vector<32x128xf32>
    %c0_22 = arith.constant 0 : index
    %c0_23 = arith.constant 0 : index
    %c0_24 = arith.constant 0 : index
    %57 = vector.load %arg8[%c0_22, %c0_23, %c0_24] : memref<6x64x32xf32, #tpu.memory_space<vmem>>, vector<1x64x32xf32>
    %58 = vector.shape_cast %57 : vector<1x64x32xf32> to vector<64x32xf32>
    %cst_25 = arith.constant dense<0.000000e+00> : vector<64x128xf32>
    %59 = tpu.matmul %58, %56, %cst_25 {dimension_numbers = #tpu.dot_dimension_numbers<[1], [0], [0], [1], [0, 0, 1, 1], [], []>} : vector<64x32xf32>, vector<32x128xf32>, vector<64x128xf32> -> vector<64x128xf32>
    %c0_26 = arith.constant 0 : index
    %c0_27 = arith.constant 0 : index
    %c0_28 = arith.constant 0 : index
    %60 = vector.load %arg9[%c0_26, %c0_27, %c0_28] : memref<6x64x1xf32, #tpu.memory_space<vmem>>, vector<1x64x1xf32>
    %61 = vector.shape_cast %60 : vector<1x64x1xf32> to vector<64x1xf32>
    %62 = vector.broadcast %61 : vector<64x1xf32> to vector<64x128xf32>
    %63 = arith.addf %59, %62 : vector<64x128xf32>
    %c0_29 = arith.constant 0 : index
    %c0_30 = arith.constant 0 : index
    %c0_31 = arith.constant 0 : index
    %64 = vector.load %arg10[%c0_29, %c0_30, %c0_31] : memref<6x1x1xf32, #tpu.memory_space<vmem>>, vector<1x1x1xf32>
    %65 = vector.shape_cast %64 : vector<1x1x1xf32> to vector<1x1xf32>
    %cst_32 = arith.constant 0.000000e+00 : f32
    %66 = vector.broadcast %cst_32 : f32 to vector<64x128xf32>
    %67 = arith.maximumf %63, %66 : vector<64x128xf32>
    %cst_33 = arith.constant 0.000000e+00 : f32
    %68 = vector.broadcast %cst_33 : f32 to vector<64x128xf32>
    %69 = arith.minimumf %63, %68 : vector<64x128xf32>
    %70 = vector.broadcast %65 : vector<1x1xf32> to vector<64x128xf32>
    %71 = arith.mulf %70, %69 : vector<64x128xf32>
    %72 = arith.addf %67, %71 : vector<64x128xf32>
    %c0_34 = arith.constant 0 : index
    %c0_35 = arith.constant 0 : index
    %c0_36 = arith.constant 0 : index
    %73 = vector.load %arg11[%c0_34, %c0_35, %c0_36] : memref<6x64x1xf32, #tpu.memory_space<vmem>>, vector<1x64x1xf32>
    %74 = vector.shape_cast %73 : vector<1x64x1xf32> to vector<64x1xf32>
    %c0_37 = arith.constant 0 : index
    %c0_38 = arith.constant 0 : index
    %c0_39 = arith.constant 0 : index
    %75 = vector.load %arg12[%c0_37, %c0_38, %c0_39] : memref<6x64x1xf32, #tpu.memory_space<vmem>>, vector<1x64x1xf32>
    %76 = vector.shape_cast %75 : vector<1x64x1xf32> to vector<64x1xf32>
    %cst_40 = arith.constant dense<0.000000e+00> : vector<128xf32>
    %77 = vector.multi_reduction <add>, %72, %cst_40 [0] : vector<64x128xf32> to vector<128xf32>
    %78 = vector.shape_cast %77 : vector<128xf32> to vector<1x128xf32>
    %79 = arith.mulf %72, %72 : vector<64x128xf32>
    %cst_41 = arith.constant dense<0.000000e+00> : vector<128xf32>
    %80 = vector.multi_reduction <add>, %79, %cst_41 [0] : vector<64x128xf32> to vector<128xf32>
    %81 = vector.shape_cast %80 : vector<128xf32> to vector<1x128xf32>
    %82 = tpu.concatenate %78, %81 in 0 : vector<1x128xf32>, vector<1x128xf32> -> vector<2x128xf32>
    %cst_42 = arith.constant dense<0.000000e+00> : vector<2x2xf32>
    %83 = tpu.matmul %82, %2, %cst_42 {dimension_numbers = #tpu.dot_dimension_numbers<[1], [0], [0], [1], [0, 0, 1, 1], [], []>} : vector<2x128xf32>, vector<128x2xf32>, vector<2x2xf32> -> vector<2x2xf32>
    %cst_43 = arith.constant 2.44140625E-4 : f32
    %84 = vector.broadcast %cst_43 : f32 to vector<2x2xf32>
    %85 = arith.mulf %83, %84 : vector<2x2xf32>
    %cst_44 = arith.constant dense<0.000000e+00> : vector<2x128xf32>
    %86 = tpu.matmul %85, %3, %cst_44 {dimension_numbers = #tpu.dot_dimension_numbers<[1], [0], [0], [1], [0, 0, 1, 1], [], []>} : vector<2x2xf32>, vector<2x128xf32>, vector<2x128xf32> -> vector<2x128xf32>
    %87 = vector.extract_strided_slice %86 {offsets = [0, 0], sizes = [1, 128], strides = [1, 1]} : vector<2x128xf32> to vector<1x128xf32>
    %88 = vector.extract_strided_slice %86 {offsets = [1, 0], sizes = [1, 128], strides = [1, 1]} : vector<2x128xf32> to vector<1x128xf32>
    %89 = arith.mulf %87, %87 : vector<1x128xf32>
    %90 = arith.subf %88, %89 : vector<1x128xf32>
    %cst_45 = arith.constant 0.000000e+00 : f32
    %91 = vector.broadcast %cst_45 : f32 to vector<1x128xf32>
    %92 = arith.maximumf %90, %91 : vector<1x128xf32>
    %cst_46 = arith.constant 9.99999993E-9 : f32
    %93 = vector.broadcast %cst_46 : f32 to vector<1x128xf32>
    %94 = arith.addf %92, %93 : vector<1x128xf32>
    %95 = math.rsqrt %94 : vector<1x128xf32>
    %96 = vector.broadcast %74 : vector<64x1xf32> to vector<64x128xf32>
    %97 = vector.broadcast %95 : vector<1x128xf32> to vector<64x128xf32>
    %98 = arith.mulf %96, %97 : vector<64x128xf32>
    %99 = arith.mulf %72, %98 : vector<64x128xf32>
    %100 = vector.broadcast %87 : vector<1x128xf32> to vector<64x128xf32>
    %101 = arith.mulf %100, %98 : vector<64x128xf32>
    %102 = vector.broadcast %76 : vector<64x1xf32> to vector<64x128xf32>
    %103 = arith.subf %102, %101 : vector<64x128xf32>
    %104 = arith.addf %99, %103 : vector<64x128xf32>
    %c0_47 = arith.constant 0 : index
    %c0_48 = arith.constant 0 : index
    %c0_49 = arith.constant 0 : index
    %105 = vector.load %arg13[%c0_47, %c0_48, %c0_49] : memref<6x64x3xf32, #tpu.memory_space<vmem>>, vector<1x64x3xf32>
    %106 = vector.shape_cast %105 : vector<1x64x3xf32> to vector<64x3xf32>
    %107 = vector.extract_strided_slice %106 {offsets = [0, 1], sizes = [64, 1], strides = [1, 1]} : vector<64x3xf32> to vector<64x1xf32>
    %108 = vector.broadcast %107 : vector<64x1xf32> to vector<64x128xf32>
    %109 = arith.mulf %108, %104 : vector<64x128xf32>
    %c0_50 = arith.constant 0 : index
    %c0_51 = arith.constant 0 : index
    %c0_52 = arith.constant 0 : index
    %110 = vector.load %arg14[%c0_50, %c0_51, %c0_52] : memref<6x64x1xf32, #tpu.memory_space<vmem>>, vector<1x64x1xf32>
    %111 = vector.shape_cast %110 : vector<1x64x1xf32> to vector<64x1xf32>
    %112 = vector.broadcast %111 : vector<64x1xf32> to vector<64x128xf32>
    %113 = arith.addf %109, %112 : vector<64x128xf32>
    %114 = vector.extract_strided_slice %106 {offsets = [0, 0], sizes = [64, 1], strides = [1, 1]} : vector<64x3xf32> to vector<64x1xf32>
    %c1_i32_53 = arith.constant 1 : i32
    %115 = tpu.dynamic_rotate %104 by %c1_i32_53 dim 1 : vector<64x128xf32>, i32 -> vector<64x128xf32>
    %cst_54 = arith.constant 0.000000e+00 : f32
    %116 = vector.shape_cast %11 : vector<1x128xi1> to vector<1x128xi1>
    %117 = vector.broadcast %116 : vector<1x128xi1> to vector<64x128xi1>
    %118 = vector.broadcast %cst_54 : f32 to vector<64x128xf32>
    %119 = arith.select %117, %115, %118 : vector<64x128xi1>, vector<64x128xf32>
    %120 = vector.broadcast %114 : vector<64x1xf32> to vector<64x128xf32>
    %121 = arith.mulf %120, %119 : vector<64x128xf32>
    %122 = arith.addf %113, %121 : vector<64x128xf32>
    %123 = vector.extract_strided_slice %106 {offsets = [0, 2], sizes = [64, 1], strides = [1, 1]} : vector<64x3xf32> to vector<64x1xf32>
    %c127_i32 = arith.constant 127 : i32
    %124 = tpu.dynamic_rotate %104 by %c127_i32 dim 1 : vector<64x128xf32>, i32 -> vector<64x128xf32>
    %cst_55 = arith.constant 0.000000e+00 : f32
    %125 = vector.shape_cast %13 : vector<1x128xi1> to vector<1x128xi1>
    %126 = vector.broadcast %125 : vector<1x128xi1> to vector<64x128xi1>
    %127 = vector.broadcast %cst_55 : f32 to vector<64x128xf32>
    %128 = arith.select %126, %124, %127 : vector<64x128xi1>, vector<64x128xf32>
    %129 = vector.broadcast %123 : vector<64x1xf32> to vector<64x128xf32>
    %130 = arith.mulf %129, %128 : vector<64x128xf32>
    %131 = arith.addf %122, %130 : vector<64x128xf32>
    %c0_56 = arith.constant 0 : index
    %c0_57 = arith.constant 0 : index
    %c0_58 = arith.constant 0 : index
    %132 = vector.load %arg15[%c0_56, %c0_57, %c0_58] : memref<6x1x1xf32, #tpu.memory_space<vmem>>, vector<1x1x1xf32>
    %133 = vector.shape_cast %132 : vector<1x1x1xf32> to vector<1x1xf32>
    %cst_59 = arith.constant 0.000000e+00 : f32
    %134 = vector.broadcast %cst_59 : f32 to vector<64x128xf32>
    %135 = arith.maximumf %131, %134 : vector<64x128xf32>
    %cst_60 = arith.constant 0.000000e+00 : f32
    %136 = vector.broadcast %cst_60 : f32 to vector<64x128xf32>
    %137 = arith.minimumf %131, %136 : vector<64x128xf32>
    %138 = vector.broadcast %133 : vector<1x1xf32> to vector<64x128xf32>
    %139 = arith.mulf %138, %137 : vector<64x128xf32>
    %140 = arith.addf %135, %139 : vector<64x128xf32>
    %c0_61 = arith.constant 0 : index
    %c0_62 = arith.constant 0 : index
    %c0_63 = arith.constant 0 : index
    %141 = vector.load %arg16[%c0_61, %c0_62, %c0_63] : memref<6x64x1xf32, #tpu.memory_space<vmem>>, vector<1x64x1xf32>
    %142 = vector.shape_cast %141 : vector<1x64x1xf32> to vector<64x1xf32>
    %c0_64 = arith.constant 0 : index
    %c0_65 = arith.constant 0 : index
    %c0_66 = arith.constant 0 : index
    %143 = vector.load %arg17[%c0_64, %c0_65, %c0_66] : memref<6x64x1xf32, #tpu.memory_space<vmem>>, vector<1x64x1xf32>
    %144 = vector.shape_cast %143 : vector<1x64x1xf32> to vector<64x1xf32>
    %cst_67 = arith.constant dense<0.000000e+00> : vector<128xf32>
    %145 = vector.multi_reduction <add>, %140, %cst_67 [0] : vector<64x128xf32> to vector<128xf32>
    %146 = vector.shape_cast %145 : vector<128xf32> to vector<1x128xf32>
    %147 = arith.mulf %140, %140 : vector<64x128xf32>
    %cst_68 = arith.constant dense<0.000000e+00> : vector<128xf32>
    %148 = vector.multi_reduction <add>, %147, %cst_68 [0] : vector<64x128xf32> to vector<128xf32>
    %149 = vector.shape_cast %148 : vector<128xf32> to vector<1x128xf32>
    %150 = tpu.concatenate %146, %149 in 0 : vector<1x128xf32>, vector<1x128xf32> -> vector<2x128xf32>
    %cst_69 = arith.constant dense<0.000000e+00> : vector<2x2xf32>
    %151 = tpu.matmul %150, %2, %cst_69 {dimension_numbers = #tpu.dot_dimension_numbers<[1], [0], [0], [1], [0, 0, 1, 1], [], []>} : vector<2x128xf32>, vector<128x2xf32>, vector<2x2xf32> -> vector<2x2xf32>
    %cst_70 = arith.constant 2.44140625E-4 : f32
    %152 = vector.broadcast %cst_70 : f32 to vector<2x2xf32>
    %153 = arith.mulf %151, %152 : vector<2x2xf32>
    %cst_71 = arith.constant dense<0.000000e+00> : vector<2x128xf32>
    %154 = tpu.matmul %153, %3, %cst_71 {dimension_numbers = #tpu.dot_dimension_numbers<[1], [0], [0], [1], [0, 0, 1, 1], [], []>} : vector<2x2xf32>, vector<2x128xf32>, vector<2x128xf32> -> vector<2x128xf32>
    %155 = vector.extract_strided_slice %154 {offsets = [0, 0], sizes = [1, 128], strides = [1, 1]} : vector<2x128xf32> to vector<1x128xf32>
    %156 = vector.extract_strided_slice %154 {offsets = [1, 0], sizes = [1, 128], strides = [1, 1]} : vector<2x128xf32> to vector<1x128xf32>
    %157 = arith.mulf %155, %155 : vector<1x128xf32>
    %158 = arith.subf %156, %157 : vector<1x128xf32>
    %cst_72 = arith.constant 0.000000e+00 : f32
    %159 = vector.broadcast %cst_72 : f32 to vector<1x128xf32>
    %160 = arith.maximumf %158, %159 : vector<1x128xf32>
    %cst_73 = arith.constant 9.99999993E-9 : f32
    %161 = vector.broadcast %cst_73 : f32 to vector<1x128xf32>
    %162 = arith.addf %160, %161 : vector<1x128xf32>
    %163 = math.rsqrt %162 : vector<1x128xf32>
    %164 = vector.broadcast %142 : vector<64x1xf32> to vector<64x128xf32>
    %165 = vector.broadcast %163 : vector<1x128xf32> to vector<64x128xf32>
    %166 = arith.mulf %164, %165 : vector<64x128xf32>
    %167 = arith.mulf %140, %166 : vector<64x128xf32>
    %168 = vector.broadcast %155 : vector<1x128xf32> to vector<64x128xf32>
    %169 = arith.mulf %168, %166 : vector<64x128xf32>
    %170 = vector.broadcast %144 : vector<64x1xf32> to vector<64x128xf32>
    %171 = arith.subf %170, %169 : vector<64x128xf32>
    %172 = arith.addf %167, %171 : vector<64x128xf32>
    %c0_74 = arith.constant 0 : index
    %c0_75 = arith.constant 0 : index
    %c0_76 = arith.constant 0 : index
    %173 = vector.load %arg18[%c0_74, %c0_75, %c0_76] : memref<6x32x64xf32, #tpu.memory_space<vmem>>, vector<1x32x64xf32>
    %174 = vector.shape_cast %173 : vector<1x32x64xf32> to vector<32x64xf32>
    %cst_77 = arith.constant dense<0.000000e+00> : vector<32x128xf32>
    %175 = tpu.matmul %174, %172, %cst_77 {dimension_numbers = #tpu.dot_dimension_numbers<[1], [0], [0], [1], [0, 0, 1, 1], [], []>} : vector<32x64xf32>, vector<64x128xf32>, vector<32x128xf32> -> vector<32x128xf32>
    %176 = arith.addf %56, %175 : vector<32x128xf32>
    %c0_78 = arith.constant 0 : index
    %c0_79 = arith.constant 0 : index
    %c0_80 = arith.constant 0 : index
    %177 = vector.load %arg19[%c0_78, %c0_79, %c0_80] : memref<6x32x1xf32, #tpu.memory_space<vmem>>, vector<1x32x1xf32>
    %178 = vector.shape_cast %177 : vector<1x32x1xf32> to vector<32x1xf32>
    %179 = vector.broadcast %178 : vector<32x1xf32> to vector<32x128xf32>
    %180 = arith.addf %176, %179 : vector<32x128xf32>
    %c1 = arith.constant 1 : index
    %c0_81 = arith.constant 0 : index
    %c0_82 = arith.constant 0 : index
    %181 = vector.load %arg8[%c1, %c0_81, %c0_82] : memref<6x64x32xf32, #tpu.memory_space<vmem>>, vector<1x64x32xf32>
    %182 = vector.shape_cast %181 : vector<1x64x32xf32> to vector<64x32xf32>
    %cst_83 = arith.constant dense<0.000000e+00> : vector<64x128xf32>
    %183 = tpu.matmul %182, %180, %cst_83 {dimension_numbers = #tpu.dot_dimension_numbers<[1], [0], [0], [1], [0, 0, 1, 1], [], []>} : vector<64x32xf32>, vector<32x128xf32>, vector<64x128xf32> -> vector<64x128xf32>
    %c1_84 = arith.constant 1 : index
    %c0_85 = arith.constant 0 : index
    %c0_86 = arith.constant 0 : index
    %184 = vector.load %arg9[%c1_84, %c0_85, %c0_86] : memref<6x64x1xf32, #tpu.memory_space<vmem>>, vector<1x64x1xf32>
    %185 = vector.shape_cast %184 : vector<1x64x1xf32> to vector<64x1xf32>
    %186 = vector.broadcast %185 : vector<64x1xf32> to vector<64x128xf32>
    %187 = arith.addf %183, %186 : vector<64x128xf32>
    %c1_87 = arith.constant 1 : index
    %c0_88 = arith.constant 0 : index
    %c0_89 = arith.constant 0 : index
    %188 = vector.load %arg10[%c1_87, %c0_88, %c0_89] : memref<6x1x1xf32, #tpu.memory_space<vmem>>, vector<1x1x1xf32>
    %189 = vector.shape_cast %188 : vector<1x1x1xf32> to vector<1x1xf32>
    %cst_90 = arith.constant 0.000000e+00 : f32
    %190 = vector.broadcast %cst_90 : f32 to vector<64x128xf32>
    %191 = arith.maximumf %187, %190 : vector<64x128xf32>
    %cst_91 = arith.constant 0.000000e+00 : f32
    %192 = vector.broadcast %cst_91 : f32 to vector<64x128xf32>
    %193 = arith.minimumf %187, %192 : vector<64x128xf32>
    %194 = vector.broadcast %189 : vector<1x1xf32> to vector<64x128xf32>
    %195 = arith.mulf %194, %193 : vector<64x128xf32>
    %196 = arith.addf %191, %195 : vector<64x128xf32>
    %c1_92 = arith.constant 1 : index
    %c0_93 = arith.constant 0 : index
    %c0_94 = arith.constant 0 : index
    %197 = vector.load %arg11[%c1_92, %c0_93, %c0_94] : memref<6x64x1xf32, #tpu.memory_space<vmem>>, vector<1x64x1xf32>
    %198 = vector.shape_cast %197 : vector<1x64x1xf32> to vector<64x1xf32>
    %c1_95 = arith.constant 1 : index
    %c0_96 = arith.constant 0 : index
    %c0_97 = arith.constant 0 : index
    %199 = vector.load %arg12[%c1_95, %c0_96, %c0_97] : memref<6x64x1xf32, #tpu.memory_space<vmem>>, vector<1x64x1xf32>
    %200 = vector.shape_cast %199 : vector<1x64x1xf32> to vector<64x1xf32>
    %cst_98 = arith.constant dense<0.000000e+00> : vector<128xf32>
    %201 = vector.multi_reduction <add>, %196, %cst_98 [0] : vector<64x128xf32> to vector<128xf32>
    %202 = vector.shape_cast %201 : vector<128xf32> to vector<1x128xf32>
    %203 = arith.mulf %196, %196 : vector<64x128xf32>
    %cst_99 = arith.constant dense<0.000000e+00> : vector<128xf32>
    %204 = vector.multi_reduction <add>, %203, %cst_99 [0] : vector<64x128xf32> to vector<128xf32>
    %205 = vector.shape_cast %204 : vector<128xf32> to vector<1x128xf32>
    %206 = tpu.concatenate %202, %205 in 0 : vector<1x128xf32>, vector<1x128xf32> -> vector<2x128xf32>
    %cst_100 = arith.constant dense<0.000000e+00> : vector<2x2xf32>
    %207 = tpu.matmul %206, %2, %cst_100 {dimension_numbers = #tpu.dot_dimension_numbers<[1], [0], [0], [1], [0, 0, 1, 1], [], []>} : vector<2x128xf32>, vector<128x2xf32>, vector<2x2xf32> -> vector<2x2xf32>
    %cst_101 = arith.constant 2.44140625E-4 : f32
    %208 = vector.broadcast %cst_101 : f32 to vector<2x2xf32>
    %209 = arith.mulf %207, %208 : vector<2x2xf32>
    %cst_102 = arith.constant dense<0.000000e+00> : vector<2x128xf32>
    %210 = tpu.matmul %209, %3, %cst_102 {dimension_numbers = #tpu.dot_dimension_numbers<[1], [0], [0], [1], [0, 0, 1, 1], [], []>} : vector<2x2xf32>, vector<2x128xf32>, vector<2x128xf32> -> vector<2x128xf32>
    %211 = vector.extract_strided_slice %210 {offsets = [0, 0], sizes = [1, 128], strides = [1, 1]} : vector<2x128xf32> to vector<1x128xf32>
    %212 = vector.extract_strided_slice %210 {offsets = [1, 0], sizes = [1, 128], strides = [1, 1]} : vector<2x128xf32> to vector<1x128xf32>
    %213 = arith.mulf %211, %211 : vector<1x128xf32>
    %214 = arith.subf %212, %213 : vector<1x128xf32>
    %cst_103 = arith.constant 0.000000e+00 : f32
    %215 = vector.broadcast %cst_103 : f32 to vector<1x128xf32>
    %216 = arith.maximumf %214, %215 : vector<1x128xf32>
    %cst_104 = arith.constant 9.99999993E-9 : f32
    %217 = vector.broadcast %cst_104 : f32 to vector<1x128xf32>
    %218 = arith.addf %216, %217 : vector<1x128xf32>
    %219 = math.rsqrt %218 : vector<1x128xf32>
    %220 = vector.broadcast %198 : vector<64x1xf32> to vector<64x128xf32>
    %221 = vector.broadcast %219 : vector<1x128xf32> to vector<64x128xf32>
    %222 = arith.mulf %220, %221 : vector<64x128xf32>
    %223 = arith.mulf %196, %222 : vector<64x128xf32>
    %224 = vector.broadcast %211 : vector<1x128xf32> to vector<64x128xf32>
    %225 = arith.mulf %224, %222 : vector<64x128xf32>
    %226 = vector.broadcast %200 : vector<64x1xf32> to vector<64x128xf32>
    %227 = arith.subf %226, %225 : vector<64x128xf32>
    %228 = arith.addf %223, %227 : vector<64x128xf32>
    %c1_105 = arith.constant 1 : index
    %c0_106 = arith.constant 0 : index
    %c0_107 = arith.constant 0 : index
    %229 = vector.load %arg13[%c1_105, %c0_106, %c0_107] : memref<6x64x3xf32, #tpu.memory_space<vmem>>, vector<1x64x3xf32>
    %230 = vector.shape_cast %229 : vector<1x64x3xf32> to vector<64x3xf32>
    %231 = vector.extract_strided_slice %230 {offsets = [0, 1], sizes = [64, 1], strides = [1, 1]} : vector<64x3xf32> to vector<64x1xf32>
    %232 = vector.broadcast %231 : vector<64x1xf32> to vector<64x128xf32>
    %233 = arith.mulf %232, %228 : vector<64x128xf32>
    %c1_108 = arith.constant 1 : index
    %c0_109 = arith.constant 0 : index
    %c0_110 = arith.constant 0 : index
    %234 = vector.load %arg14[%c1_108, %c0_109, %c0_110] : memref<6x64x1xf32, #tpu.memory_space<vmem>>, vector<1x64x1xf32>
    %235 = vector.shape_cast %234 : vector<1x64x1xf32> to vector<64x1xf32>
    %236 = vector.broadcast %235 : vector<64x1xf32> to vector<64x128xf32>
    %237 = arith.addf %233, %236 : vector<64x128xf32>
    %238 = vector.extract_strided_slice %230 {offsets = [0, 0], sizes = [64, 1], strides = [1, 1]} : vector<64x3xf32> to vector<64x1xf32>
    %c2_i32_111 = arith.constant 2 : i32
    %239 = tpu.dynamic_rotate %228 by %c2_i32_111 dim 1 : vector<64x128xf32>, i32 -> vector<64x128xf32>
    %cst_112 = arith.constant 0.000000e+00 : f32
    %240 = vector.shape_cast %15 : vector<1x128xi1> to vector<1x128xi1>
    %241 = vector.broadcast %240 : vector<1x128xi1> to vector<64x128xi1>
    %242 = vector.broadcast %cst_112 : f32 to vector<64x128xf32>
    %243 = arith.select %241, %239, %242 : vector<64x128xi1>, vector<64x128xf32>
    %244 = vector.broadcast %238 : vector<64x1xf32> to vector<64x128xf32>
    %245 = arith.mulf %244, %243 : vector<64x128xf32>
    %246 = arith.addf %237, %245 : vector<64x128xf32>
    %247 = vector.extract_strided_slice %230 {offsets = [0, 2], sizes = [64, 1], strides = [1, 1]} : vector<64x3xf32> to vector<64x1xf32>
    %c126_i32 = arith.constant 126 : i32
    %248 = tpu.dynamic_rotate %228 by %c126_i32 dim 1 : vector<64x128xf32>, i32 -> vector<64x128xf32>
    %cst_113 = arith.constant 0.000000e+00 : f32
    %249 = vector.shape_cast %17 : vector<1x128xi1> to vector<1x128xi1>
    %250 = vector.broadcast %249 : vector<1x128xi1> to vector<64x128xi1>
    %251 = vector.broadcast %cst_113 : f32 to vector<64x128xf32>
    %252 = arith.select %250, %248, %251 : vector<64x128xi1>, vector<64x128xf32>
    %253 = vector.broadcast %247 : vector<64x1xf32> to vector<64x128xf32>
    %254 = arith.mulf %253, %252 : vector<64x128xf32>
    %255 = arith.addf %246, %254 : vector<64x128xf32>
    %c1_114 = arith.constant 1 : index
    %c0_115 = arith.constant 0 : index
    %c0_116 = arith.constant 0 : index
    %256 = vector.load %arg15[%c1_114, %c0_115, %c0_116] : memref<6x1x1xf32, #tpu.memory_space<vmem>>, vector<1x1x1xf32>
    %257 = vector.shape_cast %256 : vector<1x1x1xf32> to vector<1x1xf32>
    %cst_117 = arith.constant 0.000000e+00 : f32
    %258 = vector.broadcast %cst_117 : f32 to vector<64x128xf32>
    %259 = arith.maximumf %255, %258 : vector<64x128xf32>
    %cst_118 = arith.constant 0.000000e+00 : f32
    %260 = vector.broadcast %cst_118 : f32 to vector<64x128xf32>
    %261 = arith.minimumf %255, %260 : vector<64x128xf32>
    %262 = vector.broadcast %257 : vector<1x1xf32> to vector<64x128xf32>
    %263 = arith.mulf %262, %261 : vector<64x128xf32>
    %264 = arith.addf %259, %263 : vector<64x128xf32>
    %c1_119 = arith.constant 1 : index
    %c0_120 = arith.constant 0 : index
    %c0_121 = arith.constant 0 : index
    %265 = vector.load %arg16[%c1_119, %c0_120, %c0_121] : memref<6x64x1xf32, #tpu.memory_space<vmem>>, vector<1x64x1xf32>
    %266 = vector.shape_cast %265 : vector<1x64x1xf32> to vector<64x1xf32>
    %c1_122 = arith.constant 1 : index
    %c0_123 = arith.constant 0 : index
    %c0_124 = arith.constant 0 : index
    %267 = vector.load %arg17[%c1_122, %c0_123, %c0_124] : memref<6x64x1xf32, #tpu.memory_space<vmem>>, vector<1x64x1xf32>
    %268 = vector.shape_cast %267 : vector<1x64x1xf32> to vector<64x1xf32>
    %cst_125 = arith.constant dense<0.000000e+00> : vector<128xf32>
    %269 = vector.multi_reduction <add>, %264, %cst_125 [0] : vector<64x128xf32> to vector<128xf32>
    %270 = vector.shape_cast %269 : vector<128xf32> to vector<1x128xf32>
    %271 = arith.mulf %264, %264 : vector<64x128xf32>
    %cst_126 = arith.constant dense<0.000000e+00> : vector<128xf32>
    %272 = vector.multi_reduction <add>, %271, %cst_126 [0] : vector<64x128xf32> to vector<128xf32>
    %273 = vector.shape_cast %272 : vector<128xf32> to vector<1x128xf32>
    %274 = tpu.concatenate %270, %273 in 0 : vector<1x128xf32>, vector<1x128xf32> -> vector<2x128xf32>
    %cst_127 = arith.constant dense<0.000000e+00> : vector<2x2xf32>
    %275 = tpu.matmul %274, %2, %cst_127 {dimension_numbers = #tpu.dot_dimension_numbers<[1], [0], [0], [1], [0, 0, 1, 1], [], []>} : vector<2x128xf32>, vector<128x2xf32>, vector<2x2xf32> -> vector<2x2xf32>
    %cst_128 = arith.constant 2.44140625E-4 : f32
    %276 = vector.broadcast %cst_128 : f32 to vector<2x2xf32>
    %277 = arith.mulf %275, %276 : vector<2x2xf32>
    %cst_129 = arith.constant dense<0.000000e+00> : vector<2x128xf32>
    %278 = tpu.matmul %277, %3, %cst_129 {dimension_numbers = #tpu.dot_dimension_numbers<[1], [0], [0], [1], [0, 0, 1, 1], [], []>} : vector<2x2xf32>, vector<2x128xf32>, vector<2x128xf32> -> vector<2x128xf32>
    %279 = vector.extract_strided_slice %278 {offsets = [0, 0], sizes = [1, 128], strides = [1, 1]} : vector<2x128xf32> to vector<1x128xf32>
    %280 = vector.extract_strided_slice %278 {offsets = [1, 0], sizes = [1, 128], strides = [1, 1]} : vector<2x128xf32> to vector<1x128xf32>
    %281 = arith.mulf %279, %279 : vector<1x128xf32>
    %282 = arith.subf %280, %281 : vector<1x128xf32>
    %cst_130 = arith.constant 0.000000e+00 : f32
    %283 = vector.broadcast %cst_130 : f32 to vector<1x128xf32>
    %284 = arith.maximumf %282, %283 : vector<1x128xf32>
    %cst_131 = arith.constant 9.99999993E-9 : f32
    %285 = vector.broadcast %cst_131 : f32 to vector<1x128xf32>
    %286 = arith.addf %284, %285 : vector<1x128xf32>
    %287 = math.rsqrt %286 : vector<1x128xf32>
    %288 = vector.broadcast %266 : vector<64x1xf32> to vector<64x128xf32>
    %289 = vector.broadcast %287 : vector<1x128xf32> to vector<64x128xf32>
    %290 = arith.mulf %288, %289 : vector<64x128xf32>
    %291 = arith.mulf %264, %290 : vector<64x128xf32>
    %292 = vector.broadcast %279 : vector<1x128xf32> to vector<64x128xf32>
    %293 = arith.mulf %292, %290 : vector<64x128xf32>
    %294 = vector.broadcast %268 : vector<64x1xf32> to vector<64x128xf32>
    %295 = arith.subf %294, %293 : vector<64x128xf32>
    %296 = arith.addf %291, %295 : vector<64x128xf32>
    %c1_132 = arith.constant 1 : index
    %c0_133 = arith.constant 0 : index
    %c0_134 = arith.constant 0 : index
    %297 = vector.load %arg18[%c1_132, %c0_133, %c0_134] : memref<6x32x64xf32, #tpu.memory_space<vmem>>, vector<1x32x64xf32>
    %298 = vector.shape_cast %297 : vector<1x32x64xf32> to vector<32x64xf32>
    %cst_135 = arith.constant dense<0.000000e+00> : vector<32x128xf32>
    %299 = tpu.matmul %298, %296, %cst_135 {dimension_numbers = #tpu.dot_dimension_numbers<[1], [0], [0], [1], [0, 0, 1, 1], [], []>} : vector<32x64xf32>, vector<64x128xf32>, vector<32x128xf32> -> vector<32x128xf32>
    %300 = arith.addf %180, %299 : vector<32x128xf32>
    %c1_136 = arith.constant 1 : index
    %c0_137 = arith.constant 0 : index
    %c0_138 = arith.constant 0 : index
    %301 = vector.load %arg19[%c1_136, %c0_137, %c0_138] : memref<6x32x1xf32, #tpu.memory_space<vmem>>, vector<1x32x1xf32>
    %302 = vector.shape_cast %301 : vector<1x32x1xf32> to vector<32x1xf32>
    %303 = vector.broadcast %302 : vector<32x1xf32> to vector<32x128xf32>
    %304 = arith.addf %300, %303 : vector<32x128xf32>
    %c2 = arith.constant 2 : index
    %c0_139 = arith.constant 0 : index
    %c0_140 = arith.constant 0 : index
    %305 = vector.load %arg8[%c2, %c0_139, %c0_140] : memref<6x64x32xf32, #tpu.memory_space<vmem>>, vector<1x64x32xf32>
    %306 = vector.shape_cast %305 : vector<1x64x32xf32> to vector<64x32xf32>
    %cst_141 = arith.constant dense<0.000000e+00> : vector<64x128xf32>
    %307 = tpu.matmul %306, %304, %cst_141 {dimension_numbers = #tpu.dot_dimension_numbers<[1], [0], [0], [1], [0, 0, 1, 1], [], []>} : vector<64x32xf32>, vector<32x128xf32>, vector<64x128xf32> -> vector<64x128xf32>
    %c2_142 = arith.constant 2 : index
    %c0_143 = arith.constant 0 : index
    %c0_144 = arith.constant 0 : index
    %308 = vector.load %arg9[%c2_142, %c0_143, %c0_144] : memref<6x64x1xf32, #tpu.memory_space<vmem>>, vector<1x64x1xf32>
    %309 = vector.shape_cast %308 : vector<1x64x1xf32> to vector<64x1xf32>
    %310 = vector.broadcast %309 : vector<64x1xf32> to vector<64x128xf32>
    %311 = arith.addf %307, %310 : vector<64x128xf32>
    %c2_145 = arith.constant 2 : index
    %c0_146 = arith.constant 0 : index
    %c0_147 = arith.constant 0 : index
    %312 = vector.load %arg10[%c2_145, %c0_146, %c0_147] : memref<6x1x1xf32, #tpu.memory_space<vmem>>, vector<1x1x1xf32>
    %313 = vector.shape_cast %312 : vector<1x1x1xf32> to vector<1x1xf32>
    %cst_148 = arith.constant 0.000000e+00 : f32
    %314 = vector.broadcast %cst_148 : f32 to vector<64x128xf32>
    %315 = arith.maximumf %311, %314 : vector<64x128xf32>
    %cst_149 = arith.constant 0.000000e+00 : f32
    %316 = vector.broadcast %cst_149 : f32 to vector<64x128xf32>
    %317 = arith.minimumf %311, %316 : vector<64x128xf32>
    %318 = vector.broadcast %313 : vector<1x1xf32> to vector<64x128xf32>
    %319 = arith.mulf %318, %317 : vector<64x128xf32>
    %320 = arith.addf %315, %319 : vector<64x128xf32>
    %c2_150 = arith.constant 2 : index
    %c0_151 = arith.constant 0 : index
    %c0_152 = arith.constant 0 : index
    %321 = vector.load %arg11[%c2_150, %c0_151, %c0_152] : memref<6x64x1xf32, #tpu.memory_space<vmem>>, vector<1x64x1xf32>
    %322 = vector.shape_cast %321 : vector<1x64x1xf32> to vector<64x1xf32>
    %c2_153 = arith.constant 2 : index
    %c0_154 = arith.constant 0 : index
    %c0_155 = arith.constant 0 : index
    %323 = vector.load %arg12[%c2_153, %c0_154, %c0_155] : memref<6x64x1xf32, #tpu.memory_space<vmem>>, vector<1x64x1xf32>
    %324 = vector.shape_cast %323 : vector<1x64x1xf32> to vector<64x1xf32>
    %cst_156 = arith.constant dense<0.000000e+00> : vector<128xf32>
    %325 = vector.multi_reduction <add>, %320, %cst_156 [0] : vector<64x128xf32> to vector<128xf32>
    %326 = vector.shape_cast %325 : vector<128xf32> to vector<1x128xf32>
    %327 = arith.mulf %320, %320 : vector<64x128xf32>
    %cst_157 = arith.constant dense<0.000000e+00> : vector<128xf32>
    %328 = vector.multi_reduction <add>, %327, %cst_157 [0] : vector<64x128xf32> to vector<128xf32>
    %329 = vector.shape_cast %328 : vector<128xf32> to vector<1x128xf32>
    %330 = tpu.concatenate %326, %329 in 0 : vector<1x128xf32>, vector<1x128xf32> -> vector<2x128xf32>
    %cst_158 = arith.constant dense<0.000000e+00> : vector<2x2xf32>
    %331 = tpu.matmul %330, %2, %cst_158 {dimension_numbers = #tpu.dot_dimension_numbers<[1], [0], [0], [1], [0, 0, 1, 1], [], []>} : vector<2x128xf32>, vector<128x2xf32>, vector<2x2xf32> -> vector<2x2xf32>
    %cst_159 = arith.constant 2.44140625E-4 : f32
    %332 = vector.broadcast %cst_159 : f32 to vector<2x2xf32>
    %333 = arith.mulf %331, %332 : vector<2x2xf32>
    %cst_160 = arith.constant dense<0.000000e+00> : vector<2x128xf32>
    %334 = tpu.matmul %333, %3, %cst_160 {dimension_numbers = #tpu.dot_dimension_numbers<[1], [0], [0], [1], [0, 0, 1, 1], [], []>} : vector<2x2xf32>, vector<2x128xf32>, vector<2x128xf32> -> vector<2x128xf32>
    %335 = vector.extract_strided_slice %334 {offsets = [0, 0], sizes = [1, 128], strides = [1, 1]} : vector<2x128xf32> to vector<1x128xf32>
    %336 = vector.extract_strided_slice %334 {offsets = [1, 0], sizes = [1, 128], strides = [1, 1]} : vector<2x128xf32> to vector<1x128xf32>
    %337 = arith.mulf %335, %335 : vector<1x128xf32>
    %338 = arith.subf %336, %337 : vector<1x128xf32>
    %cst_161 = arith.constant 0.000000e+00 : f32
    %339 = vector.broadcast %cst_161 : f32 to vector<1x128xf32>
    %340 = arith.maximumf %338, %339 : vector<1x128xf32>
    %cst_162 = arith.constant 9.99999993E-9 : f32
    %341 = vector.broadcast %cst_162 : f32 to vector<1x128xf32>
    %342 = arith.addf %340, %341 : vector<1x128xf32>
    %343 = math.rsqrt %342 : vector<1x128xf32>
    %344 = vector.broadcast %322 : vector<64x1xf32> to vector<64x128xf32>
    %345 = vector.broadcast %343 : vector<1x128xf32> to vector<64x128xf32>
    %346 = arith.mulf %344, %345 : vector<64x128xf32>
    %347 = arith.mulf %320, %346 : vector<64x128xf32>
    %348 = vector.broadcast %335 : vector<1x128xf32> to vector<64x128xf32>
    %349 = arith.mulf %348, %346 : vector<64x128xf32>
    %350 = vector.broadcast %324 : vector<64x1xf32> to vector<64x128xf32>
    %351 = arith.subf %350, %349 : vector<64x128xf32>
    %352 = arith.addf %347, %351 : vector<64x128xf32>
    %c2_163 = arith.constant 2 : index
    %c0_164 = arith.constant 0 : index
    %c0_165 = arith.constant 0 : index
    %353 = vector.load %arg13[%c2_163, %c0_164, %c0_165] : memref<6x64x3xf32, #tpu.memory_space<vmem>>, vector<1x64x3xf32>
    %354 = vector.shape_cast %353 : vector<1x64x3xf32> to vector<64x3xf32>
    %355 = vector.extract_strided_slice %354 {offsets = [0, 1], sizes = [64, 1], strides = [1, 1]} : vector<64x3xf32> to vector<64x1xf32>
    %356 = vector.broadcast %355 : vector<64x1xf32> to vector<64x128xf32>
    %357 = arith.mulf %356, %352 : vector<64x128xf32>
    %c2_166 = arith.constant 2 : index
    %c0_167 = arith.constant 0 : index
    %c0_168 = arith.constant 0 : index
    %358 = vector.load %arg14[%c2_166, %c0_167, %c0_168] : memref<6x64x1xf32, #tpu.memory_space<vmem>>, vector<1x64x1xf32>
    %359 = vector.shape_cast %358 : vector<1x64x1xf32> to vector<64x1xf32>
    %360 = vector.broadcast %359 : vector<64x1xf32> to vector<64x128xf32>
    %361 = arith.addf %357, %360 : vector<64x128xf32>
    %362 = vector.extract_strided_slice %354 {offsets = [0, 0], sizes = [64, 1], strides = [1, 1]} : vector<64x3xf32> to vector<64x1xf32>
    %c4_i32_169 = arith.constant 4 : i32
    %363 = tpu.dynamic_rotate %352 by %c4_i32_169 dim 1 : vector<64x128xf32>, i32 -> vector<64x128xf32>
    %cst_170 = arith.constant 0.000000e+00 : f32
    %364 = vector.shape_cast %19 : vector<1x128xi1> to vector<1x128xi1>
    %365 = vector.broadcast %364 : vector<1x128xi1> to vector<64x128xi1>
    %366 = vector.broadcast %cst_170 : f32 to vector<64x128xf32>
    %367 = arith.select %365, %363, %366 : vector<64x128xi1>, vector<64x128xf32>
    %368 = vector.broadcast %362 : vector<64x1xf32> to vector<64x128xf32>
    %369 = arith.mulf %368, %367 : vector<64x128xf32>
    %370 = arith.addf %361, %369 : vector<64x128xf32>
    %371 = vector.extract_strided_slice %354 {offsets = [0, 2], sizes = [64, 1], strides = [1, 1]} : vector<64x3xf32> to vector<64x1xf32>
    %c124_i32 = arith.constant 124 : i32
    %372 = tpu.dynamic_rotate %352 by %c124_i32 dim 1 : vector<64x128xf32>, i32 -> vector<64x128xf32>
    %cst_171 = arith.constant 0.000000e+00 : f32
    %373 = vector.shape_cast %21 : vector<1x128xi1> to vector<1x128xi1>
    %374 = vector.broadcast %373 : vector<1x128xi1> to vector<64x128xi1>
    %375 = vector.broadcast %cst_171 : f32 to vector<64x128xf32>
    %376 = arith.select %374, %372, %375 : vector<64x128xi1>, vector<64x128xf32>
    %377 = vector.broadcast %371 : vector<64x1xf32> to vector<64x128xf32>
    %378 = arith.mulf %377, %376 : vector<64x128xf32>
    %379 = arith.addf %370, %378 : vector<64x128xf32>
    %c2_172 = arith.constant 2 : index
    %c0_173 = arith.constant 0 : index
    %c0_174 = arith.constant 0 : index
    %380 = vector.load %arg15[%c2_172, %c0_173, %c0_174] : memref<6x1x1xf32, #tpu.memory_space<vmem>>, vector<1x1x1xf32>
    %381 = vector.shape_cast %380 : vector<1x1x1xf32> to vector<1x1xf32>
    %cst_175 = arith.constant 0.000000e+00 : f32
    %382 = vector.broadcast %cst_175 : f32 to vector<64x128xf32>
    %383 = arith.maximumf %379, %382 : vector<64x128xf32>
    %cst_176 = arith.constant 0.000000e+00 : f32
    %384 = vector.broadcast %cst_176 : f32 to vector<64x128xf32>
    %385 = arith.minimumf %379, %384 : vector<64x128xf32>
    %386 = vector.broadcast %381 : vector<1x1xf32> to vector<64x128xf32>
    %387 = arith.mulf %386, %385 : vector<64x128xf32>
    %388 = arith.addf %383, %387 : vector<64x128xf32>
    %c2_177 = arith.constant 2 : index
    %c0_178 = arith.constant 0 : index
    %c0_179 = arith.constant 0 : index
    %389 = vector.load %arg16[%c2_177, %c0_178, %c0_179] : memref<6x64x1xf32, #tpu.memory_space<vmem>>, vector<1x64x1xf32>
    %390 = vector.shape_cast %389 : vector<1x64x1xf32> to vector<64x1xf32>
    %c2_180 = arith.constant 2 : index
    %c0_181 = arith.constant 0 : index
    %c0_182 = arith.constant 0 : index
    %391 = vector.load %arg17[%c2_180, %c0_181, %c0_182] : memref<6x64x1xf32, #tpu.memory_space<vmem>>, vector<1x64x1xf32>
    %392 = vector.shape_cast %391 : vector<1x64x1xf32> to vector<64x1xf32>
    %cst_183 = arith.constant dense<0.000000e+00> : vector<128xf32>
    %393 = vector.multi_reduction <add>, %388, %cst_183 [0] : vector<64x128xf32> to vector<128xf32>
    %394 = vector.shape_cast %393 : vector<128xf32> to vector<1x128xf32>
    %395 = arith.mulf %388, %388 : vector<64x128xf32>
    %cst_184 = arith.constant dense<0.000000e+00> : vector<128xf32>
    %396 = vector.multi_reduction <add>, %395, %cst_184 [0] : vector<64x128xf32> to vector<128xf32>
    %397 = vector.shape_cast %396 : vector<128xf32> to vector<1x128xf32>
    %398 = tpu.concatenate %394, %397 in 0 : vector<1x128xf32>, vector<1x128xf32> -> vector<2x128xf32>
    %cst_185 = arith.constant dense<0.000000e+00> : vector<2x2xf32>
    %399 = tpu.matmul %398, %2, %cst_185 {dimension_numbers = #tpu.dot_dimension_numbers<[1], [0], [0], [1], [0, 0, 1, 1], [], []>} : vector<2x128xf32>, vector<128x2xf32>, vector<2x2xf32> -> vector<2x2xf32>
    %cst_186 = arith.constant 2.44140625E-4 : f32
    %400 = vector.broadcast %cst_186 : f32 to vector<2x2xf32>
    %401 = arith.mulf %399, %400 : vector<2x2xf32>
    %cst_187 = arith.constant dense<0.000000e+00> : vector<2x128xf32>
    %402 = tpu.matmul %401, %3, %cst_187 {dimension_numbers = #tpu.dot_dimension_numbers<[1], [0], [0], [1], [0, 0, 1, 1], [], []>} : vector<2x2xf32>, vector<2x128xf32>, vector<2x128xf32> -> vector<2x128xf32>
    %403 = vector.extract_strided_slice %402 {offsets = [0, 0], sizes = [1, 128], strides = [1, 1]} : vector<2x128xf32> to vector<1x128xf32>
    %404 = vector.extract_strided_slice %402 {offsets = [1, 0], sizes = [1, 128], strides = [1, 1]} : vector<2x128xf32> to vector<1x128xf32>
    %405 = arith.mulf %403, %403 : vector<1x128xf32>
    %406 = arith.subf %404, %405 : vector<1x128xf32>
    %cst_188 = arith.constant 0.000000e+00 : f32
    %407 = vector.broadcast %cst_188 : f32 to vector<1x128xf32>
    %408 = arith.maximumf %406, %407 : vector<1x128xf32>
    %cst_189 = arith.constant 9.99999993E-9 : f32
    %409 = vector.broadcast %cst_189 : f32 to vector<1x128xf32>
    %410 = arith.addf %408, %409 : vector<1x128xf32>
    %411 = math.rsqrt %410 : vector<1x128xf32>
    %412 = vector.broadcast %390 : vector<64x1xf32> to vector<64x128xf32>
    %413 = vector.broadcast %411 : vector<1x128xf32> to vector<64x128xf32>
    %414 = arith.mulf %412, %413 : vector<64x128xf32>
    %415 = arith.mulf %388, %414 : vector<64x128xf32>
    %416 = vector.broadcast %403 : vector<1x128xf32> to vector<64x128xf32>
    %417 = arith.mulf %416, %414 : vector<64x128xf32>
    %418 = vector.broadcast %392 : vector<64x1xf32> to vector<64x128xf32>
    %419 = arith.subf %418, %417 : vector<64x128xf32>
    %420 = arith.addf %415, %419 : vector<64x128xf32>
    %c2_190 = arith.constant 2 : index
    %c0_191 = arith.constant 0 : index
    %c0_192 = arith.constant 0 : index
    %421 = vector.load %arg18[%c2_190, %c0_191, %c0_192] : memref<6x32x64xf32, #tpu.memory_space<vmem>>, vector<1x32x64xf32>
    %422 = vector.shape_cast %421 : vector<1x32x64xf32> to vector<32x64xf32>
    %cst_193 = arith.constant dense<0.000000e+00> : vector<32x128xf32>
    %423 = tpu.matmul %422, %420, %cst_193 {dimension_numbers = #tpu.dot_dimension_numbers<[1], [0], [0], [1], [0, 0, 1, 1], [], []>} : vector<32x64xf32>, vector<64x128xf32>, vector<32x128xf32> -> vector<32x128xf32>
    %424 = arith.addf %304, %423 : vector<32x128xf32>
    %c2_194 = arith.constant 2 : index
    %c0_195 = arith.constant 0 : index
    %c0_196 = arith.constant 0 : index
    %425 = vector.load %arg19[%c2_194, %c0_195, %c0_196] : memref<6x32x1xf32, #tpu.memory_space<vmem>>, vector<1x32x1xf32>
    %426 = vector.shape_cast %425 : vector<1x32x1xf32> to vector<32x1xf32>
    %427 = vector.broadcast %426 : vector<32x1xf32> to vector<32x128xf32>
    %428 = arith.addf %424, %427 : vector<32x128xf32>
    %c3 = arith.constant 3 : index
    %c0_197 = arith.constant 0 : index
    %c0_198 = arith.constant 0 : index
    %429 = vector.load %arg8[%c3, %c0_197, %c0_198] : memref<6x64x32xf32, #tpu.memory_space<vmem>>, vector<1x64x32xf32>
    %430 = vector.shape_cast %429 : vector<1x64x32xf32> to vector<64x32xf32>
    %cst_199 = arith.constant dense<0.000000e+00> : vector<64x128xf32>
    %431 = tpu.matmul %430, %428, %cst_199 {dimension_numbers = #tpu.dot_dimension_numbers<[1], [0], [0], [1], [0, 0, 1, 1], [], []>} : vector<64x32xf32>, vector<32x128xf32>, vector<64x128xf32> -> vector<64x128xf32>
    %c3_200 = arith.constant 3 : index
    %c0_201 = arith.constant 0 : index
    %c0_202 = arith.constant 0 : index
    %432 = vector.load %arg9[%c3_200, %c0_201, %c0_202] : memref<6x64x1xf32, #tpu.memory_space<vmem>>, vector<1x64x1xf32>
    %433 = vector.shape_cast %432 : vector<1x64x1xf32> to vector<64x1xf32>
    %434 = vector.broadcast %433 : vector<64x1xf32> to vector<64x128xf32>
    %435 = arith.addf %431, %434 : vector<64x128xf32>
    %c3_203 = arith.constant 3 : index
    %c0_204 = arith.constant 0 : index
    %c0_205 = arith.constant 0 : index
    %436 = vector.load %arg10[%c3_203, %c0_204, %c0_205] : memref<6x1x1xf32, #tpu.memory_space<vmem>>, vector<1x1x1xf32>
    %437 = vector.shape_cast %436 : vector<1x1x1xf32> to vector<1x1xf32>
    %cst_206 = arith.constant 0.000000e+00 : f32
    %438 = vector.broadcast %cst_206 : f32 to vector<64x128xf32>
    %439 = arith.maximumf %435, %438 : vector<64x128xf32>
    %cst_207 = arith.constant 0.000000e+00 : f32
    %440 = vector.broadcast %cst_207 : f32 to vector<64x128xf32>
    %441 = arith.minimumf %435, %440 : vector<64x128xf32>
    %442 = vector.broadcast %437 : vector<1x1xf32> to vector<64x128xf32>
    %443 = arith.mulf %442, %441 : vector<64x128xf32>
    %444 = arith.addf %439, %443 : vector<64x128xf32>
    %c3_208 = arith.constant 3 : index
    %c0_209 = arith.constant 0 : index
    %c0_210 = arith.constant 0 : index
    %445 = vector.load %arg11[%c3_208, %c0_209, %c0_210] : memref<6x64x1xf32, #tpu.memory_space<vmem>>, vector<1x64x1xf32>
    %446 = vector.shape_cast %445 : vector<1x64x1xf32> to vector<64x1xf32>
    %c3_211 = arith.constant 3 : index
    %c0_212 = arith.constant 0 : index
    %c0_213 = arith.constant 0 : index
    %447 = vector.load %arg12[%c3_211, %c0_212, %c0_213] : memref<6x64x1xf32, #tpu.memory_space<vmem>>, vector<1x64x1xf32>
    %448 = vector.shape_cast %447 : vector<1x64x1xf32> to vector<64x1xf32>
    %cst_214 = arith.constant dense<0.000000e+00> : vector<128xf32>
    %449 = vector.multi_reduction <add>, %444, %cst_214 [0] : vector<64x128xf32> to vector<128xf32>
    %450 = vector.shape_cast %449 : vector<128xf32> to vector<1x128xf32>
    %451 = arith.mulf %444, %444 : vector<64x128xf32>
    %cst_215 = arith.constant dense<0.000000e+00> : vector<128xf32>
    %452 = vector.multi_reduction <add>, %451, %cst_215 [0] : vector<64x128xf32> to vector<128xf32>
    %453 = vector.shape_cast %452 : vector<128xf32> to vector<1x128xf32>
    %454 = tpu.concatenate %450, %453 in 0 : vector<1x128xf32>, vector<1x128xf32> -> vector<2x128xf32>
    %cst_216 = arith.constant dense<0.000000e+00> : vector<2x2xf32>
    %455 = tpu.matmul %454, %2, %cst_216 {dimension_numbers = #tpu.dot_dimension_numbers<[1], [0], [0], [1], [0, 0, 1, 1], [], []>} : vector<2x128xf32>, vector<128x2xf32>, vector<2x2xf32> -> vector<2x2xf32>
    %cst_217 = arith.constant 2.44140625E-4 : f32
    %456 = vector.broadcast %cst_217 : f32 to vector<2x2xf32>
    %457 = arith.mulf %455, %456 : vector<2x2xf32>
    %cst_218 = arith.constant dense<0.000000e+00> : vector<2x128xf32>
    %458 = tpu.matmul %457, %3, %cst_218 {dimension_numbers = #tpu.dot_dimension_numbers<[1], [0], [0], [1], [0, 0, 1, 1], [], []>} : vector<2x2xf32>, vector<2x128xf32>, vector<2x128xf32> -> vector<2x128xf32>
    %459 = vector.extract_strided_slice %458 {offsets = [0, 0], sizes = [1, 128], strides = [1, 1]} : vector<2x128xf32> to vector<1x128xf32>
    %460 = vector.extract_strided_slice %458 {offsets = [1, 0], sizes = [1, 128], strides = [1, 1]} : vector<2x128xf32> to vector<1x128xf32>
    %461 = arith.mulf %459, %459 : vector<1x128xf32>
    %462 = arith.subf %460, %461 : vector<1x128xf32>
    %cst_219 = arith.constant 0.000000e+00 : f32
    %463 = vector.broadcast %cst_219 : f32 to vector<1x128xf32>
    %464 = arith.maximumf %462, %463 : vector<1x128xf32>
    %cst_220 = arith.constant 9.99999993E-9 : f32
    %465 = vector.broadcast %cst_220 : f32 to vector<1x128xf32>
    %466 = arith.addf %464, %465 : vector<1x128xf32>
    %467 = math.rsqrt %466 : vector<1x128xf32>
    %468 = vector.broadcast %446 : vector<64x1xf32> to vector<64x128xf32>
    %469 = vector.broadcast %467 : vector<1x128xf32> to vector<64x128xf32>
    %470 = arith.mulf %468, %469 : vector<64x128xf32>
    %471 = arith.mulf %444, %470 : vector<64x128xf32>
    %472 = vector.broadcast %459 : vector<1x128xf32> to vector<64x128xf32>
    %473 = arith.mulf %472, %470 : vector<64x128xf32>
    %474 = vector.broadcast %448 : vector<64x1xf32> to vector<64x128xf32>
    %475 = arith.subf %474, %473 : vector<64x128xf32>
    %476 = arith.addf %471, %475 : vector<64x128xf32>
    %c3_221 = arith.constant 3 : index
    %c0_222 = arith.constant 0 : index
    %c0_223 = arith.constant 0 : index
    %477 = vector.load %arg13[%c3_221, %c0_222, %c0_223] : memref<6x64x3xf32, #tpu.memory_space<vmem>>, vector<1x64x3xf32>
    %478 = vector.shape_cast %477 : vector<1x64x3xf32> to vector<64x3xf32>
    %479 = vector.extract_strided_slice %478 {offsets = [0, 1], sizes = [64, 1], strides = [1, 1]} : vector<64x3xf32> to vector<64x1xf32>
    %480 = vector.broadcast %479 : vector<64x1xf32> to vector<64x128xf32>
    %481 = arith.mulf %480, %476 : vector<64x128xf32>
    %c3_224 = arith.constant 3 : index
    %c0_225 = arith.constant 0 : index
    %c0_226 = arith.constant 0 : index
    %482 = vector.load %arg14[%c3_224, %c0_225, %c0_226] : memref<6x64x1xf32, #tpu.memory_space<vmem>>, vector<1x64x1xf32>
    %483 = vector.shape_cast %482 : vector<1x64x1xf32> to vector<64x1xf32>
    %484 = vector.broadcast %483 : vector<64x1xf32> to vector<64x128xf32>
    %485 = arith.addf %481, %484 : vector<64x128xf32>
    %486 = vector.extract_strided_slice %478 {offsets = [0, 0], sizes = [64, 1], strides = [1, 1]} : vector<64x3xf32> to vector<64x1xf32>
    %c1_i32_227 = arith.constant 1 : i32
    %487 = tpu.dynamic_rotate %476 by %c1_i32_227 dim 1 : vector<64x128xf32>, i32 -> vector<64x128xf32>
    %cst_228 = arith.constant 0.000000e+00 : f32
    %488 = vector.shape_cast %11 : vector<1x128xi1> to vector<1x128xi1>
    %489 = vector.broadcast %488 : vector<1x128xi1> to vector<64x128xi1>
    %490 = vector.broadcast %cst_228 : f32 to vector<64x128xf32>
    %491 = arith.select %489, %487, %490 : vector<64x128xi1>, vector<64x128xf32>
    %492 = vector.broadcast %486 : vector<64x1xf32> to vector<64x128xf32>
    %493 = arith.mulf %492, %491 : vector<64x128xf32>
    %494 = arith.addf %485, %493 : vector<64x128xf32>
    %495 = vector.extract_strided_slice %478 {offsets = [0, 2], sizes = [64, 1], strides = [1, 1]} : vector<64x3xf32> to vector<64x1xf32>
    %c127_i32_229 = arith.constant 127 : i32
    %496 = tpu.dynamic_rotate %476 by %c127_i32_229 dim 1 : vector<64x128xf32>, i32 -> vector<64x128xf32>
    %cst_230 = arith.constant 0.000000e+00 : f32
    %497 = vector.shape_cast %13 : vector<1x128xi1> to vector<1x128xi1>
    %498 = vector.broadcast %497 : vector<1x128xi1> to vector<64x128xi1>
    %499 = vector.broadcast %cst_230 : f32 to vector<64x128xf32>
    %500 = arith.select %498, %496, %499 : vector<64x128xi1>, vector<64x128xf32>
    %501 = vector.broadcast %495 : vector<64x1xf32> to vector<64x128xf32>
    %502 = arith.mulf %501, %500 : vector<64x128xf32>
    %503 = arith.addf %494, %502 : vector<64x128xf32>
    %c3_231 = arith.constant 3 : index
    %c0_232 = arith.constant 0 : index
    %c0_233 = arith.constant 0 : index
    %504 = vector.load %arg15[%c3_231, %c0_232, %c0_233] : memref<6x1x1xf32, #tpu.memory_space<vmem>>, vector<1x1x1xf32>
    %505 = vector.shape_cast %504 : vector<1x1x1xf32> to vector<1x1xf32>
    %cst_234 = arith.constant 0.000000e+00 : f32
    %506 = vector.broadcast %cst_234 : f32 to vector<64x128xf32>
    %507 = arith.maximumf %503, %506 : vector<64x128xf32>
    %cst_235 = arith.constant 0.000000e+00 : f32
    %508 = vector.broadcast %cst_235 : f32 to vector<64x128xf32>
    %509 = arith.minimumf %503, %508 : vector<64x128xf32>
    %510 = vector.broadcast %505 : vector<1x1xf32> to vector<64x128xf32>
    %511 = arith.mulf %510, %509 : vector<64x128xf32>
    %512 = arith.addf %507, %511 : vector<64x128xf32>
    %c3_236 = arith.constant 3 : index
    %c0_237 = arith.constant 0 : index
    %c0_238 = arith.constant 0 : index
    %513 = vector.load %arg16[%c3_236, %c0_237, %c0_238] : memref<6x64x1xf32, #tpu.memory_space<vmem>>, vector<1x64x1xf32>
    %514 = vector.shape_cast %513 : vector<1x64x1xf32> to vector<64x1xf32>
    %c3_239 = arith.constant 3 : index
    %c0_240 = arith.constant 0 : index
    %c0_241 = arith.constant 0 : index
    %515 = vector.load %arg17[%c3_239, %c0_240, %c0_241] : memref<6x64x1xf32, #tpu.memory_space<vmem>>, vector<1x64x1xf32>
    %516 = vector.shape_cast %515 : vector<1x64x1xf32> to vector<64x1xf32>
    %cst_242 = arith.constant dense<0.000000e+00> : vector<128xf32>
    %517 = vector.multi_reduction <add>, %512, %cst_242 [0] : vector<64x128xf32> to vector<128xf32>
    %518 = vector.shape_cast %517 : vector<128xf32> to vector<1x128xf32>
    %519 = arith.mulf %512, %512 : vector<64x128xf32>
    %cst_243 = arith.constant dense<0.000000e+00> : vector<128xf32>
    %520 = vector.multi_reduction <add>, %519, %cst_243 [0] : vector<64x128xf32> to vector<128xf32>
    %521 = vector.shape_cast %520 : vector<128xf32> to vector<1x128xf32>
    %522 = tpu.concatenate %518, %521 in 0 : vector<1x128xf32>, vector<1x128xf32> -> vector<2x128xf32>
    %cst_244 = arith.constant dense<0.000000e+00> : vector<2x2xf32>
    %523 = tpu.matmul %522, %2, %cst_244 {dimension_numbers = #tpu.dot_dimension_numbers<[1], [0], [0], [1], [0, 0, 1, 1], [], []>} : vector<2x128xf32>, vector<128x2xf32>, vector<2x2xf32> -> vector<2x2xf32>
    %cst_245 = arith.constant 2.44140625E-4 : f32
    %524 = vector.broadcast %cst_245 : f32 to vector<2x2xf32>
    %525 = arith.mulf %523, %524 : vector<2x2xf32>
    %cst_246 = arith.constant dense<0.000000e+00> : vector<2x128xf32>
    %526 = tpu.matmul %525, %3, %cst_246 {dimension_numbers = #tpu.dot_dimension_numbers<[1], [0], [0], [1], [0, 0, 1, 1], [], []>} : vector<2x2xf32>, vector<2x128xf32>, vector<2x128xf32> -> vector<2x128xf32>
    %527 = vector.extract_strided_slice %526 {offsets = [0, 0], sizes = [1, 128], strides = [1, 1]} : vector<2x128xf32> to vector<1x128xf32>
    %528 = vector.extract_strided_slice %526 {offsets = [1, 0], sizes = [1, 128], strides = [1, 1]} : vector<2x128xf32> to vector<1x128xf32>
    %529 = arith.mulf %527, %527 : vector<1x128xf32>
    %530 = arith.subf %528, %529 : vector<1x128xf32>
    %cst_247 = arith.constant 0.000000e+00 : f32
    %531 = vector.broadcast %cst_247 : f32 to vector<1x128xf32>
    %532 = arith.maximumf %530, %531 : vector<1x128xf32>
    %cst_248 = arith.constant 9.99999993E-9 : f32
    %533 = vector.broadcast %cst_248 : f32 to vector<1x128xf32>
    %534 = arith.addf %532, %533 : vector<1x128xf32>
    %535 = math.rsqrt %534 : vector<1x128xf32>
    %536 = vector.broadcast %514 : vector<64x1xf32> to vector<64x128xf32>
    %537 = vector.broadcast %535 : vector<1x128xf32> to vector<64x128xf32>
    %538 = arith.mulf %536, %537 : vector<64x128xf32>
    %539 = arith.mulf %512, %538 : vector<64x128xf32>
    %540 = vector.broadcast %527 : vector<1x128xf32> to vector<64x128xf32>
    %541 = arith.mulf %540, %538 : vector<64x128xf32>
    %542 = vector.broadcast %516 : vector<64x1xf32> to vector<64x128xf32>
    %543 = arith.subf %542, %541 : vector<64x128xf32>
    %544 = arith.addf %539, %543 : vector<64x128xf32>
    %c3_249 = arith.constant 3 : index
    %c0_250 = arith.constant 0 : index
    %c0_251 = arith.constant 0 : index
    %545 = vector.load %arg18[%c3_249, %c0_250, %c0_251] : memref<6x32x64xf32, #tpu.memory_space<vmem>>, vector<1x32x64xf32>
    %546 = vector.shape_cast %545 : vector<1x32x64xf32> to vector<32x64xf32>
    %cst_252 = arith.constant dense<0.000000e+00> : vector<32x128xf32>
    %547 = tpu.matmul %546, %544, %cst_252 {dimension_numbers = #tpu.dot_dimension_numbers<[1], [0], [0], [1], [0, 0, 1, 1], [], []>} : vector<32x64xf32>, vector<64x128xf32>, vector<32x128xf32> -> vector<32x128xf32>
    %548 = arith.addf %428, %547 : vector<32x128xf32>
    %c3_253 = arith.constant 3 : index
    %c0_254 = arith.constant 0 : index
    %c0_255 = arith.constant 0 : index
    %549 = vector.load %arg19[%c3_253, %c0_254, %c0_255] : memref<6x32x1xf32, #tpu.memory_space<vmem>>, vector<1x32x1xf32>
    %550 = vector.shape_cast %549 : vector<1x32x1xf32> to vector<32x1xf32>
    %551 = vector.broadcast %550 : vector<32x1xf32> to vector<32x128xf32>
    %552 = arith.addf %548, %551 : vector<32x128xf32>
    %c4 = arith.constant 4 : index
    %c0_256 = arith.constant 0 : index
    %c0_257 = arith.constant 0 : index
    %553 = vector.load %arg8[%c4, %c0_256, %c0_257] : memref<6x64x32xf32, #tpu.memory_space<vmem>>, vector<1x64x32xf32>
    %554 = vector.shape_cast %553 : vector<1x64x32xf32> to vector<64x32xf32>
    %cst_258 = arith.constant dense<0.000000e+00> : vector<64x128xf32>
    %555 = tpu.matmul %554, %552, %cst_258 {dimension_numbers = #tpu.dot_dimension_numbers<[1], [0], [0], [1], [0, 0, 1, 1], [], []>} : vector<64x32xf32>, vector<32x128xf32>, vector<64x128xf32> -> vector<64x128xf32>
    %c4_259 = arith.constant 4 : index
    %c0_260 = arith.constant 0 : index
    %c0_261 = arith.constant 0 : index
    %556 = vector.load %arg9[%c4_259, %c0_260, %c0_261] : memref<6x64x1xf32, #tpu.memory_space<vmem>>, vector<1x64x1xf32>
    %557 = vector.shape_cast %556 : vector<1x64x1xf32> to vector<64x1xf32>
    %558 = vector.broadcast %557 : vector<64x1xf32> to vector<64x128xf32>
    %559 = arith.addf %555, %558 : vector<64x128xf32>
    %c4_262 = arith.constant 4 : index
    %c0_263 = arith.constant 0 : index
    %c0_264 = arith.constant 0 : index
    %560 = vector.load %arg10[%c4_262, %c0_263, %c0_264] : memref<6x1x1xf32, #tpu.memory_space<vmem>>, vector<1x1x1xf32>
    %561 = vector.shape_cast %560 : vector<1x1x1xf32> to vector<1x1xf32>
    %cst_265 = arith.constant 0.000000e+00 : f32
    %562 = vector.broadcast %cst_265 : f32 to vector<64x128xf32>
    %563 = arith.maximumf %559, %562 : vector<64x128xf32>
    %cst_266 = arith.constant 0.000000e+00 : f32
    %564 = vector.broadcast %cst_266 : f32 to vector<64x128xf32>
    %565 = arith.minimumf %559, %564 : vector<64x128xf32>
    %566 = vector.broadcast %561 : vector<1x1xf32> to vector<64x128xf32>
    %567 = arith.mulf %566, %565 : vector<64x128xf32>
    %568 = arith.addf %563, %567 : vector<64x128xf32>
    %c4_267 = arith.constant 4 : index
    %c0_268 = arith.constant 0 : index
    %c0_269 = arith.constant 0 : index
    %569 = vector.load %arg11[%c4_267, %c0_268, %c0_269] : memref<6x64x1xf32, #tpu.memory_space<vmem>>, vector<1x64x1xf32>
    %570 = vector.shape_cast %569 : vector<1x64x1xf32> to vector<64x1xf32>
    %c4_270 = arith.constant 4 : index
    %c0_271 = arith.constant 0 : index
    %c0_272 = arith.constant 0 : index
    %571 = vector.load %arg12[%c4_270, %c0_271, %c0_272] : memref<6x64x1xf32, #tpu.memory_space<vmem>>, vector<1x64x1xf32>
    %572 = vector.shape_cast %571 : vector<1x64x1xf32> to vector<64x1xf32>
    %cst_273 = arith.constant dense<0.000000e+00> : vector<128xf32>
    %573 = vector.multi_reduction <add>, %568, %cst_273 [0] : vector<64x128xf32> to vector<128xf32>
    %574 = vector.shape_cast %573 : vector<128xf32> to vector<1x128xf32>
    %575 = arith.mulf %568, %568 : vector<64x128xf32>
    %cst_274 = arith.constant dense<0.000000e+00> : vector<128xf32>
    %576 = vector.multi_reduction <add>, %575, %cst_274 [0] : vector<64x128xf32> to vector<128xf32>
    %577 = vector.shape_cast %576 : vector<128xf32> to vector<1x128xf32>
    %578 = tpu.concatenate %574, %577 in 0 : vector<1x128xf32>, vector<1x128xf32> -> vector<2x128xf32>
    %cst_275 = arith.constant dense<0.000000e+00> : vector<2x2xf32>
    %579 = tpu.matmul %578, %2, %cst_275 {dimension_numbers = #tpu.dot_dimension_numbers<[1], [0], [0], [1], [0, 0, 1, 1], [], []>} : vector<2x128xf32>, vector<128x2xf32>, vector<2x2xf32> -> vector<2x2xf32>
    %cst_276 = arith.constant 2.44140625E-4 : f32
    %580 = vector.broadcast %cst_276 : f32 to vector<2x2xf32>
    %581 = arith.mulf %579, %580 : vector<2x2xf32>
    %cst_277 = arith.constant dense<0.000000e+00> : vector<2x128xf32>
    %582 = tpu.matmul %581, %3, %cst_277 {dimension_numbers = #tpu.dot_dimension_numbers<[1], [0], [0], [1], [0, 0, 1, 1], [], []>} : vector<2x2xf32>, vector<2x128xf32>, vector<2x128xf32> -> vector<2x128xf32>
    %583 = vector.extract_strided_slice %582 {offsets = [0, 0], sizes = [1, 128], strides = [1, 1]} : vector<2x128xf32> to vector<1x128xf32>
    %584 = vector.extract_strided_slice %582 {offsets = [1, 0], sizes = [1, 128], strides = [1, 1]} : vector<2x128xf32> to vector<1x128xf32>
    %585 = arith.mulf %583, %583 : vector<1x128xf32>
    %586 = arith.subf %584, %585 : vector<1x128xf32>
    %cst_278 = arith.constant 0.000000e+00 : f32
    %587 = vector.broadcast %cst_278 : f32 to vector<1x128xf32>
    %588 = arith.maximumf %586, %587 : vector<1x128xf32>
    %cst_279 = arith.constant 9.99999993E-9 : f32
    %589 = vector.broadcast %cst_279 : f32 to vector<1x128xf32>
    %590 = arith.addf %588, %589 : vector<1x128xf32>
    %591 = math.rsqrt %590 : vector<1x128xf32>
    %592 = vector.broadcast %570 : vector<64x1xf32> to vector<64x128xf32>
    %593 = vector.broadcast %591 : vector<1x128xf32> to vector<64x128xf32>
    %594 = arith.mulf %592, %593 : vector<64x128xf32>
    %595 = arith.mulf %568, %594 : vector<64x128xf32>
    %596 = vector.broadcast %583 : vector<1x128xf32> to vector<64x128xf32>
    %597 = arith.mulf %596, %594 : vector<64x128xf32>
    %598 = vector.broadcast %572 : vector<64x1xf32> to vector<64x128xf32>
    %599 = arith.subf %598, %597 : vector<64x128xf32>
    %600 = arith.addf %595, %599 : vector<64x128xf32>
    %c4_280 = arith.constant 4 : index
    %c0_281 = arith.constant 0 : index
    %c0_282 = arith.constant 0 : index
    %601 = vector.load %arg13[%c4_280, %c0_281, %c0_282] : memref<6x64x3xf32, #tpu.memory_space<vmem>>, vector<1x64x3xf32>
    %602 = vector.shape_cast %601 : vector<1x64x3xf32> to vector<64x3xf32>
    %603 = vector.extract_strided_slice %602 {offsets = [0, 1], sizes = [64, 1], strides = [1, 1]} : vector<64x3xf32> to vector<64x1xf32>
    %604 = vector.broadcast %603 : vector<64x1xf32> to vector<64x128xf32>
    %605 = arith.mulf %604, %600 : vector<64x128xf32>
    %c4_283 = arith.constant 4 : index
    %c0_284 = arith.constant 0 : index
    %c0_285 = arith.constant 0 : index
    %606 = vector.load %arg14[%c4_283, %c0_284, %c0_285] : memref<6x64x1xf32, #tpu.memory_space<vmem>>, vector<1x64x1xf32>
    %607 = vector.shape_cast %606 : vector<1x64x1xf32> to vector<64x1xf32>
    %608 = vector.broadcast %607 : vector<64x1xf32> to vector<64x128xf32>
    %609 = arith.addf %605, %608 : vector<64x128xf32>
    %610 = vector.extract_strided_slice %602 {offsets = [0, 0], sizes = [64, 1], strides = [1, 1]} : vector<64x3xf32> to vector<64x1xf32>
    %c2_i32_286 = arith.constant 2 : i32
    %611 = tpu.dynamic_rotate %600 by %c2_i32_286 dim 1 : vector<64x128xf32>, i32 -> vector<64x128xf32>
    %cst_287 = arith.constant 0.000000e+00 : f32
    %612 = vector.shape_cast %15 : vector<1x128xi1> to vector<1x128xi1>
    %613 = vector.broadcast %612 : vector<1x128xi1> to vector<64x128xi1>
    %614 = vector.broadcast %cst_287 : f32 to vector<64x128xf32>
    %615 = arith.select %613, %611, %614 : vector<64x128xi1>, vector<64x128xf32>
    %616 = vector.broadcast %610 : vector<64x1xf32> to vector<64x128xf32>
    %617 = arith.mulf %616, %615 : vector<64x128xf32>
    %618 = arith.addf %609, %617 : vector<64x128xf32>
    %619 = vector.extract_strided_slice %602 {offsets = [0, 2], sizes = [64, 1], strides = [1, 1]} : vector<64x3xf32> to vector<64x1xf32>
    %c126_i32_288 = arith.constant 126 : i32
    %620 = tpu.dynamic_rotate %600 by %c126_i32_288 dim 1 : vector<64x128xf32>, i32 -> vector<64x128xf32>
    %cst_289 = arith.constant 0.000000e+00 : f32
    %621 = vector.shape_cast %17 : vector<1x128xi1> to vector<1x128xi1>
    %622 = vector.broadcast %621 : vector<1x128xi1> to vector<64x128xi1>
    %623 = vector.broadcast %cst_289 : f32 to vector<64x128xf32>
    %624 = arith.select %622, %620, %623 : vector<64x128xi1>, vector<64x128xf32>
    %625 = vector.broadcast %619 : vector<64x1xf32> to vector<64x128xf32>
    %626 = arith.mulf %625, %624 : vector<64x128xf32>
    %627 = arith.addf %618, %626 : vector<64x128xf32>
    %c4_290 = arith.constant 4 : index
    %c0_291 = arith.constant 0 : index
    %c0_292 = arith.constant 0 : index
    %628 = vector.load %arg15[%c4_290, %c0_291, %c0_292] : memref<6x1x1xf32, #tpu.memory_space<vmem>>, vector<1x1x1xf32>
    %629 = vector.shape_cast %628 : vector<1x1x1xf32> to vector<1x1xf32>
    %cst_293 = arith.constant 0.000000e+00 : f32
    %630 = vector.broadcast %cst_293 : f32 to vector<64x128xf32>
    %631 = arith.maximumf %627, %630 : vector<64x128xf32>
    %cst_294 = arith.constant 0.000000e+00 : f32
    %632 = vector.broadcast %cst_294 : f32 to vector<64x128xf32>
    %633 = arith.minimumf %627, %632 : vector<64x128xf32>
    %634 = vector.broadcast %629 : vector<1x1xf32> to vector<64x128xf32>
    %635 = arith.mulf %634, %633 : vector<64x128xf32>
    %636 = arith.addf %631, %635 : vector<64x128xf32>
    %c4_295 = arith.constant 4 : index
    %c0_296 = arith.constant 0 : index
    %c0_297 = arith.constant 0 : index
    %637 = vector.load %arg16[%c4_295, %c0_296, %c0_297] : memref<6x64x1xf32, #tpu.memory_space<vmem>>, vector<1x64x1xf32>
    %638 = vector.shape_cast %637 : vector<1x64x1xf32> to vector<64x1xf32>
    %c4_298 = arith.constant 4 : index
    %c0_299 = arith.constant 0 : index
    %c0_300 = arith.constant 0 : index
    %639 = vector.load %arg17[%c4_298, %c0_299, %c0_300] : memref<6x64x1xf32, #tpu.memory_space<vmem>>, vector<1x64x1xf32>
    %640 = vector.shape_cast %639 : vector<1x64x1xf32> to vector<64x1xf32>
    %cst_301 = arith.constant dense<0.000000e+00> : vector<128xf32>
    %641 = vector.multi_reduction <add>, %636, %cst_301 [0] : vector<64x128xf32> to vector<128xf32>
    %642 = vector.shape_cast %641 : vector<128xf32> to vector<1x128xf32>
    %643 = arith.mulf %636, %636 : vector<64x128xf32>
    %cst_302 = arith.constant dense<0.000000e+00> : vector<128xf32>
    %644 = vector.multi_reduction <add>, %643, %cst_302 [0] : vector<64x128xf32> to vector<128xf32>
    %645 = vector.shape_cast %644 : vector<128xf32> to vector<1x128xf32>
    %646 = tpu.concatenate %642, %645 in 0 : vector<1x128xf32>, vector<1x128xf32> -> vector<2x128xf32>
    %cst_303 = arith.constant dense<0.000000e+00> : vector<2x2xf32>
    %647 = tpu.matmul %646, %2, %cst_303 {dimension_numbers = #tpu.dot_dimension_numbers<[1], [0], [0], [1], [0, 0, 1, 1], [], []>} : vector<2x128xf32>, vector<128x2xf32>, vector<2x2xf32> -> vector<2x2xf32>
    %cst_304 = arith.constant 2.44140625E-4 : f32
    %648 = vector.broadcast %cst_304 : f32 to vector<2x2xf32>
    %649 = arith.mulf %647, %648 : vector<2x2xf32>
    %cst_305 = arith.constant dense<0.000000e+00> : vector<2x128xf32>
    %650 = tpu.matmul %649, %3, %cst_305 {dimension_numbers = #tpu.dot_dimension_numbers<[1], [0], [0], [1], [0, 0, 1, 1], [], []>} : vector<2x2xf32>, vector<2x128xf32>, vector<2x128xf32> -> vector<2x128xf32>
    %651 = vector.extract_strided_slice %650 {offsets = [0, 0], sizes = [1, 128], strides = [1, 1]} : vector<2x128xf32> to vector<1x128xf32>
    %652 = vector.extract_strided_slice %650 {offsets = [1, 0], sizes = [1, 128], strides = [1, 1]} : vector<2x128xf32> to vector<1x128xf32>
    %653 = arith.mulf %651, %651 : vector<1x128xf32>
    %654 = arith.subf %652, %653 : vector<1x128xf32>
    %cst_306 = arith.constant 0.000000e+00 : f32
    %655 = vector.broadcast %cst_306 : f32 to vector<1x128xf32>
    %656 = arith.maximumf %654, %655 : vector<1x128xf32>
    %cst_307 = arith.constant 9.99999993E-9 : f32
    %657 = vector.broadcast %cst_307 : f32 to vector<1x128xf32>
    %658 = arith.addf %656, %657 : vector<1x128xf32>
    %659 = math.rsqrt %658 : vector<1x128xf32>
    %660 = vector.broadcast %638 : vector<64x1xf32> to vector<64x128xf32>
    %661 = vector.broadcast %659 : vector<1x128xf32> to vector<64x128xf32>
    %662 = arith.mulf %660, %661 : vector<64x128xf32>
    %663 = arith.mulf %636, %662 : vector<64x128xf32>
    %664 = vector.broadcast %651 : vector<1x128xf32> to vector<64x128xf32>
    %665 = arith.mulf %664, %662 : vector<64x128xf32>
    %666 = vector.broadcast %640 : vector<64x1xf32> to vector<64x128xf32>
    %667 = arith.subf %666, %665 : vector<64x128xf32>
    %668 = arith.addf %663, %667 : vector<64x128xf32>
    %c4_308 = arith.constant 4 : index
    %c0_309 = arith.constant 0 : index
    %c0_310 = arith.constant 0 : index
    %669 = vector.load %arg18[%c4_308, %c0_309, %c0_310] : memref<6x32x64xf32, #tpu.memory_space<vmem>>, vector<1x32x64xf32>
    %670 = vector.shape_cast %669 : vector<1x32x64xf32> to vector<32x64xf32>
    %cst_311 = arith.constant dense<0.000000e+00> : vector<32x128xf32>
    %671 = tpu.matmul %670, %668, %cst_311 {dimension_numbers = #tpu.dot_dimension_numbers<[1], [0], [0], [1], [0, 0, 1, 1], [], []>} : vector<32x64xf32>, vector<64x128xf32>, vector<32x128xf32> -> vector<32x128xf32>
    %672 = arith.addf %552, %671 : vector<32x128xf32>
    %c4_312 = arith.constant 4 : index
    %c0_313 = arith.constant 0 : index
    %c0_314 = arith.constant 0 : index
    %673 = vector.load %arg19[%c4_312, %c0_313, %c0_314] : memref<6x32x1xf32, #tpu.memory_space<vmem>>, vector<1x32x1xf32>
    %674 = vector.shape_cast %673 : vector<1x32x1xf32> to vector<32x1xf32>
    %675 = vector.broadcast %674 : vector<32x1xf32> to vector<32x128xf32>
    %676 = arith.addf %672, %675 : vector<32x128xf32>
    %c5 = arith.constant 5 : index
    %c0_315 = arith.constant 0 : index
    %c0_316 = arith.constant 0 : index
    %677 = vector.load %arg8[%c5, %c0_315, %c0_316] : memref<6x64x32xf32, #tpu.memory_space<vmem>>, vector<1x64x32xf32>
    %678 = vector.shape_cast %677 : vector<1x64x32xf32> to vector<64x32xf32>
    %cst_317 = arith.constant dense<0.000000e+00> : vector<64x128xf32>
    %679 = tpu.matmul %678, %676, %cst_317 {dimension_numbers = #tpu.dot_dimension_numbers<[1], [0], [0], [1], [0, 0, 1, 1], [], []>} : vector<64x32xf32>, vector<32x128xf32>, vector<64x128xf32> -> vector<64x128xf32>
    %c5_318 = arith.constant 5 : index
    %c0_319 = arith.constant 0 : index
    %c0_320 = arith.constant 0 : index
    %680 = vector.load %arg9[%c5_318, %c0_319, %c0_320] : memref<6x64x1xf32, #tpu.memory_space<vmem>>, vector<1x64x1xf32>
    %681 = vector.shape_cast %680 : vector<1x64x1xf32> to vector<64x1xf32>
    %682 = vector.broadcast %681 : vector<64x1xf32> to vector<64x128xf32>
    %683 = arith.addf %679, %682 : vector<64x128xf32>
    %c5_321 = arith.constant 5 : index
    %c0_322 = arith.constant 0 : index
    %c0_323 = arith.constant 0 : index
    %684 = vector.load %arg10[%c5_321, %c0_322, %c0_323] : memref<6x1x1xf32, #tpu.memory_space<vmem>>, vector<1x1x1xf32>
    %685 = vector.shape_cast %684 : vector<1x1x1xf32> to vector<1x1xf32>
    %cst_324 = arith.constant 0.000000e+00 : f32
    %686 = vector.broadcast %cst_324 : f32 to vector<64x128xf32>
    %687 = arith.maximumf %683, %686 : vector<64x128xf32>
    %cst_325 = arith.constant 0.000000e+00 : f32
    %688 = vector.broadcast %cst_325 : f32 to vector<64x128xf32>
    %689 = arith.minimumf %683, %688 : vector<64x128xf32>
    %690 = vector.broadcast %685 : vector<1x1xf32> to vector<64x128xf32>
    %691 = arith.mulf %690, %689 : vector<64x128xf32>
    %692 = arith.addf %687, %691 : vector<64x128xf32>
    %c5_326 = arith.constant 5 : index
    %c0_327 = arith.constant 0 : index
    %c0_328 = arith.constant 0 : index
    %693 = vector.load %arg11[%c5_326, %c0_327, %c0_328] : memref<6x64x1xf32, #tpu.memory_space<vmem>>, vector<1x64x1xf32>
    %694 = vector.shape_cast %693 : vector<1x64x1xf32> to vector<64x1xf32>
    %c5_329 = arith.constant 5 : index
    %c0_330 = arith.constant 0 : index
    %c0_331 = arith.constant 0 : index
    %695 = vector.load %arg12[%c5_329, %c0_330, %c0_331] : memref<6x64x1xf32, #tpu.memory_space<vmem>>, vector<1x64x1xf32>
    %696 = vector.shape_cast %695 : vector<1x64x1xf32> to vector<64x1xf32>
    %cst_332 = arith.constant dense<0.000000e+00> : vector<128xf32>
    %697 = vector.multi_reduction <add>, %692, %cst_332 [0] : vector<64x128xf32> to vector<128xf32>
    %698 = vector.shape_cast %697 : vector<128xf32> to vector<1x128xf32>
    %699 = arith.mulf %692, %692 : vector<64x128xf32>
    %cst_333 = arith.constant dense<0.000000e+00> : vector<128xf32>
    %700 = vector.multi_reduction <add>, %699, %cst_333 [0] : vector<64x128xf32> to vector<128xf32>
    %701 = vector.shape_cast %700 : vector<128xf32> to vector<1x128xf32>
    %702 = tpu.concatenate %698, %701 in 0 : vector<1x128xf32>, vector<1x128xf32> -> vector<2x128xf32>
    %cst_334 = arith.constant dense<0.000000e+00> : vector<2x2xf32>
    %703 = tpu.matmul %702, %2, %cst_334 {dimension_numbers = #tpu.dot_dimension_numbers<[1], [0], [0], [1], [0, 0, 1, 1], [], []>} : vector<2x128xf32>, vector<128x2xf32>, vector<2x2xf32> -> vector<2x2xf32>
    %cst_335 = arith.constant 2.44140625E-4 : f32
    %704 = vector.broadcast %cst_335 : f32 to vector<2x2xf32>
    %705 = arith.mulf %703, %704 : vector<2x2xf32>
    %cst_336 = arith.constant dense<0.000000e+00> : vector<2x128xf32>
    %706 = tpu.matmul %705, %3, %cst_336 {dimension_numbers = #tpu.dot_dimension_numbers<[1], [0], [0], [1], [0, 0, 1, 1], [], []>} : vector<2x2xf32>, vector<2x128xf32>, vector<2x128xf32> -> vector<2x128xf32>
    %707 = vector.extract_strided_slice %706 {offsets = [0, 0], sizes = [1, 128], strides = [1, 1]} : vector<2x128xf32> to vector<1x128xf32>
    %708 = vector.extract_strided_slice %706 {offsets = [1, 0], sizes = [1, 128], strides = [1, 1]} : vector<2x128xf32> to vector<1x128xf32>
    %709 = arith.mulf %707, %707 : vector<1x128xf32>
    %710 = arith.subf %708, %709 : vector<1x128xf32>
    %cst_337 = arith.constant 0.000000e+00 : f32
    %711 = vector.broadcast %cst_337 : f32 to vector<1x128xf32>
    %712 = arith.maximumf %710, %711 : vector<1x128xf32>
    %cst_338 = arith.constant 9.99999993E-9 : f32
    %713 = vector.broadcast %cst_338 : f32 to vector<1x128xf32>
    %714 = arith.addf %712, %713 : vector<1x128xf32>
    %715 = math.rsqrt %714 : vector<1x128xf32>
    %716 = vector.broadcast %694 : vector<64x1xf32> to vector<64x128xf32>
    %717 = vector.broadcast %715 : vector<1x128xf32> to vector<64x128xf32>
    %718 = arith.mulf %716, %717 : vector<64x128xf32>
    %719 = arith.mulf %692, %718 : vector<64x128xf32>
    %720 = vector.broadcast %707 : vector<1x128xf32> to vector<64x128xf32>
    %721 = arith.mulf %720, %718 : vector<64x128xf32>
    %722 = vector.broadcast %696 : vector<64x1xf32> to vector<64x128xf32>
    %723 = arith.subf %722, %721 : vector<64x128xf32>
    %724 = arith.addf %719, %723 : vector<64x128xf32>
    %c5_339 = arith.constant 5 : index
    %c0_340 = arith.constant 0 : index
    %c0_341 = arith.constant 0 : index
    %725 = vector.load %arg13[%c5_339, %c0_340, %c0_341] : memref<6x64x3xf32, #tpu.memory_space<vmem>>, vector<1x64x3xf32>
    %726 = vector.shape_cast %725 : vector<1x64x3xf32> to vector<64x3xf32>
    %727 = vector.extract_strided_slice %726 {offsets = [0, 1], sizes = [64, 1], strides = [1, 1]} : vector<64x3xf32> to vector<64x1xf32>
    %728 = vector.broadcast %727 : vector<64x1xf32> to vector<64x128xf32>
    %729 = arith.mulf %728, %724 : vector<64x128xf32>
    %c5_342 = arith.constant 5 : index
    %c0_343 = arith.constant 0 : index
    %c0_344 = arith.constant 0 : index
    %730 = vector.load %arg14[%c5_342, %c0_343, %c0_344] : memref<6x64x1xf32, #tpu.memory_space<vmem>>, vector<1x64x1xf32>
    %731 = vector.shape_cast %730 : vector<1x64x1xf32> to vector<64x1xf32>
    %732 = vector.broadcast %731 : vector<64x1xf32> to vector<64x128xf32>
    %733 = arith.addf %729, %732 : vector<64x128xf32>
    %734 = vector.extract_strided_slice %726 {offsets = [0, 0], sizes = [64, 1], strides = [1, 1]} : vector<64x3xf32> to vector<64x1xf32>
    %c4_i32_345 = arith.constant 4 : i32
    %735 = tpu.dynamic_rotate %724 by %c4_i32_345 dim 1 : vector<64x128xf32>, i32 -> vector<64x128xf32>
    %cst_346 = arith.constant 0.000000e+00 : f32
    %736 = vector.shape_cast %19 : vector<1x128xi1> to vector<1x128xi1>
    %737 = vector.broadcast %736 : vector<1x128xi1> to vector<64x128xi1>
    %738 = vector.broadcast %cst_346 : f32 to vector<64x128xf32>
    %739 = arith.select %737, %735, %738 : vector<64x128xi1>, vector<64x128xf32>
    %740 = vector.broadcast %734 : vector<64x1xf32> to vector<64x128xf32>
    %741 = arith.mulf %740, %739 : vector<64x128xf32>
    %742 = arith.addf %733, %741 : vector<64x128xf32>
    %743 = vector.extract_strided_slice %726 {offsets = [0, 2], sizes = [64, 1], strides = [1, 1]} : vector<64x3xf32> to vector<64x1xf32>
    %c124_i32_347 = arith.constant 124 : i32
    %744 = tpu.dynamic_rotate %724 by %c124_i32_347 dim 1 : vector<64x128xf32>, i32 -> vector<64x128xf32>
    %cst_348 = arith.constant 0.000000e+00 : f32
    %745 = vector.shape_cast %21 : vector<1x128xi1> to vector<1x128xi1>
    %746 = vector.broadcast %745 : vector<1x128xi1> to vector<64x128xi1>
    %747 = vector.broadcast %cst_348 : f32 to vector<64x128xf32>
    %748 = arith.select %746, %744, %747 : vector<64x128xi1>, vector<64x128xf32>
    %749 = vector.broadcast %743 : vector<64x1xf32> to vector<64x128xf32>
    %750 = arith.mulf %749, %748 : vector<64x128xf32>
    %751 = arith.addf %742, %750 : vector<64x128xf32>
    %c5_349 = arith.constant 5 : index
    %c0_350 = arith.constant 0 : index
    %c0_351 = arith.constant 0 : index
    %752 = vector.load %arg15[%c5_349, %c0_350, %c0_351] : memref<6x1x1xf32, #tpu.memory_space<vmem>>, vector<1x1x1xf32>
    %753 = vector.shape_cast %752 : vector<1x1x1xf32> to vector<1x1xf32>
    %cst_352 = arith.constant 0.000000e+00 : f32
    %754 = vector.broadcast %cst_352 : f32 to vector<64x128xf32>
    %755 = arith.maximumf %751, %754 : vector<64x128xf32>
    %cst_353 = arith.constant 0.000000e+00 : f32
    %756 = vector.broadcast %cst_353 : f32 to vector<64x128xf32>
    %757 = arith.minimumf %751, %756 : vector<64x128xf32>
    %758 = vector.broadcast %753 : vector<1x1xf32> to vector<64x128xf32>
    %759 = arith.mulf %758, %757 : vector<64x128xf32>
    %760 = arith.addf %755, %759 : vector<64x128xf32>
    %c5_354 = arith.constant 5 : index
    %c0_355 = arith.constant 0 : index
    %c0_356 = arith.constant 0 : index
    %761 = vector.load %arg16[%c5_354, %c0_355, %c0_356] : memref<6x64x1xf32, #tpu.memory_space<vmem>>, vector<1x64x1xf32>
    %762 = vector.shape_cast %761 : vector<1x64x1xf32> to vector<64x1xf32>
    %c5_357 = arith.constant 5 : index
    %c0_358 = arith.constant 0 : index
    %c0_359 = arith.constant 0 : index
    %763 = vector.load %arg17[%c5_357, %c0_358, %c0_359] : memref<6x64x1xf32, #tpu.memory_space<vmem>>, vector<1x64x1xf32>
    %764 = vector.shape_cast %763 : vector<1x64x1xf32> to vector<64x1xf32>
    %cst_360 = arith.constant dense<0.000000e+00> : vector<128xf32>
    %765 = vector.multi_reduction <add>, %760, %cst_360 [0] : vector<64x128xf32> to vector<128xf32>
    %766 = vector.shape_cast %765 : vector<128xf32> to vector<1x128xf32>
    %767 = arith.mulf %760, %760 : vector<64x128xf32>
    %cst_361 = arith.constant dense<0.000000e+00> : vector<128xf32>
    %768 = vector.multi_reduction <add>, %767, %cst_361 [0] : vector<64x128xf32> to vector<128xf32>
    %769 = vector.shape_cast %768 : vector<128xf32> to vector<1x128xf32>
    %770 = tpu.concatenate %766, %769 in 0 : vector<1x128xf32>, vector<1x128xf32> -> vector<2x128xf32>
    %cst_362 = arith.constant dense<0.000000e+00> : vector<2x2xf32>
    %771 = tpu.matmul %770, %2, %cst_362 {dimension_numbers = #tpu.dot_dimension_numbers<[1], [0], [0], [1], [0, 0, 1, 1], [], []>} : vector<2x128xf32>, vector<128x2xf32>, vector<2x2xf32> -> vector<2x2xf32>
    %cst_363 = arith.constant 2.44140625E-4 : f32
    %772 = vector.broadcast %cst_363 : f32 to vector<2x2xf32>
    %773 = arith.mulf %771, %772 : vector<2x2xf32>
    %cst_364 = arith.constant dense<0.000000e+00> : vector<2x128xf32>
    %774 = tpu.matmul %773, %3, %cst_364 {dimension_numbers = #tpu.dot_dimension_numbers<[1], [0], [0], [1], [0, 0, 1, 1], [], []>} : vector<2x2xf32>, vector<2x128xf32>, vector<2x128xf32> -> vector<2x128xf32>
    %775 = vector.extract_strided_slice %774 {offsets = [0, 0], sizes = [1, 128], strides = [1, 1]} : vector<2x128xf32> to vector<1x128xf32>
    %776 = vector.extract_strided_slice %774 {offsets = [1, 0], sizes = [1, 128], strides = [1, 1]} : vector<2x128xf32> to vector<1x128xf32>
    %777 = arith.mulf %775, %775 : vector<1x128xf32>
    %778 = arith.subf %776, %777 : vector<1x128xf32>
    %cst_365 = arith.constant 0.000000e+00 : f32
    %779 = vector.broadcast %cst_365 : f32 to vector<1x128xf32>
    %780 = arith.maximumf %778, %779 : vector<1x128xf32>
    %cst_366 = arith.constant 9.99999993E-9 : f32
    %781 = vector.broadcast %cst_366 : f32 to vector<1x128xf32>
    %782 = arith.addf %780, %781 : vector<1x128xf32>
    %783 = math.rsqrt %782 : vector<1x128xf32>
    %784 = vector.broadcast %762 : vector<64x1xf32> to vector<64x128xf32>
    %785 = vector.broadcast %783 : vector<1x128xf32> to vector<64x128xf32>
    %786 = arith.mulf %784, %785 : vector<64x128xf32>
    %787 = arith.mulf %760, %786 : vector<64x128xf32>
    %788 = vector.broadcast %775 : vector<1x128xf32> to vector<64x128xf32>
    %789 = arith.mulf %788, %786 : vector<64x128xf32>
    %790 = vector.broadcast %764 : vector<64x1xf32> to vector<64x128xf32>
    %791 = arith.subf %790, %789 : vector<64x128xf32>
    %792 = arith.addf %787, %791 : vector<64x128xf32>
    %c5_367 = arith.constant 5 : index
    %c0_368 = arith.constant 0 : index
    %c0_369 = arith.constant 0 : index
    %793 = vector.load %arg18[%c5_367, %c0_368, %c0_369] : memref<6x32x64xf32, #tpu.memory_space<vmem>>, vector<1x32x64xf32>
    %794 = vector.shape_cast %793 : vector<1x32x64xf32> to vector<32x64xf32>
    %cst_370 = arith.constant dense<0.000000e+00> : vector<32x128xf32>
    %795 = tpu.matmul %794, %792, %cst_370 {dimension_numbers = #tpu.dot_dimension_numbers<[1], [0], [0], [1], [0, 0, 1, 1], [], []>} : vector<32x64xf32>, vector<64x128xf32>, vector<32x128xf32> -> vector<32x128xf32>
    %796 = arith.addf %676, %795 : vector<32x128xf32>
    %c5_371 = arith.constant 5 : index
    %c0_372 = arith.constant 0 : index
    %c0_373 = arith.constant 0 : index
    %797 = vector.load %arg19[%c5_371, %c0_372, %c0_373] : memref<6x32x1xf32, #tpu.memory_space<vmem>>, vector<1x32x1xf32>
    %798 = vector.shape_cast %797 : vector<1x32x1xf32> to vector<32x1xf32>
    %799 = vector.broadcast %798 : vector<32x1xf32> to vector<32x128xf32>
    %800 = arith.addf %796, %799 : vector<32x128xf32>
    %c0_374 = arith.constant 0 : index
    %c0_375 = arith.constant 0 : index
    %801 = vector.load %arg20[%c0_374, %c0_375] : memref<1x1xf32, #tpu.memory_space<vmem>>, vector<1x1xf32>
    %cst_376 = arith.constant 0.000000e+00 : f32
    %802 = vector.broadcast %cst_376 : f32 to vector<32x128xf32>
    %803 = arith.maximumf %800, %802 : vector<32x128xf32>
    %cst_377 = arith.constant 0.000000e+00 : f32
    %804 = vector.broadcast %cst_377 : f32 to vector<32x128xf32>
    %805 = arith.minimumf %800, %804 : vector<32x128xf32>
    %806 = vector.broadcast %801 : vector<1x1xf32> to vector<32x128xf32>
    %807 = arith.mulf %806, %805 : vector<32x128xf32>
    %808 = arith.addf %803, %807 : vector<32x128xf32>
    %809 = tpu.concatenate %808, %800 in 0 : vector<32x128xf32>, vector<32x128xf32> -> vector<64x128xf32>
    %c0_378 = arith.constant 0 : index
    %c0_379 = arith.constant 0 : index
    %810 = vector.load %arg21[%c0_378, %c0_379] : memref<4x64xf32, #tpu.memory_space<vmem>>, vector<4x64xf32>
    %cst_380 = arith.constant dense<0.000000e+00> : vector<4x128xf32>
    %811 = tpu.matmul %810, %809, %cst_380 {dimension_numbers = #tpu.dot_dimension_numbers<[1], [0], [0], [1], [0, 0, 1, 1], [], []>} : vector<4x64xf32>, vector<64x128xf32>, vector<4x128xf32> -> vector<4x128xf32>
    %c0_381 = arith.constant 0 : index
    %c0_382 = arith.constant 0 : index
    %812 = vector.load %arg22[%c0_381, %c0_382] : memref<4x1xf32, #tpu.memory_space<vmem>>, vector<4x1xf32>
    %813 = vector.broadcast %812 : vector<4x1xf32> to vector<4x128xf32>
    %814 = arith.addf %811, %813 : vector<4x128xf32>
    %815 = vector.extract_strided_slice %814 {offsets = [0, 0], sizes = [2, 128], strides = [1, 1]} : vector<4x128xf32> to vector<2x128xf32>
    %816 = vector.extract_strided_slice %814 {offsets = [2, 0], sizes = [2, 128], strides = [1, 1]} : vector<4x128xf32> to vector<2x128xf32>
    %c0_383 = arith.constant 0 : index
    %c0_384 = arith.constant 0 : index
    %c0_385 = arith.constant 0 : index
    %817 = vector.load %arg23[%c0_383, %c0_384, %c0_385] : memref<1x2x128xf32, #tpu.memory_space<vmem>>, vector<1x2x128xf32>
    %818 = vector.shape_cast %817 : vector<1x2x128xf32> to vector<2x128xf32>
    %819 = vector.shape_cast %815 : vector<2x128xf32> to vector<1x2x128xf32>
    tpu.vector_store %arg23[%c0_383, %c0_384, %c0_385], %819 {strides = array<i32>} : memref<1x2x128xf32, #tpu.memory_space<vmem>>, vector<1x2x128xf32>,
    %820 = arith.negf %815 : vector<2x128xf32>
    %821 = math.exp %820 : vector<2x128xf32>
    %cst_386 = arith.constant 1.000000e+00 : f32
    %822 = vector.broadcast %cst_386 : f32 to vector<2x128xf32>
    %823 = arith.addf %822, %821 : vector<2x128xf32>
    %824 = arith.divf %822, %823 : vector<2x128xf32>
    %cst_387 = arith.constant dense<0xFF800000> : vector<128xf32>
    %825 = vector.multi_reduction <maximumf>, %816, %cst_387 [0] : vector<2x128xf32> to vector<128xf32>
    %826 = vector.shape_cast %825 : vector<128xf32> to vector<1x128xf32>
    %827 = vector.broadcast %826 : vector<1x128xf32> to vector<2x128xf32>
    %828 = arith.subf %816, %827 : vector<2x128xf32>
    %829 = math.exp %828 : vector<2x128xf32>
    %cst_388 = arith.constant dense<0.000000e+00> : vector<128xf32>
    %830 = vector.multi_reduction <add>, %829, %cst_388 [0] : vector<2x128xf32> to vector<128xf32>
    %831 = vector.shape_cast %830 : vector<128xf32> to vector<1x128xf32>
    %832 = tpu.reciprocal %831 {approx = true} : vector<1x128xf32> -> vector<1x128xf32>
    %833 = vector.broadcast %832 : vector<1x128xf32> to vector<2x128xf32>
    %834 = arith.mulf %829, %833 : vector<2x128xf32>
    %cst_389 = arith.constant 1.000000e-07 : f32
    %cst_390 = arith.constant 1.000000e+00 : f32
    %835 = vector.broadcast %cst_389 : f32 to vector<2x128xf32>
    %836 = arith.maximumf %835, %834 : vector<2x128xf32>
    %837 = vector.broadcast %cst_390 : f32 to vector<2x128xf32>
    %838 = arith.minimumf %837, %836 : vector<2x128xf32>
    %839 = arith.mulf %824, %838 : vector<2x128xf32>
    %840 = tpu.concatenate %839, %838 in 0 : vector<2x128xf32>, vector<2x128xf32> -> vector<4x128xf32>
    %cst_391 = arith.constant dense<0.000000e+00> : vector<4x2xf32>
    %841 = tpu.matmul %840, %2, %cst_391 {dimension_numbers = #tpu.dot_dimension_numbers<[1], [0], [0], [1], [0, 0, 1, 1], [], []>} : vector<4x128xf32>, vector<128x2xf32>, vector<4x2xf32> -> vector<4x2xf32>
    %842 = vector.extract_strided_slice %841 {offsets = [0, 0], sizes = [2, 2], strides = [1, 1]} : vector<4x2xf32> to vector<2x2xf32>
    %843 = vector.extract_strided_slice %841 {offsets = [2, 0], sizes = [2, 2], strides = [1, 1]} : vector<4x2xf32> to vector<2x2xf32>
    %844 = tpu.reciprocal %843 {approx = true} : vector<2x2xf32> -> vector<2x2xf32>
    %845 = arith.mulf %842, %844 : vector<2x2xf32>
    %c0_392 = arith.constant 0 : index
    %c0_393 = arith.constant 0 : index
    %c0_394 = arith.constant 0 : index
    %846 = vector.load %arg24[%c0_392, %c0_393, %c0_394] : memref<1x2x2xf32, #tpu.memory_space<vmem>>, vector<1x2x2xf32>
    %847 = vector.shape_cast %846 : vector<1x2x2xf32> to vector<2x2xf32>
    %848 = vector.shape_cast %845 : vector<2x2xf32> to vector<1x2x2xf32>
    tpu.vector_store %arg24[%c0_392, %c0_393, %c0_394], %848 {strides = array<i32>} : memref<1x2x2xf32, #tpu.memory_space<vmem>>, vector<1x2x2xf32>,
    return
  }
  func.func @transform_0(%arg0: i32) -> (i32, i32, i32) {
    %c0_i32 = arith.constant 0 : i32
    %c0_i32_0 = arith.constant 0 : i32
    %c0_i32_1 = arith.constant 0 : i32
    return %arg0, %c0_i32, %c0_i32_0 : i32, i32, i32
  }
  func.func @transform_1(%arg0: i32) -> (i32, i32) {
    %c0_i32 = arith.constant 0 : i32
    %c0_i32_0 = arith.constant 0 : i32
    %c0_i32_1 = arith.constant 0 : i32
    return %c0_i32, %c0_i32_0 : i32, i32
  }
  func.func @transform_2(%arg0: i32) -> (i32, i32) {
    %c0_i32 = arith.constant 0 : i32
    %c0_i32_0 = arith.constant 0 : i32
    %c0_i32_1 = arith.constant 0 : i32
    return %c0_i32, %c0_i32_0 : i32, i32
  }
  func.func @transform_3(%arg0: i32) -> (i32, i32) {
    %c0_i32 = arith.constant 0 : i32
    %c0_i32_0 = arith.constant 0 : i32
    %c0_i32_1 = arith.constant 0 : i32
    return %c0_i32, %c0_i32_0 : i32, i32
  }
  func.func @transform_4(%arg0: i32) -> (i32, i32) {
    %c0_i32 = arith.constant 0 : i32
    %c0_i32_0 = arith.constant 0 : i32
    %c0_i32_1 = arith.constant 0 : i32
    return %c0_i32, %c0_i32_0 : i32, i32
  }
  func.func @transform_5(%arg0: i32) -> (i32, i32) {
    %c0_i32 = arith.constant 0 : i32
    %c0_i32_0 = arith.constant 0 : i32
    %c0_i32_1 = arith.constant 0 : i32
    return %c0_i32, %c0_i32_0 : i32, i32
  }
  func.func @transform_6(%arg0: i32) -> (i32, i32) {
    %c0_i32 = arith.constant 0 : i32
    %c0_i32_0 = arith.constant 0 : i32
    %c0_i32_1 = arith.constant 0 : i32
    return %c0_i32, %c0_i32_0 : i32, i32
  }
  func.func @transform_7(%arg0: i32) -> (i32, i32, i32) {
    %c0_i32 = arith.constant 0 : i32
    %c0_i32_0 = arith.constant 0 : i32
    %c0_i32_1 = arith.constant 0 : i32
    %c0_i32_2 = arith.constant 0 : i32
    return %c0_i32, %c0_i32_0, %c0_i32_1 : i32, i32, i32
  }
  func.func @transform_8(%arg0: i32) -> (i32, i32, i32) {
    %c0_i32 = arith.constant 0 : i32
    %c0_i32_0 = arith.constant 0 : i32
    %c0_i32_1 = arith.constant 0 : i32
    %c0_i32_2 = arith.constant 0 : i32
    return %c0_i32, %c0_i32_0, %c0_i32_1 : i32, i32, i32
  }
  func.func @transform_9(%arg0: i32) -> (i32, i32, i32) {
    %c0_i32 = arith.constant 0 : i32
    %c0_i32_0 = arith.constant 0 : i32
    %c0_i32_1 = arith.constant 0 : i32
    %c0_i32_2 = arith.constant 0 : i32
    return %c0_i32, %c0_i32_0, %c0_i32_1 : i32, i32, i32
  }
  func.func @transform_10(%arg0: i32) -> (i32, i32, i32) {
    %c0_i32 = arith.constant 0 : i32
    %c0_i32_0 = arith.constant 0 : i32
    %c0_i32_1 = arith.constant 0 : i32
    %c0_i32_2 = arith.constant 0 : i32
    return %c0_i32, %c0_i32_0, %c0_i32_1 : i32, i32, i32
  }
  func.func @transform_11(%arg0: i32) -> (i32, i32, i32) {
    %c0_i32 = arith.constant 0 : i32
    %c0_i32_0 = arith.constant 0 : i32
    %c0_i32_1 = arith.constant 0 : i32
    %c0_i32_2 = arith.constant 0 : i32
    return %c0_i32, %c0_i32_0, %c0_i32_1 : i32, i32, i32
  }
  func.func @transform_12(%arg0: i32) -> (i32, i32, i32) {
    %c0_i32 = arith.constant 0 : i32
    %c0_i32_0 = arith.constant 0 : i32
    %c0_i32_1 = arith.constant 0 : i32
    %c0_i32_2 = arith.constant 0 : i32
    return %c0_i32, %c0_i32_0, %c0_i32_1 : i32, i32, i32
  }
  func.func @transform_13(%arg0: i32) -> (i32, i32, i32) {
    %c0_i32 = arith.constant 0 : i32
    %c0_i32_0 = arith.constant 0 : i32
    %c0_i32_1 = arith.constant 0 : i32
    %c0_i32_2 = arith.constant 0 : i32
    return %c0_i32, %c0_i32_0, %c0_i32_1 : i32, i32, i32
  }
  func.func @transform_14(%arg0: i32) -> (i32, i32, i32) {
    %c0_i32 = arith.constant 0 : i32
    %c0_i32_0 = arith.constant 0 : i32
    %c0_i32_1 = arith.constant 0 : i32
    %c0_i32_2 = arith.constant 0 : i32
    return %c0_i32, %c0_i32_0, %c0_i32_1 : i32, i32, i32
  }
  func.func @transform_15(%arg0: i32) -> (i32, i32, i32) {
    %c0_i32 = arith.constant 0 : i32
    %c0_i32_0 = arith.constant 0 : i32
    %c0_i32_1 = arith.constant 0 : i32
    %c0_i32_2 = arith.constant 0 : i32
    return %c0_i32, %c0_i32_0, %c0_i32_1 : i32, i32, i32
  }
  func.func @transform_16(%arg0: i32) -> (i32, i32, i32) {
    %c0_i32 = arith.constant 0 : i32
    %c0_i32_0 = arith.constant 0 : i32
    %c0_i32_1 = arith.constant 0 : i32
    %c0_i32_2 = arith.constant 0 : i32
    return %c0_i32, %c0_i32_0, %c0_i32_1 : i32, i32, i32
  }
  func.func @transform_17(%arg0: i32) -> (i32, i32, i32) {
    %c0_i32 = arith.constant 0 : i32
    %c0_i32_0 = arith.constant 0 : i32
    %c0_i32_1 = arith.constant 0 : i32
    %c0_i32_2 = arith.constant 0 : i32
    return %c0_i32, %c0_i32_0, %c0_i32_1 : i32, i32, i32
  }
  func.func @transform_18(%arg0: i32) -> (i32, i32, i32) {
    %c0_i32 = arith.constant 0 : i32
    %c0_i32_0 = arith.constant 0 : i32
    %c0_i32_1 = arith.constant 0 : i32
    %c0_i32_2 = arith.constant 0 : i32
    return %c0_i32, %c0_i32_0, %c0_i32_1 : i32, i32, i32
  }
  func.func @transform_19(%arg0: i32) -> (i32, i32) {
    %c0_i32 = arith.constant 0 : i32
    %c0_i32_0 = arith.constant 0 : i32
    %c0_i32_1 = arith.constant 0 : i32
    return %c0_i32, %c0_i32_0 : i32, i32
  }
  func.func @transform_20(%arg0: i32) -> (i32, i32) {
    %c0_i32 = arith.constant 0 : i32
    %c0_i32_0 = arith.constant 0 : i32
    %c0_i32_1 = arith.constant 0 : i32
    return %c0_i32, %c0_i32_0 : i32, i32
  }
  func.func @transform_21(%arg0: i32) -> (i32, i32) {
    %c0_i32 = arith.constant 0 : i32
    %c0_i32_0 = arith.constant 0 : i32
    %c0_i32_1 = arith.constant 0 : i32
    return %c0_i32, %c0_i32_0 : i32, i32
  }
  func.func @transform_22(%arg0: i32) -> (i32, i32, i32) {
    %c0_i32 = arith.constant 0 : i32
    %c0_i32_0 = arith.constant 0 : i32
    %c0_i32_1 = arith.constant 0 : i32
    return %arg0, %c0_i32, %c0_i32_0 : i32, i32, i32
  }
  func.func @transform_23(%arg0: i32) -> (i32, i32, i32) {
    %c0_i32 = arith.constant 0 : i32
    %c0_i32_0 = arith.constant 0 : i32
    %c0_i32_1 = arith.constant 0 : i32
    return %arg0, %c0_i32, %c0_i32_0 : i32, i32, i32
  }
}

</mosaic_0001>

<llo_original>
// kernel: tpu_custom_call.1
$region0: #{tpu_custom_call.1}
  #allocation0 [shape = 'u32[]', space=smem, size = 0x4, offset = 0x4, fixed_abs, tag = 'smem constant byte address 0x4 - core index']
  #allocation1 [shape = 'u32[144,128]{1,0:T(1,128)}', space=vmem, size = 0x12000, scoped, tag = 'internal scratch']
  #allocation2 [shape = 'f32[1,1]{1,0:T(1,128)S(1)}', space=vmem, size = 0x200, scoped, tag = 'scoped memory for tpu_custom_call.1']
  %s0 = inlined_call_operand.vmem [shape: f32[1,16,128], index: 0, kind: input, shape index: {}]
  %s1 = inlined_call_operand.vmem [shape: f32[128,2], index: 1, kind: input, shape index: {}]
  %s2 = inlined_call_operand.vmem [shape: f32[2,128], index: 2, kind: input, shape index: {}]
  %s3 = inlined_call_operand.vmem [shape: f32[16,1], index: 3, kind: input, shape index: {}]
  %s4 = inlined_call_operand.vmem [shape: f32[16,1], index: 4, kind: input, shape index: {}]
  %s5 = inlined_call_operand.vmem [shape: f32[32,16], index: 5, kind: input, shape index: {}]
  %s6 = inlined_call_operand.vmem [shape: f32[32,1], index: 6, kind: input, shape index: {}]
  %s7 = inlined_call_operand.vmem [shape: f32[6,64,32], index: 7, kind: input, shape index: {}]
  %s8 = inlined_call_operand.vmem [shape: f32[6,64,1], index: 8, kind: input, shape index: {}]
  %s9 = inlined_call_operand.vmem [shape: f32[6,1,1], index: 9, kind: input, shape index: {}]
  %s10 = inlined_call_operand.vmem [shape: f32[6,64,1], index: 10, kind: input, shape index: {}]
  %s11 = inlined_call_operand.vmem [shape: f32[6,64,1], index: 11, kind: input, shape index: {}]
  %s12 = inlined_call_operand.vmem [shape: f32[6,64,3], index: 12, kind: input, shape index: {}]
  %s13 = inlined_call_operand.vmem [shape: f32[6,64,1], index: 13, kind: input, shape index: {}]
  %s14 = inlined_call_operand.vmem [shape: f32[6,1,1], index: 14, kind: input, shape index: {}]
  %s15 = inlined_call_operand.vmem [shape: f32[6,64,1], index: 15, kind: input, shape index: {}]
  %s16 = inlined_call_operand.vmem [shape: f32[6,64,1], index: 16, kind: input, shape index: {}]
  %s17 = inlined_call_operand.vmem [shape: f32[6,32,64], index: 17, kind: input, shape index: {}]
  %s18 = inlined_call_operand.vmem [shape: f32[6,32,1], index: 18, kind: input, shape index: {}]
  %s19 = inlined_call_operand.<no memory space> [shape: f32[1,1], index: 19, kind: input, shape index: {}]
  %s20 = inlined_call_operand.vmem [shape: f32[4,64], index: 20, kind: input, shape index: {}]
  %s21 = inlined_call_operand.vmem [shape: f32[4,1], index: 21, kind: input, shape index: {}]
  %s22 = inlined_call_operand.hbm [shape: f32[1,2,128], index: 22, kind: output, shape index: {0}]
  %s23 = inlined_call_operand.hbm [shape: f32[1,2,2], index: 23, kind: output, shape index: {1}]
  %24 = xla_tuple %s22, %s23
  %s25 = sld [smem:[#allocation0]]
  $region106: #{tpu_custom_call.1} parent=0
    _
  %s27 = ssub.s32 1, %s25
  %s28 = scalar_select 0, %s27, %s25
  %v29 = vstv %s19
  %30 = vst [vmem:[#allocation2] sm:$0x1] %v29
  $region1: #{tpu_custom_call.1} parent=0
    #allocation3 [shape = 'u8[1024]{0}', space=vmem, size = 0x400, scoped, tag = 'output window, operand 0, single buffered']
    #allocation4 [shape = 's32[1]{0}', space=sflag, size = 0x4, scoped, tag = 'scoped memory for tpu_custom_call.1']
    #allocation5 [shape = 'u8[1024]{0}', space=vmem, size = 0x400, scoped, tag = 'output window, operand 1, single buffered']
    #allocation6 [shape = 's32[1]{0}', space=sflag, size = 0x4, scoped, tag = 'scoped memory for tpu_custom_call.1']
    %31 = vsyncpa [#allocation4], 0
    %32 = vsyncpa [#allocation6], 0
    // Predicated region
    $region2: #{tpu_custom_call.1} parent=1 // pred_check
      _
    $region3: #{tpu_custom_call.1} parent=1 // pred_check_branch
      %34 = sbr.rel (0) target = $region5
    $region4: #{tpu_custom_call.1} parent=1 // pred_region
      _
    $region5: #{tpu_custom_call.1} parent=1 // pred_fallthru
      _
    // Predicated region
    $region6: #{tpu_custom_call.1} parent=1 // pred_check
      _
    $region7: #{tpu_custom_call.1} parent=1 // pred_check_branch
      %36 = sbr.rel (0) target = $region9
    $region8: #{tpu_custom_call.1} parent=1 // pred_region
      _
    $region9: #{tpu_custom_call.1} parent=1 // pred_fallthru
      _
    // Predicated region
    $region10: #{tpu_custom_call.1} parent=1 // pred_check
      _
    $region11: #{tpu_custom_call.1} parent=1 // pred_check_branch
      %38 = sbr.rel (0) target = $region13
    $region12: #{tpu_custom_call.1} parent=1 // pred_region
      _
    $region13: #{tpu_custom_call.1} parent=1 // pred_fallthru
      _
    // Predicated region
    $region14: #{tpu_custom_call.1} parent=1 // pred_check
      _
    $region15: #{tpu_custom_call.1} parent=1 // pred_check_branch
      %40 = sbr.rel (0) target = $region17
    $region16: #{tpu_custom_call.1} parent=1 // pred_region
      _
    $region17: #{tpu_custom_call.1} parent=1 // pred_fallthru
      _
    // Predicated region
    $region18: #{tpu_custom_call.1} parent=1 // pred_check
      _
    $region19: #{tpu_custom_call.1} parent=1 // pred_check_branch
      %42 = sbr.rel (0) target = $region21
    $region20: #{tpu_custom_call.1} parent=1 // pred_region
      _
    $region21: #{tpu_custom_call.1} parent=1 // pred_fallthru
      _
    // Predicated region
    $region22: #{tpu_custom_call.1} parent=1 // pred_check
      _
    $region23: #{tpu_custom_call.1} parent=1 // pred_check_branch
      %44 = sbr.rel (0) target = $region25
    $region24: #{tpu_custom_call.1} parent=1 // pred_region
      _
    $region25: #{tpu_custom_call.1} parent=1 // pred_fallthru
      _
    // Predicated region
    $region26: #{tpu_custom_call.1} parent=1 // pred_check
      _
    $region27: #{tpu_custom_call.1} parent=1 // pred_check_branch
      %46 = sbr.rel (0) target = $region29
    $region28: #{tpu_custom_call.1} parent=1 // pred_region
      _
    $region29: #{tpu_custom_call.1} parent=1 // pred_fallthru
      _
    // Predicated region
    $region30: #{tpu_custom_call.1} parent=1 // pred_check
      _
    $region31: #{tpu_custom_call.1} parent=1 // pred_check_branch
      %48 = sbr.rel (0) target = $region33
    $region32: #{tpu_custom_call.1} parent=1 // pred_region
      _
    $region33: #{tpu_custom_call.1} parent=1 // pred_fallthru
      _
    // Predicated region
    $region34: #{tpu_custom_call.1} parent=1 // pred_check
      _
    $region35: #{tpu_custom_call.1} parent=1 // pred_check_branch
      %50 = sbr.rel (0) target = $region37
    $region36: #{tpu_custom_call.1} parent=1 // pred_region
      _
    $region37: #{tpu_custom_call.1} parent=1 // pred_fallthru
      _
    // Predicated region
    $region38: #{tpu_custom_call.1} parent=1 // pred_check
      _
    $region39: #{tpu_custom_call.1} parent=1 // pred_check_branch
      %52 = sbr.rel (0) target = $region41
    $region40: #{tpu_custom_call.1} parent=1 // pred_region
      _
    $region41: #{tpu_custom_call.1} parent=1 // pred_fallthru
      _
    // Predicated region
    $region42: #{tpu_custom_call.1} parent=1 // pred_check
      _
    $region43: #{tpu_custom_call.1} parent=1 // pred_check_branch
      %54 = sbr.rel (0) target = $region45
    $region44: #{tpu_custom_call.1} parent=1 // pred_region
      _
    $region45: #{tpu_custom_call.1} parent=1 // pred_fallthru
      _
    // Predicated region
    $region46: #{tpu_custom_call.1} parent=1 // pred_check
      _
    $region47: #{tpu_custom_call.1} parent=1 // pred_check_branch
      %56 = sbr.rel (0) target = $region49
    $region48: #{tpu_custom_call.1} parent=1 // pred_region
      _
    $region49: #{tpu_custom_call.1} parent=1 // pred_fallthru
      _
    // Predicated region
    $region50: #{tpu_custom_call.1} parent=1 // pred_check
      _
    $region51: #{tpu_custom_call.1} parent=1 // pred_check_branch
      %58 = sbr.rel (0) target = $region53
    $region52: #{tpu_custom_call.1} parent=1 // pred_region
      _
    $region53: #{tpu_custom_call.1} parent=1 // pred_fallthru
      _
    // Predicated region
    $region54: #{tpu_custom_call.1} parent=1 // pred_check
      _
    $region55: #{tpu_custom_call.1} parent=1 // pred_check_branch
      %60 = sbr.rel (0) target = $region57
    $region56: #{tpu_custom_call.1} parent=1 // pred_region
      _
    $region57: #{tpu_custom_call.1} parent=1 // pred_fallthru
      _
    // Predicated region
    $region58: #{tpu_custom_call.1} parent=1 // pred_check
      _
    $region59: #{tpu_custom_call.1} parent=1 // pred_check_branch
      %62 = sbr.rel (0) target = $region61
    $region60: #{tpu_custom_call.1} parent=1 // pred_region
      _
    $region61: #{tpu_custom_call.1} parent=1 // pred_fallthru
      _
    // Predicated region
    $region62: #{tpu_custom_call.1} parent=1 // pred_check
      _
    $region63: #{tpu_custom_call.1} parent=1 // pred_check_branch
      %64 = sbr.rel (0) target = $region65
    $region64: #{tpu_custom_call.1} parent=1 // pred_region
      _
    $region65: #{tpu_custom_call.1} parent=1 // pred_fallthru
      _
    // Predicated region
    $region66: #{tpu_custom_call.1} parent=1 // pred_check
      _
    $region67: #{tpu_custom_call.1} parent=1 // pred_check_branch
      %66 = sbr.rel (0) target = $region69
    $region68: #{tpu_custom_call.1} parent=1 // pred_region
      _
    $region69: #{tpu_custom_call.1} parent=1 // pred_fallthru
      _
    // Predicated region
    $region70: #{tpu_custom_call.1} parent=1 // pred_check
      _
    $region71: #{tpu_custom_call.1} parent=1 // pred_check_branch
      %68 = sbr.rel (0) target = $region73
    $region72: #{tpu_custom_call.1} parent=1 // pred_region
      _
    $region73: #{tpu_custom_call.1} parent=1 // pred_fallthru
      _
    // Predicated region
    $region74: #{tpu_custom_call.1} parent=1 // pred_check
      _
    $region75: #{tpu_custom_call.1} parent=1 // pred_check_branch
      %70 = sbr.rel (0) target = $region77
    $region76: #{tpu_custom_call.1} parent=1 // pred_region
      _
    $region77: #{tpu_custom_call.1} parent=1 // pred_fallthru
      _
    // Predicated region
    $region78: #{tpu_custom_call.1} parent=1 // pred_check
      _
    $region79: #{tpu_custom_call.1} parent=1 // pred_check_branch
      %72 = sbr.rel (0) target = $region81
    $region80: #{tpu_custom_call.1} parent=1 // pred_region
      _
    $region81: #{tpu_custom_call.1} parent=1 // pred_fallthru
      _
    // Predicated region
    $region82: #{tpu_custom_call.1} parent=1 // pred_check
      _
    $region83: #{tpu_custom_call.1} parent=1 // pred_check_branch
      %74 = sbr.rel (0) target = $region85
    $region84: #{tpu_custom_call.1} parent=1 // pred_region
      _
    $region85: #{tpu_custom_call.1} parent=1 // pred_fallthru
      _
    // Predicated region
    $region86: #{tpu_custom_call.1} parent=1 // pred_check
      _
    $region87: #{tpu_custom_call.1} parent=1 // pred_check_branch
      %76 = sbr.rel (0) target = $region89
    $region88: #{tpu_custom_call.1} parent=1 // pred_region
      _
    $region89: #{tpu_custom_call.1} parent=1 // pred_fallthru
      _
    %v77 = vld [vmem:[%s0] sm:$0xff]
    %v78 = vld [vmem:[%s0 + $0x8] sm:$0xff]
    %v79 = vld [vmem:[%s1] sm:$0xff]
    %v80 = vld [vmem:[%s1 + $0x8] sm:$0xff]
    %v81 = vld [vmem:[%s1 + $0x10] sm:$0xff]
    %v82 = vld [vmem:[%s1 + $0x18] sm:$0xff]
    %v83 = vld [vmem:[%s1 + $0x20] sm:$0xff]
    %v84 = vld [vmem:[%s1 + $0x28] sm:$0xff]
    %v85 = vld [vmem:[%s1 + $0x30] sm:$0xff]
    %v86 = vld [vmem:[%s1 + $0x38] sm:$0xff]
    %v87 = vld [vmem:[%s1 + $0x40] sm:$0xff]
    %v88 = vld [vmem:[%s1 + $0x48] sm:$0xff]
    %v89 = vld [vmem:[%s1 + $0x50] sm:$0xff]
    %v90 = vld [vmem:[%s1 + $0x58] sm:$0xff]
    %v91 = vld [vmem:[%s1 + $0x60] sm:$0xff]
    %v92 = vld [vmem:[%s1 + $0x68] sm:$0xff]
    %v93 = vld [vmem:[%s1 + $0x70] sm:$0xff]
    %v94 = vld [vmem:[%s1 + $0x78] sm:$0xff]
    %v95 = vld [vmem:[%s2] sm:$0x3]
    %v96 = vlaneseq
    %v97 = vand.u32 %v96, 127
    %vm98 = vcmp.ge.s32.totalorder %v97, 64
    %v99 = vsub.s32 %v97, 64
    %v100 = vsel %vm98, %v99, %v97
    %vm101 = vcmp.ge.s32.totalorder %v100, 1
    %vm102 = vcmp.lt.s32.totalorder %v100, 63
    %vm103 = vcmp.ge.s32.totalorder %v100, 2
    %vm104 = vcmp.lt.s32.totalorder %v100, 62
    %vm105 = vcmp.ge.s32.totalorder %v100, 4
    %vm106 = vcmp.lt.s32.totalorder %v100, 60
    %v107 = vld [vmem:[%s3] sm:$0xff]
    %v108 = vld [vmem:[%s3 + $0x8] sm:$0xff]
    %v109 = vld [vmem:[%s4] sm:$0xff]
    %v110 = vld [vmem:[%s4 + $0x8] sm:$0xff]
    %v111 = vadd.f32 %v77, %v78
    %v112 = vrot.slane %v111, 4
    %v113 = vadd.f32 %v111, %v112
    %v114 = vrot.slane %v113, 2
    %v115 = vadd.f32 %v113, %v114
    %v116 = vrot.slane %v115, 1
    %v117 = vadd.f32 %v115, %v116
    %v118 = vmul.f32 %v77, %v77
    %v119 = vmul.f32 %v78, %v78
    %v120 = vadd.f32 %v118, %v119
    %v121 = vrot.slane %v120, 4
    %v122 = vadd.f32 %v120, %v121
    %v123 = vrot.slane %v122, 2
    %v124 = vadd.f32 %v122, %v123
    %v125 = vrot.slane %v124, 1
    %v126 = vadd.f32 %v124, %v125
    %vm127 = vcmask 1040384
    %v128 = vsel %vm127, %v117, %v126
    %129 = vmatprep.subr.mxu0 0.0
    %130 = vmatpush1.msra.mxu0 %v79
    %131 = vmatprep.subr.mxu0 0.0
    %132 = vmatpush1.msra.mxu0 %v80
    %133 = vmatprep.subr.mxu0 0.0
    %134 = vmatpush1.msra.mxu0 %v81
    %135 = vmatprep.subr.mxu0 0.0
    %136 = vmatpush1.msra.mxu0 %v82
    %137 = vmatprep.subr.mxu0 0.0
    %138 = vmatpush1.msra.mxu0 %v83
    %139 = vmatprep.subr.mxu0 0.0
    %140 = vmatpush1.msra.mxu0 %v84
    %141 = vmatprep.subr.mxu0 0.0
    %142 = vmatpush1.msra.mxu0 %v85
    %143 = vmatprep.subr.mxu0 0.0
    %144 = vmatpush1.msra.mxu0 %v86
    %145 = vmatprep.subr.mxu0 0.0
    %146 = vmatpush1.msra.mxu0 %v87
    %147 = vmatprep.subr.mxu0 0.0
    %148 = vmatpush1.msra.mxu0 %v88
    %149 = vmatprep.subr.mxu0 0.0
    %150 = vmatpush1.msra.mxu0 %v89
    %151 = vmatprep.subr.mxu0 0.0
    %152 = vmatpush1.msra.mxu0 %v90
    %153 = vmatprep.subr.mxu0 0.0
    %154 = vmatpush1.msra.mxu0 %v91
    %155 = vmatprep.subr.mxu0 0.0
    %156 = vmatpush1.msra.mxu0 %v92
    %157 = vmatprep.subr.mxu0 0.0
    %158 = vmatpush1.msra.mxu0 %v93
    %159 = vmatprep.subr.mxu0 0.0
    %160 = vmatpush1.msra.mxu0 %v94
    %161 = vmatprep.subr.mxu0 0.0
    %162 = vmatpush1.msra.mxu0 0.0
    %163 = vmatprep.subr.mxu0 0.0
    %164 = vmatpush1.msra.mxu0 0.0
    %165 = vmatprep.subr.mxu0 0.0
    %166 = vmatpush1.msra.mxu0 0.0
    %167 = vmatprep.subr.mxu0 0.0
    %168 = vmatpush1.msra.mxu0 0.0
    %169 = vmatprep.subr.mxu0 0.0
    %170 = vmatpush1.msra.mxu0 0.0
    %171 = vmatprep.subr.mxu0 0.0
    %172 = vmatpush1.msra.mxu0 0.0
    %173 = vmatprep.subr.mxu0 0.0
    %174 = vmatpush1.msra.mxu0 0.0
    %175 = vmatprep.subr.mxu0 0.0
    %176 = vmatpush1.msra.mxu0 0.0
    %177 = vmatprep.subr.mxu0 0.0
    %178 = vmatpush1.msra.mxu0 0.0
    %179 = vmatprep.subr.mxu0 0.0
    %180 = vmatpush1.msra.mxu0 0.0
    %181 = vmatprep.subr.mxu0 0.0
    %182 = vmatpush1.msra.mxu0 0.0
    %183 = vmatprep.subr.mxu0 0.0
    %184 = vmatpush1.msra.mxu0 0.0
    %185 = vmatprep.subr.mxu0 0.0
    %186 = vmatpush1.msra.mxu0 0.0
    %187 = vmatprep.subr.mxu0 0.0
    %188 = vmatpush1.msra.mxu0 0.0
    %189 = vmatprep.subr.mxu0 0.0
    %190 = vmatpush1.msra.mxu0 0.0
    %191 = vmatprep.subr.mxu0 0.0
    %192 = vmatpush1.msra.mxu0 0.0
    %193 = vmatprep.mubr.f32.mxu0 0.0
    %194 = vmatmul.mubr.f32.gmra.mrb[0].mxu0 %v128
    %v195 = vpop.f32.mrb[0].mxu0
    %v196 = vadd.f32 0.0, %v195
    %v197 = vpop.f32.mrb[0].mxu0
    %198 = vdwg.mxu0
    %v199 = vmul.f32 %v196, 0.0009765625
    %vm200 = vcmask 15360
    %v202 = vsel %vm200, %v199, 0
    %vm204 = vcmask 1041408
    %v206 = vsel %vm204, %v95, 0
    %208 = vmatprep.subr.mxu0 0.0
    %209 = vmatpush1.msra.mxu0 %v206
    %210 = vmatprep.subr.mxu0 0.0
    %211 = vmatpush1.msra.mxu0 0.0
    %212 = vmatprep.subr.mxu0 0.0
    %213 = vmatpush1.msra.mxu0 0.0
    %214 = vmatprep.subr.mxu0 0.0
    %215 = vmatpush1.msra.mxu0 0.0
    %216 = vmatprep.subr.mxu0 0.0
    %217 = vmatpush1.msra.mxu0 0.0
    %218 = vmatprep.subr.mxu0 0.0
    %219 = vmatpush1.msra.mxu0 0.0
    %220 = vmatprep.subr.mxu0 0.0
    %221 = vmatpush1.msra.mxu0 0.0
    %222 = vmatprep.subr.mxu0 0.0
    %223 = vmatpush1.msra.mxu0 0.0
    %224 = vmatprep.subr.mxu0 0.0
    %225 = vmatpush1.msra.mxu0 0.0
    %226 = vmatprep.subr.mxu0 0.0
    %227 = vmatpush1.msra.mxu0 0.0
    %228 = vmatprep.subr.mxu0 0.0
    %229 = vmatpush1.msra.mxu0 0.0
    %230 = vmatprep.subr.mxu0 0.0
    %231 = vmatpush1.msra.mxu0 0.0
    %232 = vmatprep.subr.mxu0 0.0
    %233 = vmatpush1.msra.mxu0 0.0
    %234 = vmatprep.subr.mxu0 0.0
    %235 = vmatpush1.msra.mxu0 0.0
    %236 = vmatprep.subr.mxu0 0.0
    %237 = vmatpush1.msra.mxu0 0.0
    %238 = vmatprep.subr.mxu0 0.0
    %239 = vmatpush1.msra.mxu0 0.0
    %240 = vmatprep.subr.mxu0 0.0
    %241 = vmatpush1.msra.mxu0 0.0
    %242 = vmatprep.subr.mxu0 0.0
    %243 = vmatpush1.msra.mxu0 0.0
    %244 = vmatprep.subr.mxu0 0.0
    %245 = vmatpush1.msra.mxu0 0.0
    %246 = vmatprep.subr.mxu0 0.0
    %247 = vmatpush1.msra.mxu0 0.0
    %248 = vmatprep.subr.mxu0 0.0
    %249 = vmatpush1.msra.mxu0 0.0
    %250 = vmatprep.subr.mxu0 0.0
    %251 = vmatpush1.msra.mxu0 0.0
    %252 = vmatprep.subr.mxu0 0.0
    %253 = vmatpush1.msra.mxu0 0.0
    %254 = vmatprep.subr.mxu0 0.0
    %255 = vmatpush1.msra.mxu0 0.0
    %256 = vmatprep.subr.mxu0 0.0
    %257 = vmatpush1.msra.mxu0 0.0
    %258 = vmatprep.subr.mxu0 0.0
    %259 = vmatpush1.msra.mxu0 0.0
    %260 = vmatprep.subr.mxu0 0.0
    %261 = vmatpush1.msra.mxu0 0.0
    %262 = vmatprep.subr.mxu0 0.0
    %263 = vmatpush1.msra.mxu0 0.0
    %264 = vmatprep.subr.mxu0 0.0
    %265 = vmatpush1.msra.mxu0 0.0
    %266 = vmatprep.subr.mxu0 0.0
    %267 = vmatpush1.msra.mxu0 0.0
    %268 = vmatprep.subr.mxu0 0.0
    %269 = vmatpush1.msra.mxu0 0.0
    %270 = vmatprep.subr.mxu0 0.0
    %271 = vmatpush1.msra.mxu0 0.0
    %272 = vmatprep.mubr.f32.mxu0 0.0
    %273 = vmatmul.mubr.f32.gmra.mrb[0].mxu0 %v202
    %v274 = vpop.f32.mrb[0].mxu0
    %v275 = vadd.f32 0.0, %v274
    %v276 = vpop.f32.mrb[0].mxu0
    %277 = vdwg.mxu0
    %v278 = vmul.f32 %v275, %v275
    %v280 = vrot.slane %v278, 7
    %v282 = vsub.f32 %v275, %v280
    %v283 = vmax.f32 %v282, 0.0
    %v284 = vadd.f32 %v283, 1e-08
    %v285 = vrsqrt.pop %v284
    %287 = vset.pattern.permute.xlu0 0
    %288 = vperm.xlu0 %287, %v107
    %v289 = vpop.permute.xlu0 %288
    %292 = vset.pattern.permute.xlu0 0
    %293 = vperm.xlu0 %292, %v108
    %v294 = vpop.permute.xlu0 %293
    %v296 = vlaneseq
    %v297 = vshrl.u32 %v296, 7
    %v298 = vsub.s32 1, %v297
    %v299 = vrot.slane %v285, %v298
    %v300 = vmul.f32 %v289, %v299
    %v301 = vmul.f32 %v294, %v299
    %v302 = vmul.f32 %v77, %v300
    %v303 = vmul.f32 %v78, %v301
    %v304 = vlaneseq
    %v305 = vshrl.u32 %v304, 7
    %v306 = vsub.s32 0, %v305
    %v307 = vrot.slane %v275, %v306
    %v308 = vmul.f32 %v307, %v300
    %v309 = vmul.f32 %v307, %v301
    %311 = vset.pattern.permute.xlu0 0
    %312 = vperm.xlu0 %311, %v109
    %v313 = vpop.permute.xlu0 %312
    %316 = vset.pattern.permute.xlu0 0
    %317 = vperm.xlu0 %316, %v110
    %v318 = vpop.permute.xlu0 %317
    %v320 = vsub.f32 %v313, %v308
    %v321 = vsub.f32 %v318, %v309
    %v322 = vadd.f32 %v302, %v320
    %v323 = vadd.f32 %v303, %v321
    %v324 = vld [vmem:[%s5] sm:$0xff]
    %v325 = vld [vmem:[%s5 + $0x8] sm:$0xff]
    %v326 = vld [vmem:[%s5 + $0x10] sm:$0xff]
    %v327 = vld [vmem:[%s5 + $0x18] sm:$0xff]
    %v328 = vld [vmem:[%s6] sm:$0xff]
    %v329 = vld [vmem:[%s6 + $0x8] sm:$0xff]
    %v330 = vld [vmem:[%s6 + $0x10] sm:$0xff]
    %v331 = vld [vmem:[%s6 + $0x18] sm:$0xff]
    %333 = vset.pattern.permute.xlu0 0
    %334 = vperm.xlu0 %333, %v328
    %v335 = vpop.permute.xlu0 %334
    %338 = vset.pattern.permute.xlu0 0
    %339 = vperm.xlu0 %338, %v329
    %v340 = vpop.permute.xlu0 %339
    %343 = vset.pattern.permute.xlu0 0
    %344 = vperm.xlu0 %343, %v330
    %v345 = vpop.permute.xlu0 %344
    %348 = vset.pattern.permute.xlu0 0
    %349 = vperm.xlu0 %348, %v331
    %v350 = vpop.permute.xlu0 %349
    %vm352 = vcmask 130048
    %v354 = vsel %vm352, %v324, 0
    %v357 = vsel %vm352, %v325, 0
    %v360 = vsel %vm352, %v326, 0
    %v363 = vsel %vm352, %v327, 0
    %365 = vmatprep.subr.mxu0 0.0
    %366 = vmatpush1.msra.mxu0 %v322
    %367 = vmatprep.subr.mxu0 0.0
    %368 = vmatpush1.msra.mxu0 %v323
    %369 = vmatprep.subr.mxu0 0.0
    %370 = vmatpush1.msra.mxu0 0.0
    %371 = vmatprep.subr.mxu0 0.0
    %372 = vmatpush1.msra.mxu0 0.0
    %373 = vmatprep.subr.mxu0 0.0
    %374 = vmatpush1.msra.mxu0 0.0
    %375 = vmatprep.subr.mxu0 0.0
    %376 = vmatpush1.msra.mxu0 0.0
    %377 = vmatprep.subr.mxu0 0.0
    %378 = vmatpush1.msra.mxu0 0.0
    %379 = vmatprep.subr.mxu0 0.0
    %380 = vmatpush1.msra.mxu0 0.0
    %381 = vmatprep.subr.mxu0 0.0
    %382 = vmatpush1.msra.mxu0 0.0
    %383 = vmatprep.subr.mxu0 0.0
    %384 = vmatpush1.msra.mxu0 0.0
    %385 = vmatprep.subr.mxu0 0.0
    %386 = vmatpush1.msra.mxu0 0.0
    %387 = vmatprep.subr.mxu0 0.0
    %388 = vmatpush1.msra.mxu0 0.0
    %389 = vmatprep.subr.mxu0 0.0
    %390 = vmatpush1.msra.mxu0 0.0
    %391 = vmatprep.subr.mxu0 0.0
    %392 = vmatpush1.msra.mxu0 0.0
    %393 = vmatprep.subr.mxu0 0.0
    %394 = vmatpush1.msra.mxu0 0.0
    %395 = vmatprep.subr.mxu0 0.0
    %396 = vmatpush1.msra.mxu0 0.0
    %397 = vmatprep.subr.mxu0 0.0
    %398 = vmatpush1.msra.mxu0 0.0
    %399 = vmatprep.subr.mxu0 0.0
    %400 = vmatpush1.msra.mxu0 0.0
    %401 = vmatprep.subr.mxu0 0.0
    %402 = vmatpush1.msra.mxu0 0.0
    %403 = vmatprep.subr.mxu0 0.0
    %404 = vmatpush1.msra.mxu0 0.0
    %405 = vmatprep.subr.mxu0 0.0
    %406 = vmatpush1.msra.mxu0 0.0
    %407 = vmatprep.subr.mxu0 0.0
    %408 = vmatpush1.msra.mxu0 0.0
    %409 = vmatprep.subr.mxu0 0.0
    %410 = vmatpush1.msra.mxu0 0.0
    %411 = vmatprep.subr.mxu0 0.0
    %412 = vmatpush1.msra.mxu0 0.0
    %413 = vmatprep.subr.mxu0 0.0
    %414 = vmatpush1.msra.mxu0 0.0
    %415 = vmatprep.subr.mxu0 0.0
    %416 = vmatpush1.msra.mxu0 0.0
    %417 = vmatprep.subr.mxu0 0.0
    %418 = vmatpush1.msra.mxu0 0.0
    %419 = vmatprep.subr.mxu0 0.0
    %420 = vmatpush1.msra.mxu0 0.0
    %421 = vmatprep.subr.mxu0 0.0
    %422 = vmatpush1.msra.mxu0 0.0
    %423 = vmatprep.subr.mxu0 0.0
    %424 = vmatpush1.msra.mxu0 0.0
    %425 = vmatprep.subr.mxu0 0.0
    %426 = vmatpush1.msra.mxu0 0.0
    %427 = vmatprep.subr.mxu0 0.0
    %428 = vmatpush1.msra.mxu0 0.0
    %429 = vmatprep.mubr.f32.mxu0 0.0
    %430 = vmatmul.mubr.f32.gmra.mrb[0].mxu0 %v354
    %v431 = vpop.f32.mrb[0].mxu0
    %v432 = vadd.f32 %v335, %v431
    %v433 = vpop.f32.mrb[0].mxu0
    %434 = vmatprep.mubr.f32.mxu0 0.0
    %435 = vmatmul.mubr.f32.gmra.mrb[0].mxu0 %v357
    %v436 = vpop.f32.mrb[0].mxu0
    %v437 = vadd.f32 %v340, %v436
    %v438 = vpop.f32.mrb[0].mxu0
    %439 = vmatprep.mubr.f32.mxu0 0.0
    %440 = vmatmul.mubr.f32.gmra.mrb[0].mxu0 %v360
    %v441 = vpop.f32.mrb[0].mxu0
    %v442 = vadd.f32 %v345, %v441
    %v443 = vpop.f32.mrb[0].mxu0
    %444 = vmatprep.mubr.f32.mxu0 0.0
    %445 = vmatmul.mubr.f32.gmra.mrb[0].mxu0 %v363
    %v446 = vpop.f32.mrb[0].mxu0
    %v447 = vadd.f32 %v350, %v446
    %v448 = vpop.f32.mrb[0].mxu0
    %449 = vdwg.mxu0
    %v450 = vld [vmem:[%s7] sm:$0xff]
    %v451 = vld [vmem:[%s7 + $0x8] sm:$0xff]
    %v452 = vld [vmem:[%s7 + $0x10] sm:$0xff]
    %v453 = vld [vmem:[%s7 + $0x18] sm:$0xff]
    %v454 = vld [vmem:[%s7 + $0x20] sm:$0xff]
    %v455 = vld [vmem:[%s7 + $0x28] sm:$0xff]
    %v456 = vld [vmem:[%s7 + $0x30] sm:$0xff]
    %v457 = vld [vmem:[%s7 + $0x38] sm:$0xff]
    %v458 = vld [vmem:[%s8] sm:$0xff]
    %v459 = vld [vmem:[%s8 + $0x8] sm:$0xff]
    %v460 = vld [vmem:[%s8 + $0x10] sm:$0xff]
    %v461 = vld [vmem:[%s8 + $0x18] sm:$0xff]
    %v462 = vld [vmem:[%s8 + $0x20] sm:$0xff]
    %v463 = vld [vmem:[%s8 + $0x28] sm:$0xff]
    %v464 = vld [vmem:[%s8 + $0x30] sm:$0xff]
    %v465 = vld [vmem:[%s8 + $0x38] sm:$0xff]
    %467 = vset.pattern.permute.xlu0 0
    %468 = vperm.xlu0 %467, %v458
    %v469 = vpop.permute.xlu0 %468
    %472 = vset.pattern.permute.xlu0 0
    %473 = vperm.xlu0 %472, %v459
    %v474 = vpop.permute.xlu0 %473
    %477 = vset.pattern.permute.xlu0 0
    %478 = vperm.xlu0 %477, %v460
    %v479 = vpop.permute.xlu0 %478
    %482 = vset.pattern.permute.xlu0 0
    %483 = vperm.xlu0 %482, %v461
    %v484 = vpop.permute.xlu0 %483
    %487 = vset.pattern.permute.xlu0 0
    %488 = vperm.xlu0 %487, %v462
    %v489 = vpop.permute.xlu0 %488
    %492 = vset.pattern.permute.xlu0 0
    %493 = vperm.xlu0 %492, %v463
    %v494 = vpop.permute.xlu0 %493
    %497 = vset.pattern.permute.xlu0 0
    %498 = vperm.xlu0 %497, %v464
    %v499 = vpop.permute.xlu0 %498
    %502 = vset.pattern.permute.xlu0 0
    %503 = vperm.xlu0 %502, %v465
    %v504 = vpop.permute.xlu0 %503
    %vm506 = vcmask 261120
    %v508 = vsel %vm506, %v450, 0
    %v511 = vsel %vm506, %v451, 0
    %v514 = vsel %vm506, %v452, 0
    %v517 = vsel %vm506, %v453, 0
    %v520 = vsel %vm506, %v454, 0
    %v523 = vsel %vm506, %v455, 0
    %v526 = vsel %vm506, %v456, 0
    %v529 = vsel %vm506, %v457, 0
    %531 = vmatprep.subr.mxu0 0.0
    %532 = vmatpush1.msra.mxu0 %v432
    %533 = vmatprep.subr.mxu0 0.0
    %534 = vmatpush1.msra.mxu0 %v437
    %535 = vmatprep.subr.mxu0 0.0
    %536 = vmatpush1.msra.mxu0 %v442
    %537 = vmatprep.subr.mxu0 0.0
    %538 = vmatpush1.msra.mxu0 %v447
    %539 = vmatprep.subr.mxu0 0.0
    %540 = vmatpush1.msra.mxu0 0.0
    %541 = vmatprep.subr.mxu0 0.0
    %542 = vmatpush1.msra.mxu0 0.0
    %543 = vmatprep.subr.mxu0 0.0
    %544 = vmatpush1.msra.mxu0 0.0
    %545 = vmatprep.subr.mxu0 0.0
    %546 = vmatpush1.msra.mxu0 0.0
    %547 = vmatprep.subr.mxu0 0.0
    %548 = vmatpush1.msra.mxu0 0.0
    %549 = vmatprep.subr.mxu0 0.0
    %550 = vmatpush1.msra.mxu0 0.0
    %551 = vmatprep.subr.mxu0 0.0
    %552 = vmatpush1.msra.mxu0 0.0
    %553 = vmatprep.subr.mxu0 0.0
    %554 = vmatpush1.msra.mxu0 0.0
    %555 = vmatprep.subr.mxu0 0.0
    %556 = vmatpush1.msra.mxu0 0.0
    %557 = vmatprep.subr.mxu0 0.0
    %558 = vmatpush1.msra.mxu0 0.0
    %559 = vmatprep.subr.mxu0 0.0
    %560 = vmatpush1.msra.mxu0 0.0
    %561 = vmatprep.subr.mxu0 0.0
    %562 = vmatpush1.msra.mxu0 0.0
    %563 = vmatprep.subr.mxu0 0.0
    %564 = vmatpush1.msra.mxu0 0.0
    %565 = vmatprep.subr.mxu0 0.0
    %566 = vmatpush1.msra.mxu0 0.0
    %567 = vmatprep.subr.mxu0 0.0
    %568 = vmatpush1.msra.mxu0 0.0
    %569 = vmatprep.subr.mxu0 0.0
    %570 = vmatpush1.msra.mxu0 0.0
    %571 = vmatprep.subr.mxu0 0.0
    %572 = vmatpush1.msra.mxu0 0.0
    %573 = vmatprep.subr.mxu0 0.0
    %574 = vmatpush1.msra.mxu0 0.0
    %575 = vmatprep.subr.mxu0 0.0
    %576 = vmatpush1.msra.mxu0 0.0
    %577 = vmatprep.subr.mxu0 0.0
    %578 = vmatpush1.msra.mxu0 0.0
    %579 = vmatprep.subr.mxu0 0.0
    %580 = vmatpush1.msra.mxu0 0.0
    %581 = vmatprep.subr.mxu0 0.0
    %582 = vmatpush1.msra.mxu0 0.0
    %583 = vmatprep.subr.mxu0 0.0
    %584 = vmatpush1.msra.mxu0 0.0
    %585 = vmatprep.subr.mxu0 0.0
    %586 = vmatpush1.msra.mxu0 0.0
    %587 = vmatprep.subr.mxu0 0.0
    %588 = vmatpush1.msra.mxu0 0.0
    %589 = vmatprep.subr.mxu0 0.0
    %590 = vmatpush1.msra.mxu0 0.0
    %591 = vmatprep.subr.mxu0 0.0
    %592 = vmatpush1.msra.mxu0 0.0
    %593 = vmatprep.subr.mxu0 0.0
    %594 = vmatpush1.msra.mxu0 0.0
    %595 = vmatprep.mubr.f32.mxu0 0.0
    %596 = vmatmul.mubr.f32.gmra.mrb[0].mxu0 %v508
    %v597 = vpop.f32.mrb[0].mxu0
    %v598 = vadd.f32 %v469, %v597
    %v599 = vpop.f32.mrb[0].mxu0
    %600 = vmatprep.mubr.f32.mxu0 0.0
    %601 = vmatmul.mubr.f32.gmra.mrb[0].mxu0 %v511
    %v602 = vpop.f32.mrb[0].mxu0
    %v603 = vadd.f32 %v474, %v602
    %v604 = vpop.f32.mrb[0].mxu0
    %605 = vmatprep.mubr.f32.mxu0 0.0
    %606 = vmatmul.mubr.f32.gmra.mrb[0].mxu0 %v514
    %v607 = vpop.f32.mrb[0].mxu0
    %v608 = vadd.f32 %v479, %v607
    %v609 = vpop.f32.mrb[0].mxu0
    %610 = vmatprep.mubr.f32.mxu0 0.0
    %611 = vmatmul.mubr.f32.gmra.mrb[0].mxu0 %v517
    %v612 = vpop.f32.mrb[0].mxu0
    %v613 = vadd.f32 %v484, %v612
    %v614 = vpop.f32.mrb[0].mxu0
    %615 = vmatprep.mubr.f32.mxu0 0.0
    %616 = vmatmul.mubr.f32.gmra.mrb[0].mxu0 %v520
    %v617 = vpop.f32.mrb[0].mxu0
    %v618 = vadd.f32 %v489, %v617
    %v619 = vpop.f32.mrb[0].mxu0
    %620 = vmatprep.mubr.f32.mxu0 0.0
    %621 = vmatmul.mubr.f32.gmra.mrb[0].mxu0 %v523
    %v622 = vpop.f32.mrb[0].mxu0
    %v623 = vadd.f32 %v494, %v622
    %v624 = vpop.f32.mrb[0].mxu0
    %625 = vmatprep.mubr.f32.mxu0 0.0
    %626 = vmatmul.mubr.f32.gmra.mrb[0].mxu0 %v526
    %v627 = vpop.f32.mrb[0].mxu0
    %v628 = vadd.f32 %v499, %v627
    %v629 = vpop.f32.mrb[0].mxu0
    %630 = vmatprep.mubr.f32.mxu0 0.0
    %631 = vmatmul.mubr.f32.gmra.mrb[0].mxu0 %v529
    %v632 = vpop.f32.mrb[0].mxu0
    %v633 = vadd.f32 %v504, %v632
    %v634 = vpop.f32.mrb[0].mxu0
    %635 = vdwg.mxu0
    %v636 = vld [vmem:[%s9] sm:$0x1]
    %v637 = vmax.f32 %v598, 0.0
    %v638 = vmax.f32 %v603, 0.0
    %v639 = vmax.f32 %v608, 0.0
    %v640 = vmax.f32 %v613, 0.0
    %v641 = vmax.f32 %v618, 0.0
    %v642 = vmax.f32 %v623, 0.0
    %v643 = vmax.f32 %v628, 0.0
    %v644 = vmax.f32 %v633, 0.0
    %v645 = vmin.f32 %v598, 0.0
    %v646 = vmin.f32 %v603, 0.0
    %v647 = vmin.f32 %v608, 0.0
    %v648 = vmin.f32 %v613, 0.0
    %v649 = vmin.f32 %v618, 0.0
    %v650 = vmin.f32 %v623, 0.0
    %v651 = vmin.f32 %v628, 0.0
    %v652 = vmin.f32 %v633, 0.0
    %v654 = vlaneseq
    %v655 = vshrl.u32 %v654, 7
    %v656 = vsub.s32 0, %v655
    %v657 = vrot.slane %v636, %v656
    %658 = vset.pattern.permute.xlu0 0
    %659 = vperm.xlu0 %658, %v657
    %v660 = vpop.permute.xlu0 %659
    %v662 = vmul.f32 %v660, %v645
    %v663 = vmul.f32 %v660, %v646
    %v664 = vmul.f32 %v660, %v647
    %v665 = vmul.f32 %v660, %v648
    %v666 = vmul.f32 %v660, %v649
    %v667 = vmul.f32 %v660, %v650
    %v668 = vmul.f32 %v660, %v651
    %v669 = vmul.f32 %v660, %v652
    %v670 = vadd.f32 %v637, %v662
    %v671 = vadd.f32 %v638, %v663
    %v672 = vadd.f32 %v639, %v664
    %v673 = vadd.f32 %v640, %v665
    %v674 = vadd.f32 %v641, %v666
    %v675 = vadd.f32 %v642, %v667
    %v676 = vadd.f32 %v643, %v668
    %v677 = vadd.f32 %v644, %v669
    %v678 = vld [vmem:[%s10] sm:$0xff]
    %v679 = vld [vmem:[%s10 + $0x8] sm:$0xff]
    %v680 = vld [vmem:[%s10 + $0x10] sm:$0xff]
    %v681 = vld [vmem:[%s10 + $0x18] sm:$0xff]
    %v682 = vld [vmem:[%s10 + $0x20] sm:$0xff]
    %v683 = vld [vmem:[%s10 + $0x28] sm:$0xff]
    %v684 = vld [vmem:[%s10 + $0x30] sm:$0xff]
    %v685 = vld [vmem:[%s10 + $0x38] sm:$0xff]
    %v686 = vld [vmem:[%s11] sm:$0xff]
    %v687 = vld [vmem:[%s11 + $0x8] sm:$0xff]
    %v688 = vld [vmem:[%s11 + $0x10] sm:$0xff]
    %v689 = vld [vmem:[%s11 + $0x18] sm:$0xff]
    %v690 = vld [vmem:[%s11 + $0x20] sm:$0xff]
    %v691 = vld [vmem:[%s11 + $0x28] sm:$0xff]
    %v692 = vld [vmem:[%s11 + $0x30] sm:$0xff]
    %v693 = vld [vmem:[%s11 + $0x38] sm:$0xff]
    %v694 = vadd.f32 %v670, %v671
    %v695 = vadd.f32 %v694, %v672
    %v696 = vadd.f32 %v695, %v673
    %v697 = vadd.f32 %v696, %v674
    %v698 = vadd.f32 %v697, %v675
    %v699 = vadd.f32 %v698, %v676
    %v700 = vadd.f32 %v699, %v677
    %v701 = vrot.slane %v700, 4
    %v702 = vadd.f32 %v700, %v701
    %v703 = vrot.slane %v702, 2
    %v704 = vadd.f32 %v702, %v703
    %v705 = vrot.slane %v704, 1
    %v706 = vadd.f32 %v704, %v705
    %v707 = vmul.f32 %v670, %v670
    %v708 = vmul.f32 %v671, %v671
    %v709 = vmul.f32 %v672, %v672
    %v710 = vmul.f32 %v673, %v673
    %v711 = vmul.f32 %v674, %v674
    %v712 = vmul.f32 %v675, %v675
    %v713 = vmul.f32 %v676, %v676
    %v714 = vmul.f32 %v677, %v677
    %v715 = vadd.f32 %v707, %v708
    %v716 = vadd.f32 %v715, %v709
    %v717 = vadd.f32 %v716, %v710
    %v718 = vadd.f32 %v717, %v711
    %v719 = vadd.f32 %v718, %v712
    %v720 = vadd.f32 %v719, %v713
    %v721 = vadd.f32 %v720, %v714
    %v722 = vrot.slane %v721, 4
    %v723 = vadd.f32 %v721, %v722
    %v724 = vrot.slane %v723, 2
    %v725 = vadd.f32 %v723, %v724
    %v726 = vrot.slane %v725, 1
    %v727 = vadd.f32 %v725, %v726
    %v728 = vsel %vm127, %v706, %v727
    %729 = vmatprep.subr.mxu0 0.0
    %730 = vmatpush1.msra.mxu0 %v79
    %731 = vmatprep.subr.mxu0 0.0
    %732 = vmatpush1.msra.mxu0 %v80
    %733 = vmatprep.subr.mxu0 0.0
    %734 = vmatpush1.msra.mxu0 %v81
    %735 = vmatprep.subr.mxu0 0.0
    %736 = vmatpush1.msra.mxu0 %v82
    %737 = vmatprep.subr.mxu0 0.0
    %738 = vmatpush1.msra.mxu0 %v83
    %739 = vmatprep.subr.mxu0 0.0
    %740 = vmatpush1.msra.mxu0 %v84
    %741 = vmatprep.subr.mxu0 0.0
    %742 = vmatpush1.msra.mxu0 %v85
    %743 = vmatprep.subr.mxu0 0.0
    %744 = vmatpush1.msra.mxu0 %v86
    %745 = vmatprep.subr.mxu0 0.0
    %746 = vmatpush1.msra.mxu0 %v87
    %747 = vmatprep.subr.mxu0 0.0
    %748 = vmatpush1.msra.mxu0 %v88
    %749 = vmatprep.subr.mxu0 0.0
    %750 = vmatpush1.msra.mxu0 %v89
    %751 = vmatprep.subr.mxu0 0.0
    %752 = vmatpush1.msra.mxu0 %v90
    %753 = vmatprep.subr.mxu0 0.0
    %754 = vmatpush1.msra.mxu0 %v91
    %755 = vmatprep.subr.mxu0 0.0
    %756 = vmatpush1.msra.mxu0 %v92
    %757 = vmatprep.subr.mxu0 0.0
    %758 = vmatpush1.msra.mxu0 %v93
    %759 = vmatprep.subr.mxu0 0.0
    %760 = vmatpush1.msra.mxu0 %v94
    %761 = vmatprep.subr.mxu0 0.0
    %762 = vmatpush1.msra.mxu0 0.0
    %763 = vmatprep.subr.mxu0 0.0
    %764 = vmatpush1.msra.mxu0 0.0
    %765 = vmatprep.subr.mxu0 0.0
    %766 = vmatpush1.msra.mxu0 0.0
    %767 = vmatprep.subr.mxu0 0.0
    %768 = vmatpush1.msra.mxu0 0.0
    %769 = vmatprep.subr.mxu0 0.0
    %770 = vmatpush1.msra.mxu0 0.0
    %771 = vmatprep.subr.mxu0 0.0
    %772 = vmatpush1.msra.mxu0 0.0
    %773 = vmatprep.subr.mxu0 0.0
    %774 = vmatpush1.msra.mxu0 0.0
    %775 = vmatprep.subr.mxu0 0.0
    %776 = vmatpush1.msra.mxu0 0.0
    %777 = vmatprep.subr.mxu0 0.0
    %778 = vmatpush1.msra.mxu0 0.0
    %779 = vmatprep.subr.mxu0 0.0
    %780 = vmatpush1.msra.mxu0 0.0
    %781 = vmatprep.subr.mxu0 0.0
    %782 = vmatpush1.msra.mxu0 0.0
    %783 = vmatprep.subr.mxu0 0.0
    %784 = vmatpush1.msra.mxu0 0.0
    %785 = vmatprep.subr.mxu0 0.0
    %786 = vmatpush1.msra.mxu0 0.0
    %787 = vmatprep.subr.mxu0 0.0
    %788 = vmatpush1.msra.mxu0 0.0
    %789 = vmatprep.subr.mxu0 0.0
    %790 = vmatpush1.msra.mxu0 0.0
    %791 = vmatprep.subr.mxu0 0.0
    %792 = vmatpush1.msra.mxu0 0.0
    %793 = vmatprep.mubr.f32.mxu0 0.0
    %794 = vmatmul.mubr.f32.gmra.mrb[0].mxu0 %v728
    %v795 = vpop.f32.mrb[0].mxu0
    %v796 = vadd.f32 0.0, %v795
    %v797 = vpop.f32.mrb[0].mxu0
    %798 = vdwg.mxu0
    %v799 = vmul.f32 %v796, 0.00024414063
    %v801 = vsel %vm200, %v799, 0
    %803 = vmatprep.subr.mxu0 0.0
    %804 = vmatpush1.msra.mxu0 %v206
    %805 = vmatprep.subr.mxu0 0.0
    %806 = vmatpush1.msra.mxu0 0.0
    %807 = vmatprep.subr.mxu0 0.0
    %808 = vmatpush1.msra.mxu0 0.0
    %809 = vmatprep.subr.mxu0 0.0
    %810 = vmatpush1.msra.mxu0 0.0
    %811 = vmatprep.subr.mxu0 0.0
    %812 = vmatpush1.msra.mxu0 0.0
    %813 = vmatprep.subr.mxu0 0.0
    %814 = vmatpush1.msra.mxu0 0.0
    %815 = vmatprep.subr.mxu0 0.0
    %816 = vmatpush1.msra.mxu0 0.0
    %817 = vmatprep.subr.mxu0 0.0
    %818 = vmatpush1.msra.mxu0 0.0
    %819 = vmatprep.subr.mxu0 0.0
    %820 = vmatpush1.msra.mxu0 0.0
    %821 = vmatprep.subr.mxu0 0.0
    %822 = vmatpush1.msra.mxu0 0.0
    %823 = vmatprep.subr.mxu0 0.0
    %824 = vmatpush1.msra.mxu0 0.0
    %825 = vmatprep.subr.mxu0 0.0
    %826 = vmatpush1.msra.mxu0 0.0
    %827 = vmatprep.subr.mxu0 0.0
    %828 = vmatpush1.msra.mxu0 0.0
    %829 = vmatprep.subr.mxu0 0.0
    %830 = vmatpush1.msra.mxu0 0.0
    %831 = vmatprep.subr.mxu0 0.0
    %832 = vmatpush1.msra.mxu0 0.0
    %833 = vmatprep.subr.mxu0 0.0
    %834 = vmatpush1.msra.mxu0 0.0
    %835 = vmatprep.subr.mxu0 0.0
    %836 = vmatpush1.msra.mxu0 0.0
    %837 = vmatprep.subr.mxu0 0.0
    %838 = vmatpush1.msra.mxu0 0.0
    %839 = vmatprep.subr.mxu0 0.0
    %840 = vmatpush1.msra.mxu0 0.0
    %841 = vmatprep.subr.mxu0 0.0
    %842 = vmatpush1.msra.mxu0 0.0
    %843 = vmatprep.subr.mxu0 0.0
    %844 = vmatpush1.msra.mxu0 0.0
    %845 = vmatprep.subr.mxu0 0.0
    %846 = vmatpush1.msra.mxu0 0.0
    %847 = vmatprep.subr.mxu0 0.0
    %848 = vmatpush1.msra.mxu0 0.0
    %849 = vmatprep.subr.mxu0 0.0
    %850 = vmatpush1.msra.mxu0 0.0
    %851 = vmatprep.subr.mxu0 0.0
    %852 = vmatpush1.msra.mxu0 0.0
    %853 = vmatprep.subr.mxu0 0.0
    %854 = vmatpush1.msra.mxu0 0.0
    %855 = vmatprep.subr.mxu0 0.0
    %856 = vmatpush1.msra.mxu0 0.0
    %857 = vmatprep.subr.mxu0 0.0
    %858 = vmatpush1.msra.mxu0 0.0
    %859 = vmatprep.subr.mxu0 0.0
    %860 = vmatpush1.msra.mxu0 0.0
    %861 = vmatprep.subr.mxu0 0.0
    %862 = vmatpush1.msra.mxu0 0.0
    %863 = vmatprep.subr.mxu0 0.0
    %864 = vmatpush1.msra.mxu0 0.0
    %865 = vmatprep.subr.mxu0 0.0
    %866 = vmatpush1.msra.mxu0 0.0
    %867 = vmatprep.mubr.f32.mxu0 0.0
    %868 = vmatmul.mubr.f32.gmra.mrb[0].mxu0 %v801
    %v869 = vpop.f32.mrb[0].mxu0
    %v870 = vadd.f32 0.0, %v869
    %v871 = vpop.f32.mrb[0].mxu0
    %872 = vdwg.mxu0
    %v873 = vmul.f32 %v870, %v870
    %v875 = vrot.slane %v873, 7
    %v877 = vsub.f32 %v870, %v875
    %v878 = vmax.f32 %v877, 0.0
    %v879 = vadd.f32 %v878, 1e-08
    %v880 = vrsqrt.pop %v879
    %882 = vset.pattern.permute.xlu0 0
    %883 = vperm.xlu0 %882, %v678
    %v884 = vpop.permute.xlu0 %883
    %887 = vset.pattern.permute.xlu0 0
    %888 = vperm.xlu0 %887, %v679
    %v889 = vpop.permute.xlu0 %888
    %892 = vset.pattern.permute.xlu0 0
    %893 = vperm.xlu0 %892, %v680
    %v894 = vpop.permute.xlu0 %893
    %897 = vset.pattern.permute.xlu0 0
    %898 = vperm.xlu0 %897, %v681
    %v899 = vpop.permute.xlu0 %898
    %902 = vset.pattern.permute.xlu0 0
    %903 = vperm.xlu0 %902, %v682
    %v904 = vpop.permute.xlu0 %903
    %907 = vset.pattern.permute.xlu0 0
    %908 = vperm.xlu0 %907, %v683
    %v909 = vpop.permute.xlu0 %908
    %912 = vset.pattern.permute.xlu0 0
    %913 = vperm.xlu0 %912, %v684
    %v914 = vpop.permute.xlu0 %913
    %917 = vset.pattern.permute.xlu0 0
    %918 = vperm.xlu0 %917, %v685
    %v919 = vpop.permute.xlu0 %918
    %v921 = vlaneseq
    %v922 = vshrl.u32 %v921, 7
    %v923 = vsub.s32 1, %v922
    %v924 = vrot.slane %v880, %v923
    %v925 = vmul.f32 %v884, %v924
    %v926 = vmul.f32 %v889, %v924
    %v927 = vmul.f32 %v894, %v924
    %v928 = vmul.f32 %v899, %v924
    %v929 = vmul.f32 %v904, %v924
    %v930 = vmul.f32 %v909, %v924
    %v931 = vmul.f32 %v914, %v924
    %v932 = vmul.f32 %v919, %v924
    %v933 = vmul.f32 %v670, %v925
    %v934 = vmul.f32 %v671, %v926
    %v935 = vmul.f32 %v672, %v927
    %v936 = vmul.f32 %v673, %v928
    %v937 = vmul.f32 %v674, %v929
    %v938 = vmul.f32 %v675, %v930
    %v939 = vmul.f32 %v676, %v931
    %v940 = vmul.f32 %v677, %v932
    %v941 = vlaneseq
    %v942 = vshrl.u32 %v941, 7
    %v943 = vsub.s32 0, %v942
    %v944 = vrot.slane %v870, %v943
    %v945 = vmul.f32 %v944, %v925
    %v946 = vmul.f32 %v944, %v926
    %v947 = vmul.f32 %v944, %v927
    %v948 = vmul.f32 %v944, %v928
    %v949 = vmul.f32 %v944, %v929
    %v950 = vmul.f32 %v944, %v930
    %v951 = vmul.f32 %v944, %v931
    %v952 = vmul.f32 %v944, %v932
    %954 = vset.pattern.permute.xlu0 0
    %955 = vperm.xlu0 %954, %v686
    %v956 = vpop.permute.xlu0 %955
    %959 = vset.pattern.permute.xlu0 0
    %960 = vperm.xlu0 %959, %v687
    %v961 = vpop.permute.xlu0 %960
    %964 = vset.pattern.permute.xlu0 0
    %965 = vperm.xlu0 %964, %v688
    %v966 = vpop.permute.xlu0 %965
    %969 = vset.pattern.permute.xlu0 0
    %970 = vperm.xlu0 %969, %v689
    %v971 = vpop.permute.xlu0 %970
    %974 = vset.pattern.permute.xlu0 0
    %975 = vperm.xlu0 %974, %v690
    %v976 = vpop.permute.xlu0 %975
    %979 = vset.pattern.permute.xlu0 0
    %980 = vperm.xlu0 %979, %v691
    %v981 = vpop.permute.xlu0 %980
    %984 = vset.pattern.permute.xlu0 0
    %985 = vperm.xlu0 %984, %v692
    %v986 = vpop.permute.xlu0 %985
    %989 = vset.pattern.permute.xlu0 0
    %990 = vperm.xlu0 %989, %v693
    %v991 = vpop.permute.xlu0 %990
    %v993 = vsub.f32 %v956, %v945
    %v994 = vsub.f32 %v961, %v946
    %v995 = vsub.f32 %v966, %v947
    %v996 = vsub.f32 %v971, %v948
    %v997 = vsub.f32 %v976, %v949
    %v998 = vsub.f32 %v981, %v950
    %v999 = vsub.f32 %v986, %v951
    %v1000 = vsub.f32 %v991, %v952
    %v1001 = vadd.f32 %v933, %v993
    %v1002 = vadd.f32 %v934, %v994
    %v1003 = vadd.f32 %v935, %v995
    %v1004 = vadd.f32 %v936, %v996
    %v1005 = vadd.f32 %v937, %v997
    %v1006 = vadd.f32 %v938, %v998
    %v1007 = vadd.f32 %v939, %v999
    %v1008 = vadd.f32 %v940, %v1000
    %v1009 = vld [vmem:[%s12] sm:$0xff]
    %v1010 = vld [vmem:[%s12 + $0x8] sm:$0xff]
    %v1011 = vld [vmem:[%s12 + $0x10] sm:$0xff]
    %v1012 = vld [vmem:[%s12 + $0x18] sm:$0xff]
    %v1013 = vld [vmem:[%s12 + $0x20] sm:$0xff]
    %v1014 = vld [vmem:[%s12 + $0x28] sm:$0xff]
    %v1015 = vld [vmem:[%s12 + $0x30] sm:$0xff]
    %v1016 = vld [vmem:[%s12 + $0x38] sm:$0xff]
    %1018 = vset.pattern.permute.xlu0 1
    %1019 = vperm.xlu0 %1018, %v1009
    %v1020 = vpop.permute.xlu0 %1019
    %1023 = vset.pattern.permute.xlu0 1
    %1024 = vperm.xlu0 %1023, %v1010
    %v1025 = vpop.permute.xlu0 %1024
    %1028 = vset.pattern.permute.xlu0 1
    %1029 = vperm.xlu0 %1028, %v1011
    %v1030 = vpop.permute.xlu0 %1029
    %1033 = vset.pattern.permute.xlu0 1
    %1034 = vperm.xlu0 %1033, %v1012
    %v1035 = vpop.permute.xlu0 %1034
    %1038 = vset.pattern.permute.xlu0 1
    %1039 = vperm.xlu0 %1038, %v1013
    %v1040 = vpop.permute.xlu0 %1039
    %1043 = vset.pattern.permute.xlu0 1
    %1044 = vperm.xlu0 %1043, %v1014
    %v1045 = vpop.permute.xlu0 %1044
    %1048 = vset.pattern.permute.xlu0 1
    %1049 = vperm.xlu0 %1048, %v1015
    %v1050 = vpop.permute.xlu0 %1049
    %1053 = vset.pattern.permute.xlu0 1
    %1054 = vperm.xlu0 %1053, %v1016
    %v1055 = vpop.permute.xlu0 %1054
    %v1057 = vmul.f32 %v1020, %v1001
    %v1058 = vmul.f32 %v1025, %v1002
    %v1059 = vmul.f32 %v1030, %v1003
    %v1060 = vmul.f32 %v1035, %v1004
    %v1061 = vmul.f32 %v1040, %v1005
    %v1062 = vmul.f32 %v1045, %v1006
    %v1063 = vmul.f32 %v1050, %v1007
    %v1064 = vmul.f32 %v1055, %v1008
    %v1065 = vld [vmem:[%s13] sm:$0xff]
    %v1066 = vld [vmem:[%s13 + $0x8] sm:$0xff]
    %v1067 = vld [vmem:[%s13 + $0x10] sm:$0xff]
    %v1068 = vld [vmem:[%s13 + $0x18] sm:$0xff]
    %v1069 = vld [vmem:[%s13 + $0x20] sm:$0xff]
    %v1070 = vld [vmem:[%s13 + $0x28] sm:$0xff]
    %v1071 = vld [vmem:[%s13 + $0x30] sm:$0xff]
    %v1072 = vld [vmem:[%s13 + $0x38] sm:$0xff]
    %1074 = vset.pattern.permute.xlu0 0
    %1075 = vperm.xlu0 %1074, %v1065
    %v1076 = vpop.permute.xlu0 %1075
    %1079 = vset.pattern.permute.xlu0 0
    %1080 = vperm.xlu0 %1079, %v1066
    %v1081 = vpop.permute.xlu0 %1080
    %1084 = vset.pattern.permute.xlu0 0
    %1085 = vperm.xlu0 %1084, %v1067
    %v1086 = vpop.permute.xlu0 %1085
    %1089 = vset.pattern.permute.xlu0 0
    %1090 = vperm.xlu0 %1089, %v1068
    %v1091 = vpop.permute.xlu0 %1090
    %1094 = vset.pattern.permute.xlu0 0
    %1095 = vperm.xlu0 %1094, %v1069
    %v1096 = vpop.permute.xlu0 %1095
    %1099 = vset.pattern.permute.xlu0 0
    %1100 = vperm.xlu0 %1099, %v1070
    %v1101 = vpop.permute.xlu0 %1100
    %1104 = vset.pattern.permute.xlu0 0
    %1105 = vperm.xlu0 %1104, %v1071
    %v1106 = vpop.permute.xlu0 %1105
    %1109 = vset.pattern.permute.xlu0 0
    %1110 = vperm.xlu0 %1109, %v1072
    %v1111 = vpop.permute.xlu0 %1110
    %v1113 = vadd.f32 %v1057, %v1076
    %v1114 = vadd.f32 %v1058, %v1081
    %v1115 = vadd.f32 %v1059, %v1086
    %v1116 = vadd.f32 %v1060, %v1091
    %v1117 = vadd.f32 %v1061, %v1096
    %v1118 = vadd.f32 %v1062, %v1101
    %v1119 = vadd.f32 %v1063, %v1106
    %v1120 = vadd.f32 %v1064, %v1111
    %1121 = vrot.lane.b32.xlu0 %v1001, 1
    %v1122 = vpop.permute.xlu0 %1121
    %1123 = vrot.lane.b32.xlu0 %v1002, 1
    %v1124 = vpop.permute.xlu0 %1123
    %1125 = vrot.lane.b32.xlu0 %v1003, 1
    %v1126 = vpop.permute.xlu0 %1125
    %1127 = vrot.lane.b32.xlu0 %v1004, 1
    %v1128 = vpop.permute.xlu0 %1127
    %1129 = vrot.lane.b32.xlu0 %v1005, 1
    %v1130 = vpop.permute.xlu0 %1129
    %1131 = vrot.lane.b32.xlu0 %v1006, 1
    %v1132 = vpop.permute.xlu0 %1131
    %1133 = vrot.lane.b32.xlu0 %v1007, 1
    %v1134 = vpop.permute.xlu0 %1133
    %1135 = vrot.lane.b32.xlu0 %v1008, 1
    %v1136 = vpop.permute.xlu0 %1135
    %v1137 = vsel %vm101, 1, 0
    %vm1138 = vcmp.eq.s32.totalorder %v1137, 1
    %v1139 = vsel %vm1138, %v1122, 0.0
    %v1140 = vsel %vm1138, %v1124, 0.0
    %v1141 = vsel %vm1138, %v1126, 0.0
    %v1142 = vsel %vm1138, %v1128, 0.0
    %v1143 = vsel %vm1138, %v1130, 0.0
    %v1144 = vsel %vm1138, %v1132, 0.0
    %v1145 = vsel %vm1138, %v1134, 0.0
    %v1146 = vsel %vm1138, %v1136, 0.0
    %1147 = vset.pattern.permute.xlu0 0
    %1148 = vperm.xlu0 %1147, %v1009
    %v1149 = vpop.permute.xlu0 %1148
    %1151 = vset.pattern.permute.xlu0 0
    %1152 = vperm.xlu0 %1151, %v1010
    %v1153 = vpop.permute.xlu0 %1152
    %1155 = vset.pattern.permute.xlu0 0
    %1156 = vperm.xlu0 %1155, %v1011
    %v1157 = vpop.permute.xlu0 %1156
    %1159 = vset.pattern.permute.xlu0 0
    %1160 = vperm.xlu0 %1159, %v1012
    %v1161 = vpop.permute.xlu0 %1160
    %1163 = vset.pattern.permute.xlu0 0
    %1164 = vperm.xlu0 %1163, %v1013
    %v1165 = vpop.permute.xlu0 %1164
    %1167 = vset.pattern.permute.xlu0 0
    %1168 = vperm.xlu0 %1167, %v1014
    %v1169 = vpop.permute.xlu0 %1168
    %1171 = vset.pattern.permute.xlu0 0
    %1172 = vperm.xlu0 %1171, %v1015
    %v1173 = vpop.permute.xlu0 %1172
    %1175 = vset.pattern.permute.xlu0 0
    %1176 = vperm.xlu0 %1175, %v1016
    %v1177 = vpop.permute.xlu0 %1176
    %v1179 = vmul.f32 %v1149, %v1139
    %v1180 = vmul.f32 %v1153, %v1140
    %v1181 = vmul.f32 %v1157, %v1141
    %v1182 = vmul.f32 %v1161, %v1142
    %v1183 = vmul.f32 %v1165, %v1143
    %v1184 = vmul.f32 %v1169, %v1144
    %v1185 = vmul.f32 %v1173, %v1145
    %v1186 = vmul.f32 %v1177, %v1146
    %v1187 = vadd.f32 %v1113, %v1179
    %v1188 = vadd.f32 %v1114, %v1180
    %v1189 = vadd.f32 %v1115, %v1181
    %v1190 = vadd.f32 %v1116, %v1182
    %v1191 = vadd.f32 %v1117, %v1183
    %v1192 = vadd.f32 %v1118, %v1184
    %v1193 = vadd.f32 %v1119, %v1185
    %v1194 = vadd.f32 %v1120, %v1186
    %1195 = vrot.lane.b32.xlu0 %v1001, 127
    %v1196 = vpop.permute.xlu0 %1195
    %1197 = vrot.lane.b32.xlu0 %v1002, 127
    %v1198 = vpop.permute.xlu0 %1197
    %1199 = vrot.lane.b32.xlu0 %v1003, 127
    %v1200 = vpop.permute.xlu0 %1199
    %1201 = vrot.lane.b32.xlu0 %v1004, 127
    %v1202 = vpop.permute.xlu0 %1201
    %1203 = vrot.lane.b32.xlu0 %v1005, 127
    %v1204 = vpop.permute.xlu0 %1203
    %1205 = vrot.lane.b32.xlu0 %v1006, 127
    %v1206 = vpop.permute.xlu0 %1205
    %1207 = vrot.lane.b32.xlu0 %v1007, 127
    %v1208 = vpop.permute.xlu0 %1207
    %1209 = vrot.lane.b32.xlu0 %v1008, 127
    %v1210 = vpop.permute.xlu0 %1209
    %v1211 = vsel %vm102, 1, 0
    %vm1212 = vcmp.eq.s32.totalorder %v1211, 1
    %v1213 = vsel %vm1212, %v1196, 0.0
    %v1214 = vsel %vm1212, %v1198, 0.0
    %v1215 = vsel %vm1212, %v1200, 0.0
    %v1216 = vsel %vm1212, %v1202, 0.0
    %v1217 = vsel %vm1212, %v1204, 0.0
    %v1218 = vsel %vm1212, %v1206, 0.0
    %v1219 = vsel %vm1212, %v1208, 0.0
    %v1220 = vsel %vm1212, %v1210, 0.0
    %1221 = vset.pattern.permute.xlu0 2
    %1222 = vperm.xlu0 %1221, %v1009
    %v1223 = vpop.permute.xlu0 %1222
    %1225 = vset.pattern.permute.xlu0 2
    %1226 = vperm.xlu0 %1225, %v1010
    %v1227 = vpop.permute.xlu0 %1226
    %1229 = vset.pattern.permute.xlu0 2
    %1230 = vperm.xlu0 %1229, %v1011
    %v1231 = vpop.permute.xlu0 %1230
    %1233 = vset.pattern.permute.xlu0 2
    %1234 = vperm.xlu0 %1233, %v1012
    %v1235 = vpop.permute.xlu0 %1234
    %1237 = vset.pattern.permute.xlu0 2
    %1238 = vperm.xlu0 %1237, %v1013
    %v1239 = vpop.permute.xlu0 %1238
    %1241 = vset.pattern.permute.xlu0 2
    %1242 = vperm.xlu0 %1241, %v1014
    %v1243 = vpop.permute.xlu0 %1242
    %1245 = vset.pattern.permute.xlu0 2
    %1246 = vperm.xlu0 %1245, %v1015
    %v1247 = vpop.permute.xlu0 %1246
    %1249 = vset.pattern.permute.xlu0 2
    %1250 = vperm.xlu0 %1249, %v1016
    %v1251 = vpop.permute.xlu0 %1250
    %v1253 = vmul.f32 %v1223, %v1213
    %v1254 = vmul.f32 %v1227, %v1214
    %v1255 = vmul.f32 %v1231, %v1215
    %v1256 = vmul.f32 %v1235, %v1216
    %v1257 = vmul.f32 %v1239, %v1217
    %v1258 = vmul.f32 %v1243, %v1218
    %v1259 = vmul.f32 %v1247, %v1219
    %v1260 = vmul.f32 %v1251, %v1220
    %v1261 = vadd.f32 %v1187, %v1253
    %v1262 = vadd.f32 %v1188, %v1254
    %v1263 = vadd.f32 %v1189, %v1255
    %v1264 = vadd.f32 %v1190, %v1256
    %v1265 = vadd.f32 %v1191, %v1257
    %v1266 = vadd.f32 %v1192, %v1258
    %v1267 = vadd.f32 %v1193, %v1259
    %v1268 = vadd.f32 %v1194, %v1260
    %v1269 = vld [vmem:[%s14] sm:$0x1]
    %v1270 = vmax.f32 %v1261, 0.0
    %v1271 = vmax.f32 %v1262, 0.0
    %v1272 = vmax.f32 %v1263, 0.0
    %v1273 = vmax.f32 %v1264, 0.0
    %v1274 = vmax.f32 %v1265, 0.0
    %v1275 = vmax.f32 %v1266, 0.0
    %v1276 = vmax.f32 %v1267, 0.0
    %v1277 = vmax.f32 %v1268, 0.0
    %v1278 = vmin.f32 %v1261, 0.0
    %v1279 = vmin.f32 %v1262, 0.0
    %v1280 = vmin.f32 %v1263, 0.0
    %v1281 = vmin.f32 %v1264, 0.0
    %v1282 = vmin.f32 %v1265, 0.0
    %v1283 = vmin.f32 %v1266, 0.0
    %v1284 = vmin.f32 %v1267, 0.0
    %v1285 = vmin.f32 %v1268, 0.0
    %v1287 = vlaneseq
    %v1288 = vshrl.u32 %v1287, 7
    %v1289 = vsub.s32 0, %v1288
    %v1290 = vrot.slane %v1269, %v1289
    %1291 = vset.pattern.permute.xlu0 0
    %1292 = vperm.xlu0 %1291, %v1290
    %v1293 = vpop.permute.xlu0 %1292
    %v1295 = vmul.f32 %v1293, %v1278
    %v1296 = vmul.f32 %v1293, %v1279
    %v1297 = vmul.f32 %v1293, %v1280
    %v1298 = vmul.f32 %v1293, %v1281
    %v1299 = vmul.f32 %v1293, %v1282
    %v1300 = vmul.f32 %v1293, %v1283
    %v1301 = vmul.f32 %v1293, %v1284
    %v1302 = vmul.f32 %v1293, %v1285
    %v1303 = vadd.f32 %v1270, %v1295
    %v1304 = vadd.f32 %v1271, %v1296
    %v1305 = vadd.f32 %v1272, %v1297
    %v1306 = vadd.f32 %v1273, %v1298
    %v1307 = vadd.f32 %v1274, %v1299
    %v1308 = vadd.f32 %v1275, %v1300
    %v1309 = vadd.f32 %v1276, %v1301
    %v1310 = vadd.f32 %v1277, %v1302
    %v1311 = vld [vmem:[%s15] sm:$0xff]
    %v1312 = vld [vmem:[%s15 + $0x8] sm:$0xff]
    %v1313 = vld [vmem:[%s15 + $0x10] sm:$0xff]
    %v1314 = vld [vmem:[%s15 + $0x18] sm:$0xff]
    %v1315 = vld [vmem:[%s15 + $0x20] sm:$0xff]
    %v1316 = vld [vmem:[%s15 + $0x28] sm:$0xff]
    %v1317 = vld [vmem:[%s15 + $0x30] sm:$0xff]
    %v1318 = vld [vmem:[%s15 + $0x38] sm:$0xff]
    %v1319 = vld [vmem:[%s16] sm:$0xff]
    %v1320 = vld [vmem:[%s16 + $0x8] sm:$0xff]
    %v1321 = vld [vmem:[%s16 + $0x10] sm:$0xff]
    %v1322 = vld [vmem:[%s16 + $0x18] sm:$0xff]
    %v1323 = vld [vmem:[%s16 + $0x20] sm:$0xff]
    %v1324 = vld [vmem:[%s16 + $0x28] sm:$0xff]
    %v1325 = vld [vmem:[%s16 + $0x30] sm:$0xff]
    %v1326 = vld [vmem:[%s16 + $0x38] sm:$0xff]
    %v1327 = vadd.f32 %v1303, %v1304
    %v1328 = vadd.f32 %v1327, %v1305
    %v1329 = vadd.f32 %v1328, %v1306
    %v1330 = vadd.f32 %v1329, %v1307
    %v1331 = vadd.f32 %v1330, %v1308
    %v1332 = vadd.f32 %v1331, %v1309
    %v1333 = vadd.f32 %v1332, %v1310
    %v1334 = vrot.slane %v1333, 4
    %v1335 = vadd.f32 %v1333, %v1334
    %v1336 = vrot.slane %v1335, 2
    %v1337 = vadd.f32 %v1335, %v1336
    %v1338 = vrot.slane %v1337, 1
    %v1339 = vadd.f32 %v1337, %v1338
    %v1340 = vmul.f32 %v1303, %v1303
    %v1341 = vmul.f32 %v1304, %v1304
    %v1342 = vmul.f32 %v1305, %v1305
    %v1343 = vmul.f32 %v1306, %v1306
    %v1344 = vmul.f32 %v1307, %v1307
    %v1345 = vmul.f32 %v1308, %v1308
    %v1346 = vmul.f32 %v1309, %v1309
    %v1347 = vmul.f32 %v1310, %v1310
    %v1348 = vadd.f32 %v1340, %v1341
    %v1349 = vadd.f32 %v1348, %v1342
    %v1350 = vadd.f32 %v1349, %v1343
    %v1351 = vadd.f32 %v1350, %v1344
    %v1352 = vadd.f32 %v1351, %v1345
    %v1353 = vadd.f32 %v1352, %v1346
    %v1354 = vadd.f32 %v1353, %v1347
    %v1355 = vrot.slane %v1354, 4
    %v1356 = vadd.f32 %v1354, %v1355
    %v1357 = vrot.slane %v1356, 2
    %v1358 = vadd.f32 %v1356, %v1357
    %v1359 = vrot.slane %v1358, 1
    %v1360 = vadd.f32 %v1358, %v1359
    %v1361 = vsel %vm127, %v1339, %v1360
    %1362 = vmatprep.subr.mxu0 0.0
    %1363 = vmatpush1.msra.mxu0 %v79
    %1364 = vmatprep.subr.mxu0 0.0
    %1365 = vmatpush1.msra.mxu0 %v80
    %1366 = vmatprep.subr.mxu0 0.0
    %1367 = vmatpush1.msra.mxu0 %v81
    %1368 = vmatprep.subr.mxu0 0.0
    %1369 = vmatpush1.msra.mxu0 %v82
    %1370 = vmatprep.subr.mxu0 0.0
    %1371 = vmatpush1.msra.mxu0 %v83
    %1372 = vmatprep.subr.mxu0 0.0
    %1373 = vmatpush1.msra.mxu0 %v84
    %1374 = vmatprep.subr.mxu0 0.0
    %1375 = vmatpush1.msra.mxu0 %v85
    %1376 = vmatprep.subr.mxu0 0.0
    %1377 = vmatpush1.msra.mxu0 %v86
    %1378 = vmatprep.subr.mxu0 0.0
    %1379 = vmatpush1.msra.mxu0 %v87
    %1380 = vmatprep.subr.mxu0 0.0
    %1381 = vmatpush1.msra.mxu0 %v88
    %1382 = vmatprep.subr.mxu0 0.0
    %1383 = vmatpush1.msra.mxu0 %v89
    %1384 = vmatprep.subr.mxu0 0.0
    %1385 = vmatpush1.msra.mxu0 %v90
    %1386 = vmatprep.subr.mxu0 0.0
    %1387 = vmatpush1.msra.mxu0 %v91
    %1388 = vmatprep.subr.mxu0 0.0
    %1389 = vmatpush1.msra.mxu0 %v92
    %1390 = vmatprep.subr.mxu0 0.0
    %1391 = vmatpush1.msra.mxu0 %v93
    %1392 = vmatprep.subr.mxu0 0.0
    %1393 = vmatpush1.msra.mxu0 %v94
    %1394 = vmatprep.subr.mxu0 0.0
    %1395 = vmatpush1.msra.mxu0 0.0
    %1396 = vmatprep.subr.mxu0 0.0
    %1397 = vmatpush1.msra.mxu0 0.0
    %1398 = vmatprep.subr.mxu0 0.0
    %1399 = vmatpush1.msra.mxu0 0.0
    %1400 = vmatprep.subr.mxu0 0.0
    %1401 = vmatpush1.msra.mxu0 0.0
    %1402 = vmatprep.subr.mxu0 0.0
    %1403 = vmatpush1.msra.mxu0 0.0
    %1404 = vmatprep.subr.mxu0 0.0
    %1405 = vmatpush1.msra.mxu0 0.0
    %1406 = vmatprep.subr.mxu0 0.0
    %1407 = vmatpush1.msra.mxu0 0.0
    %1408 = vmatprep.subr.mxu0 0.0
    %1409 = vmatpush1.msra.mxu0 0.0
    %1410 = vmatprep.subr.mxu0 0.0
    %1411 = vmatpush1.msra.mxu0 0.0
    %1412 = vmatprep.subr.mxu0 0.0
    %1413 = vmatpush1.msra.mxu0 0.0
    %1414 = vmatprep.subr.mxu0 0.0
    %1415 = vmatpush1.msra.mxu0 0.0
    %1416 = vmatprep.subr.mxu0 0.0
    %1417 = vmatpush1.msra.mxu0 0.0
    %1418 = vmatprep.subr.mxu0 0.0
    %1419 = vmatpush1.msra.mxu0 0.0
    %1420 = vmatprep.subr.mxu0 0.0
    %1421 = vmatpush1.msra.mxu0 0.0
    %1422 = vmatprep.subr.mxu0 0.0
    %1423 = vmatpush1.msra.mxu0 0.0
    %1424 = vmatprep.subr.mxu0 0.0
    %1425 = vmatpush1.msra.mxu0 0.0
    %1426 = vmatprep.mubr.f32.mxu0 0.0
    %1427 = vmatmul.mubr.f32.gmra.mrb[0].mxu0 %v1361
    %v1428 = vpop.f32.mrb[0].mxu0
    %v1429 = vadd.f32 0.0, %v1428
    %v1430 = vpop.f32.mrb[0].mxu0
    %1431 = vdwg.mxu0
    %v1432 = vmul.f32 %v1429, 0.00024414063
    %v1434 = vsel %vm200, %v1432, 0
    %1436 = vmatprep.subr.mxu0 0.0
    %1437 = vmatpush1.msra.mxu0 %v206
    %1438 = vmatprep.subr.mxu0 0.0
    %1439 = vmatpush1.msra.mxu0 0.0
    %1440 = vmatprep.subr.mxu0 0.0
    %1441 = vmatpush1.msra.mxu0 0.0
    %1442 = vmatprep.subr.mxu0 0.0
    %1443 = vmatpush1.msra.mxu0 0.0
    %1444 = vmatprep.subr.mxu0 0.0
    %1445 = vmatpush1.msra.mxu0 0.0
    %1446 = vmatprep.subr.mxu0 0.0
    %1447 = vmatpush1.msra.mxu0 0.0
    %1448 = vmatprep.subr.mxu0 0.0
    %1449 = vmatpush1.msra.mxu0 0.0
    %1450 = vmatprep.subr.mxu0 0.0
    %1451 = vmatpush1.msra.mxu0 0.0
    %1452 = vmatprep.subr.mxu0 0.0
    %1453 = vmatpush1.msra.mxu0 0.0
    %1454 = vmatprep.subr.mxu0 0.0
    %1455 = vmatpush1.msra.mxu0 0.0
    %1456 = vmatprep.subr.mxu0 0.0
    %1457 = vmatpush1.msra.mxu0 0.0
    %1458 = vmatprep.subr.mxu0 0.0
    %1459 = vmatpush1.msra.mxu0 0.0
    %1460 = vmatprep.subr.mxu0 0.0
    %1461 = vmatpush1.msra.mxu0 0.0
    %1462 = vmatprep.subr.mxu0 0.0
    %1463 = vmatpush1.msra.mxu0 0.0
    %1464 = vmatprep.subr.mxu0 0.0
    %1465 = vmatpush1.msra.mxu0 0.0
    %1466 = vmatprep.subr.mxu0 0.0
    %1467 = vmatpush1.msra.mxu0 0.0
    %1468 = vmatprep.subr.mxu0 0.0
    %1469 = vmatpush1.msra.mxu0 0.0
    %1470 = vmatprep.subr.mxu0 0.0
    %1471 = vmatpush1.msra.mxu0 0.0
    %1472 = vmatprep.subr.mxu0 0.0
    %1473 = vmatpush1.msra.mxu0 0.0
    %1474 = vmatprep.subr.mxu0 0.0
    %1475 = vmatpush1.msra.mxu0 0.0
    %1476 = vmatprep.subr.mxu0 0.0
    %1477 = vmatpush1.msra.mxu0 0.0
    %1478 = vmatprep.subr.mxu0 0.0
    %1479 = vmatpush1.msra.mxu0 0.0
    %1480 = vmatprep.subr.mxu0 0.0
    %1481 = vmatpush1.msra.mxu0 0.0
    %1482 = vmatprep.subr.mxu0 0.0
    %1483 = vmatpush1.msra.mxu0 0.0
    %1484 = vmatprep.subr.mxu0 0.0
    %1485 = vmatpush1.msra.mxu0 0.0
    %1486 = vmatprep.subr.mxu0 0.0
    %1487 = vmatpush1.msra.mxu0 0.0
    %1488 = vmatprep.subr.mxu0 0.0
    %1489 = vmatpush1.msra.mxu0 0.0
    %1490 = vmatprep.subr.mxu0 0.0
    %1491 = vmatpush1.msra.mxu0 0.0
    %1492 = vmatprep.subr.mxu0 0.0
    %1493 = vmatpush1.msra.mxu0 0.0
    %1494 = vmatprep.subr.mxu0 0.0
    %1495 = vmatpush1.msra.mxu0 0.0
    %1496 = vmatprep.subr.mxu0 0.0
    %1497 = vmatpush1.msra.mxu0 0.0
    %1498 = vmatprep.subr.mxu0 0.0
    %1499 = vmatpush1.msra.mxu0 0.0
    %1500 = vmatprep.mubr.f32.mxu0 0.0
    %1501 = vmatmul.mubr.f32.gmra.mrb[0].mxu0 %v1434
    %v1502 = vpop.f32.mrb[0].mxu0
    %v1503 = vadd.f32 0.0, %v1502
    %v1504 = vpop.f32.mrb[0].mxu0
    %1505 = vdwg.mxu0
    %v1506 = vmul.f32 %v1503, %v1503
    %v1508 = vrot.slane %v1506, 7
    %v1510 = vsub.f32 %v1503, %v1508
    %v1511 = vmax.f32 %v1510, 0.0
    %v1512 = vadd.f32 %v1511, 1e-08
    %v1513 = vrsqrt.pop %v1512
    %1515 = vset.pattern.permute.xlu0 0
    %1516 = vperm.xlu0 %1515, %v1311
    %v1517 = vpop.permute.xlu0 %1516
    %1520 = vset.pattern.permute.xlu0 0
    %1521 = vperm.xlu0 %1520, %v1312
    %v1522 = vpop.permute.xlu0 %1521
    %1525 = vset.pattern.permute.xlu0 0
    %1526 = vperm.xlu0 %1525, %v1313
    %v1527 = vpop.permute.xlu0 %1526
    %1530 = vset.pattern.permute.xlu0 0
    %1531 = vperm.xlu0 %1530, %v1314
    %v1532 = vpop.permute.xlu0 %1531
    %1535 = vset.pattern.permute.xlu0 0
    %1536 = vperm.xlu0 %1535, %v1315
    %v1537 = vpop.permute.xlu0 %1536
    %1540 = vset.pattern.permute.xlu0 0
    %1541 = vperm.xlu0 %1540, %v1316
    %v1542 = vpop.permute.xlu0 %1541
    %1545 = vset.pattern.permute.xlu0 0
    %1546 = vperm.xlu0 %1545, %v1317
    %v1547 = vpop.permute.xlu0 %1546
    %1550 = vset.pattern.permute.xlu0 0
    %1551 = vperm.xlu0 %1550, %v1318
    %v1552 = vpop.permute.xlu0 %1551
    %v1554 = vlaneseq
    %v1555 = vshrl.u32 %v1554, 7
    %v1556 = vsub.s32 1, %v1555
    %v1557 = vrot.slane %v1513, %v1556
    %v1558 = vmul.f32 %v1517, %v1557
    %v1559 = vmul.f32 %v1522, %v1557
    %v1560 = vmul.f32 %v1527, %v1557
    %v1561 = vmul.f32 %v1532, %v1557
    %v1562 = vmul.f32 %v1537, %v1557
    %v1563 = vmul.f32 %v1542, %v1557
    %v1564 = vmul.f32 %v1547, %v1557
    %v1565 = vmul.f32 %v1552, %v1557
    %v1566 = vmul.f32 %v1303, %v1558
    %v1567 = vmul.f32 %v1304, %v1559
    %v1568 = vmul.f32 %v1305, %v1560
    %v1569 = vmul.f32 %v1306, %v1561
    %v1570 = vmul.f32 %v1307, %v1562
    %v1571 = vmul.f32 %v1308, %v1563
    %v1572 = vmul.f32 %v1309, %v1564
    %v1573 = vmul.f32 %v1310, %v1565
    %v1574 = vlaneseq
    %v1575 = vshrl.u32 %v1574, 7
    %v1576 = vsub.s32 0, %v1575
    %v1577 = vrot.slane %v1503, %v1576
    %v1578 = vmul.f32 %v1577, %v1558
    %v1579 = vmul.f32 %v1577, %v1559
    %v1580 = vmul.f32 %v1577, %v1560
    %v1581 = vmul.f32 %v1577, %v1561
    %v1582 = vmul.f32 %v1577, %v1562
    %v1583 = vmul.f32 %v1577, %v1563
    %v1584 = vmul.f32 %v1577, %v1564
    %v1585 = vmul.f32 %v1577, %v1565
    %1587 = vset.pattern.permute.xlu0 0
    %1588 = vperm.xlu0 %1587, %v1319
    %v1589 = vpop.permute.xlu0 %1588
    %1592 = vset.pattern.permute.xlu0 0
    %1593 = vperm.xlu0 %1592, %v1320
    %v1594 = vpop.permute.xlu0 %1593
    %1597 = vset.pattern.permute.xlu0 0
    %1598 = vperm.xlu0 %1597, %v1321
    %v1599 = vpop.permute.xlu0 %1598
    %1602 = vset.pattern.permute.xlu0 0
    %1603 = vperm.xlu0 %1602, %v1322
    %v1604 = vpop.permute.xlu0 %1603
    %1607 = vset.pattern.permute.xlu0 0
    %1608 = vperm.xlu0 %1607, %v1323
    %v1609 = vpop.permute.xlu0 %1608
    %1612 = vset.pattern.permute.xlu0 0
    %1613 = vperm.xlu0 %1612, %v1324
    %v1614 = vpop.permute.xlu0 %1613
    %1617 = vset.pattern.permute.xlu0 0
    %1618 = vperm.xlu0 %1617, %v1325
    %v1619 = vpop.permute.xlu0 %1618
    %1622 = vset.pattern.permute.xlu0 0
    %1623 = vperm.xlu0 %1622, %v1326
    %v1624 = vpop.permute.xlu0 %1623
    %v1626 = vsub.f32 %v1589, %v1578
    %v1627 = vsub.f32 %v1594, %v1579
    %v1628 = vsub.f32 %v1599, %v1580
    %v1629 = vsub.f32 %v1604, %v1581
    %v1630 = vsub.f32 %v1609, %v1582
    %v1631 = vsub.f32 %v1614, %v1583
    %v1632 = vsub.f32 %v1619, %v1584
    %v1633 = vsub.f32 %v1624, %v1585
    %v1634 = vadd.f32 %v1566, %v1626
    %v1635 = vadd.f32 %v1567, %v1627
    %v1636 = vadd.f32 %v1568, %v1628
    %v1637 = vadd.f32 %v1569, %v1629
    %v1638 = vadd.f32 %v1570, %v1630
    %v1639 = vadd.f32 %v1571, %v1631
    %v1640 = vadd.f32 %v1572, %v1632
    %v1641 = vadd.f32 %v1573, %v1633
    %v1642 = vld [vmem:[%s17] sm:$0xff]
    %v1643 = vld [vmem:[%s17 + $0x8] sm:$0xff]
    %v1644 = vld [vmem:[%s17 + $0x10] sm:$0xff]
    %v1645 = vld [vmem:[%s17 + $0x18] sm:$0xff]
    %vm1646 = vcmask 523264
    %v1648 = vsel %vm1646, %v1642, 0
    %v1651 = vsel %vm1646, %v1643, 0
    %v1654 = vsel %vm1646, %v1644, 0
    %v1657 = vsel %vm1646, %v1645, 0
    %1659 = vmatprep.subr.mxu0 0.0
    %1660 = vmatpush1.msra.mxu0 %v1634
    %1661 = vmatprep.subr.mxu0 0.0
    %1662 = vmatpush1.msra.mxu0 %v1635
    %1663 = vmatprep.subr.mxu0 0.0
    %1664 = vmatpush1.msra.mxu0 %v1636
    %1665 = vmatprep.subr.mxu0 0.0
    %1666 = vmatpush1.msra.mxu0 %v1637
    %1667 = vmatprep.subr.mxu0 0.0
    %1668 = vmatpush1.msra.mxu0 %v1638
    %1669 = vmatprep.subr.mxu0 0.0
    %1670 = vmatpush1.msra.mxu0 %v1639
    %1671 = vmatprep.subr.mxu0 0.0
    %1672 = vmatpush1.msra.mxu0 %v1640
    %1673 = vmatprep.subr.mxu0 0.0
    %1674 = vmatpush1.msra.mxu0 %v1641
    %1675 = vmatprep.subr.mxu0 0.0
    %1676 = vmatpush1.msra.mxu0 0.0
    %1677 = vmatprep.subr.mxu0 0.0
    %1678 = vmatpush1.msra.mxu0 0.0
    %1679 = vmatprep.subr.mxu0 0.0
    %1680 = vmatpush1.msra.mxu0 0.0
    %1681 = vmatprep.subr.mxu0 0.0
    %1682 = vmatpush1.msra.mxu0 0.0
    %1683 = vmatprep.subr.mxu0 0.0
    %1684 = vmatpush1.msra.mxu0 0.0
    %1685 = vmatprep.subr.mxu0 0.0
    %1686 = vmatpush1.msra.mxu0 0.0
    %1687 = vmatprep.subr.mxu0 0.0
    %1688 = vmatpush1.msra.mxu0 0.0
    %1689 = vmatprep.subr.mxu0 0.0
    %1690 = vmatpush1.msra.mxu0 0.0
    %1691 = vmatprep.subr.mxu0 0.0
    %1692 = vmatpush1.msra.mxu0 0.0
    %1693 = vmatprep.subr.mxu0 0.0
    %1694 = vmatpush1.msra.mxu0 0.0
    %1695 = vmatprep.subr.mxu0 0.0
    %1696 = vmatpush1.msra.mxu0 0.0
    %1697 = vmatprep.subr.mxu0 0.0
    %1698 = vmatpush1.msra.mxu0 0.0
    %1699 = vmatprep.subr.mxu0 0.0
    %1700 = vmatpush1.msra.mxu0 0.0
    %1701 = vmatprep.subr.mxu0 0.0
    %1702 = vmatpush1.msra.mxu0 0.0
    %1703 = vmatprep.subr.mxu0 0.0
    %1704 = vmatpush1.msra.mxu0 0.0
    %1705 = vmatprep.subr.mxu0 0.0
    %1706 = vmatpush1.msra.mxu0 0.0
    %1707 = vmatprep.subr.mxu0 0.0
    %1708 = vmatpush1.msra.mxu0 0.0
    %1709 = vmatprep.subr.mxu0 0.0
    %1710 = vmatpush1.msra.mxu0 0.0
    %1711 = vmatprep.subr.mxu0 0.0
    %1712 = vmatpush1.msra.mxu0 0.0
    %1713 = vmatprep.subr.mxu0 0.0
    %1714 = vmatpush1.msra.mxu0 0.0
    %1715 = vmatprep.subr.mxu0 0.0
    %1716 = vmatpush1.msra.mxu0 0.0
    %1717 = vmatprep.subr.mxu0 0.0
    %1718 = vmatpush1.msra.mxu0 0.0
    %1719 = vmatprep.subr.mxu0 0.0
    %1720 = vmatpush1.msra.mxu0 0.0
    %1721 = vmatprep.subr.mxu0 0.0
    %1722 = vmatpush1.msra.mxu0 0.0
    %1723 = vmatprep.mubr.f32.mxu0 0.0
    %1724 = vmatmul.mubr.f32.gmra.mrb[0].mxu0 %v1648
    %v1725 = vpop.f32.mrb[0].mxu0
    %v1726 = vadd.f32 0.0, %v1725
    %v1727 = vpop.f32.mrb[0].mxu0
    %1728 = vmatprep.mubr.f32.mxu0 0.0
    %1729 = vmatmul.mubr.f32.gmra.mrb[0].mxu0 %v1651
    %v1730 = vpop.f32.mrb[0].mxu0
    %v1731 = vadd.f32 0.0, %v1730
    %v1732 = vpop.f32.mrb[0].mxu0
    %1733 = vmatprep.mubr.f32.mxu0 0.0
    %1734 = vmatmul.mubr.f32.gmra.mrb[0].mxu0 %v1654
    %v1735 = vpop.f32.mrb[0].mxu0
    %v1736 = vadd.f32 0.0, %v1735
    %v1737 = vpop.f32.mrb[0].mxu0
    %1738 = vmatprep.mubr.f32.mxu0 0.0
    %1739 = vmatmul.mubr.f32.gmra.mrb[0].mxu0 %v1657
    %v1740 = vpop.f32.mrb[0].mxu0
    %v1741 = vadd.f32 0.0, %v1740
    %v1742 = vpop.f32.mrb[0].mxu0
    %1743 = vdwg.mxu0
    %v1744 = vadd.f32 %v432, %v1726
    %v1745 = vadd.f32 %v437, %v1731
    %v1746 = vadd.f32 %v442, %v1736
    %v1747 = vadd.f32 %v447, %v1741
    %v1748 = vld [vmem:[%s18] sm:$0xff]
    %v1749 = vld [vmem:[%s18 + $0x8] sm:$0xff]
    %v1750 = vld [vmem:[%s18 + $0x10] sm:$0xff]
    %v1751 = vld [vmem:[%s18 + $0x18] sm:$0xff]
    %1753 = vset.pattern.permute.xlu0 0
    %1754 = vperm.xlu0 %1753, %v1748
    %v1755 = vpop.permute.xlu0 %1754
    %1758 = vset.pattern.permute.xlu0 0
    %1759 = vperm.xlu0 %1758, %v1749
    %v1760 = vpop.permute.xlu0 %1759
    %1763 = vset.pattern.permute.xlu0 0
    %1764 = vperm.xlu0 %1763, %v1750
    %v1765 = vpop.permute.xlu0 %1764
    %1768 = vset.pattern.permute.xlu0 0
    %1769 = vperm.xlu0 %1768, %v1751
    %v1770 = vpop.permute.xlu0 %1769
    %v1772 = vadd.f32 %v1744, %v1755
    %v1773 = vadd.f32 %v1745, %v1760
    %v1774 = vadd.f32 %v1746, %v1765
    %v1775 = vadd.f32 %v1747, %v1770
    %s1776 = scalar_lea.vmem %s7, 64
    %v1777 = vld [vmem:[%s1776] sm:$0xff]
    %v1778 = vld [vmem:[%s1776 + $0x8] sm:$0xff]
    %v1779 = vld [vmem:[%s1776 + $0x10] sm:$0xff]
    %v1780 = vld [vmem:[%s1776 + $0x18] sm:$0xff]
    %v1781 = vld [vmem:[%s1776 + $0x20] sm:$0xff]
    %v1782 = vld [vmem:[%s1776 + $0x28] sm:$0xff]
    %v1783 = vld [vmem:[%s1776 + $0x30] sm:$0xff]
    %v1784 = vld [vmem:[%s1776 + $0x38] sm:$0xff]
    %s1785 = scalar_lea.vmem %s8, 64
    %v1786 = vld [vmem:[%s1785] sm:$0xff]
    %v1787 = vld [vmem:[%s1785 + $0x8] sm:$0xff]
    %v1788 = vld [vmem:[%s1785 + $0x10] sm:$0xff]
    %v1789 = vld [vmem:[%s1785 + $0x18] sm:$0xff]
    %v1790 = vld [vmem:[%s1785 + $0x20] sm:$0xff]
    %v1791 = vld [vmem:[%s1785 + $0x28] sm:$0xff]
    %v1792 = vld [vmem:[%s1785 + $0x30] sm:$0xff]
    %v1793 = vld [vmem:[%s1785 + $0x38] sm:$0xff]
    %1795 = vset.pattern.permute.xlu0 0
    %1796 = vperm.xlu0 %1795, %v1786
    %v1797 = vpop.permute.xlu0 %1796
    %1800 = vset.pattern.permute.xlu0 0
    %1801 = vperm.xlu0 %1800, %v1787
    %v1802 = vpop.permute.xlu0 %1801
    %1805 = vset.pattern.permute.xlu0 0
    %1806 = vperm.xlu0 %1805, %v1788
    %v1807 = vpop.permute.xlu0 %1806
    %1810 = vset.pattern.permute.xlu0 0
    %1811 = vperm.xlu0 %1810, %v1789
    %v1812 = vpop.permute.xlu0 %1811
    %1815 = vset.pattern.permute.xlu0 0
    %1816 = vperm.xlu0 %1815, %v1790
    %v1817 = vpop.permute.xlu0 %1816
    %1820 = vset.pattern.permute.xlu0 0
    %1821 = vperm.xlu0 %1820, %v1791
    %v1822 = vpop.permute.xlu0 %1821
    %1825 = vset.pattern.permute.xlu0 0
    %1826 = vperm.xlu0 %1825, %v1792
    %v1827 = vpop.permute.xlu0 %1826
    %1830 = vset.pattern.permute.xlu0 0
    %1831 = vperm.xlu0 %1830, %v1793
    %v1832 = vpop.permute.xlu0 %1831
    %v1835 = vsel %vm506, %v1777, 0
    %v1838 = vsel %vm506, %v1778, 0
    %v1841 = vsel %vm506, %v1779, 0
    %v1844 = vsel %vm506, %v1780, 0
    %v1847 = vsel %vm506, %v1781, 0
    %v1850 = vsel %vm506, %v1782, 0
    %v1853 = vsel %vm506, %v1783, 0
    %v1856 = vsel %vm506, %v1784, 0
    %1858 = vmatprep.subr.mxu0 0.0
    %1859 = vmatpush1.msra.mxu0 %v1772
    %1860 = vmatprep.subr.mxu0 0.0
    %1861 = vmatpush1.msra.mxu0 %v1773
    %1862 = vmatprep.subr.mxu0 0.0
    %1863 = vmatpush1.msra.mxu0 %v1774
    %1864 = vmatprep.subr.mxu0 0.0
    %1865 = vmatpush1.msra.mxu0 %v1775
    %1866 = vmatprep.subr.mxu0 0.0
    %1867 = vmatpush1.msra.mxu0 0.0
    %1868 = vmatprep.subr.mxu0 0.0
    %1869 = vmatpush1.msra.mxu0 0.0
    %1870 = vmatprep.subr.mxu0 0.0
    %1871 = vmatpush1.msra.mxu0 0.0
    %1872 = vmatprep.subr.mxu0 0.0
    %1873 = vmatpush1.msra.mxu0 0.0
    %1874 = vmatprep.subr.mxu0 0.0
    %1875 = vmatpush1.msra.mxu0 0.0
    %1876 = vmatprep.subr.mxu0 0.0
    %1877 = vmatpush1.msra.mxu0 0.0
    %1878 = vmatprep.subr.mxu0 0.0
    %1879 = vmatpush1.msra.mxu0 0.0
    %1880 = vmatprep.subr.mxu0 0.0
    %1881 = vmatpush1.msra.mxu0 0.0
    %1882 = vmatprep.subr.mxu0 0.0
    %1883 = vmatpush1.msra.mxu0 0.0
    %1884 = vmatprep.subr.mxu0 0.0
    %1885 = vmatpush1.msra.mxu0 0.0
    %1886 = vmatprep.subr.mxu0 0.0
    %1887 = vmatpush1.msra.mxu0 0.0
    %1888 = vmatprep.subr.mxu0 0.0
    %1889 = vmatpush1.msra.mxu0 0.0
    %1890 = vmatprep.subr.mxu0 0.0
    %1891 = vmatpush1.msra.mxu0 0.0
    %1892 = vmatprep.subr.mxu0 0.0
    %1893 = vmatpush1.msra.mxu0 0.0
    %1894 = vmatprep.subr.mxu0 0.0
    %1895 = vmatpush1.msra.mxu0 0.0
    %1896 = vmatprep.subr.mxu0 0.0
    %1897 = vmatpush1.msra.mxu0 0.0
    %1898 = vmatprep.subr.mxu0 0.0
    %1899 = vmatpush1.msra.mxu0 0.0
    %1900 = vmatprep.subr.mxu0 0.0
    %1901 = vmatpush1.msra.mxu0 0.0
    %1902 = vmatprep.subr.mxu0 0.0
    %1903 = vmatpush1.msra.mxu0 0.0
    %1904 = vmatprep.subr.mxu0 0.0
    %1905 = vmatpush1.msra.mxu0 0.0
    %1906 = vmatprep.subr.mxu0 0.0
    %1907 = vmatpush1.msra.mxu0 0.0
    %1908 = vmatprep.subr.mxu0 0.0
    %1909 = vmatpush1.msra.mxu0 0.0
    %1910 = vmatprep.subr.mxu0 0.0
    %1911 = vmatpush1.msra.mxu0 0.0
    %1912 = vmatprep.subr.mxu0 0.0
    %1913 = vmatpush1.msra.mxu0 0.0
    %1914 = vmatprep.subr.mxu0 0.0
    %1915 = vmatpush1.msra.mxu0 0.0
    %1916 = vmatprep.subr.mxu0 0.0
    %1917 = vmatpush1.msra.mxu0 0.0
    %1918 = vmatprep.subr.mxu0 0.0
    %1919 = vmatpush1.msra.mxu0 0.0
    %1920 = vmatprep.subr.mxu0 0.0
    %1921 = vmatpush1.msra.mxu0 0.0
    %1922 = vmatprep.mubr.f32.mxu0 0.0
    %1923 = vmatmul.mubr.f32.gmra.mrb[0].mxu0 %v1835
    %v1924 = vpop.f32.mrb[0].mxu0
    %v1925 = vadd.f32 %v1797, %v1924
    %v1926 = vpop.f32.mrb[0].mxu0
    %1927 = vmatprep.mubr.f32.mxu0 0.0
    %1928 = vmatmul.mubr.f32.gmra.mrb[0].mxu0 %v1838
    %v1929 = vpop.f32.mrb[0].mxu0
    %v1930 = vadd.f32 %v1802, %v1929
    %v1931 = vpop.f32.mrb[0].mxu0
    %1932 = vmatprep.mubr.f32.mxu0 0.0
    %1933 = vmatmul.mubr.f32.gmra.mrb[0].mxu0 %v1841
    %v1934 = vpop.f32.mrb[0].mxu0
    %v1935 = vadd.f32 %v1807, %v1934
    %v1936 = vpop.f32.mrb[0].mxu0
    %1937 = vmatprep.mubr.f32.mxu0 0.0
    %1938 = vmatmul.mubr.f32.gmra.mrb[0].mxu0 %v1844
    %v1939 = vpop.f32.mrb[0].mxu0
    %v1940 = vadd.f32 %v1812, %v1939
    %v1941 = vpop.f32.mrb[0].mxu0
    %1942 = vmatprep.mubr.f32.mxu0 0.0
    %1943 = vmatmul.mubr.f32.gmra.mrb[0].mxu0 %v1847
    %v1944 = vpop.f32.mrb[0].mxu0
    %v1945 = vadd.f32 %v1817, %v1944
    %v1946 = vpop.f32.mrb[0].mxu0
    %1947 = vmatprep.mubr.f32.mxu0 0.0
    %1948 = vmatmul.mubr.f32.gmra.mrb[0].mxu0 %v1850
    %v1949 = vpop.f32.mrb[0].mxu0
    %v1950 = vadd.f32 %v1822, %v1949
    %v1951 = vpop.f32.mrb[0].mxu0
    %1952 = vmatprep.mubr.f32.mxu0 0.0
    %1953 = vmatmul.mubr.f32.gmra.mrb[0].mxu0 %v1853
    %v1954 = vpop.f32.mrb[0].mxu0
    %v1955 = vadd.f32 %v1827, %v1954
    %v1956 = vpop.f32.mrb[0].mxu0
    %1957 = vmatprep.mubr.f32.mxu0 0.0
    %1958 = vmatmul.mubr.f32.gmra.mrb[0].mxu0 %v1856
    %v1959 = vpop.f32.mrb[0].mxu0
    %v1960 = vadd.f32 %v1832, %v1959
    %v1961 = vpop.f32.mrb[0].mxu0
    %1962 = vdwg.mxu0
    %s1963 = scalar_lea.vmem %s9, 1
    %v1964 = vld [vmem:[%s1963] sm:$0x1]
    %v1965 = vmax.f32 %v1925, 0.0
    %v1966 = vmax.f32 %v1930, 0.0
    %v1967 = vmax.f32 %v1935, 0.0
    %v1968 = vmax.f32 %v1940, 0.0
    %v1969 = vmax.f32 %v1945, 0.0
    %v1970 = vmax.f32 %v1950, 0.0
    %v1971 = vmax.f32 %v1955, 0.0
    %v1972 = vmax.f32 %v1960, 0.0
    %v1973 = vmin.f32 %v1925, 0.0
    %v1974 = vmin.f32 %v1930, 0.0
    %v1975 = vmin.f32 %v1935, 0.0
    %v1976 = vmin.f32 %v1940, 0.0
    %v1977 = vmin.f32 %v1945, 0.0
    %v1978 = vmin.f32 %v1950, 0.0
    %v1979 = vmin.f32 %v1955, 0.0
    %v1980 = vmin.f32 %v1960, 0.0
    %v1982 = vlaneseq
    %v1983 = vshrl.u32 %v1982, 7
    %v1984 = vsub.s32 0, %v1983
    %v1985 = vrot.slane %v1964, %v1984
    %1986 = vset.pattern.permute.xlu0 0
    %1987 = vperm.xlu0 %1986, %v1985
    %v1988 = vpop.permute.xlu0 %1987
    %v1990 = vmul.f32 %v1988, %v1973
    %v1991 = vmul.f32 %v1988, %v1974
    %v1992 = vmul.f32 %v1988, %v1975
    %v1993 = vmul.f32 %v1988, %v1976
    %v1994 = vmul.f32 %v1988, %v1977
    %v1995 = vmul.f32 %v1988, %v1978
    %v1996 = vmul.f32 %v1988, %v1979
    %v1997 = vmul.f32 %v1988, %v1980
    %v1998 = vadd.f32 %v1965, %v1990
    %v1999 = vadd.f32 %v1966, %v1991
    %v2000 = vadd.f32 %v1967, %v1992
    %v2001 = vadd.f32 %v1968, %v1993
    %v2002 = vadd.f32 %v1969, %v1994
    %v2003 = vadd.f32 %v1970, %v1995
    %v2004 = vadd.f32 %v1971, %v1996
    %v2005 = vadd.f32 %v1972, %v1997
    %s2006 = scalar_lea.vmem %s10, 64
    %v2007 = vld [vmem:[%s2006] sm:$0xff]
    %v2008 = vld [vmem:[%s2006 + $0x8] sm:$0xff]
    %v2009 = vld [vmem:[%s2006 + $0x10] sm:$0xff]
    %v2010 = vld [vmem:[%s2006 + $0x18] sm:$0xff]
    %v2011 = vld [vmem:[%s2006 + $0x20] sm:$0xff]
    %v2012 = vld [vmem:[%s2006 + $0x28] sm:$0xff]
    %v2013 = vld [vmem:[%s2006 + $0x30] sm:$0xff]
    %v2014 = vld [vmem:[%s2006 + $0x38] sm:$0xff]
    %s2015 = scalar_lea.vmem %s11, 64
    %v2016 = vld [vmem:[%s2015] sm:$0xff]
    %v2017 = vld [vmem:[%s2015 + $0x8] sm:$0xff]
    %v2018 = vld [vmem:[%s2015 + $0x10] sm:$0xff]
    %v2019 = vld [vmem:[%s2015 + $0x18] sm:$0xff]
    %v2020 = vld [vmem:[%s2015 + $0x20] sm:$0xff]
    %v2021 = vld [vmem:[%s2015 + $0x28] sm:$0xff]
    %v2022 = vld [vmem:[%s2015 + $0x30] sm:$0xff]
    %v2023 = vld [vmem:[%s2015 + $0x38] sm:$0xff]
    %v2024 = vadd.f32 %v1998, %v1999
    %v2025 = vadd.f32 %v2024, %v2000
    %v2026 = vadd.f32 %v2025, %v2001
    %v2027 = vadd.f32 %v2026, %v2002
    %v2028 = vadd.f32 %v2027, %v2003
    %v2029 = vadd.f32 %v2028, %v2004
    %v2030 = vadd.f32 %v2029, %v2005
    %v2031 = vrot.slane %v2030, 4
    %v2032 = vadd.f32 %v2030, %v2031
    %v2033 = vrot.slane %v2032, 2
    %v2034 = vadd.f32 %v2032, %v2033
    %v2035 = vrot.slane %v2034, 1
    %v2036 = vadd.f32 %v2034, %v2035
    %v2037 = vmul.f32 %v1998, %v1998
    %v2038 = vmul.f32 %v1999, %v1999
    %v2039 = vmul.f32 %v2000, %v2000
    %v2040 = vmul.f32 %v2001, %v2001
    %v2041 = vmul.f32 %v2002, %v2002
    %v2042 = vmul.f32 %v2003, %v2003
    %v2043 = vmul.f32 %v2004, %v2004
    %v2044 = vmul.f32 %v2005, %v2005
    %v2045 = vadd.f32 %v2037, %v2038
    %v2046 = vadd.f32 %v2045, %v2039
    %v2047 = vadd.f32 %v2046, %v2040
    %v2048 = vadd.f32 %v2047, %v2041
    %v2049 = vadd.f32 %v2048, %v2042
    %v2050 = vadd.f32 %v2049, %v2043
    %v2051 = vadd.f32 %v2050, %v2044
    %v2052 = vrot.slane %v2051, 4
    %v2053 = vadd.f32 %v2051, %v2052
    %v2054 = vrot.slane %v2053, 2
    %v2055 = vadd.f32 %v2053, %v2054
    %v2056 = vrot.slane %v2055, 1
    %v2057 = vadd.f32 %v2055, %v2056
    %v2058 = vsel %vm127, %v2036, %v2057
    %2059 = vmatprep.subr.mxu0 0.0
    %2060 = vmatpush1.msra.mxu0 %v79
    %2061 = vmatprep.subr.mxu0 0.0
    %2062 = vmatpush1.msra.mxu0 %v80
    %2063 = vmatprep.subr.mxu0 0.0
    %2064 = vmatpush1.msra.mxu0 %v81
    %2065 = vmatprep.subr.mxu0 0.0
    %2066 = vmatpush1.msra.mxu0 %v82
    %2067 = vmatprep.subr.mxu0 0.0
    %2068 = vmatpush1.msra.mxu0 %v83
    %2069 = vmatprep.subr.mxu0 0.0
    %2070 = vmatpush1.msra.mxu0 %v84
    %2071 = vmatprep.subr.mxu0 0.0
    %2072 = vmatpush1.msra.mxu0 %v85
    %2073 = vmatprep.subr.mxu0 0.0
    %2074 = vmatpush1.msra.mxu0 %v86
    %2075 = vmatprep.subr.mxu0 0.0
    %2076 = vmatpush1.msra.mxu0 %v87
    %2077 = vmatprep.subr.mxu0 0.0
    %2078 = vmatpush1.msra.mxu0 %v88
    %2079 = vmatprep.subr.mxu0 0.0
    %2080 = vmatpush1.msra.mxu0 %v89
    %2081 = vmatprep.subr.mxu0 0.0
    %2082 = vmatpush1.msra.mxu0 %v90
    %2083 = vmatprep.subr.mxu0 0.0
    %2084 = vmatpush1.msra.mxu0 %v91
    %2085 = vmatprep.subr.mxu0 0.0
    %2086 = vmatpush1.msra.mxu0 %v92
    %2087 = vmatprep.subr.mxu0 0.0
    %2088 = vmatpush1.msra.mxu0 %v93
    %2089 = vmatprep.subr.mxu0 0.0
    %2090 = vmatpush1.msra.mxu0 %v94
    %2091 = vmatprep.subr.mxu0 0.0
    %2092 = vmatpush1.msra.mxu0 0.0
    %2093 = vmatprep.subr.mxu0 0.0
    %2094 = vmatpush1.msra.mxu0 0.0
    %2095 = vmatprep.subr.mxu0 0.0
    %2096 = vmatpush1.msra.mxu0 0.0
    %2097 = vmatprep.subr.mxu0 0.0
    %2098 = vmatpush1.msra.mxu0 0.0
    %2099 = vmatprep.subr.mxu0 0.0
    %2100 = vmatpush1.msra.mxu0 0.0
    %2101 = vmatprep.subr.mxu0 0.0
    %2102 = vmatpush1.msra.mxu0 0.0
    %2103 = vmatprep.subr.mxu0 0.0
    %2104 = vmatpush1.msra.mxu0 0.0
    %2105 = vmatprep.subr.mxu0 0.0
    %2106 = vmatpush1.msra.mxu0 0.0
    %2107 = vmatprep.subr.mxu0 0.0
    %2108 = vmatpush1.msra.mxu0 0.0
    %2109 = vmatprep.subr.mxu0 0.0
    %2110 = vmatpush1.msra.mxu0 0.0
    %2111 = vmatprep.subr.mxu0 0.0
    %2112 = vmatpush1.msra.mxu0 0.0
    %2113 = vmatprep.subr.mxu0 0.0
    %2114 = vmatpush1.msra.mxu0 0.0
    %2115 = vmatprep.subr.mxu0 0.0
    %2116 = vmatpush1.msra.mxu0 0.0
    %2117 = vmatprep.subr.mxu0 0.0
    %2118 = vmatpush1.msra.mxu0 0.0
    %2119 = vmatprep.subr.mxu0 0.0
    %2120 = vmatpush1.msra.mxu0 0.0
    %2121 = vmatprep.subr.mxu0 0.0
    %2122 = vmatpush1.msra.mxu0 0.0
    %2123 = vmatprep.mubr.f32.mxu0 0.0
    %2124 = vmatmul.mubr.f32.gmra.mrb[0].mxu0 %v2058
    %v2125 = vpop.f32.mrb[0].mxu0
    %v2126 = vadd.f32 0.0, %v2125
    %v2127 = vpop.f32.mrb[0].mxu0
    %2128 = vdwg.mxu0
    %v2129 = vmul.f32 %v2126, 0.00024414063
    %v2131 = vsel %vm200, %v2129, 0
    %2133 = vmatprep.subr.mxu0 0.0
    %2134 = vmatpush1.msra.mxu0 %v206
    %2135 = vmatprep.subr.mxu0 0.0
    %2136 = vmatpush1.msra.mxu0 0.0
    %2137 = vmatprep.subr.mxu0 0.0
    %2138 = vmatpush1.msra.mxu0 0.0
    %2139 = vmatprep.subr.mxu0 0.0
    %2140 = vmatpush1.msra.mxu0 0.0
    %2141 = vmatprep.subr.mxu0 0.0
    %2142 = vmatpush1.msra.mxu0 0.0
    %2143 = vmatprep.subr.mxu0 0.0
    %2144 = vmatpush1.msra.mxu0 0.0
    %2145 = vmatprep.subr.mxu0 0.0
    %2146 = vmatpush1.msra.mxu0 0.0
    %2147 = vmatprep.subr.mxu0 0.0
    %2148 = vmatpush1.msra.mxu0 0.0
    %2149 = vmatprep.subr.mxu0 0.0
    %2150 = vmatpush1.msra.mxu0 0.0
    %2151 = vmatprep.subr.mxu0 0.0
    %2152 = vmatpush1.msra.mxu0 0.0
    %2153 = vmatprep.subr.mxu0 0.0
    %2154 = vmatpush1.msra.mxu0 0.0
    %2155 = vmatprep.subr.mxu0 0.0
    %2156 = vmatpush1.msra.mxu0 0.0
    %2157 = vmatprep.subr.mxu0 0.0
    %2158 = vmatpush1.msra.mxu0 0.0
    %2159 = vmatprep.subr.mxu0 0.0
    %2160 = vmatpush1.msra.mxu0 0.0
    %2161 = vmatprep.subr.mxu0 0.0
    %2162 = vmatpush1.msra.mxu0 0.0
    %2163 = vmatprep.subr.mxu0 0.0
    %2164 = vmatpush1.msra.mxu0 0.0
    %2165 = vmatprep.subr.mxu0 0.0
    %2166 = vmatpush1.msra.mxu0 0.0
    %2167 = vmatprep.subr.mxu0 0.0
    %2168 = vmatpush1.msra.mxu0 0.0
    %2169 = vmatprep.subr.mxu0 0.0
    %2170 = vmatpush1.msra.mxu0 0.0
    %2171 = vmatprep.subr.mxu0 0.0
    %2172 = vmatpush1.msra.mxu0 0.0
    %2173 = vmatprep.subr.mxu0 0.0
    %2174 = vmatpush1.msra.mxu0 0.0
    %2175 = vmatprep.subr.mxu0 0.0
    %2176 = vmatpush1.msra.mxu0 0.0
    %2177 = vmatprep.subr.mxu0 0.0
    %2178 = vmatpush1.msra.mxu0 0.0
    %2179 = vmatprep.subr.mxu0 0.0
    %2180 = vmatpush1.msra.mxu0 0.0
    %2181 = vmatprep.subr.mxu0 0.0
    %2182 = vmatpush1.msra.mxu0 0.0
    %2183 = vmatprep.subr.mxu0 0.0
    %2184 = vmatpush1.msra.mxu0 0.0
    %2185 = vmatprep.subr.mxu0 0.0
    %2186 = vmatpush1.msra.mxu0 0.0
    %2187 = vmatprep.subr.mxu0 0.0
    %2188 = vmatpush1.msra.mxu0 0.0
    %2189 = vmatprep.subr.mxu0 0.0
    %2190 = vmatpush1.msra.mxu0 0.0
    %2191 = vmatprep.subr.mxu0 0.0
    %2192 = vmatpush1.msra.mxu0 0.0
    %2193 = vmatprep.subr.mxu0 0.0
    %2194 = vmatpush1.msra.mxu0 0.0
    %2195 = vmatprep.subr.mxu0 0.0
    %2196 = vmatpush1.msra.mxu0 0.0
    %2197 = vmatprep.mubr.f32.mxu0 0.0
    %2198 = vmatmul.mubr.f32.gmra.mrb[0].mxu0 %v2131
    %v2199 = vpop.f32.mrb[0].mxu0
    %v2200 = vadd.f32 0.0, %v2199
    %v2201 = vpop.f32.mrb[0].mxu0
    %2202 = vdwg.mxu0
    %v2203 = vmul.f32 %v2200, %v2200
    %v2205 = vrot.slane %v2203, 7
    %v2207 = vsub.f32 %v2200, %v2205
    %v2208 = vmax.f32 %v2207, 0.0
    %v2209 = vadd.f32 %v2208, 1e-08
    %v2210 = vrsqrt.pop %v2209
    %2212 = vset.pattern.permute.xlu0 0
    %2213 = vperm.xlu0 %2212, %v2007
    %v2214 = vpop.permute.xlu0 %2213
    %2217 = vset.pattern.permute.xlu0 0
    %2218 = vperm.xlu0 %2217, %v2008
    %v2219 = vpop.permute.xlu0 %2218
    %2222 = vset.pattern.permute.xlu0 0
    %2223 = vperm.xlu0 %2222, %v2009
    %v2224 = vpop.permute.xlu0 %2223
    %2227 = vset.pattern.permute.xlu0 0
    %2228 = vperm.xlu0 %2227, %v2010
    %v2229 = vpop.permute.xlu0 %2228
    %2232 = vset.pattern.permute.xlu0 0
    %2233 = vperm.xlu0 %2232, %v2011
    %v2234 = vpop.permute.xlu0 %2233
    %2237 = vset.pattern.permute.xlu0 0
    %2238 = vperm.xlu0 %2237, %v2012
    %v2239 = vpop.permute.xlu0 %2238
    %2242 = vset.pattern.permute.xlu0 0
    %2243 = vperm.xlu0 %2242, %v2013
    %v2244 = vpop.permute.xlu0 %2243
    %2247 = vset.pattern.permute.xlu0 0
    %2248 = vperm.xlu0 %2247, %v2014
    %v2249 = vpop.permute.xlu0 %2248
    %v2251 = vlaneseq
    %v2252 = vshrl.u32 %v2251, 7
    %v2253 = vsub.s32 1, %v2252
    %v2254 = vrot.slane %v2210, %v2253
    %v2255 = vmul.f32 %v2214, %v2254
    %v2256 = vmul.f32 %v2219, %v2254
    %v2257 = vmul.f32 %v2224, %v2254
    %v2258 = vmul.f32 %v2229, %v2254
    %v2259 = vmul.f32 %v2234, %v2254
    %v2260 = vmul.f32 %v2239, %v2254
    %v2261 = vmul.f32 %v2244, %v2254
    %v2262 = vmul.f32 %v2249, %v2254
    %v2263 = vmul.f32 %v1998, %v2255
    %v2264 = vmul.f32 %v1999, %v2256
    %v2265 = vmul.f32 %v2000, %v2257
    %v2266 = vmul.f32 %v2001, %v2258
    %v2267 = vmul.f32 %v2002, %v2259
    %v2268 = vmul.f32 %v2003, %v2260
    %v2269 = vmul.f32 %v2004, %v2261
    %v2270 = vmul.f32 %v2005, %v2262
    %v2271 = vlaneseq
    %v2272 = vshrl.u32 %v2271, 7
    %v2273 = vsub.s32 0, %v2272
    %v2274 = vrot.slane %v2200, %v2273
    %v2275 = vmul.f32 %v2274, %v2255
    %v2276 = vmul.f32 %v2274, %v2256
    %v2277 = vmul.f32 %v2274, %v2257
    %v2278 = vmul.f32 %v2274, %v2258
    %v2279 = vmul.f32 %v2274, %v2259
    %v2280 = vmul.f32 %v2274, %v2260
    %v2281 = vmul.f32 %v2274, %v2261
    %v2282 = vmul.f32 %v2274, %v2262
    %2284 = vset.pattern.permute.xlu0 0
    %2285 = vperm.xlu0 %2284, %v2016
    %v2286 = vpop.permute.xlu0 %2285
    %2289 = vset.pattern.permute.xlu0 0
    %2290 = vperm.xlu0 %2289, %v2017
    %v2291 = vpop.permute.xlu0 %2290
    %2294 = vset.pattern.permute.xlu0 0
    %2295 = vperm.xlu0 %2294, %v2018
    %v2296 = vpop.permute.xlu0 %2295
    %2299 = vset.pattern.permute.xlu0 0
    %2300 = vperm.xlu0 %2299, %v2019
    %v2301 = vpop.permute.xlu0 %2300
    %2304 = vset.pattern.permute.xlu0 0
    %2305 = vperm.xlu0 %2304, %v2020
    %v2306 = vpop.permute.xlu0 %2305
    %2309 = vset.pattern.permute.xlu0 0
    %2310 = vperm.xlu0 %2309, %v2021
    %v2311 = vpop.permute.xlu0 %2310
    %2314 = vset.pattern.permute.xlu0 0
    %2315 = vperm.xlu0 %2314, %v2022
    %v2316 = vpop.permute.xlu0 %2315
    %2319 = vset.pattern.permute.xlu0 0
    %2320 = vperm.xlu0 %2319, %v2023
    %v2321 = vpop.permute.xlu0 %2320
    %v2323 = vsub.f32 %v2286, %v2275
    %v2324 = vsub.f32 %v2291, %v2276
    %v2325 = vsub.f32 %v2296, %v2277
    %v2326 = vsub.f32 %v2301, %v2278
    %v2327 = vsub.f32 %v2306, %v2279
    %v2328 = vsub.f32 %v2311, %v2280
    %v2329 = vsub.f32 %v2316, %v2281
    %v2330 = vsub.f32 %v2321, %v2282
    %v2331 = vadd.f32 %v2263, %v2323
    %v2332 = vadd.f32 %v2264, %v2324
    %v2333 = vadd.f32 %v2265, %v2325
    %v2334 = vadd.f32 %v2266, %v2326
    %v2335 = vadd.f32 %v2267, %v2327
    %v2336 = vadd.f32 %v2268, %v2328
    %v2337 = vadd.f32 %v2269, %v2329
    %v2338 = vadd.f32 %v2270, %v2330
    %s2339 = scalar_lea.vmem %s12, 64
    %v2340 = vld [vmem:[%s2339] sm:$0xff]
    %v2341 = vld [vmem:[%s2339 + $0x8] sm:$0xff]
    %v2342 = vld [vmem:[%s2339 + $0x10] sm:$0xff]
    %v2343 = vld [vmem:[%s2339 + $0x18] sm:$0xff]
    %v2344 = vld [vmem:[%s2339 + $0x20] sm:$0xff]
    %v2345 = vld [vmem:[%s2339 + $0x28] sm:$0xff]
    %v2346 = vld [vmem:[%s2339 + $0x30] sm:$0xff]
    %v2347 = vld [vmem:[%s2339 + $0x38] sm:$0xff]
    %2349 = vset.pattern.permute.xlu0 1
    %2350 = vperm.xlu0 %2349, %v2340
    %v2351 = vpop.permute.xlu0 %2350
    %2354 = vset.pattern.permute.xlu0 1
    %2355 = vperm.xlu0 %2354, %v2341
    %v2356 = vpop.permute.xlu0 %2355
    %2359 = vset.pattern.permute.xlu0 1
    %2360 = vperm.xlu0 %2359, %v2342
    %v2361 = vpop.permute.xlu0 %2360
    %2364 = vset.pattern.permute.xlu0 1
    %2365 = vperm.xlu0 %2364, %v2343
    %v2366 = vpop.permute.xlu0 %2365
    %2369 = vset.pattern.permute.xlu0 1
    %2370 = vperm.xlu0 %2369, %v2344
    %v2371 = vpop.permute.xlu0 %2370
    %2374 = vset.pattern.permute.xlu0 1
    %2375 = vperm.xlu0 %2374, %v2345
    %v2376 = vpop.permute.xlu0 %2375
    %2379 = vset.pattern.permute.xlu0 1
    %2380 = vperm.xlu0 %2379, %v2346
    %v2381 = vpop.permute.xlu0 %2380
    %2384 = vset.pattern.permute.xlu0 1
    %2385 = vperm.xlu0 %2384, %v2347
    %v2386 = vpop.permute.xlu0 %2385
    %v2388 = vmul.f32 %v2351, %v2331
    %v2389 = vmul.f32 %v2356, %v2332
    %v2390 = vmul.f32 %v2361, %v2333
    %v2391 = vmul.f32 %v2366, %v2334
    %v2392 = vmul.f32 %v2371, %v2335
    %v2393 = vmul.f32 %v2376, %v2336
    %v2394 = vmul.f32 %v2381, %v2337
    %v2395 = vmul.f32 %v2386, %v2338
    %s2396 = scalar_lea.vmem %s13, 64
    %v2397 = vld [vmem:[%s2396] sm:$0xff]
    %v2398 = vld [vmem:[%s2396 + $0x8] sm:$0xff]
    %v2399 = vld [vmem:[%s2396 + $0x10] sm:$0xff]
    %v2400 = vld [vmem:[%s2396 + $0x18] sm:$0xff]
    %v2401 = vld [vmem:[%s2396 + $0x20] sm:$0xff]
    %v2402 = vld [vmem:[%s2396 + $0x28] sm:$0xff]
    %v2403 = vld [vmem:[%s2396 + $0x30] sm:$0xff]
    %v2404 = vld [vmem:[%s2396 + $0x38] sm:$0xff]
    %2406 = vset.pattern.permute.xlu0 0
    %2407 = vperm.xlu0 %2406, %v2397
    %v2408 = vpop.permute.xlu0 %2407
    %2411 = vset.pattern.permute.xlu0 0
    %2412 = vperm.xlu0 %2411, %v2398
    %v2413 = vpop.permute.xlu0 %2412
    %2416 = vset.pattern.permute.xlu0 0
    %2417 = vperm.xlu0 %2416, %v2399
    %v2418 = vpop.permute.xlu0 %2417
    %2421 = vset.pattern.permute.xlu0 0
    %2422 = vperm.xlu0 %2421, %v2400
    %v2423 = vpop.permute.xlu0 %2422
    %2426 = vset.pattern.permute.xlu0 0
    %2427 = vperm.xlu0 %2426, %v2401
    %v2428 = vpop.permute.xlu0 %2427
    %2431 = vset.pattern.permute.xlu0 0
    %2432 = vperm.xlu0 %2431, %v2402
    %v2433 = vpop.permute.xlu0 %2432
    %2436 = vset.pattern.permute.xlu0 0
    %2437 = vperm.xlu0 %2436, %v2403
    %v2438 = vpop.permute.xlu0 %2437
    %2441 = vset.pattern.permute.xlu0 0
    %2442 = vperm.xlu0 %2441, %v2404
    %v2443 = vpop.permute.xlu0 %2442
    %v2445 = vadd.f32 %v2388, %v2408
    %v2446 = vadd.f32 %v2389, %v2413
    %v2447 = vadd.f32 %v2390, %v2418
    %v2448 = vadd.f32 %v2391, %v2423
    %v2449 = vadd.f32 %v2392, %v2428
    %v2450 = vadd.f32 %v2393, %v2433
    %v2451 = vadd.f32 %v2394, %v2438
    %v2452 = vadd.f32 %v2395, %v2443
    %2453 = vrot.lane.b32.xlu0 %v2331, 2
    %v2454 = vpop.permute.xlu0 %2453
    %2455 = vrot.lane.b32.xlu0 %v2332, 2
    %v2456 = vpop.permute.xlu0 %2455
    %2457 = vrot.lane.b32.xlu0 %v2333, 2
    %v2458 = vpop.permute.xlu0 %2457
    %2459 = vrot.lane.b32.xlu0 %v2334, 2
    %v2460 = vpop.permute.xlu0 %2459
    %2461 = vrot.lane.b32.xlu0 %v2335, 2
    %v2462 = vpop.permute.xlu0 %2461
    %2463 = vrot.lane.b32.xlu0 %v2336, 2
    %v2464 = vpop.permute.xlu0 %2463
    %2465 = vrot.lane.b32.xlu0 %v2337, 2
    %v2466 = vpop.permute.xlu0 %2465
    %2467 = vrot.lane.b32.xlu0 %v2338, 2
    %v2468 = vpop.permute.xlu0 %2467
    %v2469 = vsel %vm103, 1, 0
    %vm2470 = vcmp.eq.s32.totalorder %v2469, 1
    %v2471 = vsel %vm2470, %v2454, 0.0
    %v2472 = vsel %vm2470, %v2456, 0.0
    %v2473 = vsel %vm2470, %v2458, 0.0
    %v2474 = vsel %vm2470, %v2460, 0.0
    %v2475 = vsel %vm2470, %v2462, 0.0
    %v2476 = vsel %vm2470, %v2464, 0.0
    %v2477 = vsel %vm2470, %v2466, 0.0
    %v2478 = vsel %vm2470, %v2468, 0.0
    %2479 = vset.pattern.permute.xlu0 0
    %2480 = vperm.xlu0 %2479, %v2340
    %v2481 = vpop.permute.xlu0 %2480
    %2483 = vset.pattern.permute.xlu0 0
    %2484 = vperm.xlu0 %2483, %v2341
    %v2485 = vpop.permute.xlu0 %2484
    %2487 = vset.pattern.permute.xlu0 0
    %2488 = vperm.xlu0 %2487, %v2342
    %v2489 = vpop.permute.xlu0 %2488
    %2491 = vset.pattern.permute.xlu0 0
    %2492 = vperm.xlu0 %2491, %v2343
    %v2493 = vpop.permute.xlu0 %2492
    %2495 = vset.pattern.permute.xlu0 0
    %2496 = vperm.xlu0 %2495, %v2344
    %v2497 = vpop.permute.xlu0 %2496
    %2499 = vset.pattern.permute.xlu0 0
    %2500 = vperm.xlu0 %2499, %v2345
    %v2501 = vpop.permute.xlu0 %2500
    %2503 = vset.pattern.permute.xlu0 0
    %2504 = vperm.xlu0 %2503, %v2346
    %v2505 = vpop.permute.xlu0 %2504
    %2507 = vset.pattern.permute.xlu0 0
    %2508 = vperm.xlu0 %2507, %v2347
    %v2509 = vpop.permute.xlu0 %2508
    %v2511 = vmul.f32 %v2481, %v2471
    %v2512 = vmul.f32 %v2485, %v2472
    %v2513 = vmul.f32 %v2489, %v2473
    %v2514 = vmul.f32 %v2493, %v2474
    %v2515 = vmul.f32 %v2497, %v2475
    %v2516 = vmul.f32 %v2501, %v2476
    %v2517 = vmul.f32 %v2505, %v2477
    %v2518 = vmul.f32 %v2509, %v2478
    %v2519 = vadd.f32 %v2445, %v2511
    %v2520 = vadd.f32 %v2446, %v2512
    %v2521 = vadd.f32 %v2447, %v2513
    %v2522 = vadd.f32 %v2448, %v2514
    %v2523 = vadd.f32 %v2449, %v2515
    %v2524 = vadd.f32 %v2450, %v2516
    %v2525 = vadd.f32 %v2451, %v2517
    %v2526 = vadd.f32 %v2452, %v2518
    %2527 = vrot.lane.b32.xlu0 %v2331, 126
    %v2528 = vpop.permute.xlu0 %2527
    %2529 = vrot.lane.b32.xlu0 %v2332, 126
    %v2530 = vpop.permute.xlu0 %2529
    %2531 = vrot.lane.b32.xlu0 %v2333, 126
    %v2532 = vpop.permute.xlu0 %2531
    %2533 = vrot.lane.b32.xlu0 %v2334, 126
    %v2534 = vpop.permute.xlu0 %2533
    %2535 = vrot.lane.b32.xlu0 %v2335, 126
    %v2536 = vpop.permute.xlu0 %2535
    %2537 = vrot.lane.b32.xlu0 %v2336, 126
    %v2538 = vpop.permute.xlu0 %2537
    %2539 = vrot.lane.b32.xlu0 %v2337, 126
    %v2540 = vpop.permute.xlu0 %2539
    %2541 = vrot.lane.b32.xlu0 %v2338, 126
    %v2542 = vpop.permute.xlu0 %2541
    %v2543 = vsel %vm104, 1, 0
    %vm2544 = vcmp.eq.s32.totalorder %v2543, 1
    %v2545 = vsel %vm2544, %v2528, 0.0
    %v2546 = vsel %vm2544, %v2530, 0.0
    %v2547 = vsel %vm2544, %v2532, 0.0
    %v2548 = vsel %vm2544, %v2534, 0.0
    %v2549 = vsel %vm2544, %v2536, 0.0
    %v2550 = vsel %vm2544, %v2538, 0.0
    %v2551 = vsel %vm2544, %v2540, 0.0
    %v2552 = vsel %vm2544, %v2542, 0.0
    %2553 = vset.pattern.permute.xlu0 2
    %2554 = vperm.xlu0 %2553, %v2340
    %v2555 = vpop.permute.xlu0 %2554
    %2557 = vset.pattern.permute.xlu0 2
    %2558 = vperm.xlu0 %2557, %v2341
    %v2559 = vpop.permute.xlu0 %2558
    %2561 = vset.pattern.permute.xlu0 2
    %2562 = vperm.xlu0 %2561, %v2342
    %v2563 = vpop.permute.xlu0 %2562
    %2565 = vset.pattern.permute.xlu0 2
    %2566 = vperm.xlu0 %2565, %v2343
    %v2567 = vpop.permute.xlu0 %2566
    %2569 = vset.pattern.permute.xlu0 2
    %2570 = vperm.xlu0 %2569, %v2344
    %v2571 = vpop.permute.xlu0 %2570
    %2573 = vset.pattern.permute.xlu0 2
    %2574 = vperm.xlu0 %2573, %v2345
    %v2575 = vpop.permute.xlu0 %2574
    %2577 = vset.pattern.permute.xlu0 2
    %2578 = vperm.xlu0 %2577, %v2346
    %v2579 = vpop.permute.xlu0 %2578
    %2581 = vset.pattern.permute.xlu0 2
    %2582 = vperm.xlu0 %2581, %v2347
    %v2583 = vpop.permute.xlu0 %2582
    %v2585 = vmul.f32 %v2555, %v2545
    %v2586 = vmul.f32 %v2559, %v2546
    %v2587 = vmul.f32 %v2563, %v2547
    %v2588 = vmul.f32 %v2567, %v2548
    %v2589 = vmul.f32 %v2571, %v2549
    %v2590 = vmul.f32 %v2575, %v2550
    %v2591 = vmul.f32 %v2579, %v2551
    %v2592 = vmul.f32 %v2583, %v2552
    %v2593 = vadd.f32 %v2519, %v2585
    %v2594 = vadd.f32 %v2520, %v2586
    %v2595 = vadd.f32 %v2521, %v2587
    %v2596 = vadd.f32 %v2522, %v2588
    %v2597 = vadd.f32 %v2523, %v2589
    %v2598 = vadd.f32 %v2524, %v2590
    %v2599 = vadd.f32 %v2525, %v2591
    %v2600 = vadd.f32 %v2526, %v2592
    %s2601 = scalar_lea.vmem %s14, 1
    %v2602 = vld [vmem:[%s2601] sm:$0x1]
    %v2603 = vmax.f32 %v2593, 0.0
    %v2604 = vmax.f32 %v2594, 0.0
    %v2605 = vmax.f32 %v2595, 0.0
    %v2606 = vmax.f32 %v2596, 0.0
    %v2607 = vmax.f32 %v2597, 0.0
    %v2608 = vmax.f32 %v2598, 0.0
    %v2609 = vmax.f32 %v2599, 0.0
    %v2610 = vmax.f32 %v2600, 0.0
    %v2611 = vmin.f32 %v2593, 0.0
    %v2612 = vmin.f32 %v2594, 0.0
    %v2613 = vmin.f32 %v2595, 0.0
    %v2614 = vmin.f32 %v2596, 0.0
    %v2615 = vmin.f32 %v2597, 0.0
    %v2616 = vmin.f32 %v2598, 0.0
    %v2617 = vmin.f32 %v2599, 0.0
    %v2618 = vmin.f32 %v2600, 0.0
    %v2620 = vlaneseq
    %v2621 = vshrl.u32 %v2620, 7
    %v2622 = vsub.s32 0, %v2621
    %v2623 = vrot.slane %v2602, %v2622
    %2624 = vset.pattern.permute.xlu0 0
    %2625 = vperm.xlu0 %2624, %v2623
    %v2626 = vpop.permute.xlu0 %2625
    %v2628 = vmul.f32 %v2626, %v2611
    %v2629 = vmul.f32 %v2626, %v2612
    %v2630 = vmul.f32 %v2626, %v2613
    %v2631 = vmul.f32 %v2626, %v2614
    %v2632 = vmul.f32 %v2626, %v2615
    %v2633 = vmul.f32 %v2626, %v2616
    %v2634 = vmul.f32 %v2626, %v2617
    %v2635 = vmul.f32 %v2626, %v2618
    %v2636 = vadd.f32 %v2603, %v2628
    %v2637 = vadd.f32 %v2604, %v2629
    %v2638 = vadd.f32 %v2605, %v2630
    %v2639 = vadd.f32 %v2606, %v2631
    %v2640 = vadd.f32 %v2607, %v2632
    %v2641 = vadd.f32 %v2608, %v2633
    %v2642 = vadd.f32 %v2609, %v2634
    %v2643 = vadd.f32 %v2610, %v2635
    %s2644 = scalar_lea.vmem %s15, 64
    %v2645 = vld [vmem:[%s2644] sm:$0xff]
    %v2646 = vld [vmem:[%s2644 + $0x8] sm:$0xff]
    %v2647 = vld [vmem:[%s2644 + $0x10] sm:$0xff]
    %v2648 = vld [vmem:[%s2644 + $0x18] sm:$0xff]
    %v2649 = vld [vmem:[%s2644 + $0x20] sm:$0xff]
    %v2650 = vld [vmem:[%s2644 + $0x28] sm:$0xff]
    %v2651 = vld [vmem:[%s2644 + $0x30] sm:$0xff]
    %v2652 = vld [vmem:[%s2644 + $0x38] sm:$0xff]
    %s2653 = scalar_lea.vmem %s16, 64
    %v2654 = vld [vmem:[%s2653] sm:$0xff]
    %v2655 = vld [vmem:[%s2653 + $0x8] sm:$0xff]
    %v2656 = vld [vmem:[%s2653 + $0x10] sm:$0xff]
    %v2657 = vld [vmem:[%s2653 + $0x18] sm:$0xff]
    %v2658 = vld [vmem:[%s2653 + $0x20] sm:$0xff]
    %v2659 = vld [vmem:[%s2653 + $0x28] sm:$0xff]
    %v2660 = vld [vmem:[%s2653 + $0x30] sm:$0xff]
    %v2661 = vld [vmem:[%s2653 + $0x38] sm:$0xff]
    %v2662 = vadd.f32 %v2636, %v2637
    %v2663 = vadd.f32 %v2662, %v2638
    %v2664 = vadd.f32 %v2663, %v2639
    %v2665 = vadd.f32 %v2664, %v2640
    %v2666 = vadd.f32 %v2665, %v2641
    %v2667 = vadd.f32 %v2666, %v2642
    %v2668 = vadd.f32 %v2667, %v2643
    %v2669 = vrot.slane %v2668, 4
    %v2670 = vadd.f32 %v2668, %v2669
    %v2671 = vrot.slane %v2670, 2
    %v2672 = vadd.f32 %v2670, %v2671
    %v2673 = vrot.slane %v2672, 1
    %v2674 = vadd.f32 %v2672, %v2673
    %v2675 = vmul.f32 %v2636, %v2636
    %v2676 = vmul.f32 %v2637, %v2637
    %v2677 = vmul.f32 %v2638, %v2638
    %v2678 = vmul.f32 %v2639, %v2639
    %v2679 = vmul.f32 %v2640, %v2640
    %v2680 = vmul.f32 %v2641, %v2641
    %v2681 = vmul.f32 %v2642, %v2642
    %v2682 = vmul.f32 %v2643, %v2643
    %v2683 = vadd.f32 %v2675, %v2676
    %v2684 = vadd.f32 %v2683, %v2677
    %v2685 = vadd.f32 %v2684, %v2678
    %v2686 = vadd.f32 %v2685, %v2679
    %v2687 = vadd.f32 %v2686, %v2680
    %v2688 = vadd.f32 %v2687, %v2681
    %v2689 = vadd.f32 %v2688, %v2682
    %v2690 = vrot.slane %v2689, 4
    %v2691 = vadd.f32 %v2689, %v2690
    %v2692 = vrot.slane %v2691, 2
    %v2693 = vadd.f32 %v2691, %v2692
    %v2694 = vrot.slane %v2693, 1
    %v2695 = vadd.f32 %v2693, %v2694
    %v2696 = vsel %vm127, %v2674, %v2695
    %2697 = vmatprep.subr.mxu0 0.0
    %2698 = vmatpush1.msra.mxu0 %v79
    %2699 = vmatprep.subr.mxu0 0.0
    %2700 = vmatpush1.msra.mxu0 %v80
    %2701 = vmatprep.subr.mxu0 0.0
    %2702 = vmatpush1.msra.mxu0 %v81
    %2703 = vmatprep.subr.mxu0 0.0
    %2704 = vmatpush1.msra.mxu0 %v82
    %2705 = vmatprep.subr.mxu0 0.0
    %2706 = vmatpush1.msra.mxu0 %v83
    %2707 = vmatprep.subr.mxu0 0.0
    %2708 = vmatpush1.msra.mxu0 %v84
    %2709 = vmatprep.subr.mxu0 0.0
    %2710 = vmatpush1.msra.mxu0 %v85
    %2711 = vmatprep.subr.mxu0 0.0
    %2712 = vmatpush1.msra.mxu0 %v86
    %2713 = vmatprep.subr.mxu0 0.0
    %2714 = vmatpush1.msra.mxu0 %v87
    %2715 = vmatprep.subr.mxu0 0.0
    %2716 = vmatpush1.msra.mxu0 %v88
    %2717 = vmatprep.subr.mxu0 0.0
    %2718 = vmatpush1.msra.mxu0 %v89
    %2719 = vmatprep.subr.mxu0 0.0
    %2720 = vmatpush1.msra.mxu0 %v90
    %2721 = vmatprep.subr.mxu0 0.0
    %2722 = vmatpush1.msra.mxu0 %v91
    %2723 = vmatprep.subr.mxu0 0.0
    %2724 = vmatpush1.msra.mxu0 %v92
    %2725 = vmatprep.subr.mxu0 0.0
    %2726 = vmatpush1.msra.mxu0 %v93
    %2727 = vmatprep.subr.mxu0 0.0
    %2728 = vmatpush1.msra.mxu0 %v94
    %2729 = vmatprep.subr.mxu0 0.0
    %2730 = vmatpush1.msra.mxu0 0.0
    %2731 = vmatprep.subr.mxu0 0.0
    %2732 = vmatpush1.msra.mxu0 0.0
    %2733 = vmatprep.subr.mxu0 0.0
    %2734 = vmatpush1.msra.mxu0 0.0
    %2735 = vmatprep.subr.mxu0 0.0
    %2736 = vmatpush1.msra.mxu0 0.0
    %2737 = vmatprep.subr.mxu0 0.0
    %2738 = vmatpush1.msra.mxu0 0.0
    %2739 = vmatprep.subr.mxu0 0.0
    %2740 = vmatpush1.msra.mxu0 0.0
    %2741 = vmatprep.subr.mxu0 0.0
    %2742 = vmatpush1.msra.mxu0 0.0
    %2743 = vmatprep.subr.mxu0 0.0
    %2744 = vmatpush1.msra.mxu0 0.0
    %2745 = vmatprep.subr.mxu0 0.0
    %2746 = vmatpush1.msra.mxu0 0.0
    %2747 = vmatprep.subr.mxu0 0.0
    %2748 = vmatpush1.msra.mxu0 0.0
    %2749 = vmatprep.subr.mxu0 0.0
    %2750 = vmatpush1.msra.mxu0 0.0
    %2751 = vmatprep.subr.mxu0 0.0
    %2752 = vmatpush1.msra.mxu0 0.0
    %2753 = vmatprep.subr.mxu0 0.0
    %2754 = vmatpush1.msra.mxu0 0.0
    %2755 = vmatprep.subr.mxu0 0.0
    %2756 = vmatpush1.msra.mxu0 0.0
    %2757 = vmatprep.subr.mxu0 0.0
    %2758 = vmatpush1.msra.mxu0 0.0
    %2759 = vmatprep.subr.mxu0 0.0
    %2760 = vmatpush1.msra.mxu0 0.0
    %2761 = vmatprep.mubr.f32.mxu0 0.0
    %2762 = vmatmul.mubr.f32.gmra.mrb[0].mxu0 %v2696
    %v2763 = vpop.f32.mrb[0].mxu0
    %v2764 = vadd.f32 0.0, %v2763
    %v2765 = vpop.f32.mrb[0].mxu0
    %2766 = vdwg.mxu0
    %v2767 = vmul.f32 %v2764, 0.00024414063
    %v2769 = vsel %vm200, %v2767, 0
    %2771 = vmatprep.subr.mxu0 0.0
    %2772 = vmatpush1.msra.mxu0 %v206
    %2773 = vmatprep.subr.mxu0 0.0
    %2774 = vmatpush1.msra.mxu0 0.0
    %2775 = vmatprep.subr.mxu0 0.0
    %2776 = vmatpush1.msra.mxu0 0.0
    %2777 = vmatprep.subr.mxu0 0.0
    %2778 = vmatpush1.msra.mxu0 0.0
    %2779 = vmatprep.subr.mxu0 0.0
    %2780 = vmatpush1.msra.mxu0 0.0
    %2781 = vmatprep.subr.mxu0 0.0
    %2782 = vmatpush1.msra.mxu0 0.0
    %2783 = vmatprep.subr.mxu0 0.0
    %2784 = vmatpush1.msra.mxu0 0.0
    %2785 = vmatprep.subr.mxu0 0.0
    %2786 = vmatpush1.msra.mxu0 0.0
    %2787 = vmatprep.subr.mxu0 0.0
    %2788 = vmatpush1.msra.mxu0 0.0
    %2789 = vmatprep.subr.mxu0 0.0
    %2790 = vmatpush1.msra.mxu0 0.0
    %2791 = vmatprep.subr.mxu0 0.0
    %2792 = vmatpush1.msra.mxu0 0.0
    %2793 = vmatprep.subr.mxu0 0.0
    %2794 = vmatpush1.msra.mxu0 0.0
    %2795 = vmatprep.subr.mxu0 0.0
    %2796 = vmatpush1.msra.mxu0 0.0
    %2797 = vmatprep.subr.mxu0 0.0
    %2798 = vmatpush1.msra.mxu0 0.0
    %2799 = vmatprep.subr.mxu0 0.0
    %2800 = vmatpush1.msra.mxu0 0.0
    %2801 = vmatprep.subr.mxu0 0.0
    %2802 = vmatpush1.msra.mxu0 0.0
    %2803 = vmatprep.subr.mxu0 0.0
    %2804 = vmatpush1.msra.mxu0 0.0
    %2805 = vmatprep.subr.mxu0 0.0
    %2806 = vmatpush1.msra.mxu0 0.0
    %2807 = vmatprep.subr.mxu0 0.0
    %2808 = vmatpush1.msra.mxu0 0.0
    %2809 = vmatprep.subr.mxu0 0.0
    %2810 = vmatpush1.msra.mxu0 0.0
    %2811 = vmatprep.subr.mxu0 0.0
    %2812 = vmatpush1.msra.mxu0 0.0
    %2813 = vmatprep.subr.mxu0 0.0
    %2814 = vmatpush1.msra.mxu0 0.0
    %2815 = vmatprep.subr.mxu0 0.0
    %2816 = vmatpush1.msra.mxu0 0.0
    %2817 = vmatprep.subr.mxu0 0.0
    %2818 = vmatpush1.msra.mxu0 0.0
    %2819 = vmatprep.subr.mxu0 0.0
    %2820 = vmatpush1.msra.mxu0 0.0
    %2821 = vmatprep.subr.mxu0 0.0
    %2822 = vmatpush1.msra.mxu0 0.0
    %2823 = vmatprep.subr.mxu0 0.0
    %2824 = vmatpush1.msra.mxu0 0.0
    %2825 = vmatprep.subr.mxu0 0.0
    %2826 = vmatpush1.msra.mxu0 0.0
    %2827 = vmatprep.subr.mxu0 0.0
    %2828 = vmatpush1.msra.mxu0 0.0
    %2829 = vmatprep.subr.mxu0 0.0
    %2830 = vmatpush1.msra.mxu0 0.0
    %2831 = vmatprep.subr.mxu0 0.0
    %2832 = vmatpush1.msra.mxu0 0.0
    %2833 = vmatprep.subr.mxu0 0.0
    %2834 = vmatpush1.msra.mxu0 0.0
    %2835 = vmatprep.mubr.f32.mxu0 0.0
    %2836 = vmatmul.mubr.f32.gmra.mrb[0].mxu0 %v2769
    %v2837 = vpop.f32.mrb[0].mxu0
    %v2838 = vadd.f32 0.0, %v2837
    %v2839 = vpop.f32.mrb[0].mxu0
    %2840 = vdwg.mxu0
    %v2841 = vmul.f32 %v2838, %v2838
    %v2843 = vrot.slane %v2841, 7
    %v2845 = vsub.f32 %v2838, %v2843
    %v2846 = vmax.f32 %v2845, 0.0
    %v2847 = vadd.f32 %v2846, 1e-08
    %v2848 = vrsqrt.pop %v2847
    %2850 = vset.pattern.permute.xlu0 0
    %2851 = vperm.xlu0 %2850, %v2645
    %v2852 = vpop.permute.xlu0 %2851
    %2855 = vset.pattern.permute.xlu0 0
    %2856 = vperm.xlu0 %2855, %v2646
    %v2857 = vpop.permute.xlu0 %2856
    %2860 = vset.pattern.permute.xlu0 0
    %2861 = vperm.xlu0 %2860, %v2647
    %v2862 = vpop.permute.xlu0 %2861
    %2865 = vset.pattern.permute.xlu0 0
    %2866 = vperm.xlu0 %2865, %v2648
    %v2867 = vpop.permute.xlu0 %2866
    %2870 = vset.pattern.permute.xlu0 0
    %2871 = vperm.xlu0 %2870, %v2649
    %v2872 = vpop.permute.xlu0 %2871
    %2875 = vset.pattern.permute.xlu0 0
    %2876 = vperm.xlu0 %2875, %v2650
    %v2877 = vpop.permute.xlu0 %2876
    %2880 = vset.pattern.permute.xlu0 0
    %2881 = vperm.xlu0 %2880, %v2651
    %v2882 = vpop.permute.xlu0 %2881
    %2885 = vset.pattern.permute.xlu0 0
    %2886 = vperm.xlu0 %2885, %v2652
    %v2887 = vpop.permute.xlu0 %2886
    %v2889 = vlaneseq
    %v2890 = vshrl.u32 %v2889, 7
    %v2891 = vsub.s32 1, %v2890
    %v2892 = vrot.slane %v2848, %v2891
    %v2893 = vmul.f32 %v2852, %v2892
    %v2894 = vmul.f32 %v2857, %v2892
    %v2895 = vmul.f32 %v2862, %v2892
    %v2896 = vmul.f32 %v2867, %v2892
    %v2897 = vmul.f32 %v2872, %v2892
    %v2898 = vmul.f32 %v2877, %v2892
    %v2899 = vmul.f32 %v2882, %v2892
    %v2900 = vmul.f32 %v2887, %v2892
    %v2901 = vmul.f32 %v2636, %v2893
    %v2902 = vmul.f32 %v2637, %v2894
    %v2903 = vmul.f32 %v2638, %v2895
    %v2904 = vmul.f32 %v2639, %v2896
    %v2905 = vmul.f32 %v2640, %v2897
    %v2906 = vmul.f32 %v2641, %v2898
    %v2907 = vmul.f32 %v2642, %v2899
    %v2908 = vmul.f32 %v2643, %v2900
    %v2909 = vlaneseq
    %v2910 = vshrl.u32 %v2909, 7
    %v2911 = vsub.s32 0, %v2910
    %v2912 = vrot.slane %v2838, %v2911
    %v2913 = vmul.f32 %v2912, %v2893
    %v2914 = vmul.f32 %v2912, %v2894
    %v2915 = vmul.f32 %v2912, %v2895
    %v2916 = vmul.f32 %v2912, %v2896
    %v2917 = vmul.f32 %v2912, %v2897
    %v2918 = vmul.f32 %v2912, %v2898
    %v2919 = vmul.f32 %v2912, %v2899
    %v2920 = vmul.f32 %v2912, %v2900
    %2922 = vset.pattern.permute.xlu0 0
    %2923 = vperm.xlu0 %2922, %v2654
    %v2924 = vpop.permute.xlu0 %2923
    %2927 = vset.pattern.permute.xlu0 0
    %2928 = vperm.xlu0 %2927, %v2655
    %v2929 = vpop.permute.xlu0 %2928
    %2932 = vset.pattern.permute.xlu0 0
    %2933 = vperm.xlu0 %2932, %v2656
    %v2934 = vpop.permute.xlu0 %2933
    %2937 = vset.pattern.permute.xlu0 0
    %2938 = vperm.xlu0 %2937, %v2657
    %v2939 = vpop.permute.xlu0 %2938
    %2942 = vset.pattern.permute.xlu0 0
    %2943 = vperm.xlu0 %2942, %v2658
    %v2944 = vpop.permute.xlu0 %2943
    %2947 = vset.pattern.permute.xlu0 0
    %2948 = vperm.xlu0 %2947, %v2659
    %v2949 = vpop.permute.xlu0 %2948
    %2952 = vset.pattern.permute.xlu0 0
    %2953 = vperm.xlu0 %2952, %v2660
    %v2954 = vpop.permute.xlu0 %2953
    %2957 = vset.pattern.permute.xlu0 0
    %2958 = vperm.xlu0 %2957, %v2661
    %v2959 = vpop.permute.xlu0 %2958
    %v2961 = vsub.f32 %v2924, %v2913
    %v2962 = vsub.f32 %v2929, %v2914
    %v2963 = vsub.f32 %v2934, %v2915
    %v2964 = vsub.f32 %v2939, %v2916
    %v2965 = vsub.f32 %v2944, %v2917
    %v2966 = vsub.f32 %v2949, %v2918
    %v2967 = vsub.f32 %v2954, %v2919
    %v2968 = vsub.f32 %v2959, %v2920
    %v2969 = vadd.f32 %v2901, %v2961
    %v2970 = vadd.f32 %v2902, %v2962
    %v2971 = vadd.f32 %v2903, %v2963
    %v2972 = vadd.f32 %v2904, %v2964
    %v2973 = vadd.f32 %v2905, %v2965
    %v2974 = vadd.f32 %v2906, %v2966
    %v2975 = vadd.f32 %v2907, %v2967
    %v2976 = vadd.f32 %v2908, %v2968
    %s2977 = scalar_lea.vmem %s17, 32
    %v2978 = vld [vmem:[%s2977] sm:$0xff]
    %v2979 = vld [vmem:[%s2977 + $0x8] sm:$0xff]
    %v2980 = vld [vmem:[%s2977 + $0x10] sm:$0xff]
    %v2981 = vld [vmem:[%s2977 + $0x18] sm:$0xff]
    %v2983 = vsel %vm1646, %v2978, 0
    %v2986 = vsel %vm1646, %v2979, 0
    %v2989 = vsel %vm1646, %v2980, 0
    %v2992 = vsel %vm1646, %v2981, 0
    %2994 = vmatprep.subr.mxu0 0.0
    %2995 = vmatpush1.msra.mxu0 %v2969
    %2996 = vmatprep.subr.mxu0 0.0
    %2997 = vmatpush1.msra.mxu0 %v2970
    %2998 = vmatprep.subr.mxu0 0.0
    %2999 = vmatpush1.msra.mxu0 %v2971
    %3000 = vmatprep.subr.mxu0 0.0
    %3001 = vmatpush1.msra.mxu0 %v2972
    %3002 = vmatprep.subr.mxu0 0.0
    %3003 = vmatpush1.msra.mxu0 %v2973
    %3004 = vmatprep.subr.mxu0 0.0
    %3005 = vmatpush1.msra.mxu0 %v2974
    %3006 = vmatprep.subr.mxu0 0.0
    %3007 = vmatpush1.msra.mxu0 %v2975
    %3008 = vmatprep.subr.mxu0 0.0
    %3009 = vmatpush1.msra.mxu0 %v2976
    %3010 = vmatprep.subr.mxu0 0.0
    %3011 = vmatpush1.msra.mxu0 0.0
    %3012 = vmatprep.subr.mxu0 0.0
    %3013 = vmatpush1.msra.mxu0 0.0
    %3014 = vmatprep.subr.mxu0 0.0
    %3015 = vmatpush1.msra.mxu0 0.0
    %3016 = vmatprep.subr.mxu0 0.0
    %3017 = vmatpush1.msra.mxu0 0.0
    %3018 = vmatprep.subr.mxu0 0.0
    %3019 = vmatpush1.msra.mxu0 0.0
    %3020 = vmatprep.subr.mxu0 0.0
    %3021 = vmatpush1.msra.mxu0 0.0
    %3022 = vmatprep.subr.mxu0 0.0
    %3023 = vmatpush1.msra.mxu0 0.0
    %3024 = vmatprep.subr.mxu0 0.0
    %3025 = vmatpush1.msra.mxu0 0.0
    %3026 = vmatprep.subr.mxu0 0.0
    %3027 = vmatpush1.msra.mxu0 0.0
    %3028 = vmatprep.subr.mxu0 0.0
    %3029 = vmatpush1.msra.mxu0 0.0
    %3030 = vmatprep.subr.mxu0 0.0
    %3031 = vmatpush1.msra.mxu0 0.0
    %3032 = vmatprep.subr.mxu0 0.0
    %3033 = vmatpush1.msra.mxu0 0.0
    %3034 = vmatprep.subr.mxu0 0.0
    %3035 = vmatpush1.msra.mxu0 0.0
    %3036 = vmatprep.subr.mxu0 0.0
    %3037 = vmatpush1.msra.mxu0 0.0
    %3038 = vmatprep.subr.mxu0 0.0
    %3039 = vmatpush1.msra.mxu0 0.0
    %3040 = vmatprep.subr.mxu0 0.0
    %3041 = vmatpush1.msra.mxu0 0.0
    %3042 = vmatprep.subr.mxu0 0.0
    %3043 = vmatpush1.msra.mxu0 0.0
    %3044 = vmatprep.subr.mxu0 0.0
    %3045 = vmatpush1.msra.mxu0 0.0
    %3046 = vmatprep.subr.mxu0 0.0
    %3047 = vmatpush1.msra.mxu0 0.0
    %3048 = vmatprep.subr.mxu0 0.0
    %3049 = vmatpush1.msra.mxu0 0.0
    %3050 = vmatprep.subr.mxu0 0.0
    %3051 = vmatpush1.msra.mxu0 0.0
    %3052 = vmatprep.subr.mxu0 0.0
    %3053 = vmatpush1.msra.mxu0 0.0
    %3054 = vmatprep.subr.mxu0 0.0
    %3055 = vmatpush1.msra.mxu0 0.0
    %3056 = vmatprep.subr.mxu0 0.0
    %3057 = vmatpush1.msra.mxu0 0.0
    %3058 = vmatprep.mubr.f32.mxu0 0.0
    %3059 = vmatmul.mubr.f32.gmra.mrb[0].mxu0 %v2983
    %v3060 = vpop.f32.mrb[0].mxu0
    %v3061 = vadd.f32 0.0, %v3060
    %v3062 = vpop.f32.mrb[0].mxu0
    %3063 = vmatprep.mubr.f32.mxu0 0.0
    %3064 = vmatmul.mubr.f32.gmra.mrb[0].mxu0 %v2986
    %v3065 = vpop.f32.mrb[0].mxu0
    %v3066 = vadd.f32 0.0, %v3065
    %v3067 = vpop.f32.mrb[0].mxu0
    %3068 = vmatprep.mubr.f32.mxu0 0.0
    %3069 = vmatmul.mubr.f32.gmra.mrb[0].mxu0 %v2989
    %v3070 = vpop.f32.mrb[0].mxu0
    %v3071 = vadd.f32 0.0, %v3070
    %v3072 = vpop.f32.mrb[0].mxu0
    %3073 = vmatprep.mubr.f32.mxu0 0.0
    %3074 = vmatmul.mubr.f32.gmra.mrb[0].mxu0 %v2992
    %v3075 = vpop.f32.mrb[0].mxu0
    %v3076 = vadd.f32 0.0, %v3075
    %v3077 = vpop.f32.mrb[0].mxu0
    %3078 = vdwg.mxu0
    %v3079 = vadd.f32 %v1772, %v3061
    %v3080 = vadd.f32 %v1773, %v3066
    %v3081 = vadd.f32 %v1774, %v3071
    %v3082 = vadd.f32 %v1775, %v3076
    %s3083 = scalar_lea.vmem %s18, 32
    %v3084 = vld [vmem:[%s3083] sm:$0xff]
    %v3085 = vld [vmem:[%s3083 + $0x8] sm:$0xff]
    %v3086 = vld [vmem:[%s3083 + $0x10] sm:$0xff]
    %v3087 = vld [vmem:[%s3083 + $0x18] sm:$0xff]
    %3089 = vset.pattern.permute.xlu0 0
    %3090 = vperm.xlu0 %3089, %v3084
    %v3091 = vpop.permute.xlu0 %3090
    %3094 = vset.pattern.permute.xlu0 0
    %3095 = vperm.xlu0 %3094, %v3085
    %v3096 = vpop.permute.xlu0 %3095
    %3099 = vset.pattern.permute.xlu0 0
    %3100 = vperm.xlu0 %3099, %v3086
    %v3101 = vpop.permute.xlu0 %3100
    %3104 = vset.pattern.permute.xlu0 0
    %3105 = vperm.xlu0 %3104, %v3087
    %v3106 = vpop.permute.xlu0 %3105
    %v3108 = vadd.f32 %v3079, %v3091
    %v3109 = vadd.f32 %v3080, %v3096
    %v3110 = vadd.f32 %v3081, %v3101
    %v3111 = vadd.f32 %v3082, %v3106
    %s3112 = scalar_lea.vmem %s7, 128
    %v3113 = vld [vmem:[%s3112] sm:$0xff]
    %v3114 = vld [vmem:[%s3112 + $0x8] sm:$0xff]
    %v3115 = vld [vmem:[%s3112 + $0x10] sm:$0xff]
    %v3116 = vld [vmem:[%s3112 + $0x18] sm:$0xff]
    %v3117 = vld [vmem:[%s3112 + $0x20] sm:$0xff]
    %v3118 = vld [vmem:[%s3112 + $0x28] sm:$0xff]
    %v3119 = vld [vmem:[%s3112 + $0x30] sm:$0xff]
    %v3120 = vld [vmem:[%s3112 + $0x38] sm:$0xff]
    %s3121 = scalar_lea.vmem %s8, 128
    %v3122 = vld [vmem:[%s3121] sm:$0xff]
    %v3123 = vld [vmem:[%s3121 + $0x8] sm:$0xff]
    %v3124 = vld [vmem:[%s3121 + $0x10] sm:$0xff]
    %v3125 = vld [vmem:[%s3121 + $0x18] sm:$0xff]
    %v3126 = vld [vmem:[%s3121 + $0x20] sm:$0xff]
    %v3127 = vld [vmem:[%s3121 + $0x28] sm:$0xff]
    %v3128 = vld [vmem:[%s3121 + $0x30] sm:$0xff]
    %v3129 = vld [vmem:[%s3121 + $0x38] sm:$0xff]
    %3131 = vset.pattern.permute.xlu0 0
    %3132 = vperm.xlu0 %3131, %v3122
    %v3133 = vpop.permute.xlu0 %3132
    %3136 = vset.pattern.permute.xlu0 0
    %3137 = vperm.xlu0 %3136, %v3123
    %v3138 = vpop.permute.xlu0 %3137
    %3141 = vset.pattern.permute.xlu0 0
    %3142 = vperm.xlu0 %3141, %v3124
    %v3143 = vpop.permute.xlu0 %3142
    %3146 = vset.pattern.permute.xlu0 0
    %3147 = vperm.xlu0 %3146, %v3125
    %v3148 = vpop.permute.xlu0 %3147
    %3151 = vset.pattern.permute.xlu0 0
    %3152 = vperm.xlu0 %3151, %v3126
    %v3153 = vpop.permute.xlu0 %3152
    %3156 = vset.pattern.permute.xlu0 0
    %3157 = vperm.xlu0 %3156, %v3127
    %v3158 = vpop.permute.xlu0 %3157
    %3161 = vset.pattern.permute.xlu0 0
    %3162 = vperm.xlu0 %3161, %v3128
    %v3163 = vpop.permute.xlu0 %3162
    %3166 = vset.pattern.permute.xlu0 0
    %3167 = vperm.xlu0 %3166, %v3129
    %v3168 = vpop.permute.xlu0 %3167
    %v3171 = vsel %vm506, %v3113, 0
    %v3174 = vsel %vm506, %v3114, 0
    %v3177 = vsel %vm506, %v3115, 0
    %v3180 = vsel %vm506, %v3116, 0
    %v3183 = vsel %vm506, %v3117, 0
    %v3186 = vsel %vm506, %v3118, 0
    %v3189 = vsel %vm506, %v3119, 0
    %v3192 = vsel %vm506, %v3120, 0
    %3194 = vmatprep.subr.mxu0 0.0
    %3195 = vmatpush1.msra.mxu0 %v3108
    %3196 = vmatprep.subr.mxu0 0.0
    %3197 = vmatpush1.msra.mxu0 %v3109
    %3198 = vmatprep.subr.mxu0 0.0
    %3199 = vmatpush1.msra.mxu0 %v3110
    %3200 = vmatprep.subr.mxu0 0.0
    %3201 = vmatpush1.msra.mxu0 %v3111
    %3202 = vmatprep.subr.mxu0 0.0
    %3203 = vmatpush1.msra.mxu0 0.0
    %3204 = vmatprep.subr.mxu0 0.0
    %3205 = vmatpush1.msra.mxu0 0.0
    %3206 = vmatprep.subr.mxu0 0.0
    %3207 = vmatpush1.msra.mxu0 0.0
    %3208 = vmatprep.subr.mxu0 0.0
    %3209 = vmatpush1.msra.mxu0 0.0
    %3210 = vmatprep.subr.mxu0 0.0
    %3211 = vmatpush1.msra.mxu0 0.0
    %3212 = vmatprep.subr.mxu0 0.0
    %3213 = vmatpush1.msra.mxu0 0.0
    %3214 = vmatprep.subr.mxu0 0.0
    %3215 = vmatpush1.msra.mxu0 0.0
    %3216 = vmatprep.subr.mxu0 0.0
    %3217 = vmatpush1.msra.mxu0 0.0
    %3218 = vmatprep.subr.mxu0 0.0
    %3219 = vmatpush1.msra.mxu0 0.0
    %3220 = vmatprep.subr.mxu0 0.0
    %3221 = vmatpush1.msra.mxu0 0.0
    %3222 = vmatprep.subr.mxu0 0.0
    %3223 = vmatpush1.msra.mxu0 0.0
    %3224 = vmatprep.subr.mxu0 0.0
    %3225 = vmatpush1.msra.mxu0 0.0
    %3226 = vmatprep.subr.mxu0 0.0
    %3227 = vmatpush1.msra.mxu0 0.0
    %3228 = vmatprep.subr.mxu0 0.0
    %3229 = vmatpush1.msra.mxu0 0.0
    %3230 = vmatprep.subr.mxu0 0.0
    %3231 = vmatpush1.msra.mxu0 0.0
    %3232 = vmatprep.subr.mxu0 0.0
    %3233 = vmatpush1.msra.mxu0 0.0
    %3234 = vmatprep.subr.mxu0 0.0
    %3235 = vmatpush1.msra.mxu0 0.0
    %3236 = vmatprep.subr.mxu0 0.0
    %3237 = vmatpush1.msra.mxu0 0.0
    %3238 = vmatprep.subr.mxu0 0.0
    %3239 = vmatpush1.msra.mxu0 0.0
    %3240 = vmatprep.subr.mxu0 0.0
    %3241 = vmatpush1.msra.mxu0 0.0
    %3242 = vmatprep.subr.mxu0 0.0
    %3243 = vmatpush1.msra.mxu0 0.0
    %3244 = vmatprep.subr.mxu0 0.0
    %3245 = vmatpush1.msra.mxu0 0.0
    %3246 = vmatprep.subr.mxu0 0.0
    %3247 = vmatpush1.msra.mxu0 0.0
    %3248 = vmatprep.subr.mxu0 0.0
    %3249 = vmatpush1.msra.mxu0 0.0
    %3250 = vmatprep.subr.mxu0 0.0
    %3251 = vmatpush1.msra.mxu0 0.0
    %3252 = vmatprep.subr.mxu0 0.0
    %3253 = vmatpush1.msra.mxu0 0.0
    %3254 = vmatprep.subr.mxu0 0.0
    %3255 = vmatpush1.msra.mxu0 0.0
    %3256 = vmatprep.subr.mxu0 0.0
    %3257 = vmatpush1.msra.mxu0 0.0
    %3258 = vmatprep.mubr.f32.mxu0 0.0
    %3259 = vmatmul.mubr.f32.gmra.mrb[0].mxu0 %v3171
    %v3260 = vpop.f32.mrb[0].mxu0
    %v3261 = vadd.f32 %v3133, %v3260
    %v3262 = vpop.f32.mrb[0].mxu0
    %3263 = vmatprep.mubr.f32.mxu0 0.0
    %3264 = vmatmul.mubr.f32.gmra.mrb[0].mxu0 %v3174
    %v3265 = vpop.f32.mrb[0].mxu0
    %v3266 = vadd.f32 %v3138, %v3265
    %v3267 = vpop.f32.mrb[0].mxu0
    %3268 = vmatprep.mubr.f32.mxu0 0.0
    %3269 = vmatmul.mubr.f32.gmra.mrb[0].mxu0 %v3177
    %v3270 = vpop.f32.mrb[0].mxu0
    %v3271 = vadd.f32 %v3143, %v3270
    %v3272 = vpop.f32.mrb[0].mxu0
    %3273 = vmatprep.mubr.f32.mxu0 0.0
    %3274 = vmatmul.mubr.f32.gmra.mrb[0].mxu0 %v3180
    %v3275 = vpop.f32.mrb[0].mxu0
    %v3276 = vadd.f32 %v3148, %v3275
    %v3277 = vpop.f32.mrb[0].mxu0
    %3278 = vmatprep.mubr.f32.mxu0 0.0
    %3279 = vmatmul.mubr.f32.gmra.mrb[0].mxu0 %v3183
    %v3280 = vpop.f32.mrb[0].mxu0
    %v3281 = vadd.f32 %v3153, %v3280
    %v3282 = vpop.f32.mrb[0].mxu0
    %3283 = vmatprep.mubr.f32.mxu0 0.0
    %3284 = vmatmul.mubr.f32.gmra.mrb[0].mxu0 %v3186
    %v3285 = vpop.f32.mrb[0].mxu0
    %v3286 = vadd.f32 %v3158, %v3285
    %v3287 = vpop.f32.mrb[0].mxu0
    %3288 = vmatprep.mubr.f32.mxu0 0.0
    %3289 = vmatmul.mubr.f32.gmra.mrb[0].mxu0 %v3189
    %v3290 = vpop.f32.mrb[0].mxu0
    %v3291 = vadd.f32 %v3163, %v3290
    %v3292 = vpop.f32.mrb[0].mxu0
    %3293 = vmatprep.mubr.f32.mxu0 0.0
    %3294 = vmatmul.mubr.f32.gmra.mrb[0].mxu0 %v3192
    %v3295 = vpop.f32.mrb[0].mxu0
    %v3296 = vadd.f32 %v3168, %v3295
    %v3297 = vpop.f32.mrb[0].mxu0
    %3298 = vdwg.mxu0
    %s3299 = scalar_lea.vmem %s9, 2
    %v3300 = vld [vmem:[%s3299] sm:$0x1]
    %v3301 = vmax.f32 %v3261, 0.0
    %v3302 = vmax.f32 %v3266, 0.0
    %v3303 = vmax.f32 %v3271, 0.0
    %v3304 = vmax.f32 %v3276, 0.0
    %v3305 = vmax.f32 %v3281, 0.0
    %v3306 = vmax.f32 %v3286, 0.0
    %v3307 = vmax.f32 %v3291, 0.0
    %v3308 = vmax.f32 %v3296, 0.0
    %v3309 = vmin.f32 %v3261, 0.0
    %v3310 = vmin.f32 %v3266, 0.0
    %v3311 = vmin.f32 %v3271, 0.0
    %v3312 = vmin.f32 %v3276, 0.0
    %v3313 = vmin.f32 %v3281, 0.0
    %v3314 = vmin.f32 %v3286, 0.0
    %v3315 = vmin.f32 %v3291, 0.0
    %v3316 = vmin.f32 %v3296, 0.0
    %v3318 = vlaneseq
    %v3319 = vshrl.u32 %v3318, 7
    %v3320 = vsub.s32 0, %v3319
    %v3321 = vrot.slane %v3300, %v3320
    %3322 = vset.pattern.permute.xlu0 0
    %3323 = vperm.xlu0 %3322, %v3321
    %v3324 = vpop.permute.xlu0 %3323
    %v3326 = vmul.f32 %v3324, %v3309
    %v3327 = vmul.f32 %v3324, %v3310
    %v3328 = vmul.f32 %v3324, %v3311
    %v3329 = vmul.f32 %v3324, %v3312
    %v3330 = vmul.f32 %v3324, %v3313
    %v3331 = vmul.f32 %v3324, %v3314
    %v3332 = vmul.f32 %v3324, %v3315
    %v3333 = vmul.f32 %v3324, %v3316
    %v3334 = vadd.f32 %v3301, %v3326
    %v3335 = vadd.f32 %v3302, %v3327
    %v3336 = vadd.f32 %v3303, %v3328
    %v3337 = vadd.f32 %v3304, %v3329
    %v3338 = vadd.f32 %v3305, %v3330
    %v3339 = vadd.f32 %v3306, %v3331
    %v3340 = vadd.f32 %v3307, %v3332
    %v3341 = vadd.f32 %v3308, %v3333
    %s3342 = scalar_lea.vmem %s10, 128
    %v3343 = vld [vmem:[%s3342] sm:$0xff]
    %v3344 = vld [vmem:[%s3342 + $0x8] sm:$0xff]
    %v3345 = vld [vmem:[%s3342 + $0x10] sm:$0xff]
    %v3346 = vld [vmem:[%s3342 + $0x18] sm:$0xff]
    %v3347 = vld [vmem:[%s3342 + $0x20] sm:$0xff]
    %v3348 = vld [vmem:[%s3342 + $0x28] sm:$0xff]
    %v3349 = vld [vmem:[%s3342 + $0x30] sm:$0xff]
    %v3350 = vld [vmem:[%s3342 + $0x38] sm:$0xff]
    %s3351 = scalar_lea.vmem %s11, 128
    %v3352 = vld [vmem:[%s3351] sm:$0xff]
    %v3353 = vld [vmem:[%s3351 + $0x8] sm:$0xff]
    %v3354 = vld [vmem:[%s3351 + $0x10] sm:$0xff]
    %v3355 = vld [vmem:[%s3351 + $0x18] sm:$0xff]
    %v3356 = vld [vmem:[%s3351 + $0x20] sm:$0xff]
    %v3357 = vld [vmem:[%s3351 + $0x28] sm:$0xff]
    %v3358 = vld [vmem:[%s3351 + $0x30] sm:$0xff]
    %v3359 = vld [vmem:[%s3351 + $0x38] sm:$0xff]
    %v3360 = vadd.f32 %v3334, %v3335
    %v3361 = vadd.f32 %v3360, %v3336
    %v3362 = vadd.f32 %v3361, %v3337
    %v3363 = vadd.f32 %v3362, %v3338
    %v3364 = vadd.f32 %v3363, %v3339
    %v3365 = vadd.f32 %v3364, %v3340
    %v3366 = vadd.f32 %v3365, %v3341
    %v3367 = vrot.slane %v3366, 4
    %v3368 = vadd.f32 %v3366, %v3367
    %v3369 = vrot.slane %v3368, 2
    %v3370 = vadd.f32 %v3368, %v3369
    %v3371 = vrot.slane %v3370, 1
    %v3372 = vadd.f32 %v3370, %v3371
    %v3373 = vmul.f32 %v3334, %v3334
    %v3374 = vmul.f32 %v3335, %v3335
    %v3375 = vmul.f32 %v3336, %v3336
    %v3376 = vmul.f32 %v3337, %v3337
    %v3377 = vmul.f32 %v3338, %v3338
    %v3378 = vmul.f32 %v3339, %v3339
    %v3379 = vmul.f32 %v3340, %v3340
    %v3380 = vmul.f32 %v3341, %v3341
    %v3381 = vadd.f32 %v3373, %v3374
    %v3382 = vadd.f32 %v3381, %v3375
    %v3383 = vadd.f32 %v3382, %v3376
    %v3384 = vadd.f32 %v3383, %v3377
    %v3385 = vadd.f32 %v3384, %v3378
    %v3386 = vadd.f32 %v3385, %v3379
    %v3387 = vadd.f32 %v3386, %v3380
    %v3388 = vrot.slane %v3387, 4
    %v3389 = vadd.f32 %v3387, %v3388
    %v3390 = vrot.slane %v3389, 2
    %v3391 = vadd.f32 %v3389, %v3390
    %v3392 = vrot.slane %v3391, 1
    %v3393 = vadd.f32 %v3391, %v3392
    %v3394 = vsel %vm127, %v3372, %v3393
    %3395 = vmatprep.subr.mxu0 0.0
    %3396 = vmatpush1.msra.mxu0 %v79
    %3397 = vmatprep.subr.mxu0 0.0
    %3398 = vmatpush1.msra.mxu0 %v80
    %3399 = vmatprep.subr.mxu0 0.0
    %3400 = vmatpush1.msra.mxu0 %v81
    %3401 = vmatprep.subr.mxu0 0.0
    %3402 = vmatpush1.msra.mxu0 %v82
    %3403 = vmatprep.subr.mxu0 0.0
    %3404 = vmatpush1.msra.mxu0 %v83
    %3405 = vmatprep.subr.mxu0 0.0
    %3406 = vmatpush1.msra.mxu0 %v84
    %3407 = vmatprep.subr.mxu0 0.0
    %3408 = vmatpush1.msra.mxu0 %v85
    %3409 = vmatprep.subr.mxu0 0.0
    %3410 = vmatpush1.msra.mxu0 %v86
    %3411 = vmatprep.subr.mxu0 0.0
    %3412 = vmatpush1.msra.mxu0 %v87
    %3413 = vmatprep.subr.mxu0 0.0
    %3414 = vmatpush1.msra.mxu0 %v88
    %3415 = vmatprep.subr.mxu0 0.0
    %3416 = vmatpush1.msra.mxu0 %v89
    %3417 = vmatprep.subr.mxu0 0.0
    %3418 = vmatpush1.msra.mxu0 %v90
    %3419 = vmatprep.subr.mxu0 0.0
    %3420 = vmatpush1.msra.mxu0 %v91
    %3421 = vmatprep.subr.mxu0 0.0
    %3422 = vmatpush1.msra.mxu0 %v92
    %3423 = vmatprep.subr.mxu0 0.0
    %3424 = vmatpush1.msra.mxu0 %v93
    %3425 = vmatprep.subr.mxu0 0.0
    %3426 = vmatpush1.msra.mxu0 %v94
    %3427 = vmatprep.subr.mxu0 0.0
    %3428 = vmatpush1.msra.mxu0 0.0
    %3429 = vmatprep.subr.mxu0 0.0
    %3430 = vmatpush1.msra.mxu0 0.0
    %3431 = vmatprep.subr.mxu0 0.0
    %3432 = vmatpush1.msra.mxu0 0.0
    %3433 = vmatprep.subr.mxu0 0.0
    %3434 = vmatpush1.msra.mxu0 0.0
    %3435 = vmatprep.subr.mxu0 0.0
    %3436 = vmatpush1.msra.mxu0 0.0
    %3437 = vmatprep.subr.mxu0 0.0
    %3438 = vmatpush1.msra.mxu0 0.0
    %3439 = vmatprep.subr.mxu0 0.0
    %3440 = vmatpush1.msra.mxu0 0.0
    %3441 = vmatprep.subr.mxu0 0.0
    %3442 = vmatpush1.msra.mxu0 0.0
    %3443 = vmatprep.subr.mxu0 0.0
    %3444 = vmatpush1.msra.mxu0 0.0
    %3445 = vmatprep.subr.mxu0 0.0
    %3446 = vmatpush1.msra.mxu0 0.0
    %3447 = vmatprep.subr.mxu0 0.0
    %3448 = vmatpush1.msra.mxu0 0.0
    %3449 = vmatprep.subr.mxu0 0.0
    %3450 = vmatpush1.msra.mxu0 0.0
    %3451 = vmatprep.subr.mxu0 0.0
    %3452 = vmatpush1.msra.mxu0 0.0
    %3453 = vmatprep.subr.mxu0 0.0
    %3454 = vmatpush1.msra.mxu0 0.0
    %3455 = vmatprep.subr.mxu0 0.0
    %3456 = vmatpush1.msra.mxu0 0.0
    %3457 = vmatprep.subr.mxu0 0.0
    %3458 = vmatpush1.msra.mxu0 0.0
    %3459 = vmatprep.mubr.f32.mxu0 0.0
    %3460 = vmatmul.mubr.f32.gmra.mrb[0].mxu0 %v3394
    %v3461 = vpop.f32.mrb[0].mxu0
    %v3462 = vadd.f32 0.0, %v3461
    %v3463 = vpop.f32.mrb[0].mxu0
    %3464 = vdwg.mxu0
    %v3465 = vmul.f32 %v3462, 0.00024414063
    %v3467 = vsel %vm200, %v3465, 0
    %3469 = vmatprep.subr.mxu0 0.0
    %3470 = vmatpush1.msra.mxu0 %v206
    %3471 = vmatprep.subr.mxu0 0.0
    %3472 = vmatpush1.msra.mxu0 0.0
    %3473 = vmatprep.subr.mxu0 0.0
    %3474 = vmatpush1.msra.mxu0 0.0
    %3475 = vmatprep.subr.mxu0 0.0
    %3476 = vmatpush1.msra.mxu0 0.0
    %3477 = vmatprep.subr.mxu0 0.0
    %3478 = vmatpush1.msra.mxu0 0.0
    %3479 = vmatprep.subr.mxu0 0.0
    %3480 = vmatpush1.msra.mxu0 0.0
    %3481 = vmatprep.subr.mxu0 0.0
    %3482 = vmatpush1.msra.mxu0 0.0
    %3483 = vmatprep.subr.mxu0 0.0
    %3484 = vmatpush1.msra.mxu0 0.0
    %3485 = vmatprep.subr.mxu0 0.0
    %3486 = vmatpush1.msra.mxu0 0.0
    %3487 = vmatprep.subr.mxu0 0.0
    %3488 = vmatpush1.msra.mxu0 0.0
    %3489 = vmatprep.subr.mxu0 0.0
    %3490 = vmatpush1.msra.mxu0 0.0
    %3491 = vmatprep.subr.mxu0 0.0
    %3492 = vmatpush1.msra.mxu0 0.0
    %3493 = vmatprep.subr.mxu0 0.0
    %3494 = vmatpush1.msra.mxu0 0.0
    %3495 = vmatprep.subr.mxu0 0.0
    %3496 = vmatpush1.msra.mxu0 0.0
    %3497 = vmatprep.subr.mxu0 0.0
    %3498 = vmatpush1.msra.mxu0 0.0
    %3499 = vmatprep.subr.mxu0 0.0
    %3500 = vmatpush1.msra.mxu0 0.0
    %3501 = vmatprep.subr.mxu0 0.0
    %3502 = vmatpush1.msra.mxu0 0.0
    %3503 = vmatprep.subr.mxu0 0.0
    %3504 = vmatpush1.msra.mxu0 0.0
    %3505 = vmatprep.subr.mxu0 0.0
    %3506 = vmatpush1.msra.mxu0 0.0
    %3507 = vmatprep.subr.mxu0 0.0
    %3508 = vmatpush1.msra.mxu0 0.0
    %3509 = vmatprep.subr.mxu0 0.0
    %3510 = vmatpush1.msra.mxu0 0.0
    %3511 = vmatprep.subr.mxu0 0.0
    %3512 = vmatpush1.msra.mxu0 0.0
    %3513 = vmatprep.subr.mxu0 0.0
    %3514 = vmatpush1.msra.mxu0 0.0
    %3515 = vmatprep.subr.mxu0 0.0
    %3516 = vmatpush1.msra.mxu0 0.0
    %3517 = vmatprep.subr.mxu0 0.0
    %3518 = vmatpush1.msra.mxu0 0.0
    %3519 = vmatprep.subr.mxu0 0.0
    %3520 = vmatpush1.msra.mxu0 0.0
    %3521 = vmatprep.subr.mxu0 0.0
    %3522 = vmatpush1.msra.mxu0 0.0
    %3523 = vmatprep.subr.mxu0 0.0
    %3524 = vmatpush1.msra.mxu0 0.0
    %3525 = vmatprep.subr.mxu0 0.0
    %3526 = vmatpush1.msra.mxu0 0.0
    %3527 = vmatprep.subr.mxu0 0.0
    %3528 = vmatpush1.msra.mxu0 0.0
    %3529 = vmatprep.subr.mxu0 0.0
    %3530 = vmatpush1.msra.mxu0 0.0
    %3531 = vmatprep.subr.mxu0 0.0
    %3532 = vmatpush1.msra.mxu0 0.0
    %3533 = vmatprep.mubr.f32.mxu0 0.0
    %3534 = vmatmul.mubr.f32.gmra.mrb[0].mxu0 %v3467
    %v3535 = vpop.f32.mrb[0].mxu0
    %v3536 = vadd.f32 0.0, %v3535
    %v3537 = vpop.f32.mrb[0].mxu0
    %3538 = vdwg.mxu0
    %v3539 = vmul.f32 %v3536, %v3536
    %v3541 = vrot.slane %v3539, 7
    %v3543 = vsub.f32 %v3536, %v3541
    %v3544 = vmax.f32 %v3543, 0.0
    %v3545 = vadd.f32 %v3544, 1e-08
    %v3546 = vrsqrt.pop %v3545
    %3548 = vset.pattern.permute.xlu0 0
    %3549 = vperm.xlu0 %3548, %v3343
    %v3550 = vpop.permute.xlu0 %3549
    %3553 = vset.pattern.permute.xlu0 0
    %3554 = vperm.xlu0 %3553, %v3344
    %v3555 = vpop.permute.xlu0 %3554
    %3558 = vset.pattern.permute.xlu0 0
    %3559 = vperm.xlu0 %3558, %v3345
    %v3560 = vpop.permute.xlu0 %3559
    %3563 = vset.pattern.permute.xlu0 0
    %3564 = vperm.xlu0 %3563, %v3346
    %v3565 = vpop.permute.xlu0 %3564
    %3568 = vset.pattern.permute.xlu0 0
    %3569 = vperm.xlu0 %3568, %v3347
    %v3570 = vpop.permute.xlu0 %3569
    %3573 = vset.pattern.permute.xlu0 0
    %3574 = vperm.xlu0 %3573, %v3348
    %v3575 = vpop.permute.xlu0 %3574
    %3578 = vset.pattern.permute.xlu0 0
    %3579 = vperm.xlu0 %3578, %v3349
    %v3580 = vpop.permute.xlu0 %3579
    %3583 = vset.pattern.permute.xlu0 0
    %3584 = vperm.xlu0 %3583, %v3350
    %v3585 = vpop.permute.xlu0 %3584
    %v3587 = vlaneseq
    %v3588 = vshrl.u32 %v3587, 7
    %v3589 = vsub.s32 1, %v3588
    %v3590 = vrot.slane %v3546, %v3589
    %v3591 = vmul.f32 %v3550, %v3590
    %v3592 = vmul.f32 %v3555, %v3590
    %v3593 = vmul.f32 %v3560, %v3590
    %v3594 = vmul.f32 %v3565, %v3590
    %v3595 = vmul.f32 %v3570, %v3590
    %v3596 = vmul.f32 %v3575, %v3590
    %v3597 = vmul.f32 %v3580, %v3590
    %v3598 = vmul.f32 %v3585, %v3590
    %v3599 = vmul.f32 %v3334, %v3591
    %v3600 = vmul.f32 %v3335, %v3592
    %v3601 = vmul.f32 %v3336, %v3593
    %v3602 = vmul.f32 %v3337, %v3594
    %v3603 = vmul.f32 %v3338, %v3595
    %v3604 = vmul.f32 %v3339, %v3596
    %v3605 = vmul.f32 %v3340, %v3597
    %v3606 = vmul.f32 %v3341, %v3598
    %v3607 = vlaneseq
    %v3608 = vshrl.u32 %v3607, 7
    %v3609 = vsub.s32 0, %v3608
    %v3610 = vrot.slane %v3536, %v3609
    %v3611 = vmul.f32 %v3610, %v3591
    %v3612 = vmul.f32 %v3610, %v3592
    %v3613 = vmul.f32 %v3610, %v3593
    %v3614 = vmul.f32 %v3610, %v3594
    %v3615 = vmul.f32 %v3610, %v3595
    %v3616 = vmul.f32 %v3610, %v3596
    %v3617 = vmul.f32 %v3610, %v3597
    %v3618 = vmul.f32 %v3610, %v3598
    %3620 = vset.pattern.permute.xlu0 0
    %3621 = vperm.xlu0 %3620, %v3352
    %v3622 = vpop.permute.xlu0 %3621
    %3625 = vset.pattern.permute.xlu0 0
    %3626 = vperm.xlu0 %3625, %v3353
    %v3627 = vpop.permute.xlu0 %3626
    %3630 = vset.pattern.permute.xlu0 0
    %3631 = vperm.xlu0 %3630, %v3354
    %v3632 = vpop.permute.xlu0 %3631
    %3635 = vset.pattern.permute.xlu0 0
    %3636 = vperm.xlu0 %3635, %v3355
    %v3637 = vpop.permute.xlu0 %3636
    %3640 = vset.pattern.permute.xlu0 0
    %3641 = vperm.xlu0 %3640, %v3356
    %v3642 = vpop.permute.xlu0 %3641
    %3645 = vset.pattern.permute.xlu0 0
    %3646 = vperm.xlu0 %3645, %v3357
    %v3647 = vpop.permute.xlu0 %3646
    %3650 = vset.pattern.permute.xlu0 0
    %3651 = vperm.xlu0 %3650, %v3358
    %v3652 = vpop.permute.xlu0 %3651
    %3655 = vset.pattern.permute.xlu0 0
    %3656 = vperm.xlu0 %3655, %v3359
    %v3657 = vpop.permute.xlu0 %3656
    %v3659 = vsub.f32 %v3622, %v3611
    %v3660 = vsub.f32 %v3627, %v3612
    %v3661 = vsub.f32 %v3632, %v3613
    %v3662 = vsub.f32 %v3637, %v3614
    %v3663 = vsub.f32 %v3642, %v3615
    %v3664 = vsub.f32 %v3647, %v3616
    %v3665 = vsub.f32 %v3652, %v3617
    %v3666 = vsub.f32 %v3657, %v3618
    %v3667 = vadd.f32 %v3599, %v3659
    %v3668 = vadd.f32 %v3600, %v3660
    %v3669 = vadd.f32 %v3601, %v3661
    %v3670 = vadd.f32 %v3602, %v3662
    %v3671 = vadd.f32 %v3603, %v3663
    %v3672 = vadd.f32 %v3604, %v3664
    %v3673 = vadd.f32 %v3605, %v3665
    %v3674 = vadd.f32 %v3606, %v3666
    %s3675 = scalar_lea.vmem %s12, 128
    %v3676 = vld [vmem:[%s3675] sm:$0xff]
    %v3677 = vld [vmem:[%s3675 + $0x8] sm:$0xff]
    %v3678 = vld [vmem:[%s3675 + $0x10] sm:$0xff]
    %v3679 = vld [vmem:[%s3675 + $0x18] sm:$0xff]
    %v3680 = vld [vmem:[%s3675 + $0x20] sm:$0xff]
    %v3681 = vld [vmem:[%s3675 + $0x28] sm:$0xff]
    %v3682 = vld [vmem:[%s3675 + $0x30] sm:$0xff]
    %v3683 = vld [vmem:[%s3675 + $0x38] sm:$0xff]
    %3685 = vset.pattern.permute.xlu0 1
    %3686 = vperm.xlu0 %3685, %v3676
    %v3687 = vpop.permute.xlu0 %3686
    %3690 = vset.pattern.permute.xlu0 1
    %3691 = vperm.xlu0 %3690, %v3677
    %v3692 = vpop.permute.xlu0 %3691
    %3695 = vset.pattern.permute.xlu0 1
    %3696 = vperm.xlu0 %3695, %v3678
    %v3697 = vpop.permute.xlu0 %3696
    %3700 = vset.pattern.permute.xlu0 1
    %3701 = vperm.xlu0 %3700, %v3679
    %v3702 = vpop.permute.xlu0 %3701
    %3705 = vset.pattern.permute.xlu0 1
    %3706 = vperm.xlu0 %3705, %v3680
    %v3707 = vpop.permute.xlu0 %3706
    %3710 = vset.pattern.permute.xlu0 1
    %3711 = vperm.xlu0 %3710, %v3681
    %v3712 = vpop.permute.xlu0 %3711
    %3715 = vset.pattern.permute.xlu0 1
    %3716 = vperm.xlu0 %3715, %v3682
    %v3717 = vpop.permute.xlu0 %3716
    %3720 = vset.pattern.permute.xlu0 1
    %3721 = vperm.xlu0 %3720, %v3683
    %v3722 = vpop.permute.xlu0 %3721
    %v3724 = vmul.f32 %v3687, %v3667
    %v3725 = vmul.f32 %v3692, %v3668
    %v3726 = vmul.f32 %v3697, %v3669
    %v3727 = vmul.f32 %v3702, %v3670
    %v3728 = vmul.f32 %v3707, %v3671
    %v3729 = vmul.f32 %v3712, %v3672
    %v3730 = vmul.f32 %v3717, %v3673
    %v3731 = vmul.f32 %v3722, %v3674
    %s3732 = scalar_lea.vmem %s13, 128
    %v3733 = vld [vmem:[%s3732] sm:$0xff]
    %v3734 = vld [vmem:[%s3732 + $0x8] sm:$0xff]
    %v3735 = vld [vmem:[%s3732 + $0x10] sm:$0xff]
    %v3736 = vld [vmem:[%s3732 + $0x18] sm:$0xff]
    %v3737 = vld [vmem:[%s3732 + $0x20] sm:$0xff]
    %v3738 = vld [vmem:[%s3732 + $0x28] sm:$0xff]
    %v3739 = vld [vmem:[%s3732 + $0x30] sm:$0xff]
    %v3740 = vld [vmem:[%s3732 + $0x38] sm:$0xff]
    %3742 = vset.pattern.permute.xlu0 0
    %3743 = vperm.xlu0 %3742, %v3733
    %v3744 = vpop.permute.xlu0 %3743
    %3747 = vset.pattern.permute.xlu0 0
    %3748 = vperm.xlu0 %3747, %v3734
    %v3749 = vpop.permute.xlu0 %3748
    %3752 = vset.pattern.permute.xlu0 0
    %3753 = vperm.xlu0 %3752, %v3735
    %v3754 = vpop.permute.xlu0 %3753
    %3757 = vset.pattern.permute.xlu0 0
    %3758 = vperm.xlu0 %3757, %v3736
    %v3759 = vpop.permute.xlu0 %3758
    %3762 = vset.pattern.permute.xlu0 0
    %3763 = vperm.xlu0 %3762, %v3737
    %v3764 = vpop.permute.xlu0 %3763
    %3767 = vset.pattern.permute.xlu0 0
    %3768 = vperm.xlu0 %3767, %v3738
    %v3769 = vpop.permute.xlu0 %3768
    %3772 = vset.pattern.permute.xlu0 0
    %3773 = vperm.xlu0 %3772, %v3739
    %v3774 = vpop.permute.xlu0 %3773
    %3777 = vset.pattern.permute.xlu0 0
    %3778 = vperm.xlu0 %3777, %v3740
    %v3779 = vpop.permute.xlu0 %3778
    %v3781 = vadd.f32 %v3724, %v3744
    %v3782 = vadd.f32 %v3725, %v3749
    %v3783 = vadd.f32 %v3726, %v3754
    %v3784 = vadd.f32 %v3727, %v3759
    %v3785 = vadd.f32 %v3728, %v3764
    %v3786 = vadd.f32 %v3729, %v3769
    %v3787 = vadd.f32 %v3730, %v3774
    %v3788 = vadd.f32 %v3731, %v3779
    %3789 = vrot.lane.b32.xlu0 %v3667, 4
    %v3790 = vpop.permute.xlu0 %3789
    %3791 = vrot.lane.b32.xlu0 %v3668, 4
    %v3792 = vpop.permute.xlu0 %3791
    %3793 = vrot.lane.b32.xlu0 %v3669, 4
    %v3794 = vpop.permute.xlu0 %3793
    %3795 = vrot.lane.b32.xlu0 %v3670, 4
    %v3796 = vpop.permute.xlu0 %3795
    %3797 = vrot.lane.b32.xlu0 %v3671, 4
    %v3798 = vpop.permute.xlu0 %3797
    %3799 = vrot.lane.b32.xlu0 %v3672, 4
    %v3800 = vpop.permute.xlu0 %3799
    %3801 = vrot.lane.b32.xlu0 %v3673, 4
    %v3802 = vpop.permute.xlu0 %3801
    %3803 = vrot.lane.b32.xlu0 %v3674, 4
    %v3804 = vpop.permute.xlu0 %3803
    %v3805 = vsel %vm105, 1, 0
    %vm3806 = vcmp.eq.s32.totalorder %v3805, 1
    %v3807 = vsel %vm3806, %v3790, 0.0
    %v3808 = vsel %vm3806, %v3792, 0.0
    %v3809 = vsel %vm3806, %v3794, 0.0
    %v3810 = vsel %vm3806, %v3796, 0.0
    %v3811 = vsel %vm3806, %v3798, 0.0
    %v3812 = vsel %vm3806, %v3800, 0.0
    %v3813 = vsel %vm3806, %v3802, 0.0
    %v3814 = vsel %vm3806, %v3804, 0.0
    %3815 = vset.pattern.permute.xlu0 0
    %3816 = vperm.xlu0 %3815, %v3676
    %v3817 = vpop.permute.xlu0 %3816
    %3819 = vset.pattern.permute.xlu0 0
    %3820 = vperm.xlu0 %3819, %v3677
    %v3821 = vpop.permute.xlu0 %3820
    %3823 = vset.pattern.permute.xlu0 0
    %3824 = vperm.xlu0 %3823, %v3678
    %v3825 = vpop.permute.xlu0 %3824
    %3827 = vset.pattern.permute.xlu0 0
    %3828 = vperm.xlu0 %3827, %v3679
    %v3829 = vpop.permute.xlu0 %3828
    %3831 = vset.pattern.permute.xlu0 0
    %3832 = vperm.xlu0 %3831, %v3680
    %v3833 = vpop.permute.xlu0 %3832
    %3835 = vset.pattern.permute.xlu0 0
    %3836 = vperm.xlu0 %3835, %v3681
    %v3837 = vpop.permute.xlu0 %3836
    %3839 = vset.pattern.permute.xlu0 0
    %3840 = vperm.xlu0 %3839, %v3682
    %v3841 = vpop.permute.xlu0 %3840
    %3843 = vset.pattern.permute.xlu0 0
    %3844 = vperm.xlu0 %3843, %v3683
    %v3845 = vpop.permute.xlu0 %3844
    %v3847 = vmul.f32 %v3817, %v3807
    %v3848 = vmul.f32 %v3821, %v3808
    %v3849 = vmul.f32 %v3825, %v3809
    %v3850 = vmul.f32 %v3829, %v3810
    %v3851 = vmul.f32 %v3833, %v3811
    %v3852 = vmul.f32 %v3837, %v3812
    %v3853 = vmul.f32 %v3841, %v3813
    %v3854 = vmul.f32 %v3845, %v3814
    %v3855 = vadd.f32 %v3781, %v3847
    %v3856 = vadd.f32 %v3782, %v3848
    %v3857 = vadd.f32 %v3783, %v3849
    %v3858 = vadd.f32 %v3784, %v3850
    %v3859 = vadd.f32 %v3785, %v3851
    %v3860 = vadd.f32 %v3786, %v3852
    %v3861 = vadd.f32 %v3787, %v3853
    %v3862 = vadd.f32 %v3788, %v3854
    %3863 = vrot.lane.b32.xlu0 %v3667, 124
    %v3864 = vpop.permute.xlu0 %3863
    %3865 = vrot.lane.b32.xlu0 %v3668, 124
    %v3866 = vpop.permute.xlu0 %3865
    %3867 = vrot.lane.b32.xlu0 %v3669, 124
    %v3868 = vpop.permute.xlu0 %3867
    %3869 = vrot.lane.b32.xlu0 %v3670, 124
    %v3870 = vpop.permute.xlu0 %3869
    %3871 = vrot.lane.b32.xlu0 %v3671, 124
    %v3872 = vpop.permute.xlu0 %3871
    %3873 = vrot.lane.b32.xlu0 %v3672, 124
    %v3874 = vpop.permute.xlu0 %3873
    %3875 = vrot.lane.b32.xlu0 %v3673, 124
    %v3876 = vpop.permute.xlu0 %3875
    %3877 = vrot.lane.b32.xlu0 %v3674, 124
    %v3878 = vpop.permute.xlu0 %3877
    %v3879 = vsel %vm106, 1, 0
    %vm3880 = vcmp.eq.s32.totalorder %v3879, 1
    %v3881 = vsel %vm3880, %v3864, 0.0
    %v3882 = vsel %vm3880, %v3866, 0.0
    %v3883 = vsel %vm3880, %v3868, 0.0
    %v3884 = vsel %vm3880, %v3870, 0.0
    %v3885 = vsel %vm3880, %v3872, 0.0
    %v3886 = vsel %vm3880, %v3874, 0.0
    %v3887 = vsel %vm3880, %v3876, 0.0
    %v3888 = vsel %vm3880, %v3878, 0.0
    %3889 = vset.pattern.permute.xlu0 2
    %3890 = vperm.xlu0 %3889, %v3676
    %v3891 = vpop.permute.xlu0 %3890
    %3893 = vset.pattern.permute.xlu0 2
    %3894 = vperm.xlu0 %3893, %v3677
    %v3895 = vpop.permute.xlu0 %3894
    %3897 = vset.pattern.permute.xlu0 2
    %3898 = vperm.xlu0 %3897, %v3678
    %v3899 = vpop.permute.xlu0 %3898
    %3901 = vset.pattern.permute.xlu0 2
    %3902 = vperm.xlu0 %3901, %v3679
    %v3903 = vpop.permute.xlu0 %3902
    %3905 = vset.pattern.permute.xlu0 2
    %3906 = vperm.xlu0 %3905, %v3680
    %v3907 = vpop.permute.xlu0 %3906
    %3909 = vset.pattern.permute.xlu0 2
    %3910 = vperm.xlu0 %3909, %v3681
    %v3911 = vpop.permute.xlu0 %3910
    %3913 = vset.pattern.permute.xlu0 2
    %3914 = vperm.xlu0 %3913, %v3682
    %v3915 = vpop.permute.xlu0 %3914
    %3917 = vset.pattern.permute.xlu0 2
    %3918 = vperm.xlu0 %3917, %v3683
    %v3919 = vpop.permute.xlu0 %3918
    %v3921 = vmul.f32 %v3891, %v3881
    %v3922 = vmul.f32 %v3895, %v3882
    %v3923 = vmul.f32 %v3899, %v3883
    %v3924 = vmul.f32 %v3903, %v3884
    %v3925 = vmul.f32 %v3907, %v3885
    %v3926 = vmul.f32 %v3911, %v3886
    %v3927 = vmul.f32 %v3915, %v3887
    %v3928 = vmul.f32 %v3919, %v3888
    %v3929 = vadd.f32 %v3855, %v3921
    %v3930 = vadd.f32 %v3856, %v3922
    %v3931 = vadd.f32 %v3857, %v3923
    %v3932 = vadd.f32 %v3858, %v3924
    %v3933 = vadd.f32 %v3859, %v3925
    %v3934 = vadd.f32 %v3860, %v3926
    %v3935 = vadd.f32 %v3861, %v3927
    %v3936 = vadd.f32 %v3862, %v3928
    %s3937 = scalar_lea.vmem %s14, 2
    %v3938 = vld [vmem:[%s3937] sm:$0x1]
    %v3939 = vmax.f32 %v3929, 0.0
    %v3940 = vmax.f32 %v3930, 0.0
    %v3941 = vmax.f32 %v3931, 0.0
    %v3942 = vmax.f32 %v3932, 0.0
    %v3943 = vmax.f32 %v3933, 0.0
    %v3944 = vmax.f32 %v3934, 0.0
    %v3945 = vmax.f32 %v3935, 0.0
    %v3946 = vmax.f32 %v3936, 0.0
    %v3947 = vmin.f32 %v3929, 0.0
    %v3948 = vmin.f32 %v3930, 0.0
    %v3949 = vmin.f32 %v3931, 0.0
    %v3950 = vmin.f32 %v3932, 0.0
    %v3951 = vmin.f32 %v3933, 0.0
    %v3952 = vmin.f32 %v3934, 0.0
    %v3953 = vmin.f32 %v3935, 0.0
    %v3954 = vmin.f32 %v3936, 0.0
    %v3956 = vlaneseq
    %v3957 = vshrl.u32 %v3956, 7
    %v3958 = vsub.s32 0, %v3957
    %v3959 = vrot.slane %v3938, %v3958
    %3960 = vset.pattern.permute.xlu0 0
    %3961 = vperm.xlu0 %3960, %v3959
    %v3962 = vpop.permute.xlu0 %3961
    %v3964 = vmul.f32 %v3962, %v3947
    %v3965 = vmul.f32 %v3962, %v3948
    %v3966 = vmul.f32 %v3962, %v3949
    %v3967 = vmul.f32 %v3962, %v3950
    %v3968 = vmul.f32 %v3962, %v3951
    %v3969 = vmul.f32 %v3962, %v3952
    %v3970 = vmul.f32 %v3962, %v3953
    %v3971 = vmul.f32 %v3962, %v3954
    %v3972 = vadd.f32 %v3939, %v3964
    %v3973 = vadd.f32 %v3940, %v3965
    %v3974 = vadd.f32 %v3941, %v3966
    %v3975 = vadd.f32 %v3942, %v3967
    %v3976 = vadd.f32 %v3943, %v3968
    %v3977 = vadd.f32 %v3944, %v3969
    %v3978 = vadd.f32 %v3945, %v3970
    %v3979 = vadd.f32 %v3946, %v3971
    %s3980 = scalar_lea.vmem %s15, 128
    %v3981 = vld [vmem:[%s3980] sm:$0xff]
    %v3982 = vld [vmem:[%s3980 + $0x8] sm:$0xff]
    %v3983 = vld [vmem:[%s3980 + $0x10] sm:$0xff]
    %v3984 = vld [vmem:[%s3980 + $0x18] sm:$0xff]
    %v3985 = vld [vmem:[%s3980 + $0x20] sm:$0xff]
    %v3986 = vld [vmem:[%s3980 + $0x28] sm:$0xff]
    %v3987 = vld [vmem:[%s3980 + $0x30] sm:$0xff]
    %v3988 = vld [vmem:[%s3980 + $0x38] sm:$0xff]
    %s3989 = scalar_lea.vmem %s16, 128
    %v3990 = vld [vmem:[%s3989] sm:$0xff]
    %v3991 = vld [vmem:[%s3989 + $0x8] sm:$0xff]
    %v3992 = vld [vmem:[%s3989 + $0x10] sm:$0xff]
    %v3993 = vld [vmem:[%s3989 + $0x18] sm:$0xff]
    %v3994 = vld [vmem:[%s3989 + $0x20] sm:$0xff]
    %v3995 = vld [vmem:[%s3989 + $0x28] sm:$0xff]
    %v3996 = vld [vmem:[%s3989 + $0x30] sm:$0xff]
    %v3997 = vld [vmem:[%s3989 + $0x38] sm:$0xff]
    %v3998 = vadd.f32 %v3972, %v3973
    %v3999 = vadd.f32 %v3998, %v3974
    %v4000 = vadd.f32 %v3999, %v3975
    %v4001 = vadd.f32 %v4000, %v3976
    %v4002 = vadd.f32 %v4001, %v3977
    %v4003 = vadd.f32 %v4002, %v3978
    %v4004 = vadd.f32 %v4003, %v3979
    %v4005 = vrot.slane %v4004, 4
    %v4006 = vadd.f32 %v4004, %v4005
    %v4007 = vrot.slane %v4006, 2
    %v4008 = vadd.f32 %v4006, %v4007
    %v4009 = vrot.slane %v4008, 1
    %v4010 = vadd.f32 %v4008, %v4009
    %v4011 = vmul.f32 %v3972, %v3972
    %v4012 = vmul.f32 %v3973, %v3973
    %v4013 = vmul.f32 %v3974, %v3974
    %v4014 = vmul.f32 %v3975, %v3975
    %v4015 = vmul.f32 %v3976, %v3976
    %v4016 = vmul.f32 %v3977, %v3977
    %v4017 = vmul.f32 %v3978, %v3978
    %v4018 = vmul.f32 %v3979, %v3979
    %v4019 = vadd.f32 %v4011, %v4012
    %v4020 = vadd.f32 %v4019, %v4013
    %v4021 = vadd.f32 %v4020, %v4014
    %v4022 = vadd.f32 %v4021, %v4015
    %v4023 = vadd.f32 %v4022, %v4016
    %v4024 = vadd.f32 %v4023, %v4017
    %v4025 = vadd.f32 %v4024, %v4018
    %v4026 = vrot.slane %v4025, 4
    %v4027 = vadd.f32 %v4025, %v4026
    %v4028 = vrot.slane %v4027, 2
    %v4029 = vadd.f32 %v4027, %v4028
    %v4030 = vrot.slane %v4029, 1
    %v4031 = vadd.f32 %v4029, %v4030
    %v4032 = vsel %vm127, %v4010, %v4031
    %4033 = vmatprep.subr.mxu0 0.0
    %4034 = vmatpush1.msra.mxu0 %v79
    %4035 = vmatprep.subr.mxu0 0.0
    %4036 = vmatpush1.msra.mxu0 %v80
    %4037 = vmatprep.subr.mxu0 0.0
    %4038 = vmatpush1.msra.mxu0 %v81
    %4039 = vmatprep.subr.mxu0 0.0
    %4040 = vmatpush1.msra.mxu0 %v82
    %4041 = vmatprep.subr.mxu0 0.0
    %4042 = vmatpush1.msra.mxu0 %v83
    %4043 = vmatprep.subr.mxu0 0.0
    %4044 = vmatpush1.msra.mxu0 %v84
    %4045 = vmatprep.subr.mxu0 0.0
    %4046 = vmatpush1.msra.mxu0 %v85
    %4047 = vmatprep.subr.mxu0 0.0
    %4048 = vmatpush1.msra.mxu0 %v86
    %4049 = vmatprep.subr.mxu0 0.0
    %4050 = vmatpush1.msra.mxu0 %v87
    %4051 = vmatprep.subr.mxu0 0.0
    %4052 = vmatpush1.msra.mxu0 %v88
    %4053 = vmatprep.subr.mxu0 0.0
    %4054 = vmatpush1.msra.mxu0 %v89
    %4055 = vmatprep.subr.mxu0 0.0
    %4056 = vmatpush1.msra.mxu0 %v90
    %4057 = vmatprep.subr.mxu0 0.0
    %4058 = vmatpush1.msra.mxu0 %v91
    %4059 = vmatprep.subr.mxu0 0.0
    %4060 = vmatpush1.msra.mxu0 %v92
    %4061 = vmatprep.subr.mxu0 0.0
    %4062 = vmatpush1.msra.mxu0 %v93
    %4063 = vmatprep.subr.mxu0 0.0
    %4064 = vmatpush1.msra.mxu0 %v94
    %4065 = vmatprep.subr.mxu0 0.0
    %4066 = vmatpush1.msra.mxu0 0.0
    %4067 = vmatprep.subr.mxu0 0.0
    %4068 = vmatpush1.msra.mxu0 0.0
    %4069 = vmatprep.subr.mxu0 0.0
    %4070 = vmatpush1.msra.mxu0 0.0
    %4071 = vmatprep.subr.mxu0 0.0
    %4072 = vmatpush1.msra.mxu0 0.0
    %4073 = vmatprep.subr.mxu0 0.0
    %4074 = vmatpush1.msra.mxu0 0.0
    %4075 = vmatprep.subr.mxu0 0.0
    %4076 = vmatpush1.msra.mxu0 0.0
    %4077 = vmatprep.subr.mxu0 0.0
    %4078 = vmatpush1.msra.mxu0 0.0
    %4079 = vmatprep.subr.mxu0 0.0
    %4080 = vmatpush1.msra.mxu0 0.0
    %4081 = vmatprep.subr.mxu0 0.0
    %4082 = vmatpush1.msra.mxu0 0.0
    %4083 = vmatprep.subr.mxu0 0.0
    %4084 = vmatpush1.msra.mxu0 0.0
    %4085 = vmatprep.subr.mxu0 0.0
    %4086 = vmatpush1.msra.mxu0 0.0
    %4087 = vmatprep.subr.mxu0 0.0
    %4088 = vmatpush1.msra.mxu0 0.0
    %4089 = vmatprep.subr.mxu0 0.0
    %4090 = vmatpush1.msra.mxu0 0.0
    %4091 = vmatprep.subr.mxu0 0.0
    %4092 = vmatpush1.msra.mxu0 0.0
    %4093 = vmatprep.subr.mxu0 0.0
    %4094 = vmatpush1.msra.mxu0 0.0
    %4095 = vmatprep.subr.mxu0 0.0
    %4096 = vmatpush1.msra.mxu0 0.0
    %4097 = vmatprep.mubr.f32.mxu0 0.0
    %4098 = vmatmul.mubr.f32.gmra.mrb[0].mxu0 %v4032
    %v4099 = vpop.f32.mrb[0].mxu0
    %v4100 = vadd.f32 0.0, %v4099
    %v4101 = vpop.f32.mrb[0].mxu0
    %4102 = vdwg.mxu0
    %v4103 = vmul.f32 %v4100, 0.00024414063
    %v4105 = vsel %vm200, %v4103, 0
    %4107 = vmatprep.subr.mxu0 0.0
    %4108 = vmatpush1.msra.mxu0 %v206
    %4109 = vmatprep.subr.mxu0 0.0
    %4110 = vmatpush1.msra.mxu0 0.0
    %4111 = vmatprep.subr.mxu0 0.0
    %4112 = vmatpush1.msra.mxu0 0.0
    %4113 = vmatprep.subr.mxu0 0.0
    %4114 = vmatpush1.msra.mxu0 0.0
    %4115 = vmatprep.subr.mxu0 0.0
    %4116 = vmatpush1.msra.mxu0 0.0
    %4117 = vmatprep.subr.mxu0 0.0
    %4118 = vmatpush1.msra.mxu0 0.0
    %4119 = vmatprep.subr.mxu0 0.0
    %4120 = vmatpush1.msra.mxu0 0.0
    %4121 = vmatprep.subr.mxu0 0.0
    %4122 = vmatpush1.msra.mxu0 0.0
    %4123 = vmatprep.subr.mxu0 0.0
    %4124 = vmatpush1.msra.mxu0 0.0
    %4125 = vmatprep.subr.mxu0 0.0
    %4126 = vmatpush1.msra.mxu0 0.0
    %4127 = vmatprep.subr.mxu0 0.0
    %4128 = vmatpush1.msra.mxu0 0.0
    %4129 = vmatprep.subr.mxu0 0.0
    %4130 = vmatpush1.msra.mxu0 0.0
    %4131 = vmatprep.subr.mxu0 0.0
    %4132 = vmatpush1.msra.mxu0 0.0
    %4133 = vmatprep.subr.mxu0 0.0
    %4134 = vmatpush1.msra.mxu0 0.0
    %4135 = vmatprep.subr.mxu0 0.0
    %4136 = vmatpush1.msra.mxu0 0.0
    %4137 = vmatprep.subr.mxu0 0.0
    %4138 = vmatpush1.msra.mxu0 0.0
    %4139 = vmatprep.subr.mxu0 0.0
    %4140 = vmatpush1.msra.mxu0 0.0
    %4141 = vmatprep.subr.mxu0 0.0
    %4142 = vmatpush1.msra.mxu0 0.0
    %4143 = vmatprep.subr.mxu0 0.0
    %4144 = vmatpush1.msra.mxu0 0.0
    %4145 = vmatprep.subr.mxu0 0.0
    %4146 = vmatpush1.msra.mxu0 0.0
    %4147 = vmatprep.subr.mxu0 0.0
    %4148 = vmatpush1.msra.mxu0 0.0
    %4149 = vmatprep.subr.mxu0 0.0
    %4150 = vmatpush1.msra.mxu0 0.0
    %4151 = vmatprep.subr.mxu0 0.0
    %4152 = vmatpush1.msra.mxu0 0.0
    %4153 = vmatprep.subr.mxu0 0.0
    %4154 = vmatpush1.msra.mxu0 0.0
    %4155 = vmatprep.subr.mxu0 0.0
    %4156 = vmatpush1.msra.mxu0 0.0
    %4157 = vmatprep.subr.mxu0 0.0
    %4158 = vmatpush1.msra.mxu0 0.0
    %4159 = vmatprep.subr.mxu0 0.0
    %4160 = vmatpush1.msra.mxu0 0.0
    %4161 = vmatprep.subr.mxu0 0.0
    %4162 = vmatpush1.msra.mxu0 0.0
    %4163 = vmatprep.subr.mxu0 0.0
    %4164 = vmatpush1.msra.mxu0 0.0
    %4165 = vmatprep.subr.mxu0 0.0
    %4166 = vmatpush1.msra.mxu0 0.0
    %4167 = vmatprep.subr.mxu0 0.0
    %4168 = vmatpush1.msra.mxu0 0.0
    %4169 = vmatprep.subr.mxu0 0.0
    %4170 = vmatpush1.msra.mxu0 0.0
    %4171 = vmatprep.mubr.f32.mxu0 0.0
    %4172 = vmatmul.mubr.f32.gmra.mrb[0].mxu0 %v4105
    %v4173 = vpop.f32.mrb[0].mxu0
    %v4174 = vadd.f32 0.0, %v4173
    %v4175 = vpop.f32.mrb[0].mxu0
    %4176 = vdwg.mxu0
    %v4177 = vmul.f32 %v4174, %v4174
    %v4179 = vrot.slane %v4177, 7
    %v4181 = vsub.f32 %v4174, %v4179
    %v4182 = vmax.f32 %v4181, 0.0
    %v4183 = vadd.f32 %v4182, 1e-08
    %v4184 = vrsqrt.pop %v4183
    %4186 = vset.pattern.permute.xlu0 0
    %4187 = vperm.xlu0 %4186, %v3981
    %v4188 = vpop.permute.xlu0 %4187
    %4191 = vset.pattern.permute.xlu0 0
    %4192 = vperm.xlu0 %4191, %v3982
    %v4193 = vpop.permute.xlu0 %4192
    %4196 = vset.pattern.permute.xlu0 0
    %4197 = vperm.xlu0 %4196, %v3983
    %v4198 = vpop.permute.xlu0 %4197
    %4201 = vset.pattern.permute.xlu0 0
    %4202 = vperm.xlu0 %4201, %v3984
    %v4203 = vpop.permute.xlu0 %4202
    %4206 = vset.pattern.permute.xlu0 0
    %4207 = vperm.xlu0 %4206, %v3985
    %v4208 = vpop.permute.xlu0 %4207
    %4211 = vset.pattern.permute.xlu0 0
    %4212 = vperm.xlu0 %4211, %v3986
    %v4213 = vpop.permute.xlu0 %4212
    %4216 = vset.pattern.permute.xlu0 0
    %4217 = vperm.xlu0 %4216, %v3987
    %v4218 = vpop.permute.xlu0 %4217
    %4221 = vset.pattern.permute.xlu0 0
    %4222 = vperm.xlu0 %4221, %v3988
    %v4223 = vpop.permute.xlu0 %4222
    %v4225 = vlaneseq
    %v4226 = vshrl.u32 %v4225, 7
    %v4227 = vsub.s32 1, %v4226
    %v4228 = vrot.slane %v4184, %v4227
    %v4229 = vmul.f32 %v4188, %v4228
    %v4230 = vmul.f32 %v4193, %v4228
    %v4231 = vmul.f32 %v4198, %v4228
    %v4232 = vmul.f32 %v4203, %v4228
    %v4233 = vmul.f32 %v4208, %v4228
    %v4234 = vmul.f32 %v4213, %v4228
    %v4235 = vmul.f32 %v4218, %v4228
    %v4236 = vmul.f32 %v4223, %v4228
    %v4237 = vmul.f32 %v3972, %v4229
    %v4238 = vmul.f32 %v3973, %v4230
    %v4239 = vmul.f32 %v3974, %v4231
    %v4240 = vmul.f32 %v3975, %v4232
    %v4241 = vmul.f32 %v3976, %v4233
    %v4242 = vmul.f32 %v3977, %v4234
    %v4243 = vmul.f32 %v3978, %v4235
    %v4244 = vmul.f32 %v3979, %v4236
    %v4245 = vlaneseq
    %v4246 = vshrl.u32 %v4245, 7
    %v4247 = vsub.s32 0, %v4246
    %v4248 = vrot.slane %v4174, %v4247
    %v4249 = vmul.f32 %v4248, %v4229
    %v4250 = vmul.f32 %v4248, %v4230
    %v4251 = vmul.f32 %v4248, %v4231
    %v4252 = vmul.f32 %v4248, %v4232
    %v4253 = vmul.f32 %v4248, %v4233
    %v4254 = vmul.f32 %v4248, %v4234
    %v4255 = vmul.f32 %v4248, %v4235
    %v4256 = vmul.f32 %v4248, %v4236
    %4258 = vset.pattern.permute.xlu0 0
    %4259 = vperm.xlu0 %4258, %v3990
    %v4260 = vpop.permute.xlu0 %4259
    %4263 = vset.pattern.permute.xlu0 0
    %4264 = vperm.xlu0 %4263, %v3991
    %v4265 = vpop.permute.xlu0 %4264
    %4268 = vset.pattern.permute.xlu0 0
    %4269 = vperm.xlu0 %4268, %v3992
    %v4270 = vpop.permute.xlu0 %4269
    %4273 = vset.pattern.permute.xlu0 0
    %4274 = vperm.xlu0 %4273, %v3993
    %v4275 = vpop.permute.xlu0 %4274
    %4278 = vset.pattern.permute.xlu0 0
    %4279 = vperm.xlu0 %4278, %v3994
    %v4280 = vpop.permute.xlu0 %4279
    %4283 = vset.pattern.permute.xlu0 0
    %4284 = vperm.xlu0 %4283, %v3995
    %v4285 = vpop.permute.xlu0 %4284
    %4288 = vset.pattern.permute.xlu0 0
    %4289 = vperm.xlu0 %4288, %v3996
    %v4290 = vpop.permute.xlu0 %4289
    %4293 = vset.pattern.permute.xlu0 0
    %4294 = vperm.xlu0 %4293, %v3997
    %v4295 = vpop.permute.xlu0 %4294
    %v4297 = vsub.f32 %v4260, %v4249
    %v4298 = vsub.f32 %v4265, %v4250
    %v4299 = vsub.f32 %v4270, %v4251
    %v4300 = vsub.f32 %v4275, %v4252
    %v4301 = vsub.f32 %v4280, %v4253
    %v4302 = vsub.f32 %v4285, %v4254
    %v4303 = vsub.f32 %v4290, %v4255
    %v4304 = vsub.f32 %v4295, %v4256
    %v4305 = vadd.f32 %v4237, %v4297
    %v4306 = vadd.f32 %v4238, %v4298
    %v4307 = vadd.f32 %v4239, %v4299
    %v4308 = vadd.f32 %v4240, %v4300
    %v4309 = vadd.f32 %v4241, %v4301
    %v4310 = vadd.f32 %v4242, %v4302
    %v4311 = vadd.f32 %v4243, %v4303
    %v4312 = vadd.f32 %v4244, %v4304
    %s4313 = scalar_lea.vmem %s17, 64
    %v4314 = vld [vmem:[%s4313] sm:$0xff]
    %v4315 = vld [vmem:[%s4313 + $0x8] sm:$0xff]
    %v4316 = vld [vmem:[%s4313 + $0x10] sm:$0xff]
    %v4317 = vld [vmem:[%s4313 + $0x18] sm:$0xff]
    %v4319 = vsel %vm1646, %v4314, 0
    %v4322 = vsel %vm1646, %v4315, 0
    %v4325 = vsel %vm1646, %v4316, 0
    %v4328 = vsel %vm1646, %v4317, 0
    %4330 = vmatprep.subr.mxu0 0.0
    %4331 = vmatpush1.msra.mxu0 %v4305
    %4332 = vmatprep.subr.mxu0 0.0
    %4333 = vmatpush1.msra.mxu0 %v4306
    %4334 = vmatprep.subr.mxu0 0.0
    %4335 = vmatpush1.msra.mxu0 %v4307
    %4336 = vmatprep.subr.mxu0 0.0
    %4337 = vmatpush1.msra.mxu0 %v4308
    %4338 = vmatprep.subr.mxu0 0.0
    %4339 = vmatpush1.msra.mxu0 %v4309
    %4340 = vmatprep.subr.mxu0 0.0
    %4341 = vmatpush1.msra.mxu0 %v4310
    %4342 = vmatprep.subr.mxu0 0.0
    %4343 = vmatpush1.msra.mxu0 %v4311
    %4344 = vmatprep.subr.mxu0 0.0
    %4345 = vmatpush1.msra.mxu0 %v4312
    %4346 = vmatprep.subr.mxu0 0.0
    %4347 = vmatpush1.msra.mxu0 0.0
    %4348 = vmatprep.subr.mxu0 0.0
    %4349 = vmatpush1.msra.mxu0 0.0
    %4350 = vmatprep.subr.mxu0 0.0
    %4351 = vmatpush1.msra.mxu0 0.0
    %4352 = vmatprep.subr.mxu0 0.0
    %4353 = vmatpush1.msra.mxu0 0.0
    %4354 = vmatprep.subr.mxu0 0.0
    %4355 = vmatpush1.msra.mxu0 0.0
    %4356 = vmatprep.subr.mxu0 0.0
    %4357 = vmatpush1.msra.mxu0 0.0
    %4358 = vmatprep.subr.mxu0 0.0
    %4359 = vmatpush1.msra.mxu0 0.0
    %4360 = vmatprep.subr.mxu0 0.0
    %4361 = vmatpush1.msra.mxu0 0.0
    %4362 = vmatprep.subr.mxu0 0.0
    %4363 = vmatpush1.msra.mxu0 0.0
    %4364 = vmatprep.subr.mxu0 0.0
    %4365 = vmatpush1.msra.mxu0 0.0
    %4366 = vmatprep.subr.mxu0 0.0
    %4367 = vmatpush1.msra.mxu0 0.0
    %4368 = vmatprep.subr.mxu0 0.0
    %4369 = vmatpush1.msra.mxu0 0.0
    %4370 = vmatprep.subr.mxu0 0.0
    %4371 = vmatpush1.msra.mxu0 0.0
    %4372 = vmatprep.subr.mxu0 0.0
    %4373 = vmatpush1.msra.mxu0 0.0
    %4374 = vmatprep.subr.mxu0 0.0
    %4375 = vmatpush1.msra.mxu0 0.0
    %4376 = vmatprep.subr.mxu0 0.0
    %4377 = vmatpush1.msra.mxu0 0.0
    %4378 = vmatprep.subr.mxu0 0.0
    %4379 = vmatpush1.msra.mxu0 0.0
    %4380 = vmatprep.subr.mxu0 0.0
    %4381 = vmatpush1.msra.mxu0 0.0
    %4382 = vmatprep.subr.mxu0 0.0
    %4383 = vmatpush1.msra.mxu0 0.0
    %4384 = vmatprep.subr.mxu0 0.0
    %4385 = vmatpush1.msra.mxu0 0.0
    %4386 = vmatprep.subr.mxu0 0.0
    %4387 = vmatpush1.msra.mxu0 0.0
    %4388 = vmatprep.subr.mxu0 0.0
    %4389 = vmatpush1.msra.mxu0 0.0
    %4390 = vmatprep.subr.mxu0 0.0
    %4391 = vmatpush1.msra.mxu0 0.0
    %4392 = vmatprep.subr.mxu0 0.0
    %4393 = vmatpush1.msra.mxu0 0.0
    %4394 = vmatprep.mubr.f32.mxu0 0.0
    %4395 = vmatmul.mubr.f32.gmra.mrb[0].mxu0 %v4319
    %v4396 = vpop.f32.mrb[0].mxu0
    %v4397 = vadd.f32 0.0, %v4396
    %v4398 = vpop.f32.mrb[0].mxu0
    %4399 = vmatprep.mubr.f32.mxu0 0.0
    %4400 = vmatmul.mubr.f32.gmra.mrb[0].mxu0 %v4322
    %v4401 = vpop.f32.mrb[0].mxu0
    %v4402 = vadd.f32 0.0, %v4401
    %v4403 = vpop.f32.mrb[0].mxu0
    %4404 = vmatprep.mubr.f32.mxu0 0.0
    %4405 = vmatmul.mubr.f32.gmra.mrb[0].mxu0 %v4325
    %v4406 = vpop.f32.mrb[0].mxu0
    %v4407 = vadd.f32 0.0, %v4406
    %v4408 = vpop.f32.mrb[0].mxu0
    %4409 = vmatprep.mubr.f32.mxu0 0.0
    %4410 = vmatmul.mubr.f32.gmra.mrb[0].mxu0 %v4328
    %v4411 = vpop.f32.mrb[0].mxu0
    %v4412 = vadd.f32 0.0, %v4411
    %v4413 = vpop.f32.mrb[0].mxu0
    %4414 = vdwg.mxu0
    %v4415 = vadd.f32 %v3108, %v4397
    %v4416 = vadd.f32 %v3109, %v4402
    %v4417 = vadd.f32 %v3110, %v4407
    %v4418 = vadd.f32 %v3111, %v4412
    %s4419 = scalar_lea.vmem %s18, 64
    %v4420 = vld [vmem:[%s4419] sm:$0xff]
    %v4421 = vld [vmem:[%s4419 + $0x8] sm:$0xff]
    %v4422 = vld [vmem:[%s4419 + $0x10] sm:$0xff]
    %v4423 = vld [vmem:[%s4419 + $0x18] sm:$0xff]
    %4425 = vset.pattern.permute.xlu0 0
    %4426 = vperm.xlu0 %4425, %v4420
    %v4427 = vpop.permute.xlu0 %4426
    %4430 = vset.pattern.permute.xlu0 0
    %4431 = vperm.xlu0 %4430, %v4421
    %v4432 = vpop.permute.xlu0 %4431
    %4435 = vset.pattern.permute.xlu0 0
    %4436 = vperm.xlu0 %4435, %v4422
    %v4437 = vpop.permute.xlu0 %4436
    %4440 = vset.pattern.permute.xlu0 0
    %4441 = vperm.xlu0 %4440, %v4423
    %v4442 = vpop.permute.xlu0 %4441
    %v4444 = vadd.f32 %v4415, %v4427
    %v4445 = vadd.f32 %v4416, %v4432
    %v4446 = vadd.f32 %v4417, %v4437
    %v4447 = vadd.f32 %v4418, %v4442
    %s4448 = scalar_lea.vmem %s7, 192
    %v4449 = vld [vmem:[%s4448] sm:$0xff]
    %v4450 = vld [vmem:[%s4448 + $0x8] sm:$0xff]
    %v4451 = vld [vmem:[%s4448 + $0x10] sm:$0xff]
    %v4452 = vld [vmem:[%s4448 + $0x18] sm:$0xff]
    %v4453 = vld [vmem:[%s4448 + $0x20] sm:$0xff]
    %v4454 = vld [vmem:[%s4448 + $0x28] sm:$0xff]
    %v4455 = vld [vmem:[%s4448 + $0x30] sm:$0xff]
    %v4456 = vld [vmem:[%s4448 + $0x38] sm:$0xff]
    %s4457 = scalar_lea.vmem %s8, 192
    %v4458 = vld [vmem:[%s4457] sm:$0xff]
    %v4459 = vld [vmem:[%s4457 + $0x8] sm:$0xff]
    %v4460 = vld [vmem:[%s4457 + $0x10] sm:$0xff]
    %v4461 = vld [vmem:[%s4457 + $0x18] sm:$0xff]
    %v4462 = vld [vmem:[%s4457 + $0x20] sm:$0xff]
    %v4463 = vld [vmem:[%s4457 + $0x28] sm:$0xff]
    %v4464 = vld [vmem:[%s4457 + $0x30] sm:$0xff]
    %v4465 = vld [vmem:[%s4457 + $0x38] sm:$0xff]
    %4467 = vset.pattern.permute.xlu0 0
    %4468 = vperm.xlu0 %4467, %v4458
    %v4469 = vpop.permute.xlu0 %4468
    %4472 = vset.pattern.permute.xlu0 0
    %4473 = vperm.xlu0 %4472, %v4459
    %v4474 = vpop.permute.xlu0 %4473
    %4477 = vset.pattern.permute.xlu0 0
    %4478 = vperm.xlu0 %4477, %v4460
    %v4479 = vpop.permute.xlu0 %4478
    %4482 = vset.pattern.permute.xlu0 0
    %4483 = vperm.xlu0 %4482, %v4461
    %v4484 = vpop.permute.xlu0 %4483
    %4487 = vset.pattern.permute.xlu0 0
    %4488 = vperm.xlu0 %4487, %v4462
    %v4489 = vpop.permute.xlu0 %4488
    %4492 = vset.pattern.permute.xlu0 0
    %4493 = vperm.xlu0 %4492, %v4463
    %v4494 = vpop.permute.xlu0 %4493
    %4497 = vset.pattern.permute.xlu0 0
    %4498 = vperm.xlu0 %4497, %v4464
    %v4499 = vpop.permute.xlu0 %4498
    %4502 = vset.pattern.permute.xlu0 0
    %4503 = vperm.xlu0 %4502, %v4465
    %v4504 = vpop.permute.xlu0 %4503
    %v4507 = vsel %vm506, %v4449, 0
    %v4510 = vsel %vm506, %v4450, 0
    %v4513 = vsel %vm506, %v4451, 0
    %v4516 = vsel %vm506, %v4452, 0
    %v4519 = vsel %vm506, %v4453, 0
    %v4522 = vsel %vm506, %v4454, 0
    %v4525 = vsel %vm506, %v4455, 0
    %v4528 = vsel %vm506, %v4456, 0
    %4530 = vmatprep.subr.mxu0 0.0
    %4531 = vmatpush1.msra.mxu0 %v4444
    %4532 = vmatprep.subr.mxu0 0.0
    %4533 = vmatpush1.msra.mxu0 %v4445
    %4534 = vmatprep.subr.mxu0 0.0
    %4535 = vmatpush1.msra.mxu0 %v4446
    %4536 = vmatprep.subr.mxu0 0.0
    %4537 = vmatpush1.msra.mxu0 %v4447
    %4538 = vmatprep.subr.mxu0 0.0
    %4539 = vmatpush1.msra.mxu0 0.0
    %4540 = vmatprep.subr.mxu0 0.0
    %4541 = vmatpush1.msra.mxu0 0.0
    %4542 = vmatprep.subr.mxu0 0.0
    %4543 = vmatpush1.msra.mxu0 0.0
    %4544 = vmatprep.subr.mxu0 0.0
    %4545 = vmatpush1.msra.mxu0 0.0
    %4546 = vmatprep.subr.mxu0 0.0
    %4547 = vmatpush1.msra.mxu0 0.0
    %4548 = vmatprep.subr.mxu0 0.0
    %4549 = vmatpush1.msra.mxu0 0.0
    %4550 = vmatprep.subr.mxu0 0.0
    %4551 = vmatpush1.msra.mxu0 0.0
    %4552 = vmatprep.subr.mxu0 0.0
    %4553 = vmatpush1.msra.mxu0 0.0
    %4554 = vmatprep.subr.mxu0 0.0
    %4555 = vmatpush1.msra.mxu0 0.0
    %4556 = vmatprep.subr.mxu0 0.0
    %4557 = vmatpush1.msra.mxu0 0.0
    %4558 = vmatprep.subr.mxu0 0.0
    %4559 = vmatpush1.msra.mxu0 0.0
    %4560 = vmatprep.subr.mxu0 0.0
    %4561 = vmatpush1.msra.mxu0 0.0
    %4562 = vmatprep.subr.mxu0 0.0
    %4563 = vmatpush1.msra.mxu0 0.0
    %4564 = vmatprep.subr.mxu0 0.0
    %4565 = vmatpush1.msra.mxu0 0.0
    %4566 = vmatprep.subr.mxu0 0.0
    %4567 = vmatpush1.msra.mxu0 0.0
    %4568 = vmatprep.subr.mxu0 0.0
    %4569 = vmatpush1.msra.mxu0 0.0
    %4570 = vmatprep.subr.mxu0 0.0
    %4571 = vmatpush1.msra.mxu0 0.0
    %4572 = vmatprep.subr.mxu0 0.0
    %4573 = vmatpush1.msra.mxu0 0.0
    %4574 = vmatprep.subr.mxu0 0.0
    %4575 = vmatpush1.msra.mxu0 0.0
    %4576 = vmatprep.subr.mxu0 0.0
    %4577 = vmatpush1.msra.mxu0 0.0
    %4578 = vmatprep.subr.mxu0 0.0
    %4579 = vmatpush1.msra.mxu0 0.0
    %4580 = vmatprep.subr.mxu0 0.0
    %4581 = vmatpush1.msra.mxu0 0.0
    %4582 = vmatprep.subr.mxu0 0.0
    %4583 = vmatpush1.msra.mxu0 0.0
    %4584 = vmatprep.subr.mxu0 0.0
    %4585 = vmatpush1.msra.mxu0 0.0
    %4586 = vmatprep.subr.mxu0 0.0
    %4587 = vmatpush1.msra.mxu0 0.0
    %4588 = vmatprep.subr.mxu0 0.0
    %4589 = vmatpush1.msra.mxu0 0.0
    %4590 = vmatprep.subr.mxu0 0.0
    %4591 = vmatpush1.msra.mxu0 0.0
    %4592 = vmatprep.subr.mxu0 0.0
    %4593 = vmatpush1.msra.mxu0 0.0
    %4594 = vmatprep.mubr.f32.mxu0 0.0
    %4595 = vmatmul.mubr.f32.gmra.mrb[0].mxu0 %v4507
    %v4596 = vpop.f32.mrb[0].mxu0
    %v4597 = vadd.f32 %v4469, %v4596
    %v4598 = vpop.f32.mrb[0].mxu0
    %4599 = vmatprep.mubr.f32.mxu0 0.0
    %4600 = vmatmul.mubr.f32.gmra.mrb[0].mxu0 %v4510
    %v4601 = vpop.f32.mrb[0].mxu0
    %v4602 = vadd.f32 %v4474, %v4601
    %v4603 = vpop.f32.mrb[0].mxu0
    %4604 = vmatprep.mubr.f32.mxu0 0.0
    %4605 = vmatmul.mubr.f32.gmra.mrb[0].mxu0 %v4513
    %v4606 = vpop.f32.mrb[0].mxu0
    %v4607 = vadd.f32 %v4479, %v4606
    %v4608 = vpop.f32.mrb[0].mxu0
    %4609 = vmatprep.mubr.f32.mxu0 0.0
    %4610 = vmatmul.mubr.f32.gmra.mrb[0].mxu0 %v4516
    %v4611 = vpop.f32.mrb[0].mxu0
    %v4612 = vadd.f32 %v4484, %v4611
    %v4613 = vpop.f32.mrb[0].mxu0
    %4614 = vmatprep.mubr.f32.mxu0 0.0
    %4615 = vmatmul.mubr.f32.gmra.mrb[0].mxu0 %v4519
    %v4616 = vpop.f32.mrb[0].mxu0
    %v4617 = vadd.f32 %v4489, %v4616
    %v4618 = vpop.f32.mrb[0].mxu0
    %4619 = vmatprep.mubr.f32.mxu0 0.0
    %4620 = vmatmul.mubr.f32.gmra.mrb[0].mxu0 %v4522
    %v4621 = vpop.f32.mrb[0].mxu0
    %v4622 = vadd.f32 %v4494, %v4621
    %v4623 = vpop.f32.mrb[0].mxu0
    %4624 = vmatprep.mubr.f32.mxu0 0.0
    %4625 = vmatmul.mubr.f32.gmra.mrb[0].mxu0 %v4525
    %v4626 = vpop.f32.mrb[0].mxu0
    %v4627 = vadd.f32 %v4499, %v4626
    %v4628 = vpop.f32.mrb[0].mxu0
    %4629 = vmatprep.mubr.f32.mxu0 0.0
    %4630 = vmatmul.mubr.f32.gmra.mrb[0].mxu0 %v4528
    %v4631 = vpop.f32.mrb[0].mxu0
    %v4632 = vadd.f32 %v4504, %v4631
    %v4633 = vpop.f32.mrb[0].mxu0
    %4634 = vdwg.mxu0
    %s4635 = scalar_lea.vmem %s9, 3
    %v4636 = vld [vmem:[%s4635] sm:$0x1]
    %v4637 = vmax.f32 %v4597, 0.0
    %v4638 = vmax.f32 %v4602, 0.0
    %v4639 = vmax.f32 %v4607, 0.0
    %v4640 = vmax.f32 %v4612, 0.0
    %v4641 = vmax.f32 %v4617, 0.0
    %v4642 = vmax.f32 %v4622, 0.0
    %v4643 = vmax.f32 %v4627, 0.0
    %v4644 = vmax.f32 %v4632, 0.0
    %v4645 = vmin.f32 %v4597, 0.0
    %v4646 = vmin.f32 %v4602, 0.0
    %v4647 = vmin.f32 %v4607, 0.0
    %v4648 = vmin.f32 %v4612, 0.0
    %v4649 = vmin.f32 %v4617, 0.0
    %v4650 = vmin.f32 %v4622, 0.0
    %v4651 = vmin.f32 %v4627, 0.0
    %v4652 = vmin.f32 %v4632, 0.0
    %v4654 = vlaneseq
    %v4655 = vshrl.u32 %v4654, 7
    %v4656 = vsub.s32 0, %v4655
    %v4657 = vrot.slane %v4636, %v4656
    %4658 = vset.pattern.permute.xlu0 0
    %4659 = vperm.xlu0 %4658, %v4657
    %v4660 = vpop.permute.xlu0 %4659
    %v4662 = vmul.f32 %v4660, %v4645
    %v4663 = vmul.f32 %v4660, %v4646
    %v4664 = vmul.f32 %v4660, %v4647
    %v4665 = vmul.f32 %v4660, %v4648
    %v4666 = vmul.f32 %v4660, %v4649
    %v4667 = vmul.f32 %v4660, %v4650
    %v4668 = vmul.f32 %v4660, %v4651
    %v4669 = vmul.f32 %v4660, %v4652
    %v4670 = vadd.f32 %v4637, %v4662
    %v4671 = vadd.f32 %v4638, %v4663
    %v4672 = vadd.f32 %v4639, %v4664
    %v4673 = vadd.f32 %v4640, %v4665
    %v4674 = vadd.f32 %v4641, %v4666
    %v4675 = vadd.f32 %v4642, %v4667
    %v4676 = vadd.f32 %v4643, %v4668
    %v4677 = vadd.f32 %v4644, %v4669
    %s4678 = scalar_lea.vmem %s10, 192
    %v4679 = vld [vmem:[%s4678] sm:$0xff]
    %v4680 = vld [vmem:[%s4678 + $0x8] sm:$0xff]
    %v4681 = vld [vmem:[%s4678 + $0x10] sm:$0xff]
    %v4682 = vld [vmem:[%s4678 + $0x18] sm:$0xff]
    %v4683 = vld [vmem:[%s4678 + $0x20] sm:$0xff]
    %v4684 = vld [vmem:[%s4678 + $0x28] sm:$0xff]
    %v4685 = vld [vmem:[%s4678 + $0x30] sm:$0xff]
    %v4686 = vld [vmem:[%s4678 + $0x38] sm:$0xff]
    %s4687 = scalar_lea.vmem %s11, 192
    %v4688 = vld [vmem:[%s4687] sm:$0xff]
    %v4689 = vld [vmem:[%s4687 + $0x8] sm:$0xff]
    %v4690 = vld [vmem:[%s4687 + $0x10] sm:$0xff]
    %v4691 = vld [vmem:[%s4687 + $0x18] sm:$0xff]
    %v4692 = vld [vmem:[%s4687 + $0x20] sm:$0xff]
    %v4693 = vld [vmem:[%s4687 + $0x28] sm:$0xff]
    %v4694 = vld [vmem:[%s4687 + $0x30] sm:$0xff]
    %v4695 = vld [vmem:[%s4687 + $0x38] sm:$0xff]
    %v4696 = vadd.f32 %v4670, %v4671
    %v4697 = vadd.f32 %v4696, %v4672
    %v4698 = vadd.f32 %v4697, %v4673
    %v4699 = vadd.f32 %v4698, %v4674
    %v4700 = vadd.f32 %v4699, %v4675
    %v4701 = vadd.f32 %v4700, %v4676
    %v4702 = vadd.f32 %v4701, %v4677
    %v4703 = vrot.slane %v4702, 4
    %v4704 = vadd.f32 %v4702, %v4703
    %v4705 = vrot.slane %v4704, 2
    %v4706 = vadd.f32 %v4704, %v4705
    %v4707 = vrot.slane %v4706, 1
    %v4708 = vadd.f32 %v4706, %v4707
    %v4709 = vmul.f32 %v4670, %v4670
    %v4710 = vmul.f32 %v4671, %v4671
    %v4711 = vmul.f32 %v4672, %v4672
    %v4712 = vmul.f32 %v4673, %v4673
    %v4713 = vmul.f32 %v4674, %v4674
    %v4714 = vmul.f32 %v4675, %v4675
    %v4715 = vmul.f32 %v4676, %v4676
    %v4716 = vmul.f32 %v4677, %v4677
    %v4717 = vadd.f32 %v4709, %v4710
    %v4718 = vadd.f32 %v4717, %v4711
    %v4719 = vadd.f32 %v4718, %v4712
    %v4720 = vadd.f32 %v4719, %v4713
    %v4721 = vadd.f32 %v4720, %v4714
    %v4722 = vadd.f32 %v4721, %v4715
    %v4723 = vadd.f32 %v4722, %v4716
    %v4724 = vrot.slane %v4723, 4
    %v4725 = vadd.f32 %v4723, %v4724
    %v4726 = vrot.slane %v4725, 2
    %v4727 = vadd.f32 %v4725, %v4726
    %v4728 = vrot.slane %v4727, 1
    %v4729 = vadd.f32 %v4727, %v4728
    %v4730 = vsel %vm127, %v4708, %v4729
    %4731 = vmatprep.subr.mxu0 0.0
    %4732 = vmatpush1.msra.mxu0 %v79
    %4733 = vmatprep.subr.mxu0 0.0
    %4734 = vmatpush1.msra.mxu0 %v80
    %4735 = vmatprep.subr.mxu0 0.0
    %4736 = vmatpush1.msra.mxu0 %v81
    %4737 = vmatprep.subr.mxu0 0.0
    %4738 = vmatpush1.msra.mxu0 %v82
    %4739 = vmatprep.subr.mxu0 0.0
    %4740 = vmatpush1.msra.mxu0 %v83
    %4741 = vmatprep.subr.mxu0 0.0
    %4742 = vmatpush1.msra.mxu0 %v84
    %4743 = vmatprep.subr.mxu0 0.0
    %4744 = vmatpush1.msra.mxu0 %v85
    %4745 = vmatprep.subr.mxu0 0.0
    %4746 = vmatpush1.msra.mxu0 %v86
    %4747 = vmatprep.subr.mxu0 0.0
    %4748 = vmatpush1.msra.mxu0 %v87
    %4749 = vmatprep.subr.mxu0 0.0
    %4750 = vmatpush1.msra.mxu0 %v88
    %4751 = vmatprep.subr.mxu0 0.0
    %4752 = vmatpush1.msra.mxu0 %v89
    %4753 = vmatprep.subr.mxu0 0.0
    %4754 = vmatpush1.msra.mxu0 %v90
    %4755 = vmatprep.subr.mxu0 0.0
    %4756 = vmatpush1.msra.mxu0 %v91
    %4757 = vmatprep.subr.mxu0 0.0
    %4758 = vmatpush1.msra.mxu0 %v92
    %4759 = vmatprep.subr.mxu0 0.0
    %4760 = vmatpush1.msra.mxu0 %v93
    %4761 = vmatprep.subr.mxu0 0.0
    %4762 = vmatpush1.msra.mxu0 %v94
    %4763 = vmatprep.subr.mxu0 0.0
    %4764 = vmatpush1.msra.mxu0 0.0
    %4765 = vmatprep.subr.mxu0 0.0
    %4766 = vmatpush1.msra.mxu0 0.0
    %4767 = vmatprep.subr.mxu0 0.0
    %4768 = vmatpush1.msra.mxu0 0.0
    %4769 = vmatprep.subr.mxu0 0.0
    %4770 = vmatpush1.msra.mxu0 0.0
    %4771 = vmatprep.subr.mxu0 0.0
    %4772 = vmatpush1.msra.mxu0 0.0
    %4773 = vmatprep.subr.mxu0 0.0
    %4774 = vmatpush1.msra.mxu0 0.0
    %4775 = vmatprep.subr.mxu0 0.0
    %4776 = vmatpush1.msra.mxu0 0.0
    %4777 = vmatprep.subr.mxu0 0.0
    %4778 = vmatpush1.msra.mxu0 0.0
    %4779 = vmatprep.subr.mxu0 0.0
    %4780 = vmatpush1.msra.mxu0 0.0
    %4781 = vmatprep.subr.mxu0 0.0
    %4782 = vmatpush1.msra.mxu0 0.0
    %4783 = vmatprep.subr.mxu0 0.0
    %4784 = vmatpush1.msra.mxu0 0.0
    %4785 = vmatprep.subr.mxu0 0.0
    %4786 = vmatpush1.msra.mxu0 0.0
    %4787 = vmatprep.subr.mxu0 0.0
    %4788 = vmatpush1.msra.mxu0 0.0
    %4789 = vmatprep.subr.mxu0 0.0
    %4790 = vmatpush1.msra.mxu0 0.0
    %4791 = vmatprep.subr.mxu0 0.0
    %4792 = vmatpush1.msra.mxu0 0.0
    %4793 = vmatprep.subr.mxu0 0.0
    %4794 = vmatpush1.msra.mxu0 0.0
    %4795 = vmatprep.mubr.f32.mxu0 0.0
    %4796 = vmatmul.mubr.f32.gmra.mrb[0].mxu0 %v4730
    %v4797 = vpop.f32.mrb[0].mxu0
    %v4798 = vadd.f32 0.0, %v4797
    %v4799 = vpop.f32.mrb[0].mxu0
    %4800 = vdwg.mxu0
    %v4801 = vmul.f32 %v4798, 0.00024414063
    %v4803 = vsel %vm200, %v4801, 0
    %4805 = vmatprep.subr.mxu0 0.0
    %4806 = vmatpush1.msra.mxu0 %v206
    %4807 = vmatprep.subr.mxu0 0.0
    %4808 = vmatpush1.msra.mxu0 0.0
    %4809 = vmatprep.subr.mxu0 0.0
    %4810 = vmatpush1.msra.mxu0 0.0
    %4811 = vmatprep.subr.mxu0 0.0
    %4812 = vmatpush1.msra.mxu0 0.0
    %4813 = vmatprep.subr.mxu0 0.0
    %4814 = vmatpush1.msra.mxu0 0.0
    %4815 = vmatprep.subr.mxu0 0.0
    %4816 = vmatpush1.msra.mxu0 0.0
    %4817 = vmatprep.subr.mxu0 0.0
    %4818 = vmatpush1.msra.mxu0 0.0
    %4819 = vmatprep.subr.mxu0 0.0
    %4820 = vmatpush1.msra.mxu0 0.0
    %4821 = vmatprep.subr.mxu0 0.0
    %4822 = vmatpush1.msra.mxu0 0.0
    %4823 = vmatprep.subr.mxu0 0.0
    %4824 = vmatpush1.msra.mxu0 0.0
    %4825 = vmatprep.subr.mxu0 0.0
    %4826 = vmatpush1.msra.mxu0 0.0
    %4827 = vmatprep.subr.mxu0 0.0
    %4828 = vmatpush1.msra.mxu0 0.0
    %4829 = vmatprep.subr.mxu0 0.0
    %4830 = vmatpush1.msra.mxu0 0.0
    %4831 = vmatprep.subr.mxu0 0.0
    %4832 = vmatpush1.msra.mxu0 0.0
    %4833 = vmatprep.subr.mxu0 0.0
    %4834 = vmatpush1.msra.mxu0 0.0
    %4835 = vmatprep.subr.mxu0 0.0
    %4836 = vmatpush1.msra.mxu0 0.0
    %4837 = vmatprep.subr.mxu0 0.0
    %4838 = vmatpush1.msra.mxu0 0.0
    %4839 = vmatprep.subr.mxu0 0.0
    %4840 = vmatpush1.msra.mxu0 0.0
    %4841 = vmatprep.subr.mxu0 0.0
    %4842 = vmatpush1.msra.mxu0 0.0
    %4843 = vmatprep.subr.mxu0 0.0
    %4844 = vmatpush1.msra.mxu0 0.0
    %4845 = vmatprep.subr.mxu0 0.0
    %4846 = vmatpush1.msra.mxu0 0.0
    %4847 = vmatprep.subr.mxu0 0.0
    %4848 = vmatpush1.msra.mxu0 0.0
    %4849 = vmatprep.subr.mxu0 0.0
    %4850 = vmatpush1.msra.mxu0 0.0
    %4851 = vmatprep.subr.mxu0 0.0
    %4852 = vmatpush1.msra.mxu0 0.0
    %4853 = vmatprep.subr.mxu0 0.0
    %4854 = vmatpush1.msra.mxu0 0.0
    %4855 = vmatprep.subr.mxu0 0.0
    %4856 = vmatpush1.msra.mxu0 0.0
    %4857 = vmatprep.subr.mxu0 0.0
    %4858 = vmatpush1.msra.mxu0 0.0
    %4859 = vmatprep.subr.mxu0 0.0
    %4860 = vmatpush1.msra.mxu0 0.0
    %4861 = vmatprep.subr.mxu0 0.0
    %4862 = vmatpush1.msra.mxu0 0.0
    %4863 = vmatprep.subr.mxu0 0.0
    %4864 = vmatpush1.msra.mxu0 0.0
    %4865 = vmatprep.subr.mxu0 0.0
    %4866 = vmatpush1.msra.mxu0 0.0
    %4867 = vmatprep.subr.mxu0 0.0
    %4868 = vmatpush1.msra.mxu0 0.0
    %4869 = vmatprep.mubr.f32.mxu0 0.0
    %4870 = vmatmul.mubr.f32.gmra.mrb[0].mxu0 %v4803
    %v4871 = vpop.f32.mrb[0].mxu0
    %v4872 = vadd.f32 0.0, %v4871
    %v4873 = vpop.f32.mrb[0].mxu0
    %4874 = vdwg.mxu0
    %v4875 = vmul.f32 %v4872, %v4872
    %v4877 = vrot.slane %v4875, 7
    %v4879 = vsub.f32 %v4872, %v4877
    %v4880 = vmax.f32 %v4879, 0.0
    %v4881 = vadd.f32 %v4880, 1e-08
    %v4882 = vrsqrt.pop %v4881
    %4884 = vset.pattern.permute.xlu0 0
    %4885 = vperm.xlu0 %4884, %v4679
    %v4886 = vpop.permute.xlu0 %4885
    %4889 = vset.pattern.permute.xlu0 0
    %4890 = vperm.xlu0 %4889, %v4680
    %v4891 = vpop.permute.xlu0 %4890
    %4894 = vset.pattern.permute.xlu0 0
    %4895 = vperm.xlu0 %4894, %v4681
    %v4896 = vpop.permute.xlu0 %4895
    %4899 = vset.pattern.permute.xlu0 0
    %4900 = vperm.xlu0 %4899, %v4682
    %v4901 = vpop.permute.xlu0 %4900
    %4904 = vset.pattern.permute.xlu0 0
    %4905 = vperm.xlu0 %4904, %v4683
    %v4906 = vpop.permute.xlu0 %4905
    %4909 = vset.pattern.permute.xlu0 0
    %4910 = vperm.xlu0 %4909, %v4684
    %v4911 = vpop.permute.xlu0 %4910
    %4914 = vset.pattern.permute.xlu0 0
    %4915 = vperm.xlu0 %4914, %v4685
    %v4916 = vpop.permute.xlu0 %4915
    %4919 = vset.pattern.permute.xlu0 0
    %4920 = vperm.xlu0 %4919, %v4686
    %v4921 = vpop.permute.xlu0 %4920
    %v4923 = vlaneseq
    %v4924 = vshrl.u32 %v4923, 7
    %v4925 = vsub.s32 1, %v4924
    %v4926 = vrot.slane %v4882, %v4925
    %v4927 = vmul.f32 %v4886, %v4926
    %v4928 = vmul.f32 %v4891, %v4926
    %v4929 = vmul.f32 %v4896, %v4926
    %v4930 = vmul.f32 %v4901, %v4926
    %v4931 = vmul.f32 %v4906, %v4926
    %v4932 = vmul.f32 %v4911, %v4926
    %v4933 = vmul.f32 %v4916, %v4926
    %v4934 = vmul.f32 %v4921, %v4926
    %v4935 = vmul.f32 %v4670, %v4927
    %v4936 = vmul.f32 %v4671, %v4928
    %v4937 = vmul.f32 %v4672, %v4929
    %v4938 = vmul.f32 %v4673, %v4930
    %v4939 = vmul.f32 %v4674, %v4931
    %v4940 = vmul.f32 %v4675, %v4932
    %v4941 = vmul.f32 %v4676, %v4933
    %v4942 = vmul.f32 %v4677, %v4934
    %v4943 = vlaneseq
    %v4944 = vshrl.u32 %v4943, 7
    %v4945 = vsub.s32 0, %v4944
    %v4946 = vrot.slane %v4872, %v4945
    %v4947 = vmul.f32 %v4946, %v4927
    %v4948 = vmul.f32 %v4946, %v4928
    %v4949 = vmul.f32 %v4946, %v4929
    %v4950 = vmul.f32 %v4946, %v4930
    %v4951 = vmul.f32 %v4946, %v4931
    %v4952 = vmul.f32 %v4946, %v4932
    %v4953 = vmul.f32 %v4946, %v4933
    %v4954 = vmul.f32 %v4946, %v4934
    %4956 = vset.pattern.permute.xlu0 0
    %4957 = vperm.xlu0 %4956, %v4688
    %v4958 = vpop.permute.xlu0 %4957
    %4961 = vset.pattern.permute.xlu0 0
    %4962 = vperm.xlu0 %4961, %v4689
    %v4963 = vpop.permute.xlu0 %4962
    %4966 = vset.pattern.permute.xlu0 0
    %4967 = vperm.xlu0 %4966, %v4690
    %v4968 = vpop.permute.xlu0 %4967
    %4971 = vset.pattern.permute.xlu0 0
    %4972 = vperm.xlu0 %4971, %v4691
    %v4973 = vpop.permute.xlu0 %4972
    %4976 = vset.pattern.permute.xlu0 0
    %4977 = vperm.xlu0 %4976, %v4692
    %v4978 = vpop.permute.xlu0 %4977
    %4981 = vset.pattern.permute.xlu0 0
    %4982 = vperm.xlu0 %4981, %v4693
    %v4983 = vpop.permute.xlu0 %4982
    %4986 = vset.pattern.permute.xlu0 0
    %4987 = vperm.xlu0 %4986, %v4694
    %v4988 = vpop.permute.xlu0 %4987
    %4991 = vset.pattern.permute.xlu0 0
    %4992 = vperm.xlu0 %4991, %v4695
    %v4993 = vpop.permute.xlu0 %4992
    %v4995 = vsub.f32 %v4958, %v4947
    %v4996 = vsub.f32 %v4963, %v4948
    %v4997 = vsub.f32 %v4968, %v4949
    %v4998 = vsub.f32 %v4973, %v4950
    %v4999 = vsub.f32 %v4978, %v4951
    %v5000 = vsub.f32 %v4983, %v4952
    %v5001 = vsub.f32 %v4988, %v4953
    %v5002 = vsub.f32 %v4993, %v4954
    %v5003 = vadd.f32 %v4935, %v4995
    %v5004 = vadd.f32 %v4936, %v4996
    %v5005 = vadd.f32 %v4937, %v4997
    %v5006 = vadd.f32 %v4938, %v4998
    %v5007 = vadd.f32 %v4939, %v4999
    %v5008 = vadd.f32 %v4940, %v5000
    %v5009 = vadd.f32 %v4941, %v5001
    %v5010 = vadd.f32 %v4942, %v5002
    %s5011 = scalar_lea.vmem %s12, 192
    %v5012 = vld [vmem:[%s5011] sm:$0xff]
    %v5013 = vld [vmem:[%s5011 + $0x8] sm:$0xff]
    %v5014 = vld [vmem:[%s5011 + $0x10] sm:$0xff]
    %v5015 = vld [vmem:[%s5011 + $0x18] sm:$0xff]
    %v5016 = vld [vmem:[%s5011 + $0x20] sm:$0xff]
    %v5017 = vld [vmem:[%s5011 + $0x28] sm:$0xff]
    %v5018 = vld [vmem:[%s5011 + $0x30] sm:$0xff]
    %v5019 = vld [vmem:[%s5011 + $0x38] sm:$0xff]
    %5021 = vset.pattern.permute.xlu0 1
    %5022 = vperm.xlu0 %5021, %v5012
    %v5023 = vpop.permute.xlu0 %5022
    %5026 = vset.pattern.permute.xlu0 1
    %5027 = vperm.xlu0 %5026, %v5013
    %v5028 = vpop.permute.xlu0 %5027
    %5031 = vset.pattern.permute.xlu0 1
    %5032 = vperm.xlu0 %5031, %v5014
    %v5033 = vpop.permute.xlu0 %5032
    %5036 = vset.pattern.permute.xlu0 1
    %5037 = vperm.xlu0 %5036, %v5015
    %v5038 = vpop.permute.xlu0 %5037
    %5041 = vset.pattern.permute.xlu0 1
    %5042 = vperm.xlu0 %5041, %v5016
    %v5043 = vpop.permute.xlu0 %5042
    %5046 = vset.pattern.permute.xlu0 1
    %5047 = vperm.xlu0 %5046, %v5017
    %v5048 = vpop.permute.xlu0 %5047
    %5051 = vset.pattern.permute.xlu0 1
    %5052 = vperm.xlu0 %5051, %v5018
    %v5053 = vpop.permute.xlu0 %5052
    %5056 = vset.pattern.permute.xlu0 1
    %5057 = vperm.xlu0 %5056, %v5019
    %v5058 = vpop.permute.xlu0 %5057
    %v5060 = vmul.f32 %v5023, %v5003
    %v5061 = vmul.f32 %v5028, %v5004
    %v5062 = vmul.f32 %v5033, %v5005
    %v5063 = vmul.f32 %v5038, %v5006
    %v5064 = vmul.f32 %v5043, %v5007
    %v5065 = vmul.f32 %v5048, %v5008
    %v5066 = vmul.f32 %v5053, %v5009
    %v5067 = vmul.f32 %v5058, %v5010
    %s5068 = scalar_lea.vmem %s13, 192
    %v5069 = vld [vmem:[%s5068] sm:$0xff]
    %v5070 = vld [vmem:[%s5068 + $0x8] sm:$0xff]
    %v5071 = vld [vmem:[%s5068 + $0x10] sm:$0xff]
    %v5072 = vld [vmem:[%s5068 + $0x18] sm:$0xff]
    %v5073 = vld [vmem:[%s5068 + $0x20] sm:$0xff]
    %v5074 = vld [vmem:[%s5068 + $0x28] sm:$0xff]
    %v5075 = vld [vmem:[%s5068 + $0x30] sm:$0xff]
    %v5076 = vld [vmem:[%s5068 + $0x38] sm:$0xff]
    %5078 = vset.pattern.permute.xlu0 0
    %5079 = vperm.xlu0 %5078, %v5069
    %v5080 = vpop.permute.xlu0 %5079
    %5083 = vset.pattern.permute.xlu0 0
    %5084 = vperm.xlu0 %5083, %v5070
    %v5085 = vpop.permute.xlu0 %5084
    %5088 = vset.pattern.permute.xlu0 0
    %5089 = vperm.xlu0 %5088, %v5071
    %v5090 = vpop.permute.xlu0 %5089
    %5093 = vset.pattern.permute.xlu0 0
    %5094 = vperm.xlu0 %5093, %v5072
    %v5095 = vpop.permute.xlu0 %5094
    %5098 = vset.pattern.permute.xlu0 0
    %5099 = vperm.xlu0 %5098, %v5073
    %v5100 = vpop.permute.xlu0 %5099
    %5103 = vset.pattern.permute.xlu0 0
    %5104 = vperm.xlu0 %5103, %v5074
    %v5105 = vpop.permute.xlu0 %5104
    %5108 = vset.pattern.permute.xlu0 0
    %5109 = vperm.xlu0 %5108, %v5075
    %v5110 = vpop.permute.xlu0 %5109
    %5113 = vset.pattern.permute.xlu0 0
    %5114 = vperm.xlu0 %5113, %v5076
    %v5115 = vpop.permute.xlu0 %5114
    %v5117 = vadd.f32 %v5060, %v5080
    %v5118 = vadd.f32 %v5061, %v5085
    %v5119 = vadd.f32 %v5062, %v5090
    %v5120 = vadd.f32 %v5063, %v5095
    %v5121 = vadd.f32 %v5064, %v5100
    %v5122 = vadd.f32 %v5065, %v5105
    %v5123 = vadd.f32 %v5066, %v5110
    %v5124 = vadd.f32 %v5067, %v5115
    %5125 = vrot.lane.b32.xlu0 %v5003, 1
    %v5126 = vpop.permute.xlu0 %5125
    %5127 = vrot.lane.b32.xlu0 %v5004, 1
    %v5128 = vpop.permute.xlu0 %5127
    %5129 = vrot.lane.b32.xlu0 %v5005, 1
    %v5130 = vpop.permute.xlu0 %5129
    %5131 = vrot.lane.b32.xlu0 %v5006, 1
    %v5132 = vpop.permute.xlu0 %5131
    %5133 = vrot.lane.b32.xlu0 %v5007, 1
    %v5134 = vpop.permute.xlu0 %5133
    %5135 = vrot.lane.b32.xlu0 %v5008, 1
    %v5136 = vpop.permute.xlu0 %5135
    %5137 = vrot.lane.b32.xlu0 %v5009, 1
    %v5138 = vpop.permute.xlu0 %5137
    %5139 = vrot.lane.b32.xlu0 %v5010, 1
    %v5140 = vpop.permute.xlu0 %5139
    %v5141 = vsel %vm1138, %v5126, 0.0
    %v5142 = vsel %vm1138, %v5128, 0.0
    %v5143 = vsel %vm1138, %v5130, 0.0
    %v5144 = vsel %vm1138, %v5132, 0.0
    %v5145 = vsel %vm1138, %v5134, 0.0
    %v5146 = vsel %vm1138, %v5136, 0.0
    %v5147 = vsel %vm1138, %v5138, 0.0
    %v5148 = vsel %vm1138, %v5140, 0.0
    %5149 = vset.pattern.permute.xlu0 0
    %5150 = vperm.xlu0 %5149, %v5012
    %v5151 = vpop.permute.xlu0 %5150
    %5153 = vset.pattern.permute.xlu0 0
    %5154 = vperm.xlu0 %5153, %v5013
    %v5155 = vpop.permute.xlu0 %5154
    %5157 = vset.pattern.permute.xlu0 0
    %5158 = vperm.xlu0 %5157, %v5014
    %v5159 = vpop.permute.xlu0 %5158
    %5161 = vset.pattern.permute.xlu0 0
    %5162 = vperm.xlu0 %5161, %v5015
    %v5163 = vpop.permute.xlu0 %5162
    %5165 = vset.pattern.permute.xlu0 0
    %5166 = vperm.xlu0 %5165, %v5016
    %v5167 = vpop.permute.xlu0 %5166
    %5169 = vset.pattern.permute.xlu0 0
    %5170 = vperm.xlu0 %5169, %v5017
    %v5171 = vpop.permute.xlu0 %5170
    %5173 = vset.pattern.permute.xlu0 0
    %5174 = vperm.xlu0 %5173, %v5018
    %v5175 = vpop.permute.xlu0 %5174
    %5177 = vset.pattern.permute.xlu0 0
    %5178 = vperm.xlu0 %5177, %v5019
    %v5179 = vpop.permute.xlu0 %5178
    %v5181 = vmul.f32 %v5151, %v5141
    %v5182 = vmul.f32 %v5155, %v5142
    %v5183 = vmul.f32 %v5159, %v5143
    %v5184 = vmul.f32 %v5163, %v5144
    %v5185 = vmul.f32 %v5167, %v5145
    %v5186 = vmul.f32 %v5171, %v5146
    %v5187 = vmul.f32 %v5175, %v5147
    %v5188 = vmul.f32 %v5179, %v5148
    %v5189 = vadd.f32 %v5117, %v5181
    %v5190 = vadd.f32 %v5118, %v5182
    %v5191 = vadd.f32 %v5119, %v5183
    %v5192 = vadd.f32 %v5120, %v5184
    %v5193 = vadd.f32 %v5121, %v5185
    %v5194 = vadd.f32 %v5122, %v5186
    %v5195 = vadd.f32 %v5123, %v5187
    %v5196 = vadd.f32 %v5124, %v5188
    %5197 = vrot.lane.b32.xlu0 %v5003, 127
    %v5198 = vpop.permute.xlu0 %5197
    %5199 = vrot.lane.b32.xlu0 %v5004, 127
    %v5200 = vpop.permute.xlu0 %5199
    %5201 = vrot.lane.b32.xlu0 %v5005, 127
    %v5202 = vpop.permute.xlu0 %5201
    %5203 = vrot.lane.b32.xlu0 %v5006, 127
    %v5204 = vpop.permute.xlu0 %5203
    %5205 = vrot.lane.b32.xlu0 %v5007, 127
    %v5206 = vpop.permute.xlu0 %5205
    %5207 = vrot.lane.b32.xlu0 %v5008, 127
    %v5208 = vpop.permute.xlu0 %5207
    %5209 = vrot.lane.b32.xlu0 %v5009, 127
    %v5210 = vpop.permute.xlu0 %5209
    %5211 = vrot.lane.b32.xlu0 %v5010, 127
    %v5212 = vpop.permute.xlu0 %5211
    %v5213 = vsel %vm1212, %v5198, 0.0
    %v5214 = vsel %vm1212, %v5200, 0.0
    %v5215 = vsel %vm1212, %v5202, 0.0
    %v5216 = vsel %vm1212, %v5204, 0.0
    %v5217 = vsel %vm1212, %v5206, 0.0
    %v5218 = vsel %vm1212, %v5208, 0.0
    %v5219 = vsel %vm1212, %v5210, 0.0
    %v5220 = vsel %vm1212, %v5212, 0.0
    %5221 = vset.pattern.permute.xlu0 2
    %5222 = vperm.xlu0 %5221, %v5012
    %v5223 = vpop.permute.xlu0 %5222
    %5225 = vset.pattern.permute.xlu0 2
    %5226 = vperm.xlu0 %5225, %v5013
    %v5227 = vpop.permute.xlu0 %5226
    %5229 = vset.pattern.permute.xlu0 2
    %5230 = vperm.xlu0 %5229, %v5014
    %v5231 = vpop.permute.xlu0 %5230
    %5233 = vset.pattern.permute.xlu0 2
    %5234 = vperm.xlu0 %5233, %v5015
    %v5235 = vpop.permute.xlu0 %5234
    %5237 = vset.pattern.permute.xlu0 2
    %5238 = vperm.xlu0 %5237, %v5016
    %v5239 = vpop.permute.xlu0 %5238
    %5241 = vset.pattern.permute.xlu0 2
    %5242 = vperm.xlu0 %5241, %v5017
    %v5243 = vpop.permute.xlu0 %5242
    %5245 = vset.pattern.permute.xlu0 2
    %5246 = vperm.xlu0 %5245, %v5018
    %v5247 = vpop.permute.xlu0 %5246
    %5249 = vset.pattern.permute.xlu0 2
    %5250 = vperm.xlu0 %5249, %v5019
    %v5251 = vpop.permute.xlu0 %5250
    %v5253 = vmul.f32 %v5223, %v5213
    %v5254 = vmul.f32 %v5227, %v5214
    %v5255 = vmul.f32 %v5231, %v5215
    %v5256 = vmul.f32 %v5235, %v5216
    %v5257 = vmul.f32 %v5239, %v5217
    %v5258 = vmul.f32 %v5243, %v5218
    %v5259 = vmul.f32 %v5247, %v5219
    %v5260 = vmul.f32 %v5251, %v5220
    %v5261 = vadd.f32 %v5189, %v5253
    %v5262 = vadd.f32 %v5190, %v5254
    %v5263 = vadd.f32 %v5191, %v5255
    %v5264 = vadd.f32 %v5192, %v5256
    %v5265 = vadd.f32 %v5193, %v5257
    %v5266 = vadd.f32 %v5194, %v5258
    %v5267 = vadd.f32 %v5195, %v5259
    %v5268 = vadd.f32 %v5196, %v5260
    %s5269 = scalar_lea.vmem %s14, 3
    %v5270 = vld [vmem:[%s5269] sm:$0x1]
    %v5271 = vmax.f32 %v5261, 0.0
    %v5272 = vmax.f32 %v5262, 0.0
    %v5273 = vmax.f32 %v5263, 0.0
    %v5274 = vmax.f32 %v5264, 0.0
    %v5275 = vmax.f32 %v5265, 0.0
    %v5276 = vmax.f32 %v5266, 0.0
    %v5277 = vmax.f32 %v5267, 0.0
    %v5278 = vmax.f32 %v5268, 0.0
    %v5279 = vmin.f32 %v5261, 0.0
    %v5280 = vmin.f32 %v5262, 0.0
    %v5281 = vmin.f32 %v5263, 0.0
    %v5282 = vmin.f32 %v5264, 0.0
    %v5283 = vmin.f32 %v5265, 0.0
    %v5284 = vmin.f32 %v5266, 0.0
    %v5285 = vmin.f32 %v5267, 0.0
    %v5286 = vmin.f32 %v5268, 0.0
    %v5288 = vlaneseq
    %v5289 = vshrl.u32 %v5288, 7
    %v5290 = vsub.s32 0, %v5289
    %v5291 = vrot.slane %v5270, %v5290
    %5292 = vset.pattern.permute.xlu0 0
    %5293 = vperm.xlu0 %5292, %v5291
    %v5294 = vpop.permute.xlu0 %5293
    %v5296 = vmul.f32 %v5294, %v5279
    %v5297 = vmul.f32 %v5294, %v5280
    %v5298 = vmul.f32 %v5294, %v5281
    %v5299 = vmul.f32 %v5294, %v5282
    %v5300 = vmul.f32 %v5294, %v5283
    %v5301 = vmul.f32 %v5294, %v5284
    %v5302 = vmul.f32 %v5294, %v5285
    %v5303 = vmul.f32 %v5294, %v5286
    %v5304 = vadd.f32 %v5271, %v5296
    %v5305 = vadd.f32 %v5272, %v5297
    %v5306 = vadd.f32 %v5273, %v5298
    %v5307 = vadd.f32 %v5274, %v5299
    %v5308 = vadd.f32 %v5275, %v5300
    %v5309 = vadd.f32 %v5276, %v5301
    %v5310 = vadd.f32 %v5277, %v5302
    %v5311 = vadd.f32 %v5278, %v5303
    %s5312 = scalar_lea.vmem %s15, 192
    %v5313 = vld [vmem:[%s5312] sm:$0xff]
    %v5314 = vld [vmem:[%s5312 + $0x8] sm:$0xff]
    %v5315 = vld [vmem:[%s5312 + $0x10] sm:$0xff]
    %v5316 = vld [vmem:[%s5312 + $0x18] sm:$0xff]
    %v5317 = vld [vmem:[%s5312 + $0x20] sm:$0xff]
    %v5318 = vld [vmem:[%s5312 + $0x28] sm:$0xff]
    %v5319 = vld [vmem:[%s5312 + $0x30] sm:$0xff]
    %v5320 = vld [vmem:[%s5312 + $0x38] sm:$0xff]
    %s5321 = scalar_lea.vmem %s16, 192
    %v5322 = vld [vmem:[%s5321] sm:$0xff]
    %v5323 = vld [vmem:[%s5321 + $0x8] sm:$0xff]
    %v5324 = vld [vmem:[%s5321 + $0x10] sm:$0xff]
    %v5325 = vld [vmem:[%s5321 + $0x18] sm:$0xff]
    %v5326 = vld [vmem:[%s5321 + $0x20] sm:$0xff]
    %v5327 = vld [vmem:[%s5321 + $0x28] sm:$0xff]
    %v5328 = vld [vmem:[%s5321 + $0x30] sm:$0xff]
    %v5329 = vld [vmem:[%s5321 + $0x38] sm:$0xff]
    %v5330 = vadd.f32 %v5304, %v5305
    %v5331 = vadd.f32 %v5330, %v5306
    %v5332 = vadd.f32 %v5331, %v5307
    %v5333 = vadd.f32 %v5332, %v5308
    %v5334 = vadd.f32 %v5333, %v5309
    %v5335 = vadd.f32 %v5334, %v5310
    %v5336 = vadd.f32 %v5335, %v5311
    %v5337 = vrot.slane %v5336, 4
    %v5338 = vadd.f32 %v5336, %v5337
    %v5339 = vrot.slane %v5338, 2
    %v5340 = vadd.f32 %v5338, %v5339
    %v5341 = vrot.slane %v5340, 1
    %v5342 = vadd.f32 %v5340, %v5341
    %v5343 = vmul.f32 %v5304, %v5304
    %v5344 = vmul.f32 %v5305, %v5305
    %v5345 = vmul.f32 %v5306, %v5306
    %v5346 = vmul.f32 %v5307, %v5307
    %v5347 = vmul.f32 %v5308, %v5308
    %v5348 = vmul.f32 %v5309, %v5309
    %v5349 = vmul.f32 %v5310, %v5310
    %v5350 = vmul.f32 %v5311, %v5311
    %v5351 = vadd.f32 %v5343, %v5344
    %v5352 = vadd.f32 %v5351, %v5345
    %v5353 = vadd.f32 %v5352, %v5346
    %v5354 = vadd.f32 %v5353, %v5347
    %v5355 = vadd.f32 %v5354, %v5348
    %v5356 = vadd.f32 %v5355, %v5349
    %v5357 = vadd.f32 %v5356, %v5350
    %v5358 = vrot.slane %v5357, 4
    %v5359 = vadd.f32 %v5357, %v5358
    %v5360 = vrot.slane %v5359, 2
    %v5361 = vadd.f32 %v5359, %v5360
    %v5362 = vrot.slane %v5361, 1
    %v5363 = vadd.f32 %v5361, %v5362
    %v5364 = vsel %vm127, %v5342, %v5363
    %5365 = vmatprep.subr.mxu0 0.0
    %5366 = vmatpush1.msra.mxu0 %v79
    %5367 = vmatprep.subr.mxu0 0.0
    %5368 = vmatpush1.msra.mxu0 %v80
    %5369 = vmatprep.subr.mxu0 0.0
    %5370 = vmatpush1.msra.mxu0 %v81
    %5371 = vmatprep.subr.mxu0 0.0
    %5372 = vmatpush1.msra.mxu0 %v82
    %5373 = vmatprep.subr.mxu0 0.0
    %5374 = vmatpush1.msra.mxu0 %v83
    %5375 = vmatprep.subr.mxu0 0.0
    %5376 = vmatpush1.msra.mxu0 %v84
    %5377 = vmatprep.subr.mxu0 0.0
    %5378 = vmatpush1.msra.mxu0 %v85
    %5379 = vmatprep.subr.mxu0 0.0
    %5380 = vmatpush1.msra.mxu0 %v86
    %5381 = vmatprep.subr.mxu0 0.0
    %5382 = vmatpush1.msra.mxu0 %v87
    %5383 = vmatprep.subr.mxu0 0.0
    %5384 = vmatpush1.msra.mxu0 %v88
    %5385 = vmatprep.subr.mxu0 0.0
    %5386 = vmatpush1.msra.mxu0 %v89
    %5387 = vmatprep.subr.mxu0 0.0
    %5388 = vmatpush1.msra.mxu0 %v90
    %5389 = vmatprep.subr.mxu0 0.0
    %5390 = vmatpush1.msra.mxu0 %v91
    %5391 = vmatprep.subr.mxu0 0.0
    %5392 = vmatpush1.msra.mxu0 %v92
    %5393 = vmatprep.subr.mxu0 0.0
    %5394 = vmatpush1.msra.mxu0 %v93
    %5395 = vmatprep.subr.mxu0 0.0
    %5396 = vmatpush1.msra.mxu0 %v94
    %5397 = vmatprep.subr.mxu0 0.0
    %5398 = vmatpush1.msra.mxu0 0.0
    %5399 = vmatprep.subr.mxu0 0.0
    %5400 = vmatpush1.msra.mxu0 0.0
    %5401 = vmatprep.subr.mxu0 0.0
    %5402 = vmatpush1.msra.mxu0 0.0
    %5403 = vmatprep.subr.mxu0 0.0
    %5404 = vmatpush1.msra.mxu0 0.0
    %5405 = vmatprep.subr.mxu0 0.0
    %5406 = vmatpush1.msra.mxu0 0.0
    %5407 = vmatprep.subr.mxu0 0.0
    %5408 = vmatpush1.msra.mxu0 0.0
    %5409 = vmatprep.subr.mxu0 0.0
    %5410 = vmatpush1.msra.mxu0 0.0
    %5411 = vmatprep.subr.mxu0 0.0
    %5412 = vmatpush1.msra.mxu0 0.0
    %5413 = vmatprep.subr.mxu0 0.0
    %5414 = vmatpush1.msra.mxu0 0.0
    %5415 = vmatprep.subr.mxu0 0.0
    %5416 = vmatpush1.msra.mxu0 0.0
    %5417 = vmatprep.subr.mxu0 0.0
    %5418 = vmatpush1.msra.mxu0 0.0
    %5419 = vmatprep.subr.mxu0 0.0
    %5420 = vmatpush1.msra.mxu0 0.0
    %5421 = vmatprep.subr.mxu0 0.0
    %5422 = vmatpush1.msra.mxu0 0.0
    %5423 = vmatprep.subr.mxu0 0.0
    %5424 = vmatpush1.msra.mxu0 0.0
    %5425 = vmatprep.subr.mxu0 0.0
    %5426 = vmatpush1.msra.mxu0 0.0
    %5427 = vmatprep.subr.mxu0 0.0
    %5428 = vmatpush1.msra.mxu0 0.0
    %5429 = vmatprep.mubr.f32.mxu0 0.0
    %5430 = vmatmul.mubr.f32.gmra.mrb[0].mxu0 %v5364
    %v5431 = vpop.f32.mrb[0].mxu0
    %v5432 = vadd.f32 0.0, %v5431
    %v5433 = vpop.f32.mrb[0].mxu0
    %5434 = vdwg.mxu0
    %v5435 = vmul.f32 %v5432, 0.00024414063
    %v5437 = vsel %vm200, %v5435, 0
    %5439 = vmatprep.subr.mxu0 0.0
    %5440 = vmatpush1.msra.mxu0 %v206
    %5441 = vmatprep.subr.mxu0 0.0
    %5442 = vmatpush1.msra.mxu0 0.0
    %5443 = vmatprep.subr.mxu0 0.0
    %5444 = vmatpush1.msra.mxu0 0.0
    %5445 = vmatprep.subr.mxu0 0.0
    %5446 = vmatpush1.msra.mxu0 0.0
    %5447 = vmatprep.subr.mxu0 0.0
    %5448 = vmatpush1.msra.mxu0 0.0
    %5449 = vmatprep.subr.mxu0 0.0
    %5450 = vmatpush1.msra.mxu0 0.0
    %5451 = vmatprep.subr.mxu0 0.0
    %5452 = vmatpush1.msra.mxu0 0.0
    %5453 = vmatprep.subr.mxu0 0.0
    %5454 = vmatpush1.msra.mxu0 0.0
    %5455 = vmatprep.subr.mxu0 0.0
    %5456 = vmatpush1.msra.mxu0 0.0
    %5457 = vmatprep.subr.mxu0 0.0
    %5458 = vmatpush1.msra.mxu0 0.0
    %5459 = vmatprep.subr.mxu0 0.0
    %5460 = vmatpush1.msra.mxu0 0.0
    %5461 = vmatprep.subr.mxu0 0.0
    %5462 = vmatpush1.msra.mxu0 0.0
    %5463 = vmatprep.subr.mxu0 0.0
    %5464 = vmatpush1.msra.mxu0 0.0
    %5465 = vmatprep.subr.mxu0 0.0
    %5466 = vmatpush1.msra.mxu0 0.0
    %5467 = vmatprep.subr.mxu0 0.0
    %5468 = vmatpush1.msra.mxu0 0.0
    %5469 = vmatprep.subr.mxu0 0.0
    %5470 = vmatpush1.msra.mxu0 0.0
    %5471 = vmatprep.subr.mxu0 0.0
    %5472 = vmatpush1.msra.mxu0 0.0
    %5473 = vmatprep.subr.mxu0 0.0
    %5474 = vmatpush1.msra.mxu0 0.0
    %5475 = vmatprep.subr.mxu0 0.0
    %5476 = vmatpush1.msra.mxu0 0.0
    %5477 = vmatprep.subr.mxu0 0.0
    %5478 = vmatpush1.msra.mxu0 0.0
    %5479 = vmatprep.subr.mxu0 0.0
    %5480 = vmatpush1.msra.mxu0 0.0
    %5481 = vmatprep.subr.mxu0 0.0
    %5482 = vmatpush1.msra.mxu0 0.0
    %5483 = vmatprep.subr.mxu0 0.0
    %5484 = vmatpush1.msra.mxu0 0.0
    %5485 = vmatprep.subr.mxu0 0.0
    %5486 = vmatpush1.msra.mxu0 0.0
    %5487 = vmatprep.subr.mxu0 0.0
    %5488 = vmatpush1.msra.mxu0 0.0
    %5489 = vmatprep.subr.mxu0 0.0
    %5490 = vmatpush1.msra.mxu0 0.0
    %5491 = vmatprep.subr.mxu0 0.0
    %5492 = vmatpush1.msra.mxu0 0.0
    %5493 = vmatprep.subr.mxu0 0.0
    %5494 = vmatpush1.msra.mxu0 0.0
    %5495 = vmatprep.subr.mxu0 0.0
    %5496 = vmatpush1.msra.mxu0 0.0
    %5497 = vmatprep.subr.mxu0 0.0
    %5498 = vmatpush1.msra.mxu0 0.0
    %5499 = vmatprep.subr.mxu0 0.0
    %5500 = vmatpush1.msra.mxu0 0.0
    %5501 = vmatprep.subr.mxu0 0.0
    %5502 = vmatpush1.msra.mxu0 0.0
    %5503 = vmatprep.mubr.f32.mxu0 0.0
    %5504 = vmatmul.mubr.f32.gmra.mrb[0].mxu0 %v5437
    %v5505 = vpop.f32.mrb[0].mxu0
    %v5506 = vadd.f32 0.0, %v5505
    %v5507 = vpop.f32.mrb[0].mxu0
    %5508 = vdwg.mxu0
    %v5509 = vmul.f32 %v5506, %v5506
    %v5511 = vrot.slane %v5509, 7
    %v5513 = vsub.f32 %v5506, %v5511
    %v5514 = vmax.f32 %v5513, 0.0
    %v5515 = vadd.f32 %v5514, 1e-08
    %v5516 = vrsqrt.pop %v5515
    %5518 = vset.pattern.permute.xlu0 0
    %5519 = vperm.xlu0 %5518, %v5313
    %v5520 = vpop.permute.xlu0 %5519
    %5523 = vset.pattern.permute.xlu0 0
    %5524 = vperm.xlu0 %5523, %v5314
    %v5525 = vpop.permute.xlu0 %5524
    %5528 = vset.pattern.permute.xlu0 0
    %5529 = vperm.xlu0 %5528, %v5315
    %v5530 = vpop.permute.xlu0 %5529
    %5533 = vset.pattern.permute.xlu0 0
    %5534 = vperm.xlu0 %5533, %v5316
    %v5535 = vpop.permute.xlu0 %5534
    %5538 = vset.pattern.permute.xlu0 0
    %5539 = vperm.xlu0 %5538, %v5317
    %v5540 = vpop.permute.xlu0 %5539
    %5543 = vset.pattern.permute.xlu0 0
    %5544 = vperm.xlu0 %5543, %v5318
    %v5545 = vpop.permute.xlu0 %5544
    %5548 = vset.pattern.permute.xlu0 0
    %5549 = vperm.xlu0 %5548, %v5319
    %v5550 = vpop.permute.xlu0 %5549
    %5553 = vset.pattern.permute.xlu0 0
    %5554 = vperm.xlu0 %5553, %v5320
    %v5555 = vpop.permute.xlu0 %5554
    %v5557 = vlaneseq
    %v5558 = vshrl.u32 %v5557, 7
    %v5559 = vsub.s32 1, %v5558
    %v5560 = vrot.slane %v5516, %v5559
    %v5561 = vmul.f32 %v5520, %v5560
    %v5562 = vmul.f32 %v5525, %v5560
    %v5563 = vmul.f32 %v5530, %v5560
    %v5564 = vmul.f32 %v5535, %v5560
    %v5565 = vmul.f32 %v5540, %v5560
    %v5566 = vmul.f32 %v5545, %v5560
    %v5567 = vmul.f32 %v5550, %v5560
    %v5568 = vmul.f32 %v5555, %v5560
    %v5569 = vmul.f32 %v5304, %v5561
    %v5570 = vmul.f32 %v5305, %v5562
    %v5571 = vmul.f32 %v5306, %v5563
    %v5572 = vmul.f32 %v5307, %v5564
    %v5573 = vmul.f32 %v5308, %v5565
    %v5574 = vmul.f32 %v5309, %v5566
    %v5575 = vmul.f32 %v5310, %v5567
    %v5576 = vmul.f32 %v5311, %v5568
    %v5577 = vlaneseq
    %v5578 = vshrl.u32 %v5577, 7
    %v5579 = vsub.s32 0, %v5578
    %v5580 = vrot.slane %v5506, %v5579
    %v5581 = vmul.f32 %v5580, %v5561
    %v5582 = vmul.f32 %v5580, %v5562
    %v5583 = vmul.f32 %v5580, %v5563
    %v5584 = vmul.f32 %v5580, %v5564
    %v5585 = vmul.f32 %v5580, %v5565
    %v5586 = vmul.f32 %v5580, %v5566
    %v5587 = vmul.f32 %v5580, %v5567
    %v5588 = vmul.f32 %v5580, %v5568
    %5590 = vset.pattern.permute.xlu0 0
    %5591 = vperm.xlu0 %5590, %v5322
    %v5592 = vpop.permute.xlu0 %5591
    %5595 = vset.pattern.permute.xlu0 0
    %5596 = vperm.xlu0 %5595, %v5323
    %v5597 = vpop.permute.xlu0 %5596
    %5600 = vset.pattern.permute.xlu0 0
    %5601 = vperm.xlu0 %5600, %v5324
    %v5602 = vpop.permute.xlu0 %5601
    %5605 = vset.pattern.permute.xlu0 0
    %5606 = vperm.xlu0 %5605, %v5325
    %v5607 = vpop.permute.xlu0 %5606
    %5610 = vset.pattern.permute.xlu0 0
    %5611 = vperm.xlu0 %5610, %v5326
    %v5612 = vpop.permute.xlu0 %5611
    %5615 = vset.pattern.permute.xlu0 0
    %5616 = vperm.xlu0 %5615, %v5327
    %v5617 = vpop.permute.xlu0 %5616
    %5620 = vset.pattern.permute.xlu0 0
    %5621 = vperm.xlu0 %5620, %v5328
    %v5622 = vpop.permute.xlu0 %5621
    %5625 = vset.pattern.permute.xlu0 0
    %5626 = vperm.xlu0 %5625, %v5329
    %v5627 = vpop.permute.xlu0 %5626
    %v5629 = vsub.f32 %v5592, %v5581
    %v5630 = vsub.f32 %v5597, %v5582
    %v5631 = vsub.f32 %v5602, %v5583
    %v5632 = vsub.f32 %v5607, %v5584
    %v5633 = vsub.f32 %v5612, %v5585
    %v5634 = vsub.f32 %v5617, %v5586
    %v5635 = vsub.f32 %v5622, %v5587
    %v5636 = vsub.f32 %v5627, %v5588
    %v5637 = vadd.f32 %v5569, %v5629
    %v5638 = vadd.f32 %v5570, %v5630
    %v5639 = vadd.f32 %v5571, %v5631
    %v5640 = vadd.f32 %v5572, %v5632
    %v5641 = vadd.f32 %v5573, %v5633
    %v5642 = vadd.f32 %v5574, %v5634
    %v5643 = vadd.f32 %v5575, %v5635
    %v5644 = vadd.f32 %v5576, %v5636
    %s5645 = scalar_lea.vmem %s17, 96
    %v5646 = vld [vmem:[%s5645] sm:$0xff]
    %v5647 = vld [vmem:[%s5645 + $0x8] sm:$0xff]
    %v5648 = vld [vmem:[%s5645 + $0x10] sm:$0xff]
    %v5649 = vld [vmem:[%s5645 + $0x18] sm:$0xff]
    %v5651 = vsel %vm1646, %v5646, 0
    %v5654 = vsel %vm1646, %v5647, 0
    %v5657 = vsel %vm1646, %v5648, 0
    %v5660 = vsel %vm1646, %v5649, 0
    %5662 = vmatprep.subr.mxu0 0.0
    %5663 = vmatpush1.msra.mxu0 %v5637
    %5664 = vmatprep.subr.mxu0 0.0
    %5665 = vmatpush1.msra.mxu0 %v5638
    %5666 = vmatprep.subr.mxu0 0.0
    %5667 = vmatpush1.msra.mxu0 %v5639
    %5668 = vmatprep.subr.mxu0 0.0
    %5669 = vmatpush1.msra.mxu0 %v5640
    %5670 = vmatprep.subr.mxu0 0.0
    %5671 = vmatpush1.msra.mxu0 %v5641
    %5672 = vmatprep.subr.mxu0 0.0
    %5673 = vmatpush1.msra.mxu0 %v5642
    %5674 = vmatprep.subr.mxu0 0.0
    %5675 = vmatpush1.msra.mxu0 %v5643
    %5676 = vmatprep.subr.mxu0 0.0
    %5677 = vmatpush1.msra.mxu0 %v5644
    %5678 = vmatprep.subr.mxu0 0.0
    %5679 = vmatpush1.msra.mxu0 0.0
    %5680 = vmatprep.subr.mxu0 0.0
    %5681 = vmatpush1.msra.mxu0 0.0
    %5682 = vmatprep.subr.mxu0 0.0
    %5683 = vmatpush1.msra.mxu0 0.0
    %5684 = vmatprep.subr.mxu0 0.0
    %5685 = vmatpush1.msra.mxu0 0.0
    %5686 = vmatprep.subr.mxu0 0.0
    %5687 = vmatpush1.msra.mxu0 0.0
    %5688 = vmatprep.subr.mxu0 0.0
    %5689 = vmatpush1.msra.mxu0 0.0
    %5690 = vmatprep.subr.mxu0 0.0
    %5691 = vmatpush1.msra.mxu0 0.0
    %5692 = vmatprep.subr.mxu0 0.0
    %5693 = vmatpush1.msra.mxu0 0.0
    %5694 = vmatprep.subr.mxu0 0.0
    %5695 = vmatpush1.msra.mxu0 0.0
    %5696 = vmatprep.subr.mxu0 0.0
    %5697 = vmatpush1.msra.mxu0 0.0
    %5698 = vmatprep.subr.mxu0 0.0
    %5699 = vmatpush1.msra.mxu0 0.0
    %5700 = vmatprep.subr.mxu0 0.0
    %5701 = vmatpush1.msra.mxu0 0.0
    %5702 = vmatprep.subr.mxu0 0.0
    %5703 = vmatpush1.msra.mxu0 0.0
    %5704 = vmatprep.subr.mxu0 0.0
    %5705 = vmatpush1.msra.mxu0 0.0
    %5706 = vmatprep.subr.mxu0 0.0
    %5707 = vmatpush1.msra.mxu0 0.0
    %5708 = vmatprep.subr.mxu0 0.0
    %5709 = vmatpush1.msra.mxu0 0.0
    %5710 = vmatprep.subr.mxu0 0.0
    %5711 = vmatpush1.msra.mxu0 0.0
    %5712 = vmatprep.subr.mxu0 0.0
    %5713 = vmatpush1.msra.mxu0 0.0
    %5714 = vmatprep.subr.mxu0 0.0
    %5715 = vmatpush1.msra.mxu0 0.0
    %5716 = vmatprep.subr.mxu0 0.0
    %5717 = vmatpush1.msra.mxu0 0.0
    %5718 = vmatprep.subr.mxu0 0.0
    %5719 = vmatpush1.msra.mxu0 0.0
    %5720 = vmatprep.subr.mxu0 0.0
    %5721 = vmatpush1.msra.mxu0 0.0
    %5722 = vmatprep.subr.mxu0 0.0
    %5723 = vmatpush1.msra.mxu0 0.0
    %5724 = vmatprep.subr.mxu0 0.0
    %5725 = vmatpush1.msra.mxu0 0.0
    %5726 = vmatprep.mubr.f32.mxu0 0.0
    %5727 = vmatmul.mubr.f32.gmra.mrb[0].mxu0 %v5651
    %v5728 = vpop.f32.mrb[0].mxu0
    %v5729 = vadd.f32 0.0, %v5728
    %v5730 = vpop.f32.mrb[0].mxu0
    %5731 = vmatprep.mubr.f32.mxu0 0.0
    %5732 = vmatmul.mubr.f32.gmra.mrb[0].mxu0 %v5654
    %v5733 = vpop.f32.mrb[0].mxu0
    %v5734 = vadd.f32 0.0, %v5733
    %v5735 = vpop.f32.mrb[0].mxu0
    %5736 = vmatprep.mubr.f32.mxu0 0.0
    %5737 = vmatmul.mubr.f32.gmra.mrb[0].mxu0 %v5657
    %v5738 = vpop.f32.mrb[0].mxu0
    %v5739 = vadd.f32 0.0, %v5738
    %v5740 = vpop.f32.mrb[0].mxu0
    %5741 = vmatprep.mubr.f32.mxu0 0.0
    %5742 = vmatmul.mubr.f32.gmra.mrb[0].mxu0 %v5660
    %v5743 = vpop.f32.mrb[0].mxu0
    %v5744 = vadd.f32 0.0, %v5743
    %v5745 = vpop.f32.mrb[0].mxu0
    %5746 = vdwg.mxu0
    %v5747 = vadd.f32 %v4444, %v5729
    %v5748 = vadd.f32 %v4445, %v5734
    %v5749 = vadd.f32 %v4446, %v5739
    %v5750 = vadd.f32 %v4447, %v5744
    %s5751 = scalar_lea.vmem %s18, 96
    %v5752 = vld [vmem:[%s5751] sm:$0xff]
    %v5753 = vld [vmem:[%s5751 + $0x8] sm:$0xff]
    %v5754 = vld [vmem:[%s5751 + $0x10] sm:$0xff]
    %v5755 = vld [vmem:[%s5751 + $0x18] sm:$0xff]
    %5757 = vset.pattern.permute.xlu0 0
    %5758 = vperm.xlu0 %5757, %v5752
    %v5759 = vpop.permute.xlu0 %5758
    %5762 = vset.pattern.permute.xlu0 0
    %5763 = vperm.xlu0 %5762, %v5753
    %v5764 = vpop.permute.xlu0 %5763
    %5767 = vset.pattern.permute.xlu0 0
    %5768 = vperm.xlu0 %5767, %v5754
    %v5769 = vpop.permute.xlu0 %5768
    %5772 = vset.pattern.permute.xlu0 0
    %5773 = vperm.xlu0 %5772, %v5755
    %v5774 = vpop.permute.xlu0 %5773
    %v5776 = vadd.f32 %v5747, %v5759
    %v5777 = vadd.f32 %v5748, %v5764
    %v5778 = vadd.f32 %v5749, %v5769
    %v5779 = vadd.f32 %v5750, %v5774
    %s5780 = scalar_lea.vmem %s7, 256
    %v5781 = vld [vmem:[%s5780] sm:$0xff]
    %v5782 = vld [vmem:[%s5780 + $0x8] sm:$0xff]
    %v5783 = vld [vmem:[%s5780 + $0x10] sm:$0xff]
    %v5784 = vld [vmem:[%s5780 + $0x18] sm:$0xff]
    %v5785 = vld [vmem:[%s5780 + $0x20] sm:$0xff]
    %v5786 = vld [vmem:[%s5780 + $0x28] sm:$0xff]
    %v5787 = vld [vmem:[%s5780 + $0x30] sm:$0xff]
    %v5788 = vld [vmem:[%s5780 + $0x38] sm:$0xff]
    %s5789 = scalar_lea.vmem %s8, 256
    %v5790 = vld [vmem:[%s5789] sm:$0xff]
    %v5791 = vld [vmem:[%s5789 + $0x8] sm:$0xff]
    %v5792 = vld [vmem:[%s5789 + $0x10] sm:$0xff]
    %v5793 = vld [vmem:[%s5789 + $0x18] sm:$0xff]
    %v5794 = vld [vmem:[%s5789 + $0x20] sm:$0xff]
    %v5795 = vld [vmem:[%s5789 + $0x28] sm:$0xff]
    %v5796 = vld [vmem:[%s5789 + $0x30] sm:$0xff]
    %v5797 = vld [vmem:[%s5789 + $0x38] sm:$0xff]
    %5799 = vset.pattern.permute.xlu0 0
    %5800 = vperm.xlu0 %5799, %v5790
    %v5801 = vpop.permute.xlu0 %5800
    %5804 = vset.pattern.permute.xlu0 0
    %5805 = vperm.xlu0 %5804, %v5791
    %v5806 = vpop.permute.xlu0 %5805
    %5809 = vset.pattern.permute.xlu0 0
    %5810 = vperm.xlu0 %5809, %v5792
    %v5811 = vpop.permute.xlu0 %5810
    %5814 = vset.pattern.permute.xlu0 0
    %5815 = vperm.xlu0 %5814, %v5793
    %v5816 = vpop.permute.xlu0 %5815
    %5819 = vset.pattern.permute.xlu0 0
    %5820 = vperm.xlu0 %5819, %v5794
    %v5821 = vpop.permute.xlu0 %5820
    %5824 = vset.pattern.permute.xlu0 0
    %5825 = vperm.xlu0 %5824, %v5795
    %v5826 = vpop.permute.xlu0 %5825
    %5829 = vset.pattern.permute.xlu0 0
    %5830 = vperm.xlu0 %5829, %v5796
    %v5831 = vpop.permute.xlu0 %5830
    %5834 = vset.pattern.permute.xlu0 0
    %5835 = vperm.xlu0 %5834, %v5797
    %v5836 = vpop.permute.xlu0 %5835
    %v5839 = vsel %vm506, %v5781, 0
    %v5842 = vsel %vm506, %v5782, 0
    %v5845 = vsel %vm506, %v5783, 0
    %v5848 = vsel %vm506, %v5784, 0
    %v5851 = vsel %vm506, %v5785, 0
    %v5854 = vsel %vm506, %v5786, 0
    %v5857 = vsel %vm506, %v5787, 0
    %v5860 = vsel %vm506, %v5788, 0
    %5862 = vmatprep.subr.mxu0 0.0
    %5863 = vmatpush1.msra.mxu0 %v5776
    %5864 = vmatprep.subr.mxu0 0.0
    %5865 = vmatpush1.msra.mxu0 %v5777
    %5866 = vmatprep.subr.mxu0 0.0
    %5867 = vmatpush1.msra.mxu0 %v5778
    %5868 = vmatprep.subr.mxu0 0.0
    %5869 = vmatpush1.msra.mxu0 %v5779
    %5870 = vmatprep.subr.mxu0 0.0
    %5871 = vmatpush1.msra.mxu0 0.0
    %5872 = vmatprep.subr.mxu0 0.0
    %5873 = vmatpush1.msra.mxu0 0.0
    %5874 = vmatprep.subr.mxu0 0.0
    %5875 = vmatpush1.msra.mxu0 0.0
    %5876 = vmatprep.subr.mxu0 0.0
    %5877 = vmatpush1.msra.mxu0 0.0
    %5878 = vmatprep.subr.mxu0 0.0
    %5879 = vmatpush1.msra.mxu0 0.0
    %5880 = vmatprep.subr.mxu0 0.0
    %5881 = vmatpush1.msra.mxu0 0.0
    %5882 = vmatprep.subr.mxu0 0.0
    %5883 = vmatpush1.msra.mxu0 0.0
    %5884 = vmatprep.subr.mxu0 0.0
    %5885 = vmatpush1.msra.mxu0 0.0
    %5886 = vmatprep.subr.mxu0 0.0
    %5887 = vmatpush1.msra.mxu0 0.0
    %5888 = vmatprep.subr.mxu0 0.0
    %5889 = vmatpush1.msra.mxu0 0.0
    %5890 = vmatprep.subr.mxu0 0.0
    %5891 = vmatpush1.msra.mxu0 0.0
    %5892 = vmatprep.subr.mxu0 0.0
    %5893 = vmatpush1.msra.mxu0 0.0
    %5894 = vmatprep.subr.mxu0 0.0
    %5895 = vmatpush1.msra.mxu0 0.0
    %5896 = vmatprep.subr.mxu0 0.0
    %5897 = vmatpush1.msra.mxu0 0.0
    %5898 = vmatprep.subr.mxu0 0.0
    %5899 = vmatpush1.msra.mxu0 0.0
    %5900 = vmatprep.subr.mxu0 0.0
    %5901 = vmatpush1.msra.mxu0 0.0
    %5902 = vmatprep.subr.mxu0 0.0
    %5903 = vmatpush1.msra.mxu0 0.0
    %5904 = vmatprep.subr.mxu0 0.0
    %5905 = vmatpush1.msra.mxu0 0.0
    %5906 = vmatprep.subr.mxu0 0.0
    %5907 = vmatpush1.msra.mxu0 0.0
    %5908 = vmatprep.subr.mxu0 0.0
    %5909 = vmatpush1.msra.mxu0 0.0
    %5910 = vmatprep.subr.mxu0 0.0
    %5911 = vmatpush1.msra.mxu0 0.0
    %5912 = vmatprep.subr.mxu0 0.0
    %5913 = vmatpush1.msra.mxu0 0.0
    %5914 = vmatprep.subr.mxu0 0.0
    %5915 = vmatpush1.msra.mxu0 0.0
    %5916 = vmatprep.subr.mxu0 0.0
    %5917 = vmatpush1.msra.mxu0 0.0
    %5918 = vmatprep.subr.mxu0 0.0
    %5919 = vmatpush1.msra.mxu0 0.0
    %5920 = vmatprep.subr.mxu0 0.0
    %5921 = vmatpush1.msra.mxu0 0.0
    %5922 = vmatprep.subr.mxu0 0.0
    %5923 = vmatpush1.msra.mxu0 0.0
    %5924 = vmatprep.subr.mxu0 0.0
    %5925 = vmatpush1.msra.mxu0 0.0
    %5926 = vmatprep.mubr.f32.mxu0 0.0
    %5927 = vmatmul.mubr.f32.gmra.mrb[0].mxu0 %v5839
    %v5928 = vpop.f32.mrb[0].mxu0
    %v5929 = vadd.f32 %v5801, %v5928
    %v5930 = vpop.f32.mrb[0].mxu0
    %5931 = vmatprep.mubr.f32.mxu0 0.0
    %5932 = vmatmul.mubr.f32.gmra.mrb[0].mxu0 %v5842
    %v5933 = vpop.f32.mrb[0].mxu0
    %v5934 = vadd.f32 %v5806, %v5933
    %v5935 = vpop.f32.mrb[0].mxu0
    %5936 = vmatprep.mubr.f32.mxu0 0.0
    %5937 = vmatmul.mubr.f32.gmra.mrb[0].mxu0 %v5845
    %v5938 = vpop.f32.mrb[0].mxu0
    %v5939 = vadd.f32 %v5811, %v5938
    %v5940 = vpop.f32.mrb[0].mxu0
    %5941 = vmatprep.mubr.f32.mxu0 0.0
    %5942 = vmatmul.mubr.f32.gmra.mrb[0].mxu0 %v5848
    %v5943 = vpop.f32.mrb[0].mxu0
    %v5944 = vadd.f32 %v5816, %v5943
    %v5945 = vpop.f32.mrb[0].mxu0
    %5946 = vmatprep.mubr.f32.mxu0 0.0
    %5947 = vmatmul.mubr.f32.gmra.mrb[0].mxu0 %v5851
    %v5948 = vpop.f32.mrb[0].mxu0
    %v5949 = vadd.f32 %v5821, %v5948
    %v5950 = vpop.f32.mrb[0].mxu0
    %5951 = vmatprep.mubr.f32.mxu0 0.0
    %5952 = vmatmul.mubr.f32.gmra.mrb[0].mxu0 %v5854
    %v5953 = vpop.f32.mrb[0].mxu0
    %v5954 = vadd.f32 %v5826, %v5953
    %v5955 = vpop.f32.mrb[0].mxu0
    %5956 = vmatprep.mubr.f32.mxu0 0.0
    %5957 = vmatmul.mubr.f32.gmra.mrb[0].mxu0 %v5857
    %v5958 = vpop.f32.mrb[0].mxu0
    %v5959 = vadd.f32 %v5831, %v5958
    %v5960 = vpop.f32.mrb[0].mxu0
    %5961 = vmatprep.mubr.f32.mxu0 0.0
    %5962 = vmatmul.mubr.f32.gmra.mrb[0].mxu0 %v5860
    %v5963 = vpop.f32.mrb[0].mxu0
    %v5964 = vadd.f32 %v5836, %v5963
    %v5965 = vpop.f32.mrb[0].mxu0
    %5966 = vdwg.mxu0
    %s5967 = scalar_lea.vmem %s9, 4
    %v5968 = vld [vmem:[%s5967] sm:$0x1]
    %v5969 = vmax.f32 %v5929, 0.0
    %v5970 = vmax.f32 %v5934, 0.0
    %v5971 = vmax.f32 %v5939, 0.0
    %v5972 = vmax.f32 %v5944, 0.0
    %v5973 = vmax.f32 %v5949, 0.0
    %v5974 = vmax.f32 %v5954, 0.0
    %v5975 = vmax.f32 %v5959, 0.0
    %v5976 = vmax.f32 %v5964, 0.0
    %v5977 = vmin.f32 %v5929, 0.0
    %v5978 = vmin.f32 %v5934, 0.0
    %v5979 = vmin.f32 %v5939, 0.0
    %v5980 = vmin.f32 %v5944, 0.0
    %v5981 = vmin.f32 %v5949, 0.0
    %v5982 = vmin.f32 %v5954, 0.0
    %v5983 = vmin.f32 %v5959, 0.0
    %v5984 = vmin.f32 %v5964, 0.0
    %v5986 = vlaneseq
    %v5987 = vshrl.u32 %v5986, 7
    %v5988 = vsub.s32 0, %v5987
    %v5989 = vrot.slane %v5968, %v5988
    %5990 = vset.pattern.permute.xlu0 0
    %5991 = vperm.xlu0 %5990, %v5989
    %v5992 = vpop.permute.xlu0 %5991
    %v5994 = vmul.f32 %v5992, %v5977
    %v5995 = vmul.f32 %v5992, %v5978
    %v5996 = vmul.f32 %v5992, %v5979
    %v5997 = vmul.f32 %v5992, %v5980
    %v5998 = vmul.f32 %v5992, %v5981
    %v5999 = vmul.f32 %v5992, %v5982
    %v6000 = vmul.f32 %v5992, %v5983
    %v6001 = vmul.f32 %v5992, %v5984
    %v6002 = vadd.f32 %v5969, %v5994
    %v6003 = vadd.f32 %v5970, %v5995
    %v6004 = vadd.f32 %v5971, %v5996
    %v6005 = vadd.f32 %v5972, %v5997
    %v6006 = vadd.f32 %v5973, %v5998
    %v6007 = vadd.f32 %v5974, %v5999
    %v6008 = vadd.f32 %v5975, %v6000
    %v6009 = vadd.f32 %v5976, %v6001
    %s6010 = scalar_lea.vmem %s10, 256
    %v6011 = vld [vmem:[%s6010] sm:$0xff]
    %v6012 = vld [vmem:[%s6010 + $0x8] sm:$0xff]
    %v6013 = vld [vmem:[%s6010 + $0x10] sm:$0xff]
    %v6014 = vld [vmem:[%s6010 + $0x18] sm:$0xff]
    %v6015 = vld [vmem:[%s6010 + $0x20] sm:$0xff]
    %v6016 = vld [vmem:[%s6010 + $0x28] sm:$0xff]
    %v6017 = vld [vmem:[%s6010 + $0x30] sm:$0xff]
    %v6018 = vld [vmem:[%s6010 + $0x38] sm:$0xff]
    %s6019 = scalar_lea.vmem %s11, 256
    %v6020 = vld [vmem:[%s6019] sm:$0xff]
    %v6021 = vld [vmem:[%s6019 + $0x8] sm:$0xff]
    %v6022 = vld [vmem:[%s6019 + $0x10] sm:$0xff]
    %v6023 = vld [vmem:[%s6019 + $0x18] sm:$0xff]
    %v6024 = vld [vmem:[%s6019 + $0x20] sm:$0xff]
    %v6025 = vld [vmem:[%s6019 + $0x28] sm:$0xff]
    %v6026 = vld [vmem:[%s6019 + $0x30] sm:$0xff]
    %v6027 = vld [vmem:[%s6019 + $0x38] sm:$0xff]
    %v6028 = vadd.f32 %v6002, %v6003
    %v6029 = vadd.f32 %v6028, %v6004
    %v6030 = vadd.f32 %v6029, %v6005
    %v6031 = vadd.f32 %v6030, %v6006
    %v6032 = vadd.f32 %v6031, %v6007
    %v6033 = vadd.f32 %v6032, %v6008
    %v6034 = vadd.f32 %v6033, %v6009
    %v6035 = vrot.slane %v6034, 4
    %v6036 = vadd.f32 %v6034, %v6035
    %v6037 = vrot.slane %v6036, 2
    %v6038 = vadd.f32 %v6036, %v6037
    %v6039 = vrot.slane %v6038, 1
    %v6040 = vadd.f32 %v6038, %v6039
    %v6041 = vmul.f32 %v6002, %v6002
    %v6042 = vmul.f32 %v6003, %v6003
    %v6043 = vmul.f32 %v6004, %v6004
    %v6044 = vmul.f32 %v6005, %v6005
    %v6045 = vmul.f32 %v6006, %v6006
    %v6046 = vmul.f32 %v6007, %v6007
    %v6047 = vmul.f32 %v6008, %v6008
    %v6048 = vmul.f32 %v6009, %v6009
    %v6049 = vadd.f32 %v6041, %v6042
    %v6050 = vadd.f32 %v6049, %v6043
    %v6051 = vadd.f32 %v6050, %v6044
    %v6052 = vadd.f32 %v6051, %v6045
    %v6053 = vadd.f32 %v6052, %v6046
    %v6054 = vadd.f32 %v6053, %v6047
    %v6055 = vadd.f32 %v6054, %v6048
    %v6056 = vrot.slane %v6055, 4
    %v6057 = vadd.f32 %v6055, %v6056
    %v6058 = vrot.slane %v6057, 2
    %v6059 = vadd.f32 %v6057, %v6058
    %v6060 = vrot.slane %v6059, 1
    %v6061 = vadd.f32 %v6059, %v6060
    %v6062 = vsel %vm127, %v6040, %v6061
    %6063 = vmatprep.subr.mxu0 0.0
    %6064 = vmatpush1.msra.mxu0 %v79
    %6065 = vmatprep.subr.mxu0 0.0
    %6066 = vmatpush1.msra.mxu0 %v80
    %6067 = vmatprep.subr.mxu0 0.0
    %6068 = vmatpush1.msra.mxu0 %v81
    %6069 = vmatprep.subr.mxu0 0.0
    %6070 = vmatpush1.msra.mxu0 %v82
    %6071 = vmatprep.subr.mxu0 0.0
    %6072 = vmatpush1.msra.mxu0 %v83
    %6073 = vmatprep.subr.mxu0 0.0
    %6074 = vmatpush1.msra.mxu0 %v84
    %6075 = vmatprep.subr.mxu0 0.0
    %6076 = vmatpush1.msra.mxu0 %v85
    %6077 = vmatprep.subr.mxu0 0.0
    %6078 = vmatpush1.msra.mxu0 %v86
    %6079 = vmatprep.subr.mxu0 0.0
    %6080 = vmatpush1.msra.mxu0 %v87
    %6081 = vmatprep.subr.mxu0 0.0
    %6082 = vmatpush1.msra.mxu0 %v88
    %6083 = vmatprep.subr.mxu0 0.0
    %6084 = vmatpush1.msra.mxu0 %v89
    %6085 = vmatprep.subr.mxu0 0.0
    %6086 = vmatpush1.msra.mxu0 %v90
    %6087 = vmatprep.subr.mxu0 0.0
    %6088 = vmatpush1.msra.mxu0 %v91
    %6089 = vmatprep.subr.mxu0 0.0
    %6090 = vmatpush1.msra.mxu0 %v92
    %6091 = vmatprep.subr.mxu0 0.0
    %6092 = vmatpush1.msra.mxu0 %v93
    %6093 = vmatprep.subr.mxu0 0.0
    %6094 = vmatpush1.msra.mxu0 %v94
    %6095 = vmatprep.subr.mxu0 0.0
    %6096 = vmatpush1.msra.mxu0 0.0
    %6097 = vmatprep.subr.mxu0 0.0
    %6098 = vmatpush1.msra.mxu0 0.0
    %6099 = vmatprep.subr.mxu0 0.0
    %6100 = vmatpush1.msra.mxu0 0.0
    %6101 = vmatprep.subr.mxu0 0.0
    %6102 = vmatpush1.msra.mxu0 0.0
    %6103 = vmatprep.subr.mxu0 0.0
    %6104 = vmatpush1.msra.mxu0 0.0
    %6105 = vmatprep.subr.mxu0 0.0
    %6106 = vmatpush1.msra.mxu0 0.0
    %6107 = vmatprep.subr.mxu0 0.0
    %6108 = vmatpush1.msra.mxu0 0.0
    %6109 = vmatprep.subr.mxu0 0.0
    %6110 = vmatpush1.msra.mxu0 0.0
    %6111 = vmatprep.subr.mxu0 0.0
    %6112 = vmatpush1.msra.mxu0 0.0
    %6113 = vmatprep.subr.mxu0 0.0
    %6114 = vmatpush1.msra.mxu0 0.0
    %6115 = vmatprep.subr.mxu0 0.0
    %6116 = vmatpush1.msra.mxu0 0.0
    %6117 = vmatprep.subr.mxu0 0.0
    %6118 = vmatpush1.msra.mxu0 0.0
    %6119 = vmatprep.subr.mxu0 0.0
    %6120 = vmatpush1.msra.mxu0 0.0
    %6121 = vmatprep.subr.mxu0 0.0
    %6122 = vmatpush1.msra.mxu0 0.0
    %6123 = vmatprep.subr.mxu0 0.0
    %6124 = vmatpush1.msra.mxu0 0.0
    %6125 = vmatprep.subr.mxu0 0.0
    %6126 = vmatpush1.msra.mxu0 0.0
    %6127 = vmatprep.mubr.f32.mxu0 0.0
    %6128 = vmatmul.mubr.f32.gmra.mrb[0].mxu0 %v6062
    %v6129 = vpop.f32.mrb[0].mxu0
    %v6130 = vadd.f32 0.0, %v6129
    %v6131 = vpop.f32.mrb[0].mxu0
    %6132 = vdwg.mxu0
    %v6133 = vmul.f32 %v6130, 0.00024414063
    %v6135 = vsel %vm200, %v6133, 0
    %6137 = vmatprep.subr.mxu0 0.0
    %6138 = vmatpush1.msra.mxu0 %v206
    %6139 = vmatprep.subr.mxu0 0.0
    %6140 = vmatpush1.msra.mxu0 0.0
    %6141 = vmatprep.subr.mxu0 0.0
    %6142 = vmatpush1.msra.mxu0 0.0
    %6143 = vmatprep.subr.mxu0 0.0
    %6144 = vmatpush1.msra.mxu0 0.0
    %6145 = vmatprep.subr.mxu0 0.0
    %6146 = vmatpush1.msra.mxu0 0.0
    %6147 = vmatprep.subr.mxu0 0.0
    %6148 = vmatpush1.msra.mxu0 0.0
    %6149 = vmatprep.subr.mxu0 0.0
    %6150 = vmatpush1.msra.mxu0 0.0
    %6151 = vmatprep.subr.mxu0 0.0
    %6152 = vmatpush1.msra.mxu0 0.0
    %6153 = vmatprep.subr.mxu0 0.0
    %6154 = vmatpush1.msra.mxu0 0.0
    %6155 = vmatprep.subr.mxu0 0.0
    %6156 = vmatpush1.msra.mxu0 0.0
    %6157 = vmatprep.subr.mxu0 0.0
    %6158 = vmatpush1.msra.mxu0 0.0
    %6159 = vmatprep.subr.mxu0 0.0
    %6160 = vmatpush1.msra.mxu0 0.0
    %6161 = vmatprep.subr.mxu0 0.0
    %6162 = vmatpush1.msra.mxu0 0.0
    %6163 = vmatprep.subr.mxu0 0.0
    %6164 = vmatpush1.msra.mxu0 0.0
    %6165 = vmatprep.subr.mxu0 0.0
    %6166 = vmatpush1.msra.mxu0 0.0
    %6167 = vmatprep.subr.mxu0 0.0
    %6168 = vmatpush1.msra.mxu0 0.0
    %6169 = vmatprep.subr.mxu0 0.0
    %6170 = vmatpush1.msra.mxu0 0.0
    %6171 = vmatprep.subr.mxu0 0.0
    %6172 = vmatpush1.msra.mxu0 0.0
    %6173 = vmatprep.subr.mxu0 0.0
    %6174 = vmatpush1.msra.mxu0 0.0
    %6175 = vmatprep.subr.mxu0 0.0
    %6176 = vmatpush1.msra.mxu0 0.0
    %6177 = vmatprep.subr.mxu0 0.0
    %6178 = vmatpush1.msra.mxu0 0.0
    %6179 = vmatprep.subr.mxu0 0.0
    %6180 = vmatpush1.msra.mxu0 0.0
    %6181 = vmatprep.subr.mxu0 0.0
    %6182 = vmatpush1.msra.mxu0 0.0
    %6183 = vmatprep.subr.mxu0 0.0
    %6184 = vmatpush1.msra.mxu0 0.0
    %6185 = vmatprep.subr.mxu0 0.0
    %6186 = vmatpush1.msra.mxu0 0.0
    %6187 = vmatprep.subr.mxu0 0.0
    %6188 = vmatpush1.msra.mxu0 0.0
    %6189 = vmatprep.subr.mxu0 0.0
    %6190 = vmatpush1.msra.mxu0 0.0
    %6191 = vmatprep.subr.mxu0 0.0
    %6192 = vmatpush1.msra.mxu0 0.0
    %6193 = vmatprep.subr.mxu0 0.0
    %6194 = vmatpush1.msra.mxu0 0.0
    %6195 = vmatprep.subr.mxu0 0.0
    %6196 = vmatpush1.msra.mxu0 0.0
    %6197 = vmatprep.subr.mxu0 0.0
    %6198 = vmatpush1.msra.mxu0 0.0
    %6199 = vmatprep.subr.mxu0 0.0
    %6200 = vmatpush1.msra.mxu0 0.0
    %6201 = vmatprep.mubr.f32.mxu0 0.0
    %6202 = vmatmul.mubr.f32.gmra.mrb[0].mxu0 %v6135
    %v6203 = vpop.f32.mrb[0].mxu0
    %v6204 = vadd.f32 0.0, %v6203
    %v6205 = vpop.f32.mrb[0].mxu0
    %6206 = vdwg.mxu0
    %v6207 = vmul.f32 %v6204, %v6204
    %v6209 = vrot.slane %v6207, 7
    %v6211 = vsub.f32 %v6204, %v6209
    %v6212 = vmax.f32 %v6211, 0.0
    %v6213 = vadd.f32 %v6212, 1e-08
    %v6214 = vrsqrt.pop %v6213
    %6216 = vset.pattern.permute.xlu0 0
    %6217 = vperm.xlu0 %6216, %v6011
    %v6218 = vpop.permute.xlu0 %6217
    %6221 = vset.pattern.permute.xlu0 0
    %6222 = vperm.xlu0 %6221, %v6012
    %v6223 = vpop.permute.xlu0 %6222
    %6226 = vset.pattern.permute.xlu0 0
    %6227 = vperm.xlu0 %6226, %v6013
    %v6228 = vpop.permute.xlu0 %6227
    %6231 = vset.pattern.permute.xlu0 0
    %6232 = vperm.xlu0 %6231, %v6014
    %v6233 = vpop.permute.xlu0 %6232
    %6236 = vset.pattern.permute.xlu0 0
    %6237 = vperm.xlu0 %6236, %v6015
    %v6238 = vpop.permute.xlu0 %6237
    %6241 = vset.pattern.permute.xlu0 0
    %6242 = vperm.xlu0 %6241, %v6016
    %v6243 = vpop.permute.xlu0 %6242
    %6246 = vset.pattern.permute.xlu0 0
    %6247 = vperm.xlu0 %6246, %v6017
    %v6248 = vpop.permute.xlu0 %6247
    %6251 = vset.pattern.permute.xlu0 0
    %6252 = vperm.xlu0 %6251, %v6018
    %v6253 = vpop.permute.xlu0 %6252
    %v6255 = vlaneseq
    %v6256 = vshrl.u32 %v6255, 7
    %v6257 = vsub.s32 1, %v6256
    %v6258 = vrot.slane %v6214, %v6257
    %v6259 = vmul.f32 %v6218, %v6258
    %v6260 = vmul.f32 %v6223, %v6258
    %v6261 = vmul.f32 %v6228, %v6258
    %v6262 = vmul.f32 %v6233, %v6258
    %v6263 = vmul.f32 %v6238, %v6258
    %v6264 = vmul.f32 %v6243, %v6258
    %v6265 = vmul.f32 %v6248, %v6258
    %v6266 = vmul.f32 %v6253, %v6258
    %v6267 = vmul.f32 %v6002, %v6259
    %v6268 = vmul.f32 %v6003, %v6260
    %v6269 = vmul.f32 %v6004, %v6261
    %v6270 = vmul.f32 %v6005, %v6262
    %v6271 = vmul.f32 %v6006, %v6263
    %v6272 = vmul.f32 %v6007, %v6264
    %v6273 = vmul.f32 %v6008, %v6265
    %v6274 = vmul.f32 %v6009, %v6266
    %v6275 = vlaneseq
    %v6276 = vshrl.u32 %v6275, 7
    %v6277 = vsub.s32 0, %v6276
    %v6278 = vrot.slane %v6204, %v6277
    %v6279 = vmul.f32 %v6278, %v6259
    %v6280 = vmul.f32 %v6278, %v6260
    %v6281 = vmul.f32 %v6278, %v6261
    %v6282 = vmul.f32 %v6278, %v6262
    %v6283 = vmul.f32 %v6278, %v6263
    %v6284 = vmul.f32 %v6278, %v6264
    %v6285 = vmul.f32 %v6278, %v6265
    %v6286 = vmul.f32 %v6278, %v6266
    %6288 = vset.pattern.permute.xlu0 0
    %6289 = vperm.xlu0 %6288, %v6020
    %v6290 = vpop.permute.xlu0 %6289
    %6293 = vset.pattern.permute.xlu0 0
    %6294 = vperm.xlu0 %6293, %v6021
    %v6295 = vpop.permute.xlu0 %6294
    %6298 = vset.pattern.permute.xlu0 0
    %6299 = vperm.xlu0 %6298, %v6022
    %v6300 = vpop.permute.xlu0 %6299
    %6303 = vset.pattern.permute.xlu0 0
    %6304 = vperm.xlu0 %6303, %v6023
    %v6305 = vpop.permute.xlu0 %6304
    %6308 = vset.pattern.permute.xlu0 0
    %6309 = vperm.xlu0 %6308, %v6024
    %v6310 = vpop.permute.xlu0 %6309
    %6313 = vset.pattern.permute.xlu0 0
    %6314 = vperm.xlu0 %6313, %v6025
    %v6315 = vpop.permute.xlu0 %6314
    %6318 = vset.pattern.permute.xlu0 0
    %6319 = vperm.xlu0 %6318, %v6026
    %v6320 = vpop.permute.xlu0 %6319
    %6323 = vset.pattern.permute.xlu0 0
    %6324 = vperm.xlu0 %6323, %v6027
    %v6325 = vpop.permute.xlu0 %6324
    %v6327 = vsub.f32 %v6290, %v6279
    %v6328 = vsub.f32 %v6295, %v6280
    %v6329 = vsub.f32 %v6300, %v6281
    %v6330 = vsub.f32 %v6305, %v6282
    %v6331 = vsub.f32 %v6310, %v6283
    %v6332 = vsub.f32 %v6315, %v6284
    %v6333 = vsub.f32 %v6320, %v6285
    %v6334 = vsub.f32 %v6325, %v6286
    %v6335 = vadd.f32 %v6267, %v6327
    %v6336 = vadd.f32 %v6268, %v6328
    %v6337 = vadd.f32 %v6269, %v6329
    %v6338 = vadd.f32 %v6270, %v6330
    %v6339 = vadd.f32 %v6271, %v6331
    %v6340 = vadd.f32 %v6272, %v6332
    %v6341 = vadd.f32 %v6273, %v6333
    %v6342 = vadd.f32 %v6274, %v6334
    %s6343 = scalar_lea.vmem %s12, 256
    %v6344 = vld [vmem:[%s6343] sm:$0xff]
    %v6345 = vld [vmem:[%s6343 + $0x8] sm:$0xff]
    %v6346 = vld [vmem:[%s6343 + $0x10] sm:$0xff]
    %v6347 = vld [vmem:[%s6343 + $0x18] sm:$0xff]
    %v6348 = vld [vmem:[%s6343 + $0x20] sm:$0xff]
    %v6349 = vld [vmem:[%s6343 + $0x28] sm:$0xff]
    %v6350 = vld [vmem:[%s6343 + $0x30] sm:$0xff]
    %v6351 = vld [vmem:[%s6343 + $0x38] sm:$0xff]
    %6353 = vset.pattern.permute.xlu0 1
    %6354 = vperm.xlu0 %6353, %v6344
    %v6355 = vpop.permute.xlu0 %6354
    %6358 = vset.pattern.permute.xlu0 1
    %6359 = vperm.xlu0 %6358, %v6345
    %v6360 = vpop.permute.xlu0 %6359
    %6363 = vset.pattern.permute.xlu0 1
    %6364 = vperm.xlu0 %6363, %v6346
    %v6365 = vpop.permute.xlu0 %6364
    %6368 = vset.pattern.permute.xlu0 1
    %6369 = vperm.xlu0 %6368, %v6347
    %v6370 = vpop.permute.xlu0 %6369
    %6373 = vset.pattern.permute.xlu0 1
    %6374 = vperm.xlu0 %6373, %v6348
    %v6375 = vpop.permute.xlu0 %6374
    %6378 = vset.pattern.permute.xlu0 1
    %6379 = vperm.xlu0 %6378, %v6349
    %v6380 = vpop.permute.xlu0 %6379
    %6383 = vset.pattern.permute.xlu0 1
    %6384 = vperm.xlu0 %6383, %v6350
    %v6385 = vpop.permute.xlu0 %6384
    %6388 = vset.pattern.permute.xlu0 1
    %6389 = vperm.xlu0 %6388, %v6351
    %v6390 = vpop.permute.xlu0 %6389
    %v6392 = vmul.f32 %v6355, %v6335
    %v6393 = vmul.f32 %v6360, %v6336
    %v6394 = vmul.f32 %v6365, %v6337
    %v6395 = vmul.f32 %v6370, %v6338
    %v6396 = vmul.f32 %v6375, %v6339
    %v6397 = vmul.f32 %v6380, %v6340
    %v6398 = vmul.f32 %v6385, %v6341
    %v6399 = vmul.f32 %v6390, %v6342
    %s6400 = scalar_lea.vmem %s13, 256
    %v6401 = vld [vmem:[%s6400] sm:$0xff]
    %v6402 = vld [vmem:[%s6400 + $0x8] sm:$0xff]
    %v6403 = vld [vmem:[%s6400 + $0x10] sm:$0xff]
    %v6404 = vld [vmem:[%s6400 + $0x18] sm:$0xff]
    %v6405 = vld [vmem:[%s6400 + $0x20] sm:$0xff]
    %v6406 = vld [vmem:[%s6400 + $0x28] sm:$0xff]
    %v6407 = vld [vmem:[%s6400 + $0x30] sm:$0xff]
    %v6408 = vld [vmem:[%s6400 + $0x38] sm:$0xff]
    %6410 = vset.pattern.permute.xlu0 0
    %6411 = vperm.xlu0 %6410, %v6401
    %v6412 = vpop.permute.xlu0 %6411
    %6415 = vset.pattern.permute.xlu0 0
    %6416 = vperm.xlu0 %6415, %v6402
    %v6417 = vpop.permute.xlu0 %6416
    %6420 = vset.pattern.permute.xlu0 0
    %6421 = vperm.xlu0 %6420, %v6403
    %v6422 = vpop.permute.xlu0 %6421
    %6425 = vset.pattern.permute.xlu0 0
    %6426 = vperm.xlu0 %6425, %v6404
    %v6427 = vpop.permute.xlu0 %6426
    %6430 = vset.pattern.permute.xlu0 0
    %6431 = vperm.xlu0 %6430, %v6405
    %v6432 = vpop.permute.xlu0 %6431
    %6435 = vset.pattern.permute.xlu0 0
    %6436 = vperm.xlu0 %6435, %v6406
    %v6437 = vpop.permute.xlu0 %6436
    %6440 = vset.pattern.permute.xlu0 0
    %6441 = vperm.xlu0 %6440, %v6407
    %v6442 = vpop.permute.xlu0 %6441
    %6445 = vset.pattern.permute.xlu0 0
    %6446 = vperm.xlu0 %6445, %v6408
    %v6447 = vpop.permute.xlu0 %6446
    %v6449 = vadd.f32 %v6392, %v6412
    %v6450 = vadd.f32 %v6393, %v6417
    %v6451 = vadd.f32 %v6394, %v6422
    %v6452 = vadd.f32 %v6395, %v6427
    %v6453 = vadd.f32 %v6396, %v6432
    %v6454 = vadd.f32 %v6397, %v6437
    %v6455 = vadd.f32 %v6398, %v6442
    %v6456 = vadd.f32 %v6399, %v6447
    %6457 = vrot.lane.b32.xlu0 %v6335, 2
    %v6458 = vpop.permute.xlu0 %6457
    %6459 = vrot.lane.b32.xlu0 %v6336, 2
    %v6460 = vpop.permute.xlu0 %6459
    %6461 = vrot.lane.b32.xlu0 %v6337, 2
    %v6462 = vpop.permute.xlu0 %6461
    %6463 = vrot.lane.b32.xlu0 %v6338, 2
    %v6464 = vpop.permute.xlu0 %6463
    %6465 = vrot.lane.b32.xlu0 %v6339, 2
    %v6466 = vpop.permute.xlu0 %6465
    %6467 = vrot.lane.b32.xlu0 %v6340, 2
    %v6468 = vpop.permute.xlu0 %6467
    %6469 = vrot.lane.b32.xlu0 %v6341, 2
    %v6470 = vpop.permute.xlu0 %6469
    %6471 = vrot.lane.b32.xlu0 %v6342, 2
    %v6472 = vpop.permute.xlu0 %6471
    %v6473 = vsel %vm2470, %v6458, 0.0
    %v6474 = vsel %vm2470, %v6460, 0.0
    %v6475 = vsel %vm2470, %v6462, 0.0
    %v6476 = vsel %vm2470, %v6464, 0.0
    %v6477 = vsel %vm2470, %v6466, 0.0
    %v6478 = vsel %vm2470, %v6468, 0.0
    %v6479 = vsel %vm2470, %v6470, 0.0
    %v6480 = vsel %vm2470, %v6472, 0.0
    %6481 = vset.pattern.permute.xlu0 0
    %6482 = vperm.xlu0 %6481, %v6344
    %v6483 = vpop.permute.xlu0 %6482
    %6485 = vset.pattern.permute.xlu0 0
    %6486 = vperm.xlu0 %6485, %v6345
    %v6487 = vpop.permute.xlu0 %6486
    %6489 = vset.pattern.permute.xlu0 0
    %6490 = vperm.xlu0 %6489, %v6346
    %v6491 = vpop.permute.xlu0 %6490
    %6493 = vset.pattern.permute.xlu0 0
    %6494 = vperm.xlu0 %6493, %v6347
    %v6495 = vpop.permute.xlu0 %6494
    %6497 = vset.pattern.permute.xlu0 0
    %6498 = vperm.xlu0 %6497, %v6348
    %v6499 = vpop.permute.xlu0 %6498
    %6501 = vset.pattern.permute.xlu0 0
    %6502 = vperm.xlu0 %6501, %v6349
    %v6503 = vpop.permute.xlu0 %6502
    %6505 = vset.pattern.permute.xlu0 0
    %6506 = vperm.xlu0 %6505, %v6350
    %v6507 = vpop.permute.xlu0 %6506
    %6509 = vset.pattern.permute.xlu0 0
    %6510 = vperm.xlu0 %6509, %v6351
    %v6511 = vpop.permute.xlu0 %6510
    %v6513 = vmul.f32 %v6483, %v6473
    %v6514 = vmul.f32 %v6487, %v6474
    %v6515 = vmul.f32 %v6491, %v6475
    %v6516 = vmul.f32 %v6495, %v6476
    %v6517 = vmul.f32 %v6499, %v6477
    %v6518 = vmul.f32 %v6503, %v6478
    %v6519 = vmul.f32 %v6507, %v6479
    %v6520 = vmul.f32 %v6511, %v6480
    %v6521 = vadd.f32 %v6449, %v6513
    %v6522 = vadd.f32 %v6450, %v6514
    %v6523 = vadd.f32 %v6451, %v6515
    %v6524 = vadd.f32 %v6452, %v6516
    %v6525 = vadd.f32 %v6453, %v6517
    %v6526 = vadd.f32 %v6454, %v6518
    %v6527 = vadd.f32 %v6455, %v6519
    %v6528 = vadd.f32 %v6456, %v6520
    %6529 = vrot.lane.b32.xlu0 %v6335, 126
    %v6530 = vpop.permute.xlu0 %6529
    %6531 = vrot.lane.b32.xlu0 %v6336, 126
    %v6532 = vpop.permute.xlu0 %6531
    %6533 = vrot.lane.b32.xlu0 %v6337, 126
    %v6534 = vpop.permute.xlu0 %6533
    %6535 = vrot.lane.b32.xlu0 %v6338, 126
    %v6536 = vpop.permute.xlu0 %6535
    %6537 = vrot.lane.b32.xlu0 %v6339, 126
    %v6538 = vpop.permute.xlu0 %6537
    %6539 = vrot.lane.b32.xlu0 %v6340, 126
    %v6540 = vpop.permute.xlu0 %6539
    %6541 = vrot.lane.b32.xlu0 %v6341, 126
    %v6542 = vpop.permute.xlu0 %6541
    %6543 = vrot.lane.b32.xlu0 %v6342, 126
    %v6544 = vpop.permute.xlu0 %6543
    %v6545 = vsel %vm2544, %v6530, 0.0
    %v6546 = vsel %vm2544, %v6532, 0.0
    %v6547 = vsel %vm2544, %v6534, 0.0
    %v6548 = vsel %vm2544, %v6536, 0.0
    %v6549 = vsel %vm2544, %v6538, 0.0
    %v6550 = vsel %vm2544, %v6540, 0.0
    %v6551 = vsel %vm2544, %v6542, 0.0
    %v6552 = vsel %vm2544, %v6544, 0.0
    %6553 = vset.pattern.permute.xlu0 2
    %6554 = vperm.xlu0 %6553, %v6344
    %v6555 = vpop.permute.xlu0 %6554
    %6557 = vset.pattern.permute.xlu0 2
    %6558 = vperm.xlu0 %6557, %v6345
    %v6559 = vpop.permute.xlu0 %6558
    %6561 = vset.pattern.permute.xlu0 2
    %6562 = vperm.xlu0 %6561, %v6346
    %v6563 = vpop.permute.xlu0 %6562
    %6565 = vset.pattern.permute.xlu0 2
    %6566 = vperm.xlu0 %6565, %v6347
    %v6567 = vpop.permute.xlu0 %6566
    %6569 = vset.pattern.permute.xlu0 2
    %6570 = vperm.xlu0 %6569, %v6348
    %v6571 = vpop.permute.xlu0 %6570
    %6573 = vset.pattern.permute.xlu0 2
    %6574 = vperm.xlu0 %6573, %v6349
    %v6575 = vpop.permute.xlu0 %6574
    %6577 = vset.pattern.permute.xlu0 2
    %6578 = vperm.xlu0 %6577, %v6350
    %v6579 = vpop.permute.xlu0 %6578
    %6581 = vset.pattern.permute.xlu0 2
    %6582 = vperm.xlu0 %6581, %v6351
    %v6583 = vpop.permute.xlu0 %6582
    %v6585 = vmul.f32 %v6555, %v6545
    %v6586 = vmul.f32 %v6559, %v6546
    %v6587 = vmul.f32 %v6563, %v6547
    %v6588 = vmul.f32 %v6567, %v6548
    %v6589 = vmul.f32 %v6571, %v6549
    %v6590 = vmul.f32 %v6575, %v6550
    %v6591 = vmul.f32 %v6579, %v6551
    %v6592 = vmul.f32 %v6583, %v6552
    %v6593 = vadd.f32 %v6521, %v6585
    %v6594 = vadd.f32 %v6522, %v6586
    %v6595 = vadd.f32 %v6523, %v6587
    %v6596 = vadd.f32 %v6524, %v6588
    %v6597 = vadd.f32 %v6525, %v6589
    %v6598 = vadd.f32 %v6526, %v6590
    %v6599 = vadd.f32 %v6527, %v6591
    %v6600 = vadd.f32 %v6528, %v6592
    %s6601 = scalar_lea.vmem %s14, 4
    %v6602 = vld [vmem:[%s6601] sm:$0x1]
    %v6603 = vmax.f32 %v6593, 0.0
    %v6604 = vmax.f32 %v6594, 0.0
    %v6605 = vmax.f32 %v6595, 0.0
    %v6606 = vmax.f32 %v6596, 0.0
    %v6607 = vmax.f32 %v6597, 0.0
    %v6608 = vmax.f32 %v6598, 0.0
    %v6609 = vmax.f32 %v6599, 0.0
    %v6610 = vmax.f32 %v6600, 0.0
    %v6611 = vmin.f32 %v6593, 0.0
    %v6612 = vmin.f32 %v6594, 0.0
    %v6613 = vmin.f32 %v6595, 0.0
    %v6614 = vmin.f32 %v6596, 0.0
    %v6615 = vmin.f32 %v6597, 0.0
    %v6616 = vmin.f32 %v6598, 0.0
    %v6617 = vmin.f32 %v6599, 0.0
    %v6618 = vmin.f32 %v6600, 0.0
    %v6620 = vlaneseq
    %v6621 = vshrl.u32 %v6620, 7
    %v6622 = vsub.s32 0, %v6621
    %v6623 = vrot.slane %v6602, %v6622
    %6624 = vset.pattern.permute.xlu0 0
    %6625 = vperm.xlu0 %6624, %v6623
    %v6626 = vpop.permute.xlu0 %6625
    %v6628 = vmul.f32 %v6626, %v6611
    %v6629 = vmul.f32 %v6626, %v6612
    %v6630 = vmul.f32 %v6626, %v6613
    %v6631 = vmul.f32 %v6626, %v6614
    %v6632 = vmul.f32 %v6626, %v6615
    %v6633 = vmul.f32 %v6626, %v6616
    %v6634 = vmul.f32 %v6626, %v6617
    %v6635 = vmul.f32 %v6626, %v6618
    %v6636 = vadd.f32 %v6603, %v6628
    %v6637 = vadd.f32 %v6604, %v6629
    %v6638 = vadd.f32 %v6605, %v6630
    %v6639 = vadd.f32 %v6606, %v6631
    %v6640 = vadd.f32 %v6607, %v6632
    %v6641 = vadd.f32 %v6608, %v6633
    %v6642 = vadd.f32 %v6609, %v6634
    %v6643 = vadd.f32 %v6610, %v6635
    %s6644 = scalar_lea.vmem %s15, 256
    %v6645 = vld [vmem:[%s6644] sm:$0xff]
    %v6646 = vld [vmem:[%s6644 + $0x8] sm:$0xff]
    %v6647 = vld [vmem:[%s6644 + $0x10] sm:$0xff]
    %v6648 = vld [vmem:[%s6644 + $0x18] sm:$0xff]
    %v6649 = vld [vmem:[%s6644 + $0x20] sm:$0xff]
    %v6650 = vld [vmem:[%s6644 + $0x28] sm:$0xff]
    %v6651 = vld [vmem:[%s6644 + $0x30] sm:$0xff]
    %v6652 = vld [vmem:[%s6644 + $0x38] sm:$0xff]
    %s6653 = scalar_lea.vmem %s16, 256
    %v6654 = vld [vmem:[%s6653] sm:$0xff]
    %v6655 = vld [vmem:[%s6653 + $0x8] sm:$0xff]
    %v6656 = vld [vmem:[%s6653 + $0x10] sm:$0xff]
    %v6657 = vld [vmem:[%s6653 + $0x18] sm:$0xff]
    %v6658 = vld [vmem:[%s6653 + $0x20] sm:$0xff]
    %v6659 = vld [vmem:[%s6653 + $0x28] sm:$0xff]
    %v6660 = vld [vmem:[%s6653 + $0x30] sm:$0xff]
    %v6661 = vld [vmem:[%s6653 + $0x38] sm:$0xff]
    %v6662 = vadd.f32 %v6636, %v6637
    %v6663 = vadd.f32 %v6662, %v6638
    %v6664 = vadd.f32 %v6663, %v6639
    %v6665 = vadd.f32 %v6664, %v6640
    %v6666 = vadd.f32 %v6665, %v6641
    %v6667 = vadd.f32 %v6666, %v6642
    %v6668 = vadd.f32 %v6667, %v6643
    %v6669 = vrot.slane %v6668, 4
    %v6670 = vadd.f32 %v6668, %v6669
    %v6671 = vrot.slane %v6670, 2
    %v6672 = vadd.f32 %v6670, %v6671
    %v6673 = vrot.slane %v6672, 1
    %v6674 = vadd.f32 %v6672, %v6673
    %v6675 = vmul.f32 %v6636, %v6636
    %v6676 = vmul.f32 %v6637, %v6637
    %v6677 = vmul.f32 %v6638, %v6638
    %v6678 = vmul.f32 %v6639, %v6639
    %v6679 = vmul.f32 %v6640, %v6640
    %v6680 = vmul.f32 %v6641, %v6641
    %v6681 = vmul.f32 %v6642, %v6642
    %v6682 = vmul.f32 %v6643, %v6643
    %v6683 = vadd.f32 %v6675, %v6676
    %v6684 = vadd.f32 %v6683, %v6677
    %v6685 = vadd.f32 %v6684, %v6678
    %v6686 = vadd.f32 %v6685, %v6679
    %v6687 = vadd.f32 %v6686, %v6680
    %v6688 = vadd.f32 %v6687, %v6681
    %v6689 = vadd.f32 %v6688, %v6682
    %v6690 = vrot.slane %v6689, 4
    %v6691 = vadd.f32 %v6689, %v6690
    %v6692 = vrot.slane %v6691, 2
    %v6693 = vadd.f32 %v6691, %v6692
    %v6694 = vrot.slane %v6693, 1
    %v6695 = vadd.f32 %v6693, %v6694
    %v6696 = vsel %vm127, %v6674, %v6695
    %6697 = vmatprep.subr.mxu0 0.0
    %6698 = vmatpush1.msra.mxu0 %v79
    %6699 = vmatprep.subr.mxu0 0.0
    %6700 = vmatpush1.msra.mxu0 %v80
    %6701 = vmatprep.subr.mxu0 0.0
    %6702 = vmatpush1.msra.mxu0 %v81
    %6703 = vmatprep.subr.mxu0 0.0
    %6704 = vmatpush1.msra.mxu0 %v82
    %6705 = vmatprep.subr.mxu0 0.0
    %6706 = vmatpush1.msra.mxu0 %v83
    %6707 = vmatprep.subr.mxu0 0.0
    %6708 = vmatpush1.msra.mxu0 %v84
    %6709 = vmatprep.subr.mxu0 0.0
    %6710 = vmatpush1.msra.mxu0 %v85
    %6711 = vmatprep.subr.mxu0 0.0
    %6712 = vmatpush1.msra.mxu0 %v86
    %6713 = vmatprep.subr.mxu0 0.0
    %6714 = vmatpush1.msra.mxu0 %v87
    %6715 = vmatprep.subr.mxu0 0.0
    %6716 = vmatpush1.msra.mxu0 %v88
    %6717 = vmatprep.subr.mxu0 0.0
    %6718 = vmatpush1.msra.mxu0 %v89
    %6719 = vmatprep.subr.mxu0 0.0
    %6720 = vmatpush1.msra.mxu0 %v90
    %6721 = vmatprep.subr.mxu0 0.0
    %6722 = vmatpush1.msra.mxu0 %v91
    %6723 = vmatprep.subr.mxu0 0.0
    %6724 = vmatpush1.msra.mxu0 %v92
    %6725 = vmatprep.subr.mxu0 0.0
    %6726 = vmatpush1.msra.mxu0 %v93
    %6727 = vmatprep.subr.mxu0 0.0
    %6728 = vmatpush1.msra.mxu0 %v94
    %6729 = vmatprep.subr.mxu0 0.0
    %6730 = vmatpush1.msra.mxu0 0.0
    %6731 = vmatprep.subr.mxu0 0.0
    %6732 = vmatpush1.msra.mxu0 0.0
    %6733 = vmatprep.subr.mxu0 0.0
    %6734 = vmatpush1.msra.mxu0 0.0
    %6735 = vmatprep.subr.mxu0 0.0
    %6736 = vmatpush1.msra.mxu0 0.0
    %6737 = vmatprep.subr.mxu0 0.0
    %6738 = vmatpush1.msra.mxu0 0.0
    %6739 = vmatprep.subr.mxu0 0.0
    %6740 = vmatpush1.msra.mxu0 0.0
    %6741 = vmatprep.subr.mxu0 0.0
    %6742 = vmatpush1.msra.mxu0 0.0
    %6743 = vmatprep.subr.mxu0 0.0
    %6744 = vmatpush1.msra.mxu0 0.0
    %6745 = vmatprep.subr.mxu0 0.0
    %6746 = vmatpush1.msra.mxu0 0.0
    %6747 = vmatprep.subr.mxu0 0.0
    %6748 = vmatpush1.msra.mxu0 0.0
    %6749 = vmatprep.subr.mxu0 0.0
    %6750 = vmatpush1.msra.mxu0 0.0
    %6751 = vmatprep.subr.mxu0 0.0
    %6752 = vmatpush1.msra.mxu0 0.0
    %6753 = vmatprep.subr.mxu0 0.0
    %6754 = vmatpush1.msra.mxu0 0.0
    %6755 = vmatprep.subr.mxu0 0.0
    %6756 = vmatpush1.msra.mxu0 0.0
    %6757 = vmatprep.subr.mxu0 0.0
    %6758 = vmatpush1.msra.mxu0 0.0
    %6759 = vmatprep.subr.mxu0 0.0
    %6760 = vmatpush1.msra.mxu0 0.0
    %6761 = vmatprep.mubr.f32.mxu0 0.0
    %6762 = vmatmul.mubr.f32.gmra.mrb[0].mxu0 %v6696
    %v6763 = vpop.f32.mrb[0].mxu0
    %v6764 = vadd.f32 0.0, %v6763
    %v6765 = vpop.f32.mrb[0].mxu0
    %6766 = vdwg.mxu0
    %v6767 = vmul.f32 %v6764, 0.00024414063
    %v6769 = vsel %vm200, %v6767, 0
    %6771 = vmatprep.subr.mxu0 0.0
    %6772 = vmatpush1.msra.mxu0 %v206
    %6773 = vmatprep.subr.mxu0 0.0
    %6774 = vmatpush1.msra.mxu0 0.0
    %6775 = vmatprep.subr.mxu0 0.0
    %6776 = vmatpush1.msra.mxu0 0.0
    %6777 = vmatprep.subr.mxu0 0.0
    %6778 = vmatpush1.msra.mxu0 0.0
    %6779 = vmatprep.subr.mxu0 0.0
    %6780 = vmatpush1.msra.mxu0 0.0
    %6781 = vmatprep.subr.mxu0 0.0
    %6782 = vmatpush1.msra.mxu0 0.0
    %6783 = vmatprep.subr.mxu0 0.0
    %6784 = vmatpush1.msra.mxu0 0.0
    %6785 = vmatprep.subr.mxu0 0.0
    %6786 = vmatpush1.msra.mxu0 0.0
    %6787 = vmatprep.subr.mxu0 0.0
    %6788 = vmatpush1.msra.mxu0 0.0
    %6789 = vmatprep.subr.mxu0 0.0
    %6790 = vmatpush1.msra.mxu0 0.0
    %6791 = vmatprep.subr.mxu0 0.0
    %6792 = vmatpush1.msra.mxu0 0.0
    %6793 = vmatprep.subr.mxu0 0.0
    %6794 = vmatpush1.msra.mxu0 0.0
    %6795 = vmatprep.subr.mxu0 0.0
    %6796 = vmatpush1.msra.mxu0 0.0
    %6797 = vmatprep.subr.mxu0 0.0
    %6798 = vmatpush1.msra.mxu0 0.0
    %6799 = vmatprep.subr.mxu0 0.0
    %6800 = vmatpush1.msra.mxu0 0.0
    %6801 = vmatprep.subr.mxu0 0.0
    %6802 = vmatpush1.msra.mxu0 0.0
    %6803 = vmatprep.subr.mxu0 0.0
    %6804 = vmatpush1.msra.mxu0 0.0
    %6805 = vmatprep.subr.mxu0 0.0
    %6806 = vmatpush1.msra.mxu0 0.0
    %6807 = vmatprep.subr.mxu0 0.0
    %6808 = vmatpush1.msra.mxu0 0.0
    %6809 = vmatprep.subr.mxu0 0.0
    %6810 = vmatpush1.msra.mxu0 0.0
    %6811 = vmatprep.subr.mxu0 0.0
    %6812 = vmatpush1.msra.mxu0 0.0
    %6813 = vmatprep.subr.mxu0 0.0
    %6814 = vmatpush1.msra.mxu0 0.0
    %6815 = vmatprep.subr.mxu0 0.0
    %6816 = vmatpush1.msra.mxu0 0.0
    %6817 = vmatprep.subr.mxu0 0.0
    %6818 = vmatpush1.msra.mxu0 0.0
    %6819 = vmatprep.subr.mxu0 0.0
    %6820 = vmatpush1.msra.mxu0 0.0
    %6821 = vmatprep.subr.mxu0 0.0
    %6822 = vmatpush1.msra.mxu0 0.0
    %6823 = vmatprep.subr.mxu0 0.0
    %6824 = vmatpush1.msra.mxu0 0.0
    %6825 = vmatprep.subr.mxu0 0.0
    %6826 = vmatpush1.msra.mxu0 0.0
    %6827 = vmatprep.subr.mxu0 0.0
    %6828 = vmatpush1.msra.mxu0 0.0
    %6829 = vmatprep.subr.mxu0 0.0
    %6830 = vmatpush1.msra.mxu0 0.0
    %6831 = vmatprep.subr.mxu0 0.0
    %6832 = vmatpush1.msra.mxu0 0.0
    %6833 = vmatprep.subr.mxu0 0.0
    %6834 = vmatpush1.msra.mxu0 0.0
    %6835 = vmatprep.mubr.f32.mxu0 0.0
    %6836 = vmatmul.mubr.f32.gmra.mrb[0].mxu0 %v6769
    %v6837 = vpop.f32.mrb[0].mxu0
    %v6838 = vadd.f32 0.0, %v6837
    %v6839 = vpop.f32.mrb[0].mxu0
    %6840 = vdwg.mxu0
    %v6841 = vmul.f32 %v6838, %v6838
    %v6843 = vrot.slane %v6841, 7
    %v6845 = vsub.f32 %v6838, %v6843
    %v6846 = vmax.f32 %v6845, 0.0
    %v6847 = vadd.f32 %v6846, 1e-08
    %v6848 = vrsqrt.pop %v6847
    %6850 = vset.pattern.permute.xlu0 0
    %6851 = vperm.xlu0 %6850, %v6645
    %v6852 = vpop.permute.xlu0 %6851
    %6855 = vset.pattern.permute.xlu0 0
    %6856 = vperm.xlu0 %6855, %v6646
    %v6857 = vpop.permute.xlu0 %6856
    %6860 = vset.pattern.permute.xlu0 0
    %6861 = vperm.xlu0 %6860, %v6647
    %v6862 = vpop.permute.xlu0 %6861
    %6865 = vset.pattern.permute.xlu0 0
    %6866 = vperm.xlu0 %6865, %v6648
    %v6867 = vpop.permute.xlu0 %6866
    %6870 = vset.pattern.permute.xlu0 0
    %6871 = vperm.xlu0 %6870, %v6649
    %v6872 = vpop.permute.xlu0 %6871
    %6875 = vset.pattern.permute.xlu0 0
    %6876 = vperm.xlu0 %6875, %v6650
    %v6877 = vpop.permute.xlu0 %6876
    %6880 = vset.pattern.permute.xlu0 0
    %6881 = vperm.xlu0 %6880, %v6651
    %v6882 = vpop.permute.xlu0 %6881
    %6885 = vset.pattern.permute.xlu0 0
    %6886 = vperm.xlu0 %6885, %v6652
    %v6887 = vpop.permute.xlu0 %6886
    %v6889 = vlaneseq
    %v6890 = vshrl.u32 %v6889, 7
    %v6891 = vsub.s32 1, %v6890
    %v6892 = vrot.slane %v6848, %v6891
    %v6893 = vmul.f32 %v6852, %v6892
    %v6894 = vmul.f32 %v6857, %v6892
    %v6895 = vmul.f32 %v6862, %v6892
    %v6896 = vmul.f32 %v6867, %v6892
    %v6897 = vmul.f32 %v6872, %v6892
    %v6898 = vmul.f32 %v6877, %v6892
    %v6899 = vmul.f32 %v6882, %v6892
    %v6900 = vmul.f32 %v6887, %v6892
    %v6901 = vmul.f32 %v6636, %v6893
    %v6902 = vmul.f32 %v6637, %v6894
    %v6903 = vmul.f32 %v6638, %v6895
    %v6904 = vmul.f32 %v6639, %v6896
    %v6905 = vmul.f32 %v6640, %v6897
    %v6906 = vmul.f32 %v6641, %v6898
    %v6907 = vmul.f32 %v6642, %v6899
    %v6908 = vmul.f32 %v6643, %v6900
    %v6909 = vlaneseq
    %v6910 = vshrl.u32 %v6909, 7
    %v6911 = vsub.s32 0, %v6910
    %v6912 = vrot.slane %v6838, %v6911
    %v6913 = vmul.f32 %v6912, %v6893
    %v6914 = vmul.f32 %v6912, %v6894
    %v6915 = vmul.f32 %v6912, %v6895
    %v6916 = vmul.f32 %v6912, %v6896
    %v6917 = vmul.f32 %v6912, %v6897
    %v6918 = vmul.f32 %v6912, %v6898
    %v6919 = vmul.f32 %v6912, %v6899
    %v6920 = vmul.f32 %v6912, %v6900
    %6922 = vset.pattern.permute.xlu0 0
    %6923 = vperm.xlu0 %6922, %v6654
    %v6924 = vpop.permute.xlu0 %6923
    %6927 = vset.pattern.permute.xlu0 0
    %6928 = vperm.xlu0 %6927, %v6655
    %v6929 = vpop.permute.xlu0 %6928
    %6932 = vset.pattern.permute.xlu0 0
    %6933 = vperm.xlu0 %6932, %v6656
    %v6934 = vpop.permute.xlu0 %6933
    %6937 = vset.pattern.permute.xlu0 0
    %6938 = vperm.xlu0 %6937, %v6657
    %v6939 = vpop.permute.xlu0 %6938
    %6942 = vset.pattern.permute.xlu0 0
    %6943 = vperm.xlu0 %6942, %v6658
    %v6944 = vpop.permute.xlu0 %6943
    %6947 = vset.pattern.permute.xlu0 0
    %6948 = vperm.xlu0 %6947, %v6659
    %v6949 = vpop.permute.xlu0 %6948
    %6952 = vset.pattern.permute.xlu0 0
    %6953 = vperm.xlu0 %6952, %v6660
    %v6954 = vpop.permute.xlu0 %6953
    %6957 = vset.pattern.permute.xlu0 0
    %6958 = vperm.xlu0 %6957, %v6661
    %v6959 = vpop.permute.xlu0 %6958
    %v6961 = vsub.f32 %v6924, %v6913
    %v6962 = vsub.f32 %v6929, %v6914
    %v6963 = vsub.f32 %v6934, %v6915
    %v6964 = vsub.f32 %v6939, %v6916
    %v6965 = vsub.f32 %v6944, %v6917
    %v6966 = vsub.f32 %v6949, %v6918
    %v6967 = vsub.f32 %v6954, %v6919
    %v6968 = vsub.f32 %v6959, %v6920
    %v6969 = vadd.f32 %v6901, %v6961
    %v6970 = vadd.f32 %v6902, %v6962
    %v6971 = vadd.f32 %v6903, %v6963
    %v6972 = vadd.f32 %v6904, %v6964
    %v6973 = vadd.f32 %v6905, %v6965
    %v6974 = vadd.f32 %v6906, %v6966
    %v6975 = vadd.f32 %v6907, %v6967
    %v6976 = vadd.f32 %v6908, %v6968
    %s6977 = scalar_lea.vmem %s17, 128
    %v6978 = vld [vmem:[%s6977] sm:$0xff]
    %v6979 = vld [vmem:[%s6977 + $0x8] sm:$0xff]
    %v6980 = vld [vmem:[%s6977 + $0x10] sm:$0xff]
    %v6981 = vld [vmem:[%s6977 + $0x18] sm:$0xff]
    %v6983 = vsel %vm1646, %v6978, 0
    %v6986 = vsel %vm1646, %v6979, 0
    %v6989 = vsel %vm1646, %v6980, 0
    %v6992 = vsel %vm1646, %v6981, 0
    %6994 = vmatprep.subr.mxu0 0.0
    %6995 = vmatpush1.msra.mxu0 %v6969
    %6996 = vmatprep.subr.mxu0 0.0
    %6997 = vmatpush1.msra.mxu0 %v6970
    %6998 = vmatprep.subr.mxu0 0.0
    %6999 = vmatpush1.msra.mxu0 %v6971
    %7000 = vmatprep.subr.mxu0 0.0
    %7001 = vmatpush1.msra.mxu0 %v6972
    %7002 = vmatprep.subr.mxu0 0.0
    %7003 = vmatpush1.msra.mxu0 %v6973
    %7004 = vmatprep.subr.mxu0 0.0
    %7005 = vmatpush1.msra.mxu0 %v6974
    %7006 = vmatprep.subr.mxu0 0.0
    %7007 = vmatpush1.msra.mxu0 %v6975
    %7008 = vmatprep.subr.mxu0 0.0
    %7009 = vmatpush1.msra.mxu0 %v6976
    %7010 = vmatprep.subr.mxu0 0.0
    %7011 = vmatpush1.msra.mxu0 0.0
    %7012 = vmatprep.subr.mxu0 0.0
    %7013 = vmatpush1.msra.mxu0 0.0
    %7014 = vmatprep.subr.mxu0 0.0
    %7015 = vmatpush1.msra.mxu0 0.0
    %7016 = vmatprep.subr.mxu0 0.0
    %7017 = vmatpush1.msra.mxu0 0.0
    %7018 = vmatprep.subr.mxu0 0.0
    %7019 = vmatpush1.msra.mxu0 0.0
    %7020 = vmatprep.subr.mxu0 0.0
    %7021 = vmatpush1.msra.mxu0 0.0
    %7022 = vmatprep.subr.mxu0 0.0
    %7023 = vmatpush1.msra.mxu0 0.0
    %7024 = vmatprep.subr.mxu0 0.0
    %7025 = vmatpush1.msra.mxu0 0.0
    %7026 = vmatprep.subr.mxu0 0.0
    %7027 = vmatpush1.msra.mxu0 0.0
    %7028 = vmatprep.subr.mxu0 0.0
    %7029 = vmatpush1.msra.mxu0 0.0
    %7030 = vmatprep.subr.mxu0 0.0
    %7031 = vmatpush1.msra.mxu0 0.0
    %7032 = vmatprep.subr.mxu0 0.0
    %7033 = vmatpush1.msra.mxu0 0.0
    %7034 = vmatprep.subr.mxu0 0.0
    %7035 = vmatpush1.msra.mxu0 0.0
    %7036 = vmatprep.subr.mxu0 0.0
    %7037 = vmatpush1.msra.mxu0 0.0
    %7038 = vmatprep.subr.mxu0 0.0
    %7039 = vmatpush1.msra.mxu0 0.0
    %7040 = vmatprep.subr.mxu0 0.0
    %7041 = vmatpush1.msra.mxu0 0.0
    %7042 = vmatprep.subr.mxu0 0.0
    %7043 = vmatpush1.msra.mxu0 0.0
    %7044 = vmatprep.subr.mxu0 0.0
    %7045 = vmatpush1.msra.mxu0 0.0
    %7046 = vmatprep.subr.mxu0 0.0
    %7047 = vmatpush1.msra.mxu0 0.0
    %7048 = vmatprep.subr.mxu0 0.0
    %7049 = vmatpush1.msra.mxu0 0.0
    %7050 = vmatprep.subr.mxu0 0.0
    %7051 = vmatpush1.msra.mxu0 0.0
    %7052 = vmatprep.subr.mxu0 0.0
    %7053 = vmatpush1.msra.mxu0 0.0
    %7054 = vmatprep.subr.mxu0 0.0
    %7055 = vmatpush1.msra.mxu0 0.0
    %7056 = vmatprep.subr.mxu0 0.0
    %7057 = vmatpush1.msra.mxu0 0.0
    %7058 = vmatprep.mubr.f32.mxu0 0.0
    %7059 = vmatmul.mubr.f32.gmra.mrb[0].mxu0 %v6983
    %v7060 = vpop.f32.mrb[0].mxu0
    %v7061 = vadd.f32 0.0, %v7060
    %v7062 = vpop.f32.mrb[0].mxu0
    %7063 = vmatprep.mubr.f32.mxu0 0.0
    %7064 = vmatmul.mubr.f32.gmra.mrb[0].mxu0 %v6986
    %v7065 = vpop.f32.mrb[0].mxu0
    %v7066 = vadd.f32 0.0, %v7065
    %v7067 = vpop.f32.mrb[0].mxu0
    %7068 = vmatprep.mubr.f32.mxu0 0.0
    %7069 = vmatmul.mubr.f32.gmra.mrb[0].mxu0 %v6989
    %v7070 = vpop.f32.mrb[0].mxu0
    %v7071 = vadd.f32 0.0, %v7070
    %v7072 = vpop.f32.mrb[0].mxu0
    %7073 = vmatprep.mubr.f32.mxu0 0.0
    %7074 = vmatmul.mubr.f32.gmra.mrb[0].mxu0 %v6992
    %v7075 = vpop.f32.mrb[0].mxu0
    %v7076 = vadd.f32 0.0, %v7075
    %v7077 = vpop.f32.mrb[0].mxu0
    %7078 = vdwg.mxu0
    %v7079 = vadd.f32 %v5776, %v7061
    %v7080 = vadd.f32 %v5777, %v7066
    %v7081 = vadd.f32 %v5778, %v7071
    %v7082 = vadd.f32 %v5779, %v7076
    %s7083 = scalar_lea.vmem %s18, 128
    %v7084 = vld [vmem:[%s7083] sm:$0xff]
    %v7085 = vld [vmem:[%s7083 + $0x8] sm:$0xff]
    %v7086 = vld [vmem:[%s7083 + $0x10] sm:$0xff]
    %v7087 = vld [vmem:[%s7083 + $0x18] sm:$0xff]
    %7089 = vset.pattern.permute.xlu0 0
    %7090 = vperm.xlu0 %7089, %v7084
    %v7091 = vpop.permute.xlu0 %7090
    %7094 = vset.pattern.permute.xlu0 0
    %7095 = vperm.xlu0 %7094, %v7085
    %v7096 = vpop.permute.xlu0 %7095
    %7099 = vset.pattern.permute.xlu0 0
    %7100 = vperm.xlu0 %7099, %v7086
    %v7101 = vpop.permute.xlu0 %7100
    %7104 = vset.pattern.permute.xlu0 0
    %7105 = vperm.xlu0 %7104, %v7087
    %v7106 = vpop.permute.xlu0 %7105
    %v7108 = vadd.f32 %v7079, %v7091
    %v7109 = vadd.f32 %v7080, %v7096
    %v7110 = vadd.f32 %v7081, %v7101
    %v7111 = vadd.f32 %v7082, %v7106
    %s7112 = scalar_lea.vmem %s7, 320
    %v7113 = vld [vmem:[%s7112] sm:$0xff]
    %v7114 = vld [vmem:[%s7112 + $0x8] sm:$0xff]
    %v7115 = vld [vmem:[%s7112 + $0x10] sm:$0xff]
    %v7116 = vld [vmem:[%s7112 + $0x18] sm:$0xff]
    %v7117 = vld [vmem:[%s7112 + $0x20] sm:$0xff]
    %v7118 = vld [vmem:[%s7112 + $0x28] sm:$0xff]
    %v7119 = vld [vmem:[%s7112 + $0x30] sm:$0xff]
    %v7120 = vld [vmem:[%s7112 + $0x38] sm:$0xff]
    %s7121 = scalar_lea.vmem %s8, 320
    %v7122 = vld [vmem:[%s7121] sm:$0xff]
    %v7123 = vld [vmem:[%s7121 + $0x8] sm:$0xff]
    %v7124 = vld [vmem:[%s7121 + $0x10] sm:$0xff]
    %v7125 = vld [vmem:[%s7121 + $0x18] sm:$0xff]
    %v7126 = vld [vmem:[%s7121 + $0x20] sm:$0xff]
    %v7127 = vld [vmem:[%s7121 + $0x28] sm:$0xff]
    %v7128 = vld [vmem:[%s7121 + $0x30] sm:$0xff]
    %v7129 = vld [vmem:[%s7121 + $0x38] sm:$0xff]
    %7131 = vset.pattern.permute.xlu0 0
    %7132 = vperm.xlu0 %7131, %v7122
    %v7133 = vpop.permute.xlu0 %7132
    %7136 = vset.pattern.permute.xlu0 0
    %7137 = vperm.xlu0 %7136, %v7123
    %v7138 = vpop.permute.xlu0 %7137
    %7141 = vset.pattern.permute.xlu0 0
    %7142 = vperm.xlu0 %7141, %v7124
    %v7143 = vpop.permute.xlu0 %7142
    %7146 = vset.pattern.permute.xlu0 0
    %7147 = vperm.xlu0 %7146, %v7125
    %v7148 = vpop.permute.xlu0 %7147
    %7151 = vset.pattern.permute.xlu0 0
    %7152 = vperm.xlu0 %7151, %v7126
    %v7153 = vpop.permute.xlu0 %7152
    %7156 = vset.pattern.permute.xlu0 0
    %7157 = vperm.xlu0 %7156, %v7127
    %v7158 = vpop.permute.xlu0 %7157
    %7161 = vset.pattern.permute.xlu0 0
    %7162 = vperm.xlu0 %7161, %v7128
    %v7163 = vpop.permute.xlu0 %7162
    %7166 = vset.pattern.permute.xlu0 0
    %7167 = vperm.xlu0 %7166, %v7129
    %v7168 = vpop.permute.xlu0 %7167
    %v7171 = vsel %vm506, %v7113, 0
    %v7174 = vsel %vm506, %v7114, 0
    %v7177 = vsel %vm506, %v7115, 0
    %v7180 = vsel %vm506, %v7116, 0
    %v7183 = vsel %vm506, %v7117, 0
    %v7186 = vsel %vm506, %v7118, 0
    %v7189 = vsel %vm506, %v7119, 0
    %v7192 = vsel %vm506, %v7120, 0
    %7194 = vmatprep.subr.mxu0 0.0
    %7195 = vmatpush1.msra.mxu0 %v7108
    %7196 = vmatprep.subr.mxu0 0.0
    %7197 = vmatpush1.msra.mxu0 %v7109
    %7198 = vmatprep.subr.mxu0 0.0
    %7199 = vmatpush1.msra.mxu0 %v7110
    %7200 = vmatprep.subr.mxu0 0.0
    %7201 = vmatpush1.msra.mxu0 %v7111
    %7202 = vmatprep.subr.mxu0 0.0
    %7203 = vmatpush1.msra.mxu0 0.0
    %7204 = vmatprep.subr.mxu0 0.0
    %7205 = vmatpush1.msra.mxu0 0.0
    %7206 = vmatprep.subr.mxu0 0.0
    %7207 = vmatpush1.msra.mxu0 0.0
    %7208 = vmatprep.subr.mxu0 0.0
    %7209 = vmatpush1.msra.mxu0 0.0
    %7210 = vmatprep.subr.mxu0 0.0
    %7211 = vmatpush1.msra.mxu0 0.0
    %7212 = vmatprep.subr.mxu0 0.0
    %7213 = vmatpush1.msra.mxu0 0.0
    %7214 = vmatprep.subr.mxu0 0.0
    %7215 = vmatpush1.msra.mxu0 0.0
    %7216 = vmatprep.subr.mxu0 0.0
    %7217 = vmatpush1.msra.mxu0 0.0
    %7218 = vmatprep.subr.mxu0 0.0
    %7219 = vmatpush1.msra.mxu0 0.0
    %7220 = vmatprep.subr.mxu0 0.0
    %7221 = vmatpush1.msra.mxu0 0.0
    %7222 = vmatprep.subr.mxu0 0.0
    %7223 = vmatpush1.msra.mxu0 0.0
    %7224 = vmatprep.subr.mxu0 0.0
    %7225 = vmatpush1.msra.mxu0 0.0
    %7226 = vmatprep.subr.mxu0 0.0
    %7227 = vmatpush1.msra.mxu0 0.0
    %7228 = vmatprep.subr.mxu0 0.0
    %7229 = vmatpush1.msra.mxu0 0.0
    %7230 = vmatprep.subr.mxu0 0.0
    %7231 = vmatpush1.msra.mxu0 0.0
    %7232 = vmatprep.subr.mxu0 0.0
    %7233 = vmatpush1.msra.mxu0 0.0
    %7234 = vmatprep.subr.mxu0 0.0
    %7235 = vmatpush1.msra.mxu0 0.0
    %7236 = vmatprep.subr.mxu0 0.0
    %7237 = vmatpush1.msra.mxu0 0.0
    %7238 = vmatprep.subr.mxu0 0.0
    %7239 = vmatpush1.msra.mxu0 0.0
    %7240 = vmatprep.subr.mxu0 0.0
    %7241 = vmatpush1.msra.mxu0 0.0
    %7242 = vmatprep.subr.mxu0 0.0
    %7243 = vmatpush1.msra.mxu0 0.0
    %7244 = vmatprep.subr.mxu0 0.0
    %7245 = vmatpush1.msra.mxu0 0.0
    %7246 = vmatprep.subr.mxu0 0.0
    %7247 = vmatpush1.msra.mxu0 0.0
    %7248 = vmatprep.subr.mxu0 0.0
    %7249 = vmatpush1.msra.mxu0 0.0
    %7250 = vmatprep.subr.mxu0 0.0
    %7251 = vmatpush1.msra.mxu0 0.0
    %7252 = vmatprep.subr.mxu0 0.0
    %7253 = vmatpush1.msra.mxu0 0.0
    %7254 = vmatprep.subr.mxu0 0.0
    %7255 = vmatpush1.msra.mxu0 0.0
    %7256 = vmatprep.subr.mxu0 0.0
    %7257 = vmatpush1.msra.mxu0 0.0
    %7258 = vmatprep.mubr.f32.mxu0 0.0
    %7259 = vmatmul.mubr.f32.gmra.mrb[0].mxu0 %v7171
    %v7260 = vpop.f32.mrb[0].mxu0
    %v7261 = vadd.f32 %v7133, %v7260
    %v7262 = vpop.f32.mrb[0].mxu0
    %7263 = vmatprep.mubr.f32.mxu0 0.0
    %7264 = vmatmul.mubr.f32.gmra.mrb[0].mxu0 %v7174
    %v7265 = vpop.f32.mrb[0].mxu0
    %v7266 = vadd.f32 %v7138, %v7265
    %v7267 = vpop.f32.mrb[0].mxu0
    %7268 = vmatprep.mubr.f32.mxu0 0.0
    %7269 = vmatmul.mubr.f32.gmra.mrb[0].mxu0 %v7177
    %v7270 = vpop.f32.mrb[0].mxu0
    %v7271 = vadd.f32 %v7143, %v7270
    %v7272 = vpop.f32.mrb[0].mxu0
    %7273 = vmatprep.mubr.f32.mxu0 0.0
    %7274 = vmatmul.mubr.f32.gmra.mrb[0].mxu0 %v7180
    %v7275 = vpop.f32.mrb[0].mxu0
    %v7276 = vadd.f32 %v7148, %v7275
    %v7277 = vpop.f32.mrb[0].mxu0
    %7278 = vmatprep.mubr.f32.mxu0 0.0
    %7279 = vmatmul.mubr.f32.gmra.mrb[0].mxu0 %v7183
    %v7280 = vpop.f32.mrb[0].mxu0
    %v7281 = vadd.f32 %v7153, %v7280
    %v7282 = vpop.f32.mrb[0].mxu0
    %7283 = vmatprep.mubr.f32.mxu0 0.0
    %7284 = vmatmul.mubr.f32.gmra.mrb[0].mxu0 %v7186
    %v7285 = vpop.f32.mrb[0].mxu0
    %v7286 = vadd.f32 %v7158, %v7285
    %v7287 = vpop.f32.mrb[0].mxu0
    %7288 = vmatprep.mubr.f32.mxu0 0.0
    %7289 = vmatmul.mubr.f32.gmra.mrb[0].mxu0 %v7189
    %v7290 = vpop.f32.mrb[0].mxu0
    %v7291 = vadd.f32 %v7163, %v7290
    %v7292 = vpop.f32.mrb[0].mxu0
    %7293 = vmatprep.mubr.f32.mxu0 0.0
    %7294 = vmatmul.mubr.f32.gmra.mrb[0].mxu0 %v7192
    %v7295 = vpop.f32.mrb[0].mxu0
    %v7296 = vadd.f32 %v7168, %v7295
    %v7297 = vpop.f32.mrb[0].mxu0
    %7298 = vdwg.mxu0
    %s7299 = scalar_lea.vmem %s9, 5
    %v7300 = vld [vmem:[%s7299] sm:$0x1]
    %v7301 = vmax.f32 %v7261, 0.0
    %v7302 = vmax.f32 %v7266, 0.0
    %v7303 = vmax.f32 %v7271, 0.0
    %v7304 = vmax.f32 %v7276, 0.0
    %v7305 = vmax.f32 %v7281, 0.0
    %v7306 = vmax.f32 %v7286, 0.0
    %v7307 = vmax.f32 %v7291, 0.0
    %v7308 = vmax.f32 %v7296, 0.0
    %v7309 = vmin.f32 %v7261, 0.0
    %v7310 = vmin.f32 %v7266, 0.0
    %v7311 = vmin.f32 %v7271, 0.0
    %v7312 = vmin.f32 %v7276, 0.0
    %v7313 = vmin.f32 %v7281, 0.0
    %v7314 = vmin.f32 %v7286, 0.0
    %v7315 = vmin.f32 %v7291, 0.0
    %v7316 = vmin.f32 %v7296, 0.0
    %v7318 = vlaneseq
    %v7319 = vshrl.u32 %v7318, 7
    %v7320 = vsub.s32 0, %v7319
    %v7321 = vrot.slane %v7300, %v7320
    %7322 = vset.pattern.permute.xlu0 0
    %7323 = vperm.xlu0 %7322, %v7321
    %v7324 = vpop.permute.xlu0 %7323
    %v7326 = vmul.f32 %v7324, %v7309
    %v7327 = vmul.f32 %v7324, %v7310
    %v7328 = vmul.f32 %v7324, %v7311
    %v7329 = vmul.f32 %v7324, %v7312
    %v7330 = vmul.f32 %v7324, %v7313
    %v7331 = vmul.f32 %v7324, %v7314
    %v7332 = vmul.f32 %v7324, %v7315
    %v7333 = vmul.f32 %v7324, %v7316
    %v7334 = vadd.f32 %v7301, %v7326
    %v7335 = vadd.f32 %v7302, %v7327
    %v7336 = vadd.f32 %v7303, %v7328
    %v7337 = vadd.f32 %v7304, %v7329
    %v7338 = vadd.f32 %v7305, %v7330
    %v7339 = vadd.f32 %v7306, %v7331
    %v7340 = vadd.f32 %v7307, %v7332
    %v7341 = vadd.f32 %v7308, %v7333
    %s7342 = scalar_lea.vmem %s10, 320
    %v7343 = vld [vmem:[%s7342] sm:$0xff]
    %v7344 = vld [vmem:[%s7342 + $0x8] sm:$0xff]
    %v7345 = vld [vmem:[%s7342 + $0x10] sm:$0xff]
    %v7346 = vld [vmem:[%s7342 + $0x18] sm:$0xff]
    %v7347 = vld [vmem:[%s7342 + $0x20] sm:$0xff]
    %v7348 = vld [vmem:[%s7342 + $0x28] sm:$0xff]
    %v7349 = vld [vmem:[%s7342 + $0x30] sm:$0xff]
    %v7350 = vld [vmem:[%s7342 + $0x38] sm:$0xff]
    %s7351 = scalar_lea.vmem %s11, 320
    %v7352 = vld [vmem:[%s7351] sm:$0xff]
    %v7353 = vld [vmem:[%s7351 + $0x8] sm:$0xff]
    %v7354 = vld [vmem:[%s7351 + $0x10] sm:$0xff]
    %v7355 = vld [vmem:[%s7351 + $0x18] sm:$0xff]
    %v7356 = vld [vmem:[%s7351 + $0x20] sm:$0xff]
    %v7357 = vld [vmem:[%s7351 + $0x28] sm:$0xff]
    %v7358 = vld [vmem:[%s7351 + $0x30] sm:$0xff]
    %v7359 = vld [vmem:[%s7351 + $0x38] sm:$0xff]
    %v7360 = vadd.f32 %v7334, %v7335
    %v7361 = vadd.f32 %v7360, %v7336
    %v7362 = vadd.f32 %v7361, %v7337
    %v7363 = vadd.f32 %v7362, %v7338
    %v7364 = vadd.f32 %v7363, %v7339
    %v7365 = vadd.f32 %v7364, %v7340
    %v7366 = vadd.f32 %v7365, %v7341
    %v7367 = vrot.slane %v7366, 4
    %v7368 = vadd.f32 %v7366, %v7367
    %v7369 = vrot.slane %v7368, 2
    %v7370 = vadd.f32 %v7368, %v7369
    %v7371 = vrot.slane %v7370, 1
    %v7372 = vadd.f32 %v7370, %v7371
    %v7373 = vmul.f32 %v7334, %v7334
    %v7374 = vmul.f32 %v7335, %v7335
    %v7375 = vmul.f32 %v7336, %v7336
    %v7376 = vmul.f32 %v7337, %v7337
    %v7377 = vmul.f32 %v7338, %v7338
    %v7378 = vmul.f32 %v7339, %v7339
    %v7379 = vmul.f32 %v7340, %v7340
    %v7380 = vmul.f32 %v7341, %v7341
    %v7381 = vadd.f32 %v7373, %v7374
    %v7382 = vadd.f32 %v7381, %v7375
    %v7383 = vadd.f32 %v7382, %v7376
    %v7384 = vadd.f32 %v7383, %v7377
    %v7385 = vadd.f32 %v7384, %v7378
    %v7386 = vadd.f32 %v7385, %v7379
    %v7387 = vadd.f32 %v7386, %v7380
    %v7388 = vrot.slane %v7387, 4
    %v7389 = vadd.f32 %v7387, %v7388
    %v7390 = vrot.slane %v7389, 2
    %v7391 = vadd.f32 %v7389, %v7390
    %v7392 = vrot.slane %v7391, 1
    %v7393 = vadd.f32 %v7391, %v7392
    %v7394 = vsel %vm127, %v7372, %v7393
    %7395 = vmatprep.subr.mxu0 0.0
    %7396 = vmatpush1.msra.mxu0 %v79
    %7397 = vmatprep.subr.mxu0 0.0
    %7398 = vmatpush1.msra.mxu0 %v80
    %7399 = vmatprep.subr.mxu0 0.0
    %7400 = vmatpush1.msra.mxu0 %v81
    %7401 = vmatprep.subr.mxu0 0.0
    %7402 = vmatpush1.msra.mxu0 %v82
    %7403 = vmatprep.subr.mxu0 0.0
    %7404 = vmatpush1.msra.mxu0 %v83
    %7405 = vmatprep.subr.mxu0 0.0
    %7406 = vmatpush1.msra.mxu0 %v84
    %7407 = vmatprep.subr.mxu0 0.0
    %7408 = vmatpush1.msra.mxu0 %v85
    %7409 = vmatprep.subr.mxu0 0.0
    %7410 = vmatpush1.msra.mxu0 %v86
    %7411 = vmatprep.subr.mxu0 0.0
    %7412 = vmatpush1.msra.mxu0 %v87
    %7413 = vmatprep.subr.mxu0 0.0
    %7414 = vmatpush1.msra.mxu0 %v88
    %7415 = vmatprep.subr.mxu0 0.0
    %7416 = vmatpush1.msra.mxu0 %v89
    %7417 = vmatprep.subr.mxu0 0.0
    %7418 = vmatpush1.msra.mxu0 %v90
    %7419 = vmatprep.subr.mxu0 0.0
    %7420 = vmatpush1.msra.mxu0 %v91
    %7421 = vmatprep.subr.mxu0 0.0
    %7422 = vmatpush1.msra.mxu0 %v92
    %7423 = vmatprep.subr.mxu0 0.0
    %7424 = vmatpush1.msra.mxu0 %v93
    %7425 = vmatprep.subr.mxu0 0.0
    %7426 = vmatpush1.msra.mxu0 %v94
    %7427 = vmatprep.subr.mxu0 0.0
    %7428 = vmatpush1.msra.mxu0 0.0
    %7429 = vmatprep.subr.mxu0 0.0
    %7430 = vmatpush1.msra.mxu0 0.0
    %7431 = vmatprep.subr.mxu0 0.0
    %7432 = vmatpush1.msra.mxu0 0.0
    %7433 = vmatprep.subr.mxu0 0.0
    %7434 = vmatpush1.msra.mxu0 0.0
    %7435 = vmatprep.subr.mxu0 0.0
    %7436 = vmatpush1.msra.mxu0 0.0
    %7437 = vmatprep.subr.mxu0 0.0
    %7438 = vmatpush1.msra.mxu0 0.0
    %7439 = vmatprep.subr.mxu0 0.0
    %7440 = vmatpush1.msra.mxu0 0.0
    %7441 = vmatprep.subr.mxu0 0.0
    %7442 = vmatpush1.msra.mxu0 0.0
    %7443 = vmatprep.subr.mxu0 0.0
    %7444 = vmatpush1.msra.mxu0 0.0
    %7445 = vmatprep.subr.mxu0 0.0
    %7446 = vmatpush1.msra.mxu0 0.0
    %7447 = vmatprep.subr.mxu0 0.0
    %7448 = vmatpush1.msra.mxu0 0.0
    %7449 = vmatprep.subr.mxu0 0.0
    %7450 = vmatpush1.msra.mxu0 0.0
    %7451 = vmatprep.subr.mxu0 0.0
    %7452 = vmatpush1.msra.mxu0 0.0
    %7453 = vmatprep.subr.mxu0 0.0
    %7454 = vmatpush1.msra.mxu0 0.0
    %7455 = vmatprep.subr.mxu0 0.0
    %7456 = vmatpush1.msra.mxu0 0.0
    %7457 = vmatprep.subr.mxu0 0.0
    %7458 = vmatpush1.msra.mxu0 0.0
    %7459 = vmatprep.mubr.f32.mxu0 0.0
    %7460 = vmatmul.mubr.f32.gmra.mrb[0].mxu0 %v7394
    %v7461 = vpop.f32.mrb[0].mxu0
    %v7462 = vadd.f32 0.0, %v7461
    %v7463 = vpop.f32.mrb[0].mxu0
    %7464 = vdwg.mxu0
    %v7465 = vmul.f32 %v7462, 0.00024414063
    %v7467 = vsel %vm200, %v7465, 0
    %7469 = vmatprep.subr.mxu0 0.0
    %7470 = vmatpush1.msra.mxu0 %v206
    %7471 = vmatprep.subr.mxu0 0.0
    %7472 = vmatpush1.msra.mxu0 0.0
    %7473 = vmatprep.subr.mxu0 0.0
    %7474 = vmatpush1.msra.mxu0 0.0
    %7475 = vmatprep.subr.mxu0 0.0
    %7476 = vmatpush1.msra.mxu0 0.0
    %7477 = vmatprep.subr.mxu0 0.0
    %7478 = vmatpush1.msra.mxu0 0.0
    %7479 = vmatprep.subr.mxu0 0.0
    %7480 = vmatpush1.msra.mxu0 0.0
    %7481 = vmatprep.subr.mxu0 0.0
    %7482 = vmatpush1.msra.mxu0 0.0
    %7483 = vmatprep.subr.mxu0 0.0
    %7484 = vmatpush1.msra.mxu0 0.0
    %7485 = vmatprep.subr.mxu0 0.0
    %7486 = vmatpush1.msra.mxu0 0.0
    %7487 = vmatprep.subr.mxu0 0.0
    %7488 = vmatpush1.msra.mxu0 0.0
    %7489 = vmatprep.subr.mxu0 0.0
    %7490 = vmatpush1.msra.mxu0 0.0
    %7491 = vmatprep.subr.mxu0 0.0
    %7492 = vmatpush1.msra.mxu0 0.0
    %7493 = vmatprep.subr.mxu0 0.0
    %7494 = vmatpush1.msra.mxu0 0.0
    %7495 = vmatprep.subr.mxu0 0.0
    %7496 = vmatpush1.msra.mxu0 0.0
    %7497 = vmatprep.subr.mxu0 0.0
    %7498 = vmatpush1.msra.mxu0 0.0
    %7499 = vmatprep.subr.mxu0 0.0
    %7500 = vmatpush1.msra.mxu0 0.0
    %7501 = vmatprep.subr.mxu0 0.0
    %7502 = vmatpush1.msra.mxu0 0.0
    %7503 = vmatprep.subr.mxu0 0.0
    %7504 = vmatpush1.msra.mxu0 0.0
    %7505 = vmatprep.subr.mxu0 0.0
    %7506 = vmatpush1.msra.mxu0 0.0
    %7507 = vmatprep.subr.mxu0 0.0
    %7508 = vmatpush1.msra.mxu0 0.0
    %7509 = vmatprep.subr.mxu0 0.0
    %7510 = vmatpush1.msra.mxu0 0.0
    %7511 = vmatprep.subr.mxu0 0.0
    %7512 = vmatpush1.msra.mxu0 0.0
    %7513 = vmatprep.subr.mxu0 0.0
    %7514 = vmatpush1.msra.mxu0 0.0
    %7515 = vmatprep.subr.mxu0 0.0
    %7516 = vmatpush1.msra.mxu0 0.0
    %7517 = vmatprep.subr.mxu0 0.0
    %7518 = vmatpush1.msra.mxu0 0.0
    %7519 = vmatprep.subr.mxu0 0.0
    %7520 = vmatpush1.msra.mxu0 0.0
    %7521 = vmatprep.subr.mxu0 0.0
    %7522 = vmatpush1.msra.mxu0 0.0
    %7523 = vmatprep.subr.mxu0 0.0
    %7524 = vmatpush1.msra.mxu0 0.0
    %7525 = vmatprep.subr.mxu0 0.0
    %7526 = vmatpush1.msra.mxu0 0.0
    %7527 = vmatprep.subr.mxu0 0.0
    %7528 = vmatpush1.msra.mxu0 0.0
    %7529 = vmatprep.subr.mxu0 0.0
    %7530 = vmatpush1.msra.mxu0 0.0
    %7531 = vmatprep.subr.mxu0 0.0
    %7532 = vmatpush1.msra.mxu0 0.0
    %7533 = vmatprep.mubr.f32.mxu0 0.0
    %7534 = vmatmul.mubr.f32.gmra.mrb[0].mxu0 %v7467
    %v7535 = vpop.f32.mrb[0].mxu0
    %v7536 = vadd.f32 0.0, %v7535
    %v7537 = vpop.f32.mrb[0].mxu0
    %7538 = vdwg.mxu0
    %v7539 = vmul.f32 %v7536, %v7536
    %v7541 = vrot.slane %v7539, 7
    %v7543 = vsub.f32 %v7536, %v7541
    %v7544 = vmax.f32 %v7543, 0.0
    %v7545 = vadd.f32 %v7544, 1e-08
    %v7546 = vrsqrt.pop %v7545
    %7548 = vset.pattern.permute.xlu0 0
    %7549 = vperm.xlu0 %7548, %v7343
    %v7550 = vpop.permute.xlu0 %7549
    %7553 = vset.pattern.permute.xlu0 0
    %7554 = vperm.xlu0 %7553, %v7344
    %v7555 = vpop.permute.xlu0 %7554
    %7558 = vset.pattern.permute.xlu0 0
    %7559 = vperm.xlu0 %7558, %v7345
    %v7560 = vpop.permute.xlu0 %7559
    %7563 = vset.pattern.permute.xlu0 0
    %7564 = vperm.xlu0 %7563, %v7346
    %v7565 = vpop.permute.xlu0 %7564
    %7568 = vset.pattern.permute.xlu0 0
    %7569 = vperm.xlu0 %7568, %v7347
    %v7570 = vpop.permute.xlu0 %7569
    %7573 = vset.pattern.permute.xlu0 0
    %7574 = vperm.xlu0 %7573, %v7348
    %v7575 = vpop.permute.xlu0 %7574
    %7578 = vset.pattern.permute.xlu0 0
    %7579 = vperm.xlu0 %7578, %v7349
    %v7580 = vpop.permute.xlu0 %7579
    %7583 = vset.pattern.permute.xlu0 0
    %7584 = vperm.xlu0 %7583, %v7350
    %v7585 = vpop.permute.xlu0 %7584
    %v7587 = vlaneseq
    %v7588 = vshrl.u32 %v7587, 7
    %v7589 = vsub.s32 1, %v7588
    %v7590 = vrot.slane %v7546, %v7589
    %v7591 = vmul.f32 %v7550, %v7590
    %v7592 = vmul.f32 %v7555, %v7590
    %v7593 = vmul.f32 %v7560, %v7590
    %v7594 = vmul.f32 %v7565, %v7590
    %v7595 = vmul.f32 %v7570, %v7590
    %v7596 = vmul.f32 %v7575, %v7590
    %v7597 = vmul.f32 %v7580, %v7590
    %v7598 = vmul.f32 %v7585, %v7590
    %v7599 = vmul.f32 %v7334, %v7591
    %v7600 = vmul.f32 %v7335, %v7592
    %v7601 = vmul.f32 %v7336, %v7593
    %v7602 = vmul.f32 %v7337, %v7594
    %v7603 = vmul.f32 %v7338, %v7595
    %v7604 = vmul.f32 %v7339, %v7596
    %v7605 = vmul.f32 %v7340, %v7597
    %v7606 = vmul.f32 %v7341, %v7598
    %v7607 = vlaneseq
    %v7608 = vshrl.u32 %v7607, 7
    %v7609 = vsub.s32 0, %v7608
    %v7610 = vrot.slane %v7536, %v7609
    %v7611 = vmul.f32 %v7610, %v7591
    %v7612 = vmul.f32 %v7610, %v7592
    %v7613 = vmul.f32 %v7610, %v7593
    %v7614 = vmul.f32 %v7610, %v7594
    %v7615 = vmul.f32 %v7610, %v7595
    %v7616 = vmul.f32 %v7610, %v7596
    %v7617 = vmul.f32 %v7610, %v7597
    %v7618 = vmul.f32 %v7610, %v7598
    %7620 = vset.pattern.permute.xlu0 0
    %7621 = vperm.xlu0 %7620, %v7352
    %v7622 = vpop.permute.xlu0 %7621
    %7625 = vset.pattern.permute.xlu0 0
    %7626 = vperm.xlu0 %7625, %v7353
    %v7627 = vpop.permute.xlu0 %7626
    %7630 = vset.pattern.permute.xlu0 0
    %7631 = vperm.xlu0 %7630, %v7354
    %v7632 = vpop.permute.xlu0 %7631
    %7635 = vset.pattern.permute.xlu0 0
    %7636 = vperm.xlu0 %7635, %v7355
    %v7637 = vpop.permute.xlu0 %7636
    %7640 = vset.pattern.permute.xlu0 0
    %7641 = vperm.xlu0 %7640, %v7356
    %v7642 = vpop.permute.xlu0 %7641
    %7645 = vset.pattern.permute.xlu0 0
    %7646 = vperm.xlu0 %7645, %v7357
    %v7647 = vpop.permute.xlu0 %7646
    %7650 = vset.pattern.permute.xlu0 0
    %7651 = vperm.xlu0 %7650, %v7358
    %v7652 = vpop.permute.xlu0 %7651
    %7655 = vset.pattern.permute.xlu0 0
    %7656 = vperm.xlu0 %7655, %v7359
    %v7657 = vpop.permute.xlu0 %7656
    %v7659 = vsub.f32 %v7622, %v7611
    %v7660 = vsub.f32 %v7627, %v7612
    %v7661 = vsub.f32 %v7632, %v7613
    %v7662 = vsub.f32 %v7637, %v7614
    %v7663 = vsub.f32 %v7642, %v7615
    %v7664 = vsub.f32 %v7647, %v7616
    %v7665 = vsub.f32 %v7652, %v7617
    %v7666 = vsub.f32 %v7657, %v7618
    %v7667 = vadd.f32 %v7599, %v7659
    %v7668 = vadd.f32 %v7600, %v7660
    %v7669 = vadd.f32 %v7601, %v7661
    %v7670 = vadd.f32 %v7602, %v7662
    %v7671 = vadd.f32 %v7603, %v7663
    %v7672 = vadd.f32 %v7604, %v7664
    %v7673 = vadd.f32 %v7605, %v7665
    %v7674 = vadd.f32 %v7606, %v7666
    %s7675 = scalar_lea.vmem %s12, 320
    %v7676 = vld [vmem:[%s7675] sm:$0xff]
    %v7677 = vld [vmem:[%s7675 + $0x8] sm:$0xff]
    %v7678 = vld [vmem:[%s7675 + $0x10] sm:$0xff]
    %v7679 = vld [vmem:[%s7675 + $0x18] sm:$0xff]
    %v7680 = vld [vmem:[%s7675 + $0x20] sm:$0xff]
    %v7681 = vld [vmem:[%s7675 + $0x28] sm:$0xff]
    %v7682 = vld [vmem:[%s7675 + $0x30] sm:$0xff]
    %v7683 = vld [vmem:[%s7675 + $0x38] sm:$0xff]
    %7685 = vset.pattern.permute.xlu0 1
    %7686 = vperm.xlu0 %7685, %v7676
    %v7687 = vpop.permute.xlu0 %7686
    %7690 = vset.pattern.permute.xlu0 1
    %7691 = vperm.xlu0 %7690, %v7677
    %v7692 = vpop.permute.xlu0 %7691
    %7695 = vset.pattern.permute.xlu0 1
    %7696 = vperm.xlu0 %7695, %v7678
    %v7697 = vpop.permute.xlu0 %7696
    %7700 = vset.pattern.permute.xlu0 1
    %7701 = vperm.xlu0 %7700, %v7679
    %v7702 = vpop.permute.xlu0 %7701
    %7705 = vset.pattern.permute.xlu0 1
    %7706 = vperm.xlu0 %7705, %v7680
    %v7707 = vpop.permute.xlu0 %7706
    %7710 = vset.pattern.permute.xlu0 1
    %7711 = vperm.xlu0 %7710, %v7681
    %v7712 = vpop.permute.xlu0 %7711
    %7715 = vset.pattern.permute.xlu0 1
    %7716 = vperm.xlu0 %7715, %v7682
    %v7717 = vpop.permute.xlu0 %7716
    %7720 = vset.pattern.permute.xlu0 1
    %7721 = vperm.xlu0 %7720, %v7683
    %v7722 = vpop.permute.xlu0 %7721
    %v7724 = vmul.f32 %v7687, %v7667
    %v7725 = vmul.f32 %v7692, %v7668
    %v7726 = vmul.f32 %v7697, %v7669
    %v7727 = vmul.f32 %v7702, %v7670
    %v7728 = vmul.f32 %v7707, %v7671
    %v7729 = vmul.f32 %v7712, %v7672
    %v7730 = vmul.f32 %v7717, %v7673
    %v7731 = vmul.f32 %v7722, %v7674
    %s7732 = scalar_lea.vmem %s13, 320
    %v7733 = vld [vmem:[%s7732] sm:$0xff]
    %v7734 = vld [vmem:[%s7732 + $0x8] sm:$0xff]
    %v7735 = vld [vmem:[%s7732 + $0x10] sm:$0xff]
    %v7736 = vld [vmem:[%s7732 + $0x18] sm:$0xff]
    %v7737 = vld [vmem:[%s7732 + $0x20] sm:$0xff]
    %v7738 = vld [vmem:[%s7732 + $0x28] sm:$0xff]
    %v7739 = vld [vmem:[%s7732 + $0x30] sm:$0xff]
    %v7740 = vld [vmem:[%s7732 + $0x38] sm:$0xff]
    %7742 = vset.pattern.permute.xlu0 0
    %7743 = vperm.xlu0 %7742, %v7733
    %v7744 = vpop.permute.xlu0 %7743
    %7747 = vset.pattern.permute.xlu0 0
    %7748 = vperm.xlu0 %7747, %v7734
    %v7749 = vpop.permute.xlu0 %7748
    %7752 = vset.pattern.permute.xlu0 0
    %7753 = vperm.xlu0 %7752, %v7735
    %v7754 = vpop.permute.xlu0 %7753
    %7757 = vset.pattern.permute.xlu0 0
    %7758 = vperm.xlu0 %7757, %v7736
    %v7759 = vpop.permute.xlu0 %7758
    %7762 = vset.pattern.permute.xlu0 0
    %7763 = vperm.xlu0 %7762, %v7737
    %v7764 = vpop.permute.xlu0 %7763
    %7767 = vset.pattern.permute.xlu0 0
    %7768 = vperm.xlu0 %7767, %v7738
    %v7769 = vpop.permute.xlu0 %7768
    %7772 = vset.pattern.permute.xlu0 0
    %7773 = vperm.xlu0 %7772, %v7739
    %v7774 = vpop.permute.xlu0 %7773
    %7777 = vset.pattern.permute.xlu0 0
    %7778 = vperm.xlu0 %7777, %v7740
    %v7779 = vpop.permute.xlu0 %7778
    %v7781 = vadd.f32 %v7724, %v7744
    %v7782 = vadd.f32 %v7725, %v7749
    %v7783 = vadd.f32 %v7726, %v7754
    %v7784 = vadd.f32 %v7727, %v7759
    %v7785 = vadd.f32 %v7728, %v7764
    %v7786 = vadd.f32 %v7729, %v7769
    %v7787 = vadd.f32 %v7730, %v7774
    %v7788 = vadd.f32 %v7731, %v7779
    %7789 = vrot.lane.b32.xlu0 %v7667, 4
    %v7790 = vpop.permute.xlu0 %7789
    %7791 = vrot.lane.b32.xlu0 %v7668, 4
    %v7792 = vpop.permute.xlu0 %7791
    %7793 = vrot.lane.b32.xlu0 %v7669, 4
    %v7794 = vpop.permute.xlu0 %7793
    %7795 = vrot.lane.b32.xlu0 %v7670, 4
    %v7796 = vpop.permute.xlu0 %7795
    %7797 = vrot.lane.b32.xlu0 %v7671, 4
    %v7798 = vpop.permute.xlu0 %7797
    %7799 = vrot.lane.b32.xlu0 %v7672, 4
    %v7800 = vpop.permute.xlu0 %7799
    %7801 = vrot.lane.b32.xlu0 %v7673, 4
    %v7802 = vpop.permute.xlu0 %7801
    %7803 = vrot.lane.b32.xlu0 %v7674, 4
    %v7804 = vpop.permute.xlu0 %7803
    %v7805 = vsel %vm3806, %v7790, 0.0
    %v7806 = vsel %vm3806, %v7792, 0.0
    %v7807 = vsel %vm3806, %v7794, 0.0
    %v7808 = vsel %vm3806, %v7796, 0.0
    %v7809 = vsel %vm3806, %v7798, 0.0
    %v7810 = vsel %vm3806, %v7800, 0.0
    %v7811 = vsel %vm3806, %v7802, 0.0
    %v7812 = vsel %vm3806, %v7804, 0.0
    %7813 = vset.pattern.permute.xlu0 0
    %7814 = vperm.xlu0 %7813, %v7676
    %v7815 = vpop.permute.xlu0 %7814
    %7817 = vset.pattern.permute.xlu0 0
    %7818 = vperm.xlu0 %7817, %v7677
    %v7819 = vpop.permute.xlu0 %7818
    %7821 = vset.pattern.permute.xlu0 0
    %7822 = vperm.xlu0 %7821, %v7678
    %v7823 = vpop.permute.xlu0 %7822
    %7825 = vset.pattern.permute.xlu0 0
    %7826 = vperm.xlu0 %7825, %v7679
    %v7827 = vpop.permute.xlu0 %7826
    %7829 = vset.pattern.permute.xlu0 0
    %7830 = vperm.xlu0 %7829, %v7680
    %v7831 = vpop.permute.xlu0 %7830
    %7833 = vset.pattern.permute.xlu0 0
    %7834 = vperm.xlu0 %7833, %v7681
    %v7835 = vpop.permute.xlu0 %7834
    %7837 = vset.pattern.permute.xlu0 0
    %7838 = vperm.xlu0 %7837, %v7682
    %v7839 = vpop.permute.xlu0 %7838
    %7841 = vset.pattern.permute.xlu0 0
    %7842 = vperm.xlu0 %7841, %v7683
    %v7843 = vpop.permute.xlu0 %7842
    %v7845 = vmul.f32 %v7815, %v7805
    %v7846 = vmul.f32 %v7819, %v7806
    %v7847 = vmul.f32 %v7823, %v7807
    %v7848 = vmul.f32 %v7827, %v7808
    %v7849 = vmul.f32 %v7831, %v7809
    %v7850 = vmul.f32 %v7835, %v7810
    %v7851 = vmul.f32 %v7839, %v7811
    %v7852 = vmul.f32 %v7843, %v7812
    %v7853 = vadd.f32 %v7781, %v7845
    %v7854 = vadd.f32 %v7782, %v7846
    %v7855 = vadd.f32 %v7783, %v7847
    %v7856 = vadd.f32 %v7784, %v7848
    %v7857 = vadd.f32 %v7785, %v7849
    %v7858 = vadd.f32 %v7786, %v7850
    %v7859 = vadd.f32 %v7787, %v7851
    %v7860 = vadd.f32 %v7788, %v7852
    %7861 = vrot.lane.b32.xlu0 %v7667, 124
    %v7862 = vpop.permute.xlu0 %7861
    %7863 = vrot.lane.b32.xlu0 %v7668, 124
    %v7864 = vpop.permute.xlu0 %7863
    %7865 = vrot.lane.b32.xlu0 %v7669, 124
    %v7866 = vpop.permute.xlu0 %7865
    %7867 = vrot.lane.b32.xlu0 %v7670, 124
    %v7868 = vpop.permute.xlu0 %7867
    %7869 = vrot.lane.b32.xlu0 %v7671, 124
    %v7870 = vpop.permute.xlu0 %7869
    %7871 = vrot.lane.b32.xlu0 %v7672, 124
    %v7872 = vpop.permute.xlu0 %7871
    %7873 = vrot.lane.b32.xlu0 %v7673, 124
    %v7874 = vpop.permute.xlu0 %7873
    %7875 = vrot.lane.b32.xlu0 %v7674, 124
    %v7876 = vpop.permute.xlu0 %7875
    %v7877 = vsel %vm3880, %v7862, 0.0
    %v7878 = vsel %vm3880, %v7864, 0.0
    %v7879 = vsel %vm3880, %v7866, 0.0
    %v7880 = vsel %vm3880, %v7868, 0.0
    %v7881 = vsel %vm3880, %v7870, 0.0
    %v7882 = vsel %vm3880, %v7872, 0.0
    %v7883 = vsel %vm3880, %v7874, 0.0
    %v7884 = vsel %vm3880, %v7876, 0.0
    %7885 = vset.pattern.permute.xlu0 2
    %7886 = vperm.xlu0 %7885, %v7676
    %v7887 = vpop.permute.xlu0 %7886
    %7889 = vset.pattern.permute.xlu0 2
    %7890 = vperm.xlu0 %7889, %v7677
    %v7891 = vpop.permute.xlu0 %7890
    %7893 = vset.pattern.permute.xlu0 2
    %7894 = vperm.xlu0 %7893, %v7678
    %v7895 = vpop.permute.xlu0 %7894
    %7897 = vset.pattern.permute.xlu0 2
    %7898 = vperm.xlu0 %7897, %v7679
    %v7899 = vpop.permute.xlu0 %7898
    %7901 = vset.pattern.permute.xlu0 2
    %7902 = vperm.xlu0 %7901, %v7680
    %v7903 = vpop.permute.xlu0 %7902
    %7905 = vset.pattern.permute.xlu0 2
    %7906 = vperm.xlu0 %7905, %v7681
    %v7907 = vpop.permute.xlu0 %7906
    %7909 = vset.pattern.permute.xlu0 2
    %7910 = vperm.xlu0 %7909, %v7682
    %v7911 = vpop.permute.xlu0 %7910
    %7913 = vset.pattern.permute.xlu0 2
    %7914 = vperm.xlu0 %7913, %v7683
    %v7915 = vpop.permute.xlu0 %7914
    %v7917 = vmul.f32 %v7887, %v7877
    %v7918 = vmul.f32 %v7891, %v7878
    %v7919 = vmul.f32 %v7895, %v7879
    %v7920 = vmul.f32 %v7899, %v7880
    %v7921 = vmul.f32 %v7903, %v7881
    %v7922 = vmul.f32 %v7907, %v7882
    %v7923 = vmul.f32 %v7911, %v7883
    %v7924 = vmul.f32 %v7915, %v7884
    %v7925 = vadd.f32 %v7853, %v7917
    %v7926 = vadd.f32 %v7854, %v7918
    %v7927 = vadd.f32 %v7855, %v7919
    %v7928 = vadd.f32 %v7856, %v7920
    %v7929 = vadd.f32 %v7857, %v7921
    %v7930 = vadd.f32 %v7858, %v7922
    %v7931 = vadd.f32 %v7859, %v7923
    %v7932 = vadd.f32 %v7860, %v7924
    %s7933 = scalar_lea.vmem %s14, 5
    %v7934 = vld [vmem:[%s7933] sm:$0x1]
    %v7935 = vmax.f32 %v7925, 0.0
    %v7936 = vmax.f32 %v7926, 0.0
    %v7937 = vmax.f32 %v7927, 0.0
    %v7938 = vmax.f32 %v7928, 0.0
    %v7939 = vmax.f32 %v7929, 0.0
    %v7940 = vmax.f32 %v7930, 0.0
    %v7941 = vmax.f32 %v7931, 0.0
    %v7942 = vmax.f32 %v7932, 0.0
    %v7943 = vmin.f32 %v7925, 0.0
    %v7944 = vmin.f32 %v7926, 0.0
    %v7945 = vmin.f32 %v7927, 0.0
    %v7946 = vmin.f32 %v7928, 0.0
    %v7947 = vmin.f32 %v7929, 0.0
    %v7948 = vmin.f32 %v7930, 0.0
    %v7949 = vmin.f32 %v7931, 0.0
    %v7950 = vmin.f32 %v7932, 0.0
    %v7952 = vlaneseq
    %v7953 = vshrl.u32 %v7952, 7
    %v7954 = vsub.s32 0, %v7953
    %v7955 = vrot.slane %v7934, %v7954
    %7956 = vset.pattern.permute.xlu0 0
    %7957 = vperm.xlu0 %7956, %v7955
    %v7958 = vpop.permute.xlu0 %7957
    %v7960 = vmul.f32 %v7958, %v7943
    %v7961 = vmul.f32 %v7958, %v7944
    %v7962 = vmul.f32 %v7958, %v7945
    %v7963 = vmul.f32 %v7958, %v7946
    %v7964 = vmul.f32 %v7958, %v7947
    %v7965 = vmul.f32 %v7958, %v7948
    %v7966 = vmul.f32 %v7958, %v7949
    %v7967 = vmul.f32 %v7958, %v7950
    %v7968 = vadd.f32 %v7935, %v7960
    %v7969 = vadd.f32 %v7936, %v7961
    %v7970 = vadd.f32 %v7937, %v7962
    %v7971 = vadd.f32 %v7938, %v7963
    %v7972 = vadd.f32 %v7939, %v7964
    %v7973 = vadd.f32 %v7940, %v7965
    %v7974 = vadd.f32 %v7941, %v7966
    %v7975 = vadd.f32 %v7942, %v7967
    %s7976 = scalar_lea.vmem %s15, 320
    %v7977 = vld [vmem:[%s7976] sm:$0xff]
    %v7978 = vld [vmem:[%s7976 + $0x8] sm:$0xff]
    %v7979 = vld [vmem:[%s7976 + $0x10] sm:$0xff]
    %v7980 = vld [vmem:[%s7976 + $0x18] sm:$0xff]
    %v7981 = vld [vmem:[%s7976 + $0x20] sm:$0xff]
    %v7982 = vld [vmem:[%s7976 + $0x28] sm:$0xff]
    %v7983 = vld [vmem:[%s7976 + $0x30] sm:$0xff]
    %v7984 = vld [vmem:[%s7976 + $0x38] sm:$0xff]
    %s7985 = scalar_lea.vmem %s16, 320
    %v7986 = vld [vmem:[%s7985] sm:$0xff]
    %v7987 = vld [vmem:[%s7985 + $0x8] sm:$0xff]
    %v7988 = vld [vmem:[%s7985 + $0x10] sm:$0xff]
    %v7989 = vld [vmem:[%s7985 + $0x18] sm:$0xff]
    %v7990 = vld [vmem:[%s7985 + $0x20] sm:$0xff]
    %v7991 = vld [vmem:[%s7985 + $0x28] sm:$0xff]
    %v7992 = vld [vmem:[%s7985 + $0x30] sm:$0xff]
    %v7993 = vld [vmem:[%s7985 + $0x38] sm:$0xff]
    %v7994 = vadd.f32 %v7968, %v7969
    %v7995 = vadd.f32 %v7994, %v7970
    %v7996 = vadd.f32 %v7995, %v7971
    %v7997 = vadd.f32 %v7996, %v7972
    %v7998 = vadd.f32 %v7997, %v7973
    %v7999 = vadd.f32 %v7998, %v7974
    %v8000 = vadd.f32 %v7999, %v7975
    %v8001 = vrot.slane %v8000, 4
    %v8002 = vadd.f32 %v8000, %v8001
    %v8003 = vrot.slane %v8002, 2
    %v8004 = vadd.f32 %v8002, %v8003
    %v8005 = vrot.slane %v8004, 1
    %v8006 = vadd.f32 %v8004, %v8005
    %v8007 = vmul.f32 %v7968, %v7968
    %v8008 = vmul.f32 %v7969, %v7969
    %v8009 = vmul.f32 %v7970, %v7970
    %v8010 = vmul.f32 %v7971, %v7971
    %v8011 = vmul.f32 %v7972, %v7972
    %v8012 = vmul.f32 %v7973, %v7973
    %v8013 = vmul.f32 %v7974, %v7974
    %v8014 = vmul.f32 %v7975, %v7975
    %v8015 = vadd.f32 %v8007, %v8008
    %v8016 = vadd.f32 %v8015, %v8009
    %v8017 = vadd.f32 %v8016, %v8010
    %v8018 = vadd.f32 %v8017, %v8011
    %v8019 = vadd.f32 %v8018, %v8012
    %v8020 = vadd.f32 %v8019, %v8013
    %v8021 = vadd.f32 %v8020, %v8014
    %v8022 = vrot.slane %v8021, 4
    %v8023 = vadd.f32 %v8021, %v8022
    %v8024 = vrot.slane %v8023, 2
    %v8025 = vadd.f32 %v8023, %v8024
    %v8026 = vrot.slane %v8025, 1
    %v8027 = vadd.f32 %v8025, %v8026
    %v8028 = vsel %vm127, %v8006, %v8027
    %8029 = vmatprep.subr.mxu0 0.0
    %8030 = vmatpush1.msra.mxu0 %v79
    %8031 = vmatprep.subr.mxu0 0.0
    %8032 = vmatpush1.msra.mxu0 %v80
    %8033 = vmatprep.subr.mxu0 0.0
    %8034 = vmatpush1.msra.mxu0 %v81
    %8035 = vmatprep.subr.mxu0 0.0
    %8036 = vmatpush1.msra.mxu0 %v82
    %8037 = vmatprep.subr.mxu0 0.0
    %8038 = vmatpush1.msra.mxu0 %v83
    %8039 = vmatprep.subr.mxu0 0.0
    %8040 = vmatpush1.msra.mxu0 %v84
    %8041 = vmatprep.subr.mxu0 0.0
    %8042 = vmatpush1.msra.mxu0 %v85
    %8043 = vmatprep.subr.mxu0 0.0
    %8044 = vmatpush1.msra.mxu0 %v86
    %8045 = vmatprep.subr.mxu0 0.0
    %8046 = vmatpush1.msra.mxu0 %v87
    %8047 = vmatprep.subr.mxu0 0.0
    %8048 = vmatpush1.msra.mxu0 %v88
    %8049 = vmatprep.subr.mxu0 0.0
    %8050 = vmatpush1.msra.mxu0 %v89
    %8051 = vmatprep.subr.mxu0 0.0
    %8052 = vmatpush1.msra.mxu0 %v90
    %8053 = vmatprep.subr.mxu0 0.0
    %8054 = vmatpush1.msra.mxu0 %v91
    %8055 = vmatprep.subr.mxu0 0.0
    %8056 = vmatpush1.msra.mxu0 %v92
    %8057 = vmatprep.subr.mxu0 0.0
    %8058 = vmatpush1.msra.mxu0 %v93
    %8059 = vmatprep.subr.mxu0 0.0
    %8060 = vmatpush1.msra.mxu0 %v94
    %8061 = vmatprep.subr.mxu0 0.0
    %8062 = vmatpush1.msra.mxu0 0.0
    %8063 = vmatprep.subr.mxu0 0.0
    %8064 = vmatpush1.msra.mxu0 0.0
    %8065 = vmatprep.subr.mxu0 0.0
    %8066 = vmatpush1.msra.mxu0 0.0
    %8067 = vmatprep.subr.mxu0 0.0
    %8068 = vmatpush1.msra.mxu0 0.0
    %8069 = vmatprep.subr.mxu0 0.0
    %8070 = vmatpush1.msra.mxu0 0.0
    %8071 = vmatprep.subr.mxu0 0.0
    %8072 = vmatpush1.msra.mxu0 0.0
    %8073 = vmatprep.subr.mxu0 0.0
    %8074 = vmatpush1.msra.mxu0 0.0
    %8075 = vmatprep.subr.mxu0 0.0
    %8076 = vmatpush1.msra.mxu0 0.0
    %8077 = vmatprep.subr.mxu0 0.0
    %8078 = vmatpush1.msra.mxu0 0.0
    %8079 = vmatprep.subr.mxu0 0.0
    %8080 = vmatpush1.msra.mxu0 0.0
    %8081 = vmatprep.subr.mxu0 0.0
    %8082 = vmatpush1.msra.mxu0 0.0
    %8083 = vmatprep.subr.mxu0 0.0
    %8084 = vmatpush1.msra.mxu0 0.0
    %8085 = vmatprep.subr.mxu0 0.0
    %8086 = vmatpush1.msra.mxu0 0.0
    %8087 = vmatprep.subr.mxu0 0.0
    %8088 = vmatpush1.msra.mxu0 0.0
    %8089 = vmatprep.subr.mxu0 0.0
    %8090 = vmatpush1.msra.mxu0 0.0
    %8091 = vmatprep.subr.mxu0 0.0
    %8092 = vmatpush1.msra.mxu0 0.0
    %8093 = vmatprep.mubr.f32.mxu0 0.0
    %8094 = vmatmul.mubr.f32.gmra.mrb[0].mxu0 %v8028
    %v8095 = vpop.f32.mrb[0].mxu0
    %v8096 = vadd.f32 0.0, %v8095
    %v8097 = vpop.f32.mrb[0].mxu0
    %8098 = vdwg.mxu0
    %v8099 = vmul.f32 %v8096, 0.00024414063
    %v8101 = vsel %vm200, %v8099, 0
    %8103 = vmatprep.subr.mxu0 0.0
    %8104 = vmatpush1.msra.mxu0 %v206
    %8105 = vmatprep.subr.mxu0 0.0
    %8106 = vmatpush1.msra.mxu0 0.0
    %8107 = vmatprep.subr.mxu0 0.0
    %8108 = vmatpush1.msra.mxu0 0.0
    %8109 = vmatprep.subr.mxu0 0.0
    %8110 = vmatpush1.msra.mxu0 0.0
    %8111 = vmatprep.subr.mxu0 0.0
    %8112 = vmatpush1.msra.mxu0 0.0
    %8113 = vmatprep.subr.mxu0 0.0
    %8114 = vmatpush1.msra.mxu0 0.0
    %8115 = vmatprep.subr.mxu0 0.0
    %8116 = vmatpush1.msra.mxu0 0.0
    %8117 = vmatprep.subr.mxu0 0.0
    %8118 = vmatpush1.msra.mxu0 0.0
    %8119 = vmatprep.subr.mxu0 0.0
    %8120 = vmatpush1.msra.mxu0 0.0
    %8121 = vmatprep.subr.mxu0 0.0
    %8122 = vmatpush1.msra.mxu0 0.0
    %8123 = vmatprep.subr.mxu0 0.0
    %8124 = vmatpush1.msra.mxu0 0.0
    %8125 = vmatprep.subr.mxu0 0.0
    %8126 = vmatpush1.msra.mxu0 0.0
    %8127 = vmatprep.subr.mxu0 0.0
    %8128 = vmatpush1.msra.mxu0 0.0
    %8129 = vmatprep.subr.mxu0 0.0
    %8130 = vmatpush1.msra.mxu0 0.0
    %8131 = vmatprep.subr.mxu0 0.0
    %8132 = vmatpush1.msra.mxu0 0.0
    %8133 = vmatprep.subr.mxu0 0.0
    %8134 = vmatpush1.msra.mxu0 0.0
    %8135 = vmatprep.subr.mxu0 0.0
    %8136 = vmatpush1.msra.mxu0 0.0
    %8137 = vmatprep.subr.mxu0 0.0
    %8138 = vmatpush1.msra.mxu0 0.0
    %8139 = vmatprep.subr.mxu0 0.0
    %8140 = vmatpush1.msra.mxu0 0.0
    %8141 = vmatprep.subr.mxu0 0.0
    %8142 = vmatpush1.msra.mxu0 0.0
    %8143 = vmatprep.subr.mxu0 0.0
    %8144 = vmatpush1.msra.mxu0 0.0
    %8145 = vmatprep.subr.mxu0 0.0
    %8146 = vmatpush1.msra.mxu0 0.0
    %8147 = vmatprep.subr.mxu0 0.0
    %8148 = vmatpush1.msra.mxu0 0.0
    %8149 = vmatprep.subr.mxu0 0.0
    %8150 = vmatpush1.msra.mxu0 0.0
    %8151 = vmatprep.subr.mxu0 0.0
    %8152 = vmatpush1.msra.mxu0 0.0
    %8153 = vmatprep.subr.mxu0 0.0
    %8154 = vmatpush1.msra.mxu0 0.0
    %8155 = vmatprep.subr.mxu0 0.0
    %8156 = vmatpush1.msra.mxu0 0.0
    %8157 = vmatprep.subr.mxu0 0.0
    %8158 = vmatpush1.msra.mxu0 0.0
    %8159 = vmatprep.subr.mxu0 0.0
    %8160 = vmatpush1.msra.mxu0 0.0
    %8161 = vmatprep.subr.mxu0 0.0
    %8162 = vmatpush1.msra.mxu0 0.0
    %8163 = vmatprep.subr.mxu0 0.0
    %8164 = vmatpush1.msra.mxu0 0.0
    %8165 = vmatprep.subr.mxu0 0.0
    %8166 = vmatpush1.msra.mxu0 0.0
    %8167 = vmatprep.mubr.f32.mxu0 0.0
    %8168 = vmatmul.mubr.f32.gmra.mrb[0].mxu0 %v8101
    %v8169 = vpop.f32.mrb[0].mxu0
    %v8170 = vadd.f32 0.0, %v8169
    %v8171 = vpop.f32.mrb[0].mxu0
    %8172 = vdwg.mxu0
    %v8173 = vmul.f32 %v8170, %v8170
    %v8175 = vrot.slane %v8173, 7
    %v8177 = vsub.f32 %v8170, %v8175
    %v8178 = vmax.f32 %v8177, 0.0
    %v8179 = vadd.f32 %v8178, 1e-08
    %v8180 = vrsqrt.pop %v8179
    %8182 = vset.pattern.permute.xlu0 0
    %8183 = vperm.xlu0 %8182, %v7977
    %v8184 = vpop.permute.xlu0 %8183
    %8187 = vset.pattern.permute.xlu0 0
    %8188 = vperm.xlu0 %8187, %v7978
    %v8189 = vpop.permute.xlu0 %8188
    %8192 = vset.pattern.permute.xlu0 0
    %8193 = vperm.xlu0 %8192, %v7979
    %v8194 = vpop.permute.xlu0 %8193
    %8197 = vset.pattern.permute.xlu0 0
    %8198 = vperm.xlu0 %8197, %v7980
    %v8199 = vpop.permute.xlu0 %8198
    %8202 = vset.pattern.permute.xlu0 0
    %8203 = vperm.xlu0 %8202, %v7981
    %v8204 = vpop.permute.xlu0 %8203
    %8207 = vset.pattern.permute.xlu0 0
    %8208 = vperm.xlu0 %8207, %v7982
    %v8209 = vpop.permute.xlu0 %8208
    %8212 = vset.pattern.permute.xlu0 0
    %8213 = vperm.xlu0 %8212, %v7983
    %v8214 = vpop.permute.xlu0 %8213
    %8217 = vset.pattern.permute.xlu0 0
    %8218 = vperm.xlu0 %8217, %v7984
    %v8219 = vpop.permute.xlu0 %8218
    %v8221 = vlaneseq
    %v8222 = vshrl.u32 %v8221, 7
    %v8223 = vsub.s32 1, %v8222
    %v8224 = vrot.slane %v8180, %v8223
    %v8225 = vmul.f32 %v8184, %v8224
    %v8226 = vmul.f32 %v8189, %v8224
    %v8227 = vmul.f32 %v8194, %v8224
    %v8228 = vmul.f32 %v8199, %v8224
    %v8229 = vmul.f32 %v8204, %v8224
    %v8230 = vmul.f32 %v8209, %v8224
    %v8231 = vmul.f32 %v8214, %v8224
    %v8232 = vmul.f32 %v8219, %v8224
    %v8233 = vmul.f32 %v7968, %v8225
    %v8234 = vmul.f32 %v7969, %v8226
    %v8235 = vmul.f32 %v7970, %v8227
    %v8236 = vmul.f32 %v7971, %v8228
    %v8237 = vmul.f32 %v7972, %v8229
    %v8238 = vmul.f32 %v7973, %v8230
    %v8239 = vmul.f32 %v7974, %v8231
    %v8240 = vmul.f32 %v7975, %v8232
    %v8241 = vlaneseq
    %v8242 = vshrl.u32 %v8241, 7
    %v8243 = vsub.s32 0, %v8242
    %v8244 = vrot.slane %v8170, %v8243
    %v8245 = vmul.f32 %v8244, %v8225
    %v8246 = vmul.f32 %v8244, %v8226
    %v8247 = vmul.f32 %v8244, %v8227
    %v8248 = vmul.f32 %v8244, %v8228
    %v8249 = vmul.f32 %v8244, %v8229
    %v8250 = vmul.f32 %v8244, %v8230
    %v8251 = vmul.f32 %v8244, %v8231
    %v8252 = vmul.f32 %v8244, %v8232
    %8254 = vset.pattern.permute.xlu0 0
    %8255 = vperm.xlu0 %8254, %v7986
    %v8256 = vpop.permute.xlu0 %8255
    %8259 = vset.pattern.permute.xlu0 0
    %8260 = vperm.xlu0 %8259, %v7987
    %v8261 = vpop.permute.xlu0 %8260
    %8264 = vset.pattern.permute.xlu0 0
    %8265 = vperm.xlu0 %8264, %v7988
    %v8266 = vpop.permute.xlu0 %8265
    %8269 = vset.pattern.permute.xlu0 0
    %8270 = vperm.xlu0 %8269, %v7989
    %v8271 = vpop.permute.xlu0 %8270
    %8274 = vset.pattern.permute.xlu0 0
    %8275 = vperm.xlu0 %8274, %v7990
    %v8276 = vpop.permute.xlu0 %8275
    %8279 = vset.pattern.permute.xlu0 0
    %8280 = vperm.xlu0 %8279, %v7991
    %v8281 = vpop.permute.xlu0 %8280
    %8284 = vset.pattern.permute.xlu0 0
    %8285 = vperm.xlu0 %8284, %v7992
    %v8286 = vpop.permute.xlu0 %8285
    %8289 = vset.pattern.permute.xlu0 0
    %8290 = vperm.xlu0 %8289, %v7993
    %v8291 = vpop.permute.xlu0 %8290
    %v8293 = vsub.f32 %v8256, %v8245
    %v8294 = vsub.f32 %v8261, %v8246
    %v8295 = vsub.f32 %v8266, %v8247
    %v8296 = vsub.f32 %v8271, %v8248
    %v8297 = vsub.f32 %v8276, %v8249
    %v8298 = vsub.f32 %v8281, %v8250
    %v8299 = vsub.f32 %v8286, %v8251
    %v8300 = vsub.f32 %v8291, %v8252
    %v8301 = vadd.f32 %v8233, %v8293
    %v8302 = vadd.f32 %v8234, %v8294
    %v8303 = vadd.f32 %v8235, %v8295
    %v8304 = vadd.f32 %v8236, %v8296
    %v8305 = vadd.f32 %v8237, %v8297
    %v8306 = vadd.f32 %v8238, %v8298
    %v8307 = vadd.f32 %v8239, %v8299
    %v8308 = vadd.f32 %v8240, %v8300
    %s8309 = scalar_lea.vmem %s17, 160
    %v8310 = vld [vmem:[%s8309] sm:$0xff]
    %v8311 = vld [vmem:[%s8309 + $0x8] sm:$0xff]
    %v8312 = vld [vmem:[%s8309 + $0x10] sm:$0xff]
    %v8313 = vld [vmem:[%s8309 + $0x18] sm:$0xff]
    %v8315 = vsel %vm1646, %v8310, 0
    %v8318 = vsel %vm1646, %v8311, 0
    %v8321 = vsel %vm1646, %v8312, 0
    %v8324 = vsel %vm1646, %v8313, 0
    %8326 = vmatprep.subr.mxu0 0.0
    %8327 = vmatpush1.msra.mxu0 %v8301
    %8328 = vmatprep.subr.mxu0 0.0
    %8329 = vmatpush1.msra.mxu0 %v8302
    %8330 = vmatprep.subr.mxu0 0.0
    %8331 = vmatpush1.msra.mxu0 %v8303
    %8332 = vmatprep.subr.mxu0 0.0
    %8333 = vmatpush1.msra.mxu0 %v8304
    %8334 = vmatprep.subr.mxu0 0.0
    %8335 = vmatpush1.msra.mxu0 %v8305
    %8336 = vmatprep.subr.mxu0 0.0
    %8337 = vmatpush1.msra.mxu0 %v8306
    %8338 = vmatprep.subr.mxu0 0.0
    %8339 = vmatpush1.msra.mxu0 %v8307
    %8340 = vmatprep.subr.mxu0 0.0
    %8341 = vmatpush1.msra.mxu0 %v8308
    %8342 = vmatprep.subr.mxu0 0.0
    %8343 = vmatpush1.msra.mxu0 0.0
    %8344 = vmatprep.subr.mxu0 0.0
    %8345 = vmatpush1.msra.mxu0 0.0
    %8346 = vmatprep.subr.mxu0 0.0
    %8347 = vmatpush1.msra.mxu0 0.0
    %8348 = vmatprep.subr.mxu0 0.0
    %8349 = vmatpush1.msra.mxu0 0.0
    %8350 = vmatprep.subr.mxu0 0.0
    %8351 = vmatpush1.msra.mxu0 0.0
    %8352 = vmatprep.subr.mxu0 0.0
    %8353 = vmatpush1.msra.mxu0 0.0
    %8354 = vmatprep.subr.mxu0 0.0
    %8355 = vmatpush1.msra.mxu0 0.0
    %8356 = vmatprep.subr.mxu0 0.0
    %8357 = vmatpush1.msra.mxu0 0.0
    %8358 = vmatprep.subr.mxu0 0.0
    %8359 = vmatpush1.msra.mxu0 0.0
    %8360 = vmatprep.subr.mxu0 0.0
    %8361 = vmatpush1.msra.mxu0 0.0
    %8362 = vmatprep.subr.mxu0 0.0
    %8363 = vmatpush1.msra.mxu0 0.0
    %8364 = vmatprep.subr.mxu0 0.0
    %8365 = vmatpush1.msra.mxu0 0.0
    %8366 = vmatprep.subr.mxu0 0.0
    %8367 = vmatpush1.msra.mxu0 0.0
    %8368 = vmatprep.subr.mxu0 0.0
    %8369 = vmatpush1.msra.mxu0 0.0
    %8370 = vmatprep.subr.mxu0 0.0
    %8371 = vmatpush1.msra.mxu0 0.0
    %8372 = vmatprep.subr.mxu0 0.0
    %8373 = vmatpush1.msra.mxu0 0.0
    %8374 = vmatprep.subr.mxu0 0.0
    %8375 = vmatpush1.msra.mxu0 0.0
    %8376 = vmatprep.subr.mxu0 0.0
    %8377 = vmatpush1.msra.mxu0 0.0
    %8378 = vmatprep.subr.mxu0 0.0
    %8379 = vmatpush1.msra.mxu0 0.0
    %8380 = vmatprep.subr.mxu0 0.0
    %8381 = vmatpush1.msra.mxu0 0.0
    %8382 = vmatprep.subr.mxu0 0.0
    %8383 = vmatpush1.msra.mxu0 0.0
    %8384 = vmatprep.subr.mxu0 0.0
    %8385 = vmatpush1.msra.mxu0 0.0
    %8386 = vmatprep.subr.mxu0 0.0
    %8387 = vmatpush1.msra.mxu0 0.0
    %8388 = vmatprep.subr.mxu0 0.0
    %8389 = vmatpush1.msra.mxu0 0.0
    %8390 = vmatprep.mubr.f32.mxu0 0.0
    %8391 = vmatmul.mubr.f32.gmra.mrb[0].mxu0 %v8315
    %v8392 = vpop.f32.mrb[0].mxu0
    %v8393 = vadd.f32 0.0, %v8392
    %v8394 = vpop.f32.mrb[0].mxu0
    %8395 = vmatprep.mubr.f32.mxu0 0.0
    %8396 = vmatmul.mubr.f32.gmra.mrb[0].mxu0 %v8318
    %v8397 = vpop.f32.mrb[0].mxu0
    %v8398 = vadd.f32 0.0, %v8397
    %v8399 = vpop.f32.mrb[0].mxu0
    %8400 = vmatprep.mubr.f32.mxu0 0.0
    %8401 = vmatmul.mubr.f32.gmra.mrb[0].mxu0 %v8321
    %v8402 = vpop.f32.mrb[0].mxu0
    %v8403 = vadd.f32 0.0, %v8402
    %v8404 = vpop.f32.mrb[0].mxu0
    %8405 = vmatprep.mubr.f32.mxu0 0.0
    %8406 = vmatmul.mubr.f32.gmra.mrb[0].mxu0 %v8324
    %v8407 = vpop.f32.mrb[0].mxu0
    %v8408 = vadd.f32 0.0, %v8407
    %v8409 = vpop.f32.mrb[0].mxu0
    %8410 = vdwg.mxu0
    %v8411 = vadd.f32 %v7108, %v8393
    %v8412 = vadd.f32 %v7109, %v8398
    %v8413 = vadd.f32 %v7110, %v8403
    %v8414 = vadd.f32 %v7111, %v8408
    %s8415 = scalar_lea.vmem %s18, 160
    %v8416 = vld [vmem:[%s8415] sm:$0xff]
    %v8417 = vld [vmem:[%s8415 + $0x8] sm:$0xff]
    %v8418 = vld [vmem:[%s8415 + $0x10] sm:$0xff]
    %v8419 = vld [vmem:[%s8415 + $0x18] sm:$0xff]
    %8421 = vset.pattern.permute.xlu0 0
    %8422 = vperm.xlu0 %8421, %v8416
    %v8423 = vpop.permute.xlu0 %8422
    %8426 = vset.pattern.permute.xlu0 0
    %8427 = vperm.xlu0 %8426, %v8417
    %v8428 = vpop.permute.xlu0 %8427
    %8431 = vset.pattern.permute.xlu0 0
    %8432 = vperm.xlu0 %8431, %v8418
    %v8433 = vpop.permute.xlu0 %8432
    %8436 = vset.pattern.permute.xlu0 0
    %8437 = vperm.xlu0 %8436, %v8419
    %v8438 = vpop.permute.xlu0 %8437
    %v8440 = vadd.f32 %v8411, %v8423
    %v8441 = vadd.f32 %v8412, %v8428
    %v8442 = vadd.f32 %v8413, %v8433
    %v8443 = vadd.f32 %v8414, %v8438
    %v8444 = vld [vmem:[#allocation2] sm:$0x1]
    %v8445 = vmax.f32 %v8440, 0.0
    %v8446 = vmax.f32 %v8441, 0.0
    %v8447 = vmax.f32 %v8442, 0.0
    %v8448 = vmax.f32 %v8443, 0.0
    %v8449 = vmin.f32 %v8440, 0.0
    %v8450 = vmin.f32 %v8441, 0.0
    %v8451 = vmin.f32 %v8442, 0.0
    %v8452 = vmin.f32 %v8443, 0.0
    %v8454 = vlaneseq
    %v8455 = vshrl.u32 %v8454, 7
    %v8456 = vsub.s32 0, %v8455
    %v8457 = vrot.slane %v8444, %v8456
    %8458 = vset.pattern.permute.xlu0 0
    %8459 = vperm.xlu0 %8458, %v8457
    %v8460 = vpop.permute.xlu0 %8459
    %v8462 = vmul.f32 %v8460, %v8449
    %v8463 = vmul.f32 %v8460, %v8450
    %v8464 = vmul.f32 %v8460, %v8451
    %v8465 = vmul.f32 %v8460, %v8452
    %v8466 = vadd.f32 %v8445, %v8462
    %v8467 = vadd.f32 %v8446, %v8463
    %v8468 = vadd.f32 %v8447, %v8464
    %v8469 = vadd.f32 %v8448, %v8465
    %v8470 = vld [vmem:[%s20] sm:$0xf]
    %v8471 = vld [vmem:[%s21] sm:$0xf]
    %8473 = vset.pattern.permute.xlu0 0
    %8474 = vperm.xlu0 %8473, %v8471
    %v8475 = vpop.permute.xlu0 %8474
    %v8478 = vsel %vm1646, %v8470, 0
    %8480 = vmatprep.subr.mxu0 0.0
    %8481 = vmatpush1.msra.mxu0 %v8466
    %8482 = vmatprep.subr.mxu0 0.0
    %8483 = vmatpush1.msra.mxu0 %v8467
    %8484 = vmatprep.subr.mxu0 0.0
    %8485 = vmatpush1.msra.mxu0 %v8468
    %8486 = vmatprep.subr.mxu0 0.0
    %8487 = vmatpush1.msra.mxu0 %v8469
    %8488 = vmatprep.subr.mxu0 0.0
    %8489 = vmatpush1.msra.mxu0 %v8440
    %8490 = vmatprep.subr.mxu0 0.0
    %8491 = vmatpush1.msra.mxu0 %v8441
    %8492 = vmatprep.subr.mxu0 0.0
    %8493 = vmatpush1.msra.mxu0 %v8442
    %8494 = vmatprep.subr.mxu0 0.0
    %8495 = vmatpush1.msra.mxu0 %v8443
    %8496 = vmatprep.subr.mxu0 0.0
    %8497 = vmatpush1.msra.mxu0 0.0
    %8498 = vmatprep.subr.mxu0 0.0
    %8499 = vmatpush1.msra.mxu0 0.0
    %8500 = vmatprep.subr.mxu0 0.0
    %8501 = vmatpush1.msra.mxu0 0.0
    %8502 = vmatprep.subr.mxu0 0.0
    %8503 = vmatpush1.msra.mxu0 0.0
    %8504 = vmatprep.subr.mxu0 0.0
    %8505 = vmatpush1.msra.mxu0 0.0
    %8506 = vmatprep.subr.mxu0 0.0
    %8507 = vmatpush1.msra.mxu0 0.0
    %8508 = vmatprep.subr.mxu0 0.0
    %8509 = vmatpush1.msra.mxu0 0.0
    %8510 = vmatprep.subr.mxu0 0.0
    %8511 = vmatpush1.msra.mxu0 0.0
    %8512 = vmatprep.subr.mxu0 0.0
    %8513 = vmatpush1.msra.mxu0 0.0
    %8514 = vmatprep.subr.mxu0 0.0
    %8515 = vmatpush1.msra.mxu0 0.0
    %8516 = vmatprep.subr.mxu0 0.0
    %8517 = vmatpush1.msra.mxu0 0.0
    %8518 = vmatprep.subr.mxu0 0.0
    %8519 = vmatpush1.msra.mxu0 0.0
    %8520 = vmatprep.subr.mxu0 0.0
    %8521 = vmatpush1.msra.mxu0 0.0
    %8522 = vmatprep.subr.mxu0 0.0
    %8523 = vmatpush1.msra.mxu0 0.0
    %8524 = vmatprep.subr.mxu0 0.0
    %8525 = vmatpush1.msra.mxu0 0.0
    %8526 = vmatprep.subr.mxu0 0.0
    %8527 = vmatpush1.msra.mxu0 0.0
    %8528 = vmatprep.subr.mxu0 0.0
    %8529 = vmatpush1.msra.mxu0 0.0
    %8530 = vmatprep.subr.mxu0 0.0
    %8531 = vmatpush1.msra.mxu0 0.0
    %8532 = vmatprep.subr.mxu0 0.0
    %8533 = vmatpush1.msra.mxu0 0.0
    %8534 = vmatprep.subr.mxu0 0.0
    %8535 = vmatpush1.msra.mxu0 0.0
    %8536 = vmatprep.subr.mxu0 0.0
    %8537 = vmatpush1.msra.mxu0 0.0
    %8538 = vmatprep.subr.mxu0 0.0
    %8539 = vmatpush1.msra.mxu0 0.0
    %8540 = vmatprep.subr.mxu0 0.0
    %8541 = vmatpush1.msra.mxu0 0.0
    %8542 = vmatprep.subr.mxu0 0.0
    %8543 = vmatpush1.msra.mxu0 0.0
    %8544 = vmatprep.mubr.f32.mxu0 0.0
    %8545 = vmatmul.mubr.f32.gmra.mrb[0].mxu0 %v8478
    %v8546 = vpop.f32.mrb[0].mxu0
    %v8547 = vadd.f32 %v8475, %v8546
    %v8548 = vpop.f32.mrb[0].mxu0
    %8549 = vdwg.mxu0
    %8550 = vst [vmem:[#allocation3] sm:$0x3] %v8547
    %v8551 = vxor.u32 %v8547, 2147483648
    %v8552 = vmul.f32 %v8551, 1.442695
    %v8553 = vpow.pop %v8552
    %v8554 = vadd.f32 %v8553, 1.0
    %v8555 = vrcp.pop %v8554
    %v8556 = vmul.f32 1.0, %v8555
    %vm8557 = vcmask 1043458
    %v8558 = vsel %vm8557, %v8547, -inf
    %v8559 = vrot.slane %v8558, 4
    %v8560 = vmax.f32 %v8558, %v8559
    %v8561 = vrot.slane %v8560, 2
    %v8562 = vmax.f32 %v8560, %v8561
    %v8563 = vrot.slane %v8562, 1
    %v8564 = vmax.f32 %v8562, %v8563
    %v8565 = vsub.f32 %v8547, %v8564
    %v8566 = vmul.f32 %v8565, 1.442695
    %v8567 = vpow.pop %v8566
    %v8569 = vrot.slane %v8567, 2
    %v8571 = vsel %vm204, %v8569, 0.0
    %v8572 = vrot.slane %v8571, 4
    %v8573 = vadd.f32 %v8571, %v8572
    %v8574 = vrot.slane %v8573, 2
    %v8575 = vadd.f32 %v8573, %v8574
    %v8576 = vrot.slane %v8575, 1
    %v8577 = vadd.f32 %v8575, %v8576
    %v8578 = vrcp.pop %v8577
    %v8579 = vmul.f32 %v8567, %v8578
    %v8580 = vmax.f32 %v8579, 1e-07
    %v8581 = vmin.f32 %v8580, 1.0
    %v8583 = vrot.slane %v8581, 2
    %v8585 = vmul.f32 %v8556, %v8583
    %v8586 = vsel %vm204, %v8585, %v8581
    %8587 = vmatprep.subr.mxu0 0.0
    %8588 = vmatpush1.msra.mxu0 %v79
    %8589 = vmatprep.subr.mxu0 0.0
    %8590 = vmatpush1.msra.mxu0 %v80
    %8591 = vmatprep.subr.mxu0 0.0
    %8592 = vmatpush1.msra.mxu0 %v81
    %8593 = vmatprep.subr.mxu0 0.0
    %8594 = vmatpush1.msra.mxu0 %v82
    %8595 = vmatprep.subr.mxu0 0.0
    %8596 = vmatpush1.msra.mxu0 %v83
    %8597 = vmatprep.subr.mxu0 0.0
    %8598 = vmatpush1.msra.mxu0 %v84
    %8599 = vmatprep.subr.mxu0 0.0
    %8600 = vmatpush1.msra.mxu0 %v85
    %8601 = vmatprep.subr.mxu0 0.0
    %8602 = vmatpush1.msra.mxu0 %v86
    %8603 = vmatprep.subr.mxu0 0.0
    %8604 = vmatpush1.msra.mxu0 %v87
    %8605 = vmatprep.subr.mxu0 0.0
    %8606 = vmatpush1.msra.mxu0 %v88
    %8607 = vmatprep.subr.mxu0 0.0
    %8608 = vmatpush1.msra.mxu0 %v89
    %8609 = vmatprep.subr.mxu0 0.0
    %8610 = vmatpush1.msra.mxu0 %v90
    %8611 = vmatprep.subr.mxu0 0.0
    %8612 = vmatpush1.msra.mxu0 %v91
    %8613 = vmatprep.subr.mxu0 0.0
    %8614 = vmatpush1.msra.mxu0 %v92
    %8615 = vmatprep.subr.mxu0 0.0
    %8616 = vmatpush1.msra.mxu0 %v93
    %8617 = vmatprep.subr.mxu0 0.0
    %8618 = vmatpush1.msra.mxu0 %v94
    %8619 = vmatprep.subr.mxu0 0.0
    %8620 = vmatpush1.msra.mxu0 0.0
    %8621 = vmatprep.subr.mxu0 0.0
    %8622 = vmatpush1.msra.mxu0 0.0
    %8623 = vmatprep.subr.mxu0 0.0
    %8624 = vmatpush1.msra.mxu0 0.0
    %8625 = vmatprep.subr.mxu0 0.0
    %8626 = vmatpush1.msra.mxu0 0.0
    %8627 = vmatprep.subr.mxu0 0.0
    %8628 = vmatpush1.msra.mxu0 0.0
    %8629 = vmatprep.subr.mxu0 0.0
    %8630 = vmatpush1.msra.mxu0 0.0
    %8631 = vmatprep.subr.mxu0 0.0
    %8632 = vmatpush1.msra.mxu0 0.0
    %8633 = vmatprep.subr.mxu0 0.0
    %8634 = vmatpush1.msra.mxu0 0.0
    %8635 = vmatprep.subr.mxu0 0.0
    %8636 = vmatpush1.msra.mxu0 0.0
    %8637 = vmatprep.subr.mxu0 0.0
    %8638 = vmatpush1.msra.mxu0 0.0
    %8639 = vmatprep.subr.mxu0 0.0
    %8640 = vmatpush1.msra.mxu0 0.0
    %8641 = vmatprep.subr.mxu0 0.0
    %8642 = vmatpush1.msra.mxu0 0.0
    %8643 = vmatprep.subr.mxu0 0.0
    %8644 = vmatpush1.msra.mxu0 0.0
    %8645 = vmatprep.subr.mxu0 0.0
    %8646 = vmatpush1.msra.mxu0 0.0
    %8647 = vmatprep.subr.mxu0 0.0
    %8648 = vmatpush1.msra.mxu0 0.0
    %8649 = vmatprep.subr.mxu0 0.0
    %8650 = vmatpush1.msra.mxu0 0.0
    %8651 = vmatprep.mubr.f32.mxu0 0.0
    %8652 = vmatmul.mubr.f32.gmra.mrb[0].mxu0 %v8586
    %v8653 = vpop.f32.mrb[0].mxu0
    %v8654 = vadd.f32 0.0, %v8653
    %v8655 = vpop.f32.mrb[0].mxu0
    %8656 = vdwg.mxu0
    %v8657 = vrcp.pop %v8654
    %v8659 = vrot.slane %v8657, 2
    %v8661 = vmul.f32 %v8654, %v8659
    %vm8662 = vcmask 9216
    %8663 = vst.msk [vmem:[#allocation5] sm:$0x3] %vm8662, %v8661
    // Predicated region
    $region90: #{tpu_custom_call.1} parent=1 // pred_check
      _
    $region91: #{tpu_custom_call.1} parent=1 // pred_check_branch
      %8665 = sbr.rel (0) target = $region93
    $region92: #{tpu_custom_call.1} parent=1 // pred_region
      %s8667 = ssub.s32 32, 32
      %8668 = vsyncadd [#allocation4], %s8667
      %s8670 = sshll.u32 [#allocation3], 4
      %s8671 = int_to_ptr.vmem [resolvable:$true] %s8670
      %8673 = dma.vmem_to_hbm [thread:$0]  %s8671, 32, %s22, [#allocation4]
    $region93: #{tpu_custom_call.1} parent=1 // pred_fallthru
      _
    // Predicated region
    $region94: #{tpu_custom_call.1} parent=1 // pred_check
      _
    $region95: #{tpu_custom_call.1} parent=1 // pred_check_branch
      %8675 = sbr.rel (0) target = $region97
    $region96: #{tpu_custom_call.1} parent=1 // pred_region
      %s8677 = ssub.s32 32, 32
      %8678 = vsyncadd [#allocation6], %s8677
      %s8680 = sshll.u32 [#allocation5], 4
      %s8681 = int_to_ptr.vmem [resolvable:$true] %s8680
      %8683 = dma.vmem_to_hbm [thread:$0]  %s8681, 32, %s23, [#allocation6]
    $region97: #{tpu_custom_call.1} parent=1 // pred_fallthru
      _
    // Predicated region
    $region98: #{tpu_custom_call.1} parent=1 // pred_check
      _
    $region99: #{tpu_custom_call.1} parent=1 // pred_check_branch
      %8685 = sbr.rel (0) target = $region101
    $region100: #{tpu_custom_call.1} parent=1 // pred_region
      %8686 = dma.done [#allocation4], 32
    $region101: #{tpu_custom_call.1} parent=1 // pred_fallthru
      _
    // Predicated region
    $region102: #{tpu_custom_call.1} parent=1 // pred_check
      _
    $region103: #{tpu_custom_call.1} parent=1 // pred_check_branch
      %8688 = sbr.rel (0) target = $region105
    $region104: #{tpu_custom_call.1} parent=1 // pred_region
      %8689 = dma.done [#allocation6], 32
    $region105: #{tpu_custom_call.1} parent=1 // pred_fallthru
      _
    %8690 = vsyncpa [#allocation4], 1
    %8691 = vsyncpa [#allocation6], 1

</llo_original>
